<compile_context>
chip_gen: v7x
topology: tpu7x:2x2x1
jax: 0.10.0
libtpu: 0.0.40
codegen_flags: <defaults>
</compile_context>

<pallas_src>
import jax
import jax.numpy as jnp
from jax import lax
from jax.experimental import pallas as pl
from jax.experimental.pallas import tpu as pltpu

EPS = 1e-5


def _conv_bn_relu_kernel(xpad_ref, w_ref, g_ref, be_ref, out_ref, acc_ref):
    """One fused Conv2d(3x3, padding=1) + BatchNorm2d(train) + ReLU stage.

    xpad_ref : (N, H+2, W+2, Cin)  bf16   padded NHWC input (grid-invariant block)
    w_ref    : (9, Cin, CT)        bf16   conv weights for this output-channel tile
    g_ref    : (1, CT)             f32    BN gamma
    be_ref   : (1, CT)             f32    BN beta
    out_ref  : (N*H*W, CT)                normalized + ReLU'd activations
    acc_ref  : (N*H*W, CT)         f32    VMEM conv accumulator (scratch)
    """
    N, Hp2, Wp2, Cin = xpad_ref.shape
    H, W = Hp2 - 2, Wp2 - 2
    M = N * H * W

    # ---- 3x3 conv: 9 tap-matmuls, each batched over all N images at once ----
    for k in range(9):                                   # static unroll over taps
        dy, dx = k // 3, k % 3
        patch = xpad_ref[:, dy:dy + H, dx:dx + W, :].reshape(M, Cin)   # bf16
        tap = jnp.dot(patch, w_ref[k], preferred_element_type=jnp.float32)
        if k == 0:
            acc_ref[...] = tap
        else:
            acc_ref[...] += tap
    # (conv bias intentionally omitted: it cancels exactly with the BN mean
    #  subtraction below — pure dead work otherwise.)

    y = acc_ref[...]                                     # (M, CT) f32

    # ---- BatchNorm2d: one-pass batch stats (biased var), kept in f32 ----
    inv_m = 1.0 / M
    mean = jnp.sum(y, axis=0, keepdims=True) * inv_m
    ex2 = jnp.sum(y * y, axis=0, keepdims=True) * inv_m
    var = ex2 - mean * mean
    scale = g_ref[...] * lax.rsqrt(var + EPS)

    # ---- affine + ReLU, store ----
    z = jnp.maximum((y - mean) * scale + be_ref[...], 0.0)
    out_ref[...] = z.astype(out_ref.dtype)


def conv3x3_bn_relu(x_nhwc, w_hwio, gamma, beta, *, out_dtype, cout_tile=128):
    """Fused conv(3x3, pad=1) + BN(training-mode) + ReLU over an NHWC input."""
    N, H, W, Cin = x_nhwc.shape
    Cout = w_hwio.shape[-1]

    # Channel tile: BN stats are per-channel, so tiling Cout is exact.
    # Target 128 (native MXU width) for large channel counts.
    ct = Cout if Cout <= cout_tile else cout_tile
    assert Cout % ct == 0, "Cout must be a multiple of the channel tile"
    n_tiles = Cout // ct

    # Glue: pad H/W by 1; cast activations/weights to bf16 (MXU-native, halves
    # DMA bytes); BN parameters stay f32.
    xpad = jnp.pad(x_nhwc, ((0, 0), (1, 1), (1, 1), (0, 0))).astype(jnp.bfloat16)
    w = w_hwio.reshape(9, Cin, Cout).astype(jnp.bfloat16)
    g = gamma.reshape(1, Cout).astype(jnp.float32)
    be = beta.reshape(1, Cout).astype(jnp.float32)

    out = pl.pallas_call(
        _conv_bn_relu_kernel,
        out_shape=jax.ShapeDtypeStruct((N * H * W, Cout), out_dtype),
        grid_spec=pltpu.PrefetchScalarGridSpec(
            num_scalar_prefetch=0,
            grid=(n_tiles,),
            in_specs=[
                # Padded input: same block for every channel tile (not re-DMA'd
                # across consecutive grid steps).
                pl.BlockSpec((N, H + 2, W + 2, Cin), lambda j: (0, 0, 0, 0)),
                pl.BlockSpec((9, Cin, ct), lambda j: (0, 0, j)),
                pl.BlockSpec((1, ct), lambda j: (0, j)),
                pl.BlockSpec((1, ct), lambda j: (0, j)),
            ],
            out_specs=pl.BlockSpec((N * H * W, ct), lambda j: (0, j)),
            scratch_shapes=[pltpu.VMEM((N * H * W, ct), jnp.float32)],
        ),
        compiler_params=pltpu.CompilerParams(
            # Channel tiles are fully independent -> shard across TensorCores.
            dimension_semantics=("parallel",),
            vmem_limit_bytes=64 * 1024 * 1024,
        ),
    )(xpad, w, g, be)

    # Free reshape back to NHWC in the wrapper (same memory order).
    return out.reshape(N, H, W, Cout)


def double_conv(x_nchw, params):
    """Pallas DoubleConv forward. x_nchw: (N, Cin, H, W) f32 -> (N, Cout, H, W)."""
    x = jnp.transpose(x_nchw, (0, 2, 3, 1))                    # NCHW -> NHWC glue
    # Stage 1: keep the intermediate activation in bf16 (halves HBM traffic).
    # Conv biases b1/b2 are not passed: training-mode BN cancels them exactly.
    y = conv3x3_bn_relu(x, params["w1"], params["g1"], params["be1"],
                        out_dtype=jnp.bfloat16)
    # Stage 2: the wrapper re-pads y (glue) — no in-kernel padded-scratch round trip.
    z = conv3x3_bn_relu(y, params["w2"], params["g2"], params["be2"],
                        out_dtype=jnp.float32)
    return jnp.transpose(z, (0, 3, 1, 2))                      # NHWC -> NCHW


def double_conv_reference(x_nchw, params):
    """Pure-JAX f32 reference matching PyTorch DoubleConv.forward (training-mode BN)."""
    x = jnp.transpose(x_nchw, (0, 2, 3, 1)).astype(jnp.float32)

    def conv(x, w, b):
        y = lax.conv_general_dilated(x, w, (1, 1), "SAME",
                                     dimension_numbers=("NHWC", "HWIO", "NHWC"))
        return y + b

    def bn_relu(x, g, be):
        mean = jnp.mean(x, axis=(0, 1, 2))
        var = jnp.mean((x - mean) ** 2, axis=(0, 1, 2))
        return jnp.maximum((x - mean) * g * lax.rsqrt(var + EPS) + be, 0.0)

    y = bn_relu(conv(x, params["w1"], params["b1"]), params["g1"], params["be1"])
    z = bn_relu(conv(y, params["w2"], params["b2"]), params["g2"], params["be2"])
    return jnp.transpose(z, (0, 3, 1, 2))


def make_params(key, cin, cout):
    ks = jax.random.split(key, 8)
    # Conv weights stored HWIO == transpose of PyTorch's (Cout, Cin, 3, 3).
    return {
        "w1": 0.1 * jax.random.normal(ks[0], (3, 3, cin, cout), jnp.float32),
        "b1": 0.1 * jax.random.normal(ks[1], (cout,), jnp.float32),
        "g1": jax.random.uniform(ks[2], (cout,), jnp.float32, 0.5, 1.5),
        "be1": 0.1 * jax.random.normal(ks[3], (cout,), jnp.float32),
        "w2": 0.1 * jax.random.normal(ks[4], (3, 3, cout, cout), jnp.float32),
        "b2": 0.1 * jax.random.normal(ks[5], (cout,), jnp.float32),
        "g2": jax.random.uniform(ks[6], (cout,), jnp.float32, 0.5, 1.5),
        "be2": 0.1 * jax.random.normal(ks[7], (cout,), jnp.float32),
    }


if __name__ == "__main__":
    key = jax.random.PRNGKey(0)
    k_x, k_p = jax.random.split(key)

    N, Cin, Cout, H, W = 2, 4, 8, 16, 16
    x = jax.random.normal(k_x, (N, Cin, H, W), jnp.float32)    # PyTorch NCHW input
    params = make_params(k_p, Cin, Cout)

    # Round activations / conv weights to bf16-representable values so that the
    # f32 reference isolates kernel error from the (intentional) bf16 input cast.
    q = lambda a: a.astype(jnp.bfloat16).astype(jnp.float32)
    x = q(x)
    params = {k: (q(v) if k in ("w1", "w2") else v) for k, v in params.items()}

    out = jax.block_until_ready(double_conv(x, params))
    ref = jax.block_until_ready(double_conv_reference(x, params))

    assert out.shape == (N, Cout, H, W)
    # Residual error comes only from the bf16 intermediate activation of stage 1.
    assert jnp.allclose(out, ref, atol=5e-2, rtol=5e-2), float(jnp.max(jnp.abs(out - ref)))

    print("KERNEL_OK")
</pallas_src>

<mosaic_0001>
module attributes {stable_mosaic.version = 11 : i64} {
  func.func @_conv_bn_relu_kernel(%arg0: i32, %arg1: memref<2x18x18x4xbf16, #tpu.memory_space<vmem>>, %arg2: memref<9x4x8xbf16, #tpu.memory_space<vmem>>, %arg3: memref<1x8xf32, #tpu.memory_space<vmem>>, %arg4: memref<1x8xf32, #tpu.memory_space<vmem>>, %arg5: memref<512x8xbf16, #tpu.memory_space<vmem>>, %arg6: memref<512x8xf32, #tpu.memory_space<vmem>>) attributes {dimension_semantics = [#tpu.dimension_semantics<parallel>], iteration_bounds = array<i64: 1>, scalar_prefetch = 0 : i64, scratch_operands = 1 : i64, tpu.core_type = #tpu.core_type<tc>, window_params = [{pipeline_mode = #tpu.pipeline_mode<synchronous>, transform_indices = @transform_0, window_bounds = array<i64: 2, 18, 18, 4>}, {transform_indices = @transform_1, window_bounds = array<i64: 9, 4, 8>}, {transform_indices = @transform_2, window_bounds = array<i64: 1, 8>}, {transform_indices = @transform_3, window_bounds = array<i64: 1, 8>}, {transform_indices = @transform_4, window_bounds = array<i64: 512, 8>}]} {
    %c0 = arith.constant 0 : index
    %c0_0 = arith.constant 0 : index
    %c0_1 = arith.constant 0 : index
    %c0_2 = arith.constant 0 : index
    %0 = vector.load %arg1[%c0, %c0_0, %c0_1, %c0_2] : memref<2x18x18x4xbf16, #tpu.memory_space<vmem>>, vector<2x16x16x4xbf16>
    %1 = vector.shape_cast %0 : vector<2x16x16x4xbf16> to vector<512x4xbf16>
    %c0_3 = arith.constant 0 : index
    %c0_4 = arith.constant 0 : index
    %c0_5 = arith.constant 0 : index
    %2 = vector.load %arg2[%c0_3, %c0_4, %c0_5] : memref<9x4x8xbf16, #tpu.memory_space<vmem>>, vector<1x4x8xbf16>
    %3 = vector.shape_cast %2 : vector<1x4x8xbf16> to vector<4x8xbf16>
    %cst = arith.constant dense<0.000000e+00> : vector<512x8xf32>
    %4 = tpu.matmul %1, %3, %cst {dimension_numbers = #tpu.dot_dimension_numbers<[1], [0], [0], [1], [0, 0, 1, 1], [], []>} : vector<512x4xbf16>, vector<4x8xbf16>, vector<512x8xf32> -> vector<512x8xf32>
    %c0_6 = arith.constant 0 : index
    %c0_7 = arith.constant 0 : index
    %5 = vector.load %arg6[%c0_6, %c0_7] : memref<512x8xf32, #tpu.memory_space<vmem>>, vector<512x8xf32>
    tpu.vector_store %arg6[%c0_6, %c0_7], %4 {strides = array<i32>} : memref<512x8xf32, #tpu.memory_space<vmem>>, vector<512x8xf32>,
    %c0_8 = arith.constant 0 : index
    %c0_9 = arith.constant 0 : index
    %c1 = arith.constant 1 : index
    %c0_10 = arith.constant 0 : index
    %6 = vector.load %arg1[%c0_8, %c0_9, %c1, %c0_10] : memref<2x18x18x4xbf16, #tpu.memory_space<vmem>>, vector<2x16x16x4xbf16>
    %7 = vector.shape_cast %6 : vector<2x16x16x4xbf16> to vector<512x4xbf16>
    %c1_11 = arith.constant 1 : index
    %c0_12 = arith.constant 0 : index
    %c0_13 = arith.constant 0 : index
    %8 = vector.load %arg2[%c1_11, %c0_12, %c0_13] : memref<9x4x8xbf16, #tpu.memory_space<vmem>>, vector<1x4x8xbf16>
    %9 = vector.shape_cast %8 : vector<1x4x8xbf16> to vector<4x8xbf16>
    %cst_14 = arith.constant dense<0.000000e+00> : vector<512x8xf32>
    %10 = tpu.matmul %7, %9, %cst_14 {dimension_numbers = #tpu.dot_dimension_numbers<[1], [0], [0], [1], [0, 0, 1, 1], [], []>} : vector<512x4xbf16>, vector<4x8xbf16>, vector<512x8xf32> -> vector<512x8xf32>
    %c0_15 = arith.constant 0 : index
    %c0_16 = arith.constant 0 : index
    %11 = vector.load %arg6[%c0_15, %c0_16] : memref<512x8xf32, #tpu.memory_space<vmem>>, vector<512x8xf32>
    %12 = arith.addf %11, %10 : vector<512x8xf32>
    %c0_17 = arith.constant 0 : index
    %c0_18 = arith.constant 0 : index
    %13 = vector.load %arg6[%c0_17, %c0_18] : memref<512x8xf32, #tpu.memory_space<vmem>>, vector<512x8xf32>
    tpu.vector_store %arg6[%c0_17, %c0_18], %12 {strides = array<i32>} : memref<512x8xf32, #tpu.memory_space<vmem>>, vector<512x8xf32>,
    %c0_19 = arith.constant 0 : index
    %c0_20 = arith.constant 0 : index
    %c2 = arith.constant 2 : index
    %c0_21 = arith.constant 0 : index
    %14 = vector.load %arg1[%c0_19, %c0_20, %c2, %c0_21] : memref<2x18x18x4xbf16, #tpu.memory_space<vmem>>, vector<2x16x16x4xbf16>
    %15 = vector.shape_cast %14 : vector<2x16x16x4xbf16> to vector<512x4xbf16>
    %c2_22 = arith.constant 2 : index
    %c0_23 = arith.constant 0 : index
    %c0_24 = arith.constant 0 : index
    %16 = vector.load %arg2[%c2_22, %c0_23, %c0_24] : memref<9x4x8xbf16, #tpu.memory_space<vmem>>, vector<1x4x8xbf16>
    %17 = vector.shape_cast %16 : vector<1x4x8xbf16> to vector<4x8xbf16>
    %cst_25 = arith.constant dense<0.000000e+00> : vector<512x8xf32>
    %18 = tpu.matmul %15, %17, %cst_25 {dimension_numbers = #tpu.dot_dimension_numbers<[1], [0], [0], [1], [0, 0, 1, 1], [], []>} : vector<512x4xbf16>, vector<4x8xbf16>, vector<512x8xf32> -> vector<512x8xf32>
    %c0_26 = arith.constant 0 : index
    %c0_27 = arith.constant 0 : index
    %19 = vector.load %arg6[%c0_26, %c0_27] : memref<512x8xf32, #tpu.memory_space<vmem>>, vector<512x8xf32>
    %20 = arith.addf %19, %18 : vector<512x8xf32>
    %c0_28 = arith.constant 0 : index
    %c0_29 = arith.constant 0 : index
    %21 = vector.load %arg6[%c0_28, %c0_29] : memref<512x8xf32, #tpu.memory_space<vmem>>, vector<512x8xf32>
    tpu.vector_store %arg6[%c0_28, %c0_29], %20 {strides = array<i32>} : memref<512x8xf32, #tpu.memory_space<vmem>>, vector<512x8xf32>,
    %c0_30 = arith.constant 0 : index
    %c1_31 = arith.constant 1 : index
    %c0_32 = arith.constant 0 : index
    %c0_33 = arith.constant 0 : index
    %22 = vector.load %arg1[%c0_30, %c1_31, %c0_32, %c0_33] : memref<2x18x18x4xbf16, #tpu.memory_space<vmem>>, vector<2x16x16x4xbf16>
    %23 = vector.shape_cast %22 : vector<2x16x16x4xbf16> to vector<512x4xbf16>
    %c3 = arith.constant 3 : index
    %c0_34 = arith.constant 0 : index
    %c0_35 = arith.constant 0 : index
    %24 = vector.load %arg2[%c3, %c0_34, %c0_35] : memref<9x4x8xbf16, #tpu.memory_space<vmem>>, vector<1x4x8xbf16>
    %25 = vector.shape_cast %24 : vector<1x4x8xbf16> to vector<4x8xbf16>
    %cst_36 = arith.constant dense<0.000000e+00> : vector<512x8xf32>
    %26 = tpu.matmul %23, %25, %cst_36 {dimension_numbers = #tpu.dot_dimension_numbers<[1], [0], [0], [1], [0, 0, 1, 1], [], []>} : vector<512x4xbf16>, vector<4x8xbf16>, vector<512x8xf32> -> vector<512x8xf32>
    %c0_37 = arith.constant 0 : index
    %c0_38 = arith.constant 0 : index
    %27 = vector.load %arg6[%c0_37, %c0_38] : memref<512x8xf32, #tpu.memory_space<vmem>>, vector<512x8xf32>
    %28 = arith.addf %27, %26 : vector<512x8xf32>
    %c0_39 = arith.constant 0 : index
    %c0_40 = arith.constant 0 : index
    %29 = vector.load %arg6[%c0_39, %c0_40] : memref<512x8xf32, #tpu.memory_space<vmem>>, vector<512x8xf32>
    tpu.vector_store %arg6[%c0_39, %c0_40], %28 {strides = array<i32>} : memref<512x8xf32, #tpu.memory_space<vmem>>, vector<512x8xf32>,
    %c0_41 = arith.constant 0 : index
    %c1_42 = arith.constant 1 : index
    %c1_43 = arith.constant 1 : index
    %c0_44 = arith.constant 0 : index
    %30 = vector.load %arg1[%c0_41, %c1_42, %c1_43, %c0_44] : memref<2x18x18x4xbf16, #tpu.memory_space<vmem>>, vector<2x16x16x4xbf16>
    %31 = vector.shape_cast %30 : vector<2x16x16x4xbf16> to vector<512x4xbf16>
    %c4 = arith.constant 4 : index
    %c0_45 = arith.constant 0 : index
    %c0_46 = arith.constant 0 : index
    %32 = vector.load %arg2[%c4, %c0_45, %c0_46] : memref<9x4x8xbf16, #tpu.memory_space<vmem>>, vector<1x4x8xbf16>
    %33 = vector.shape_cast %32 : vector<1x4x8xbf16> to vector<4x8xbf16>
    %cst_47 = arith.constant dense<0.000000e+00> : vector<512x8xf32>
    %34 = tpu.matmul %31, %33, %cst_47 {dimension_numbers = #tpu.dot_dimension_numbers<[1], [0], [0], [1], [0, 0, 1, 1], [], []>} : vector<512x4xbf16>, vector<4x8xbf16>, vector<512x8xf32> -> vector<512x8xf32>
    %c0_48 = arith.constant 0 : index
    %c0_49 = arith.constant 0 : index
    %35 = vector.load %arg6[%c0_48, %c0_49] : memref<512x8xf32, #tpu.memory_space<vmem>>, vector<512x8xf32>
    %36 = arith.addf %35, %34 : vector<512x8xf32>
    %c0_50 = arith.constant 0 : index
    %c0_51 = arith.constant 0 : index
    %37 = vector.load %arg6[%c0_50, %c0_51] : memref<512x8xf32, #tpu.memory_space<vmem>>, vector<512x8xf32>
    tpu.vector_store %arg6[%c0_50, %c0_51], %36 {strides = array<i32>} : memref<512x8xf32, #tpu.memory_space<vmem>>, vector<512x8xf32>,
    %c0_52 = arith.constant 0 : index
    %c1_53 = arith.constant 1 : index
    %c2_54 = arith.constant 2 : index
    %c0_55 = arith.constant 0 : index
    %38 = vector.load %arg1[%c0_52, %c1_53, %c2_54, %c0_55] : memref<2x18x18x4xbf16, #tpu.memory_space<vmem>>, vector<2x16x16x4xbf16>
    %39 = vector.shape_cast %38 : vector<2x16x16x4xbf16> to vector<512x4xbf16>
    %c5 = arith.constant 5 : index
    %c0_56 = arith.constant 0 : index
    %c0_57 = arith.constant 0 : index
    %40 = vector.load %arg2[%c5, %c0_56, %c0_57] : memref<9x4x8xbf16, #tpu.memory_space<vmem>>, vector<1x4x8xbf16>
    %41 = vector.shape_cast %40 : vector<1x4x8xbf16> to vector<4x8xbf16>
    %cst_58 = arith.constant dense<0.000000e+00> : vector<512x8xf32>
    %42 = tpu.matmul %39, %41, %cst_58 {dimension_numbers = #tpu.dot_dimension_numbers<[1], [0], [0], [1], [0, 0, 1, 1], [], []>} : vector<512x4xbf16>, vector<4x8xbf16>, vector<512x8xf32> -> vector<512x8xf32>
    %c0_59 = arith.constant 0 : index
    %c0_60 = arith.constant 0 : index
    %43 = vector.load %arg6[%c0_59, %c0_60] : memref<512x8xf32, #tpu.memory_space<vmem>>, vector<512x8xf32>
    %44 = arith.addf %43, %42 : vector<512x8xf32>
    %c0_61 = arith.constant 0 : index
    %c0_62 = arith.constant 0 : index
    %45 = vector.load %arg6[%c0_61, %c0_62] : memref<512x8xf32, #tpu.memory_space<vmem>>, vector<512x8xf32>
    tpu.vector_store %arg6[%c0_61, %c0_62], %44 {strides = array<i32>} : memref<512x8xf32, #tpu.memory_space<vmem>>, vector<512x8xf32>,
    %c0_63 = arith.constant 0 : index
    %c2_64 = arith.constant 2 : index
    %c0_65 = arith.constant 0 : index
    %c0_66 = arith.constant 0 : index
    %46 = vector.load %arg1[%c0_63, %c2_64, %c0_65, %c0_66] : memref<2x18x18x4xbf16, #tpu.memory_space<vmem>>, vector<2x16x16x4xbf16>
    %47 = vector.shape_cast %46 : vector<2x16x16x4xbf16> to vector<512x4xbf16>
    %c6 = arith.constant 6 : index
    %c0_67 = arith.constant 0 : index
    %c0_68 = arith.constant 0 : index
    %48 = vector.load %arg2[%c6, %c0_67, %c0_68] : memref<9x4x8xbf16, #tpu.memory_space<vmem>>, vector<1x4x8xbf16>
    %49 = vector.shape_cast %48 : vector<1x4x8xbf16> to vector<4x8xbf16>
    %cst_69 = arith.constant dense<0.000000e+00> : vector<512x8xf32>
    %50 = tpu.matmul %47, %49, %cst_69 {dimension_numbers = #tpu.dot_dimension_numbers<[1], [0], [0], [1], [0, 0, 1, 1], [], []>} : vector<512x4xbf16>, vector<4x8xbf16>, vector<512x8xf32> -> vector<512x8xf32>
    %c0_70 = arith.constant 0 : index
    %c0_71 = arith.constant 0 : index
    %51 = vector.load %arg6[%c0_70, %c0_71] : memref<512x8xf32, #tpu.memory_space<vmem>>, vector<512x8xf32>
    %52 = arith.addf %51, %50 : vector<512x8xf32>
    %c0_72 = arith.constant 0 : index
    %c0_73 = arith.constant 0 : index
    %53 = vector.load %arg6[%c0_72, %c0_73] : memref<512x8xf32, #tpu.memory_space<vmem>>, vector<512x8xf32>
    tpu.vector_store %arg6[%c0_72, %c0_73], %52 {strides = array<i32>} : memref<512x8xf32, #tpu.memory_space<vmem>>, vector<512x8xf32>,
    %c0_74 = arith.constant 0 : index
    %c2_75 = arith.constant 2 : index
    %c1_76 = arith.constant 1 : index
    %c0_77 = arith.constant 0 : index
    %54 = vector.load %arg1[%c0_74, %c2_75, %c1_76, %c0_77] : memref<2x18x18x4xbf16, #tpu.memory_space<vmem>>, vector<2x16x16x4xbf16>
    %55 = vector.shape_cast %54 : vector<2x16x16x4xbf16> to vector<512x4xbf16>
    %c7 = arith.constant 7 : index
    %c0_78 = arith.constant 0 : index
    %c0_79 = arith.constant 0 : index
    %56 = vector.load %arg2[%c7, %c0_78, %c0_79] : memref<9x4x8xbf16, #tpu.memory_space<vmem>>, vector<1x4x8xbf16>
    %57 = vector.shape_cast %56 : vector<1x4x8xbf16> to vector<4x8xbf16>
    %cst_80 = arith.constant dense<0.000000e+00> : vector<512x8xf32>
    %58 = tpu.matmul %55, %57, %cst_80 {dimension_numbers = #tpu.dot_dimension_numbers<[1], [0], [0], [1], [0, 0, 1, 1], [], []>} : vector<512x4xbf16>, vector<4x8xbf16>, vector<512x8xf32> -> vector<512x8xf32>
    %c0_81 = arith.constant 0 : index
    %c0_82 = arith.constant 0 : index
    %59 = vector.load %arg6[%c0_81, %c0_82] : memref<512x8xf32, #tpu.memory_space<vmem>>, vector<512x8xf32>
    %60 = arith.addf %59, %58 : vector<512x8xf32>
    %c0_83 = arith.constant 0 : index
    %c0_84 = arith.constant 0 : index
    %61 = vector.load %arg6[%c0_83, %c0_84] : memref<512x8xf32, #tpu.memory_space<vmem>>, vector<512x8xf32>
    tpu.vector_store %arg6[%c0_83, %c0_84], %60 {strides = array<i32>} : memref<512x8xf32, #tpu.memory_space<vmem>>, vector<512x8xf32>,
    %c0_85 = arith.constant 0 : index
    %c2_86 = arith.constant 2 : index
    %c2_87 = arith.constant 2 : index
    %c0_88 = arith.constant 0 : index
    %62 = vector.load %arg1[%c0_85, %c2_86, %c2_87, %c0_88] : memref<2x18x18x4xbf16, #tpu.memory_space<vmem>>, vector<2x16x16x4xbf16>
    %63 = vector.shape_cast %62 : vector<2x16x16x4xbf16> to vector<512x4xbf16>
    %c8 = arith.constant 8 : index
    %c0_89 = arith.constant 0 : index
    %c0_90 = arith.constant 0 : index
    %64 = vector.load %arg2[%c8, %c0_89, %c0_90] : memref<9x4x8xbf16, #tpu.memory_space<vmem>>, vector<1x4x8xbf16>
    %65 = vector.shape_cast %64 : vector<1x4x8xbf16> to vector<4x8xbf16>
    %cst_91 = arith.constant dense<0.000000e+00> : vector<512x8xf32>
    %66 = tpu.matmul %63, %65, %cst_91 {dimension_numbers = #tpu.dot_dimension_numbers<[1], [0], [0], [1], [0, 0, 1, 1], [], []>} : vector<512x4xbf16>, vector<4x8xbf16>, vector<512x8xf32> -> vector<512x8xf32>
    %c0_92 = arith.constant 0 : index
    %c0_93 = arith.constant 0 : index
    %67 = vector.load %arg6[%c0_92, %c0_93] : memref<512x8xf32, #tpu.memory_space<vmem>>, vector<512x8xf32>
    %68 = arith.addf %67, %66 : vector<512x8xf32>
    %c0_94 = arith.constant 0 : index
    %c0_95 = arith.constant 0 : index
    %69 = vector.load %arg6[%c0_94, %c0_95] : memref<512x8xf32, #tpu.memory_space<vmem>>, vector<512x8xf32>
    tpu.vector_store %arg6[%c0_94, %c0_95], %68 {strides = array<i32>} : memref<512x8xf32, #tpu.memory_space<vmem>>, vector<512x8xf32>,
    %c0_96 = arith.constant 0 : index
    %c0_97 = arith.constant 0 : index
    %70 = vector.load %arg6[%c0_96, %c0_97] : memref<512x8xf32, #tpu.memory_space<vmem>>, vector<512x8xf32>
    %cst_98 = arith.constant dense<0.000000e+00> : vector<8xf32>
    %71 = vector.multi_reduction <add>, %70, %cst_98 [0] : vector<512x8xf32> to vector<8xf32>
    %72 = vector.shape_cast %71 : vector<8xf32> to vector<1x8xf32>
    %cst_99 = arith.constant 0.001953125 : f32
    %73 = vector.broadcast %cst_99 : f32 to vector<1x8xf32>
    %74 = arith.mulf %72, %73 : vector<1x8xf32>
    %75 = arith.mulf %70, %70 : vector<512x8xf32>
    %cst_100 = arith.constant dense<0.000000e+00> : vector<8xf32>
    %76 = vector.multi_reduction <add>, %75, %cst_100 [0] : vector<512x8xf32> to vector<8xf32>
    %77 = vector.shape_cast %76 : vector<8xf32> to vector<1x8xf32>
    %cst_101 = arith.constant 0.001953125 : f32
    %78 = vector.broadcast %cst_101 : f32 to vector<1x8xf32>
    %79 = arith.mulf %77, %78 : vector<1x8xf32>
    %80 = arith.mulf %74, %74 : vector<1x8xf32>
    %81 = arith.subf %79, %80 : vector<1x8xf32>
    %c0_102 = arith.constant 0 : index
    %c0_103 = arith.constant 0 : index
    %82 = vector.load %arg3[%c0_102, %c0_103] : memref<1x8xf32, #tpu.memory_space<vmem>>, vector<1x8xf32>
    %cst_104 = arith.constant 9.99999974E-6 : f32
    %83 = vector.broadcast %cst_104 : f32 to vector<1x8xf32>
    %84 = arith.addf %81, %83 : vector<1x8xf32>
    %85 = math.rsqrt %84 : vector<1x8xf32>
    %86 = arith.mulf %82, %85 : vector<1x8xf32>
    %87 = vector.broadcast %74 : vector<1x8xf32> to vector<512x8xf32>
    %88 = arith.subf %70, %87 : vector<512x8xf32>
    %89 = vector.broadcast %86 : vector<1x8xf32> to vector<512x8xf32>
    %90 = arith.mulf %88, %89 : vector<512x8xf32>
    %c0_105 = arith.constant 0 : index
    %c0_106 = arith.constant 0 : index
    %91 = vector.load %arg4[%c0_105, %c0_106] : memref<1x8xf32, #tpu.memory_space<vmem>>, vector<1x8xf32>
    %92 = vector.broadcast %91 : vector<1x8xf32> to vector<512x8xf32>
    %93 = arith.addf %90, %92 : vector<512x8xf32>
    %cst_107 = arith.constant 0.000000e+00 : f32
    %94 = vector.broadcast %cst_107 : f32 to vector<512x8xf32>
    %95 = arith.maximumf %93, %94 : vector<512x8xf32>
    %96 = arith.truncf %95 : vector<512x8xf32> to vector<512x8xbf16>
    %c0_108 = arith.constant 0 : index
    %c0_109 = arith.constant 0 : index
    %97 = vector.load %arg5[%c0_108, %c0_109] : memref<512x8xbf16, #tpu.memory_space<vmem>>, vector<512x8xbf16>
    tpu.vector_store %arg5[%c0_108, %c0_109], %96 {strides = array<i32>} : memref<512x8xbf16, #tpu.memory_space<vmem>>, vector<512x8xbf16>,
    return
  }
  func.func @transform_0(%arg0: i32) -> (i32, i32, i32, i32) {
    %c0_i32 = arith.constant 0 : i32
    %c0_i32_0 = arith.constant 0 : i32
    %c0_i32_1 = arith.constant 0 : i32
    %c0_i32_2 = arith.constant 0 : i32
    %c0_i32_3 = arith.constant 0 : i32
    return %c0_i32, %c0_i32_0, %c0_i32_1, %c0_i32_2 : i32, i32, i32, i32
  }
  func.func @transform_1(%arg0: i32) -> (i32, i32, i32) {
    %c0_i32 = arith.constant 0 : i32
    %c0_i32_0 = arith.constant 0 : i32
    %c0_i32_1 = arith.constant 0 : i32
    return %c0_i32, %c0_i32_0, %arg0 : i32, i32, i32
  }
  func.func @transform_2(%arg0: i32) -> (i32, i32) {
    %c0_i32 = arith.constant 0 : i32
    %c0_i32_0 = arith.constant 0 : i32
    return %c0_i32, %arg0 : i32, i32
  }
  func.func @transform_3(%arg0: i32) -> (i32, i32) {
    %c0_i32 = arith.constant 0 : i32
    %c0_i32_0 = arith.constant 0 : i32
    return %c0_i32, %arg0 : i32, i32
  }
  func.func @transform_4(%arg0: i32) -> (i32, i32) {
    %c0_i32 = arith.constant 0 : i32
    %c0_i32_0 = arith.constant 0 : i32
    return %c0_i32, %arg0 : i32, i32
  }
}

</mosaic_0001>

<llo_original>
// kernel: tpu_custom_call.1
$region0: #{tpu_custom_call.1}
  #allocation0 [shape = 'u32[]', space=smem, size = 0x4, offset = 0x4, fixed_abs, tag = 'smem constant byte address 0x4 - core index']
  #allocation1 [shape = 'u32[144,128]{1,0:T(1,128)}', space=vmem, size = 0x12000, scoped, tag = 'internal scratch']
  #allocation2 [shape = 'f32[512,8]{1,0:T(8,128)}', space=vmem, size = 0x40000, scoped, tag = 'scratch operand']
  %s0 = inlined_call_operand.hbm [shape: bf16[2,18,18,4], index: 0, kind: input, shape index: {}]
  %s1 = inlined_call_operand.hbm [shape: bf16[9,4,8], index: 1, kind: input, shape index: {}]
  %s2 = inlined_call_operand.hbm [shape: f32[1,8], index: 2, kind: input, shape index: {}]
  %s3 = inlined_call_operand.hbm [shape: f32[1,8], index: 3, kind: input, shape index: {}]
  %s4 = inlined_call_operand.hbm [shape: bf16[512,8], index: 4, kind: output, shape index: {}]
  %s5 = sld [smem:[#allocation0]]
  $region42: #{tpu_custom_call.1} parent=0
    _
  %s7 = ssub.s32 1, %s5
  %s8 = scalar_select 0, %s7, %s5
  $region1: #{tpu_custom_call.1} parent=0
    #allocation3 [shape = 'u8[221184]{0}', space=vmem, size = 0x36000, scoped, tag = 'input window, operand 0, single buffered']
    #allocation4 [shape = 's32[1]{0}', space=sflag, size = 0x4, scoped, tag = 'scoped memory for tpu_custom_call.1']
    #allocation5 [shape = 's32[1]{0}', space=sflag, size = 0x4, scoped, tag = 'scoped memory for tpu_custom_call.1']
    #allocation6 [shape = 'u8[9216]{0}', space=vmem, size = 0x2400, scoped, tag = 'input window, operand 1, single buffered']
    #allocation7 [shape = 's32[1]{0}', space=sflag, size = 0x4, scoped, tag = 'scoped memory for tpu_custom_call.1']
    #allocation8 [shape = 'u8[512]{0}', space=vmem, size = 0x400, scoped, tag = 'input window, operand 2, single buffered']
    #allocation9 [shape = 'u8[512]{0}', space=vmem, size = 0x400, scoped, tag = 'input window, operand 3, single buffered']
    #allocation10 [shape = 's32[1]{0}', space=sflag, size = 0x4, scoped, tag = 'scoped memory for tpu_custom_call.1']
    #allocation11 [shape = 'u8[131072]{0}', space=vmem, size = 0x20000, scoped, tag = 'output window, operand 0, single buffered']
    %9 = vsyncpa [#allocation4], 0
    %10 = vsyncpa [#allocation7], 0
    %11 = vsyncpa [#allocation10], 0
    %12 = vsyncpa [#allocation5], 0
    // Predicated region
    $region2: #{tpu_custom_call.1} parent=1 // pred_check
      _
    $region3: #{tpu_custom_call.1} parent=1 // pred_check_branch
      %14 = sbr.rel (0) target = $region5
    $region4: #{tpu_custom_call.1} parent=1 // pred_region
      %s16 = ssub.s32 6912, 6912
      %17 = vsyncadd [#allocation4], %s16
      %s18 = sshll.u32 [#allocation3], 4
      %s19 = int_to_ptr.vmem [resolvable:$true] %s18
      %24 = dma.hbm_to_vmem [thread:$0]  %s0, 6912, %s19, [#allocation4], 64, 64, 4
    $region5: #{tpu_custom_call.1} parent=1 // pred_fallthru
      _
    // Predicated region
    $region6: #{tpu_custom_call.1} parent=1 // pred_check
      _
    $region7: #{tpu_custom_call.1} parent=1 // pred_check_branch
      %26 = sbr.rel (0) target = $region9
    $region8: #{tpu_custom_call.1} parent=1 // pred_region
      %s28 = ssub.s32 288, 288
      %29 = vsyncadd [#allocation7], %s28
      %s30 = sshll.u32 [#allocation6], 4
      %s31 = int_to_ptr.vmem [resolvable:$true] %s30
      %36 = dma.hbm_to_vmem [thread:$0]  %s1, 288, %s31, [#allocation7], 32, 32, 2
    $region9: #{tpu_custom_call.1} parent=1 // pred_fallthru
      _
    // Predicated region
    $region10: #{tpu_custom_call.1} parent=1 // pred_check
      _
    $region11: #{tpu_custom_call.1} parent=1 // pred_check_branch
      %38 = sbr.rel (0) target = $region13
    $region12: #{tpu_custom_call.1} parent=1 // pred_region
      %s40 = ssub.s32 16, 16
      %41 = vsyncadd [#allocation7], %s40
      %s43 = sshll.u32 [#allocation8], 4
      %s44 = int_to_ptr.vmem [resolvable:$true] %s43
      %46 = dma.hbm_to_vmem [thread:$0]  %s2, 16, %s44, [#allocation7]
    $region13: #{tpu_custom_call.1} parent=1 // pred_fallthru
      _
    // Predicated region
    $region14: #{tpu_custom_call.1} parent=1 // pred_check
      _
    $region15: #{tpu_custom_call.1} parent=1 // pred_check_branch
      %48 = sbr.rel (0) target = $region17
    $region16: #{tpu_custom_call.1} parent=1 // pred_region
      %s50 = ssub.s32 16, 16
      %51 = vsyncadd [#allocation10], %s50
      %s53 = sshll.u32 [#allocation9], 4
      %s54 = int_to_ptr.vmem [resolvable:$true] %s53
      %56 = dma.hbm_to_vmem [thread:$0]  %s3, 16, %s54, [#allocation10]
    $region17: #{tpu_custom_call.1} parent=1 // pred_fallthru
      _
    // Predicated region
    $region18: #{tpu_custom_call.1} parent=1 // pred_check
      _
    $region19: #{tpu_custom_call.1} parent=1 // pred_check_branch
      %58 = sbr.rel (0) target = $region21
    $region20: #{tpu_custom_call.1} parent=1 // pred_region
      %59 = dma.done [#allocation4], 6912
    $region21: #{tpu_custom_call.1} parent=1 // pred_fallthru
      _
    // Predicated region
    $region22: #{tpu_custom_call.1} parent=1 // pred_check
      _
    $region23: #{tpu_custom_call.1} parent=1 // pred_check_branch
      %61 = sbr.rel (0) target = $region25
    $region24: #{tpu_custom_call.1} parent=1 // pred_region
      %62 = dma.done [#allocation7], 288
    $region25: #{tpu_custom_call.1} parent=1 // pred_fallthru
      _
    // Predicated region
    $region26: #{tpu_custom_call.1} parent=1 // pred_check
      _
    $region27: #{tpu_custom_call.1} parent=1 // pred_check_branch
      %64 = sbr.rel (0) target = $region29
    $region28: #{tpu_custom_call.1} parent=1 // pred_region
      %65 = dma.done [#allocation7], 16
    $region29: #{tpu_custom_call.1} parent=1 // pred_fallthru
      _
    // Predicated region
    $region30: #{tpu_custom_call.1} parent=1 // pred_check
      _
    $region31: #{tpu_custom_call.1} parent=1 // pred_check_branch
      %67 = sbr.rel (0) target = $region33
    $region32: #{tpu_custom_call.1} parent=1 // pred_region
      %68 = dma.done [#allocation10], 16
    $region33: #{tpu_custom_call.1} parent=1 // pred_fallthru
      _
    %v70 = vld [vmem:[#allocation3] sm:$0xf]
    %v71 = vld [vmem:[#allocation3 + $0x4] sm:$0xf]
    %v72 = vld [vmem:[#allocation3 + $0xc] sm:$0xf]
    %v73 = vld [vmem:[#allocation3 + $0x10] sm:$0xf]
    %v74 = vld [vmem:[#allocation3 + $0x18] sm:$0xf]
    %v75 = vld [vmem:[#allocation3 + $0x1c] sm:$0xf]
    %v76 = vld [vmem:[#allocation3 + $0x24] sm:$0xf]
    %v77 = vld [vmem:[#allocation3 + $0x28] sm:$0xf]
    %v78 = vld [vmem:[#allocation3 + $0x30] sm:$0xf]
    %v79 = vld [vmem:[#allocation3 + $0x34] sm:$0xf]
    %v80 = vld [vmem:[#allocation3 + $0x3c] sm:$0xf]
    %v81 = vld [vmem:[#allocation3 + $0x40] sm:$0xf]
    %v82 = vld [vmem:[#allocation3 + $0x48] sm:$0xf]
    %v83 = vld [vmem:[#allocation3 + $0x4c] sm:$0xf]
    %v84 = vld [vmem:[#allocation3 + $0x54] sm:$0xf]
    %v85 = vld [vmem:[#allocation3 + $0x58] sm:$0xf]
    %v86 = vld [vmem:[#allocation3 + $0x60] sm:$0xf]
    %v87 = vld [vmem:[#allocation3 + $0x64] sm:$0xf]
    %v88 = vld [vmem:[#allocation3 + $0x6c] sm:$0xf]
    %v89 = vld [vmem:[#allocation3 + $0x70] sm:$0xf]
    %v90 = vld [vmem:[#allocation3 + $0x78] sm:$0xf]
    %v91 = vld [vmem:[#allocation3 + $0x7c] sm:$0xf]
    %v92 = vld [vmem:[#allocation3 + $0x84] sm:$0xf]
    %v93 = vld [vmem:[#allocation3 + $0x88] sm:$0xf]
    %v94 = vld [vmem:[#allocation3 + $0x90] sm:$0xf]
    %v95 = vld [vmem:[#allocation3 + $0x94] sm:$0xf]
    %v96 = vld [vmem:[#allocation3 + $0x9c] sm:$0xf]
    %v97 = vld [vmem:[#allocation3 + $0xa0] sm:$0xf]
    %v98 = vld [vmem:[#allocation3 + $0xa8] sm:$0xf]
    %v99 = vld [vmem:[#allocation3 + $0xac] sm:$0xf]
    %v100 = vld [vmem:[#allocation3 + $0xb4] sm:$0xf]
    %v101 = vld [vmem:[#allocation3 + $0xb8] sm:$0xf]
    %v102 = vld [vmem:[#allocation3 + $0xd8] sm:$0xf]
    %v103 = vld [vmem:[#allocation3 + $0xdc] sm:$0xf]
    %v104 = vld [vmem:[#allocation3 + $0xe4] sm:$0xf]
    %v105 = vld [vmem:[#allocation3 + $0xe8] sm:$0xf]
    %v106 = vld [vmem:[#allocation3 + $0xf0] sm:$0xf]
    %v107 = vld [vmem:[#allocation3 + $0xf4] sm:$0xf]
    %v108 = vld [vmem:[#allocation3 + $0xfc] sm:$0xf]
    %v109 = vld [vmem:[#allocation3 + $0x100] sm:$0xf]
    %v110 = vld [vmem:[#allocation3 + $0x108] sm:$0xf]
    %v111 = vld [vmem:[#allocation3 + $0x10c] sm:$0xf]
    %v112 = vld [vmem:[#allocation3 + $0x114] sm:$0xf]
    %v113 = vld [vmem:[#allocation3 + $0x118] sm:$0xf]
    %v114 = vld [vmem:[#allocation3 + $0x120] sm:$0xf]
    %v115 = vld [vmem:[#allocation3 + $0x124] sm:$0xf]
    %v116 = vld [vmem:[#allocation3 + $0x12c] sm:$0xf]
    %v117 = vld [vmem:[#allocation3 + $0x130] sm:$0xf]
    %v118 = vld [vmem:[#allocation3 + $0x138] sm:$0xf]
    %v119 = vld [vmem:[#allocation3 + $0x13c] sm:$0xf]
    %v120 = vld [vmem:[#allocation3 + $0x144] sm:$0xf]
    %v121 = vld [vmem:[#allocation3 + $0x148] sm:$0xf]
    %v122 = vld [vmem:[#allocation3 + $0x150] sm:$0xf]
    %v123 = vld [vmem:[#allocation3 + $0x154] sm:$0xf]
    %v124 = vld [vmem:[#allocation3 + $0x15c] sm:$0xf]
    %v125 = vld [vmem:[#allocation3 + $0x160] sm:$0xf]
    %v126 = vld [vmem:[#allocation3 + $0x168] sm:$0xf]
    %v127 = vld [vmem:[#allocation3 + $0x16c] sm:$0xf]
    %v128 = vld [vmem:[#allocation3 + $0x174] sm:$0xf]
    %v129 = vld [vmem:[#allocation3 + $0x178] sm:$0xf]
    %v130 = vld [vmem:[#allocation3 + $0x180] sm:$0xf]
    %v131 = vld [vmem:[#allocation3 + $0x184] sm:$0xf]
    %v132 = vld [vmem:[#allocation3 + $0x18c] sm:$0xf]
    %v133 = vld [vmem:[#allocation3 + $0x190] sm:$0xf]
    %v134 = vld [vmem:[#allocation6] sm:$0x3]
    %v199 = vunpack.c.l.b16 %v70
    %v200 = vunpack.c.l.b16 %v71
    %v201 = vunpack.c.l.b16 %v72
    %v202 = vunpack.c.l.b16 %v73
    %v203 = vunpack.c.l.b16 %v74
    %v204 = vunpack.c.l.b16 %v75
    %v205 = vunpack.c.l.b16 %v76
    %v206 = vunpack.c.l.b16 %v77
    %v207 = vunpack.c.l.b16 %v78
    %v208 = vunpack.c.l.b16 %v79
    %v209 = vunpack.c.l.b16 %v80
    %v210 = vunpack.c.l.b16 %v81
    %v211 = vunpack.c.l.b16 %v82
    %v212 = vunpack.c.l.b16 %v83
    %v213 = vunpack.c.l.b16 %v84
    %v214 = vunpack.c.l.b16 %v85
    %v215 = vunpack.c.l.b16 %v86
    %v216 = vunpack.c.l.b16 %v87
    %v217 = vunpack.c.l.b16 %v88
    %v218 = vunpack.c.l.b16 %v89
    %v219 = vunpack.c.l.b16 %v90
    %v220 = vunpack.c.l.b16 %v91
    %v221 = vunpack.c.l.b16 %v92
    %v222 = vunpack.c.l.b16 %v93
    %v223 = vunpack.c.l.b16 %v94
    %v224 = vunpack.c.l.b16 %v95
    %v225 = vunpack.c.l.b16 %v96
    %v226 = vunpack.c.l.b16 %v97
    %v227 = vunpack.c.l.b16 %v98
    %v228 = vunpack.c.l.b16 %v99
    %v229 = vunpack.c.l.b16 %v100
    %v230 = vunpack.c.l.b16 %v101
    %v231 = vunpack.c.l.b16 %v102
    %v232 = vunpack.c.l.b16 %v103
    %v233 = vunpack.c.l.b16 %v104
    %v234 = vunpack.c.l.b16 %v105
    %v235 = vunpack.c.l.b16 %v106
    %v236 = vunpack.c.l.b16 %v107
    %v237 = vunpack.c.l.b16 %v108
    %v238 = vunpack.c.l.b16 %v109
    %v239 = vunpack.c.l.b16 %v110
    %v240 = vunpack.c.l.b16 %v111
    %v241 = vunpack.c.l.b16 %v112
    %v242 = vunpack.c.l.b16 %v113
    %v243 = vunpack.c.l.b16 %v114
    %v244 = vunpack.c.l.b16 %v115
    %v245 = vunpack.c.l.b16 %v116
    %v246 = vunpack.c.l.b16 %v117
    %v247 = vunpack.c.l.b16 %v118
    %v248 = vunpack.c.l.b16 %v119
    %v249 = vunpack.c.l.b16 %v120
    %v250 = vunpack.c.l.b16 %v121
    %v251 = vunpack.c.l.b16 %v122
    %v252 = vunpack.c.l.b16 %v123
    %v253 = vunpack.c.l.b16 %v124
    %v254 = vunpack.c.l.b16 %v125
    %v255 = vunpack.c.l.b16 %v126
    %v256 = vunpack.c.l.b16 %v127
    %v257 = vunpack.c.l.b16 %v128
    %v258 = vunpack.c.l.b16 %v129
    %v259 = vunpack.c.l.b16 %v130
    %v260 = vunpack.c.l.b16 %v131
    %v261 = vunpack.c.l.b16 %v132
    %v262 = vunpack.c.l.b16 %v133
    %v263 = vpack.c.b16 %v200, %v199
    %v264 = vpack.c.b16 %v202, %v201
    %v265 = vpack.c.b16 %v204, %v203
    %v266 = vpack.c.b16 %v206, %v205
    %v267 = vpack.c.b16 %v208, %v207
    %v268 = vpack.c.b16 %v210, %v209
    %v269 = vpack.c.b16 %v212, %v211
    %v270 = vpack.c.b16 %v214, %v213
    %v271 = vpack.c.b16 %v216, %v215
    %v272 = vpack.c.b16 %v218, %v217
    %v273 = vpack.c.b16 %v220, %v219
    %v274 = vpack.c.b16 %v222, %v221
    %v275 = vpack.c.b16 %v224, %v223
    %v276 = vpack.c.b16 %v226, %v225
    %v277 = vpack.c.b16 %v228, %v227
    %v278 = vpack.c.b16 %v230, %v229
    %v279 = vpack.c.b16 %v232, %v231
    %v280 = vpack.c.b16 %v234, %v233
    %v281 = vpack.c.b16 %v236, %v235
    %v282 = vpack.c.b16 %v238, %v237
    %v283 = vpack.c.b16 %v240, %v239
    %v284 = vpack.c.b16 %v242, %v241
    %v285 = vpack.c.b16 %v244, %v243
    %v286 = vpack.c.b16 %v246, %v245
    %v287 = vpack.c.b16 %v248, %v247
    %v288 = vpack.c.b16 %v250, %v249
    %v289 = vpack.c.b16 %v252, %v251
    %v290 = vpack.c.b16 %v254, %v253
    %v291 = vpack.c.b16 %v256, %v255
    %v292 = vpack.c.b16 %v258, %v257
    %v293 = vpack.c.b16 %v260, %v259
    %v294 = vpack.c.b16 %v262, %v261
    %vm295 = vcmask 31744
    %v297 = vsel %vm295, %v263, 0
    %v300 = vsel %vm295, %v264, 0
    %v303 = vsel %vm295, %v265, 0
    %v306 = vsel %vm295, %v266, 0
    %v309 = vsel %vm295, %v267, 0
    %v312 = vsel %vm295, %v268, 0
    %v315 = vsel %vm295, %v269, 0
    %v318 = vsel %vm295, %v270, 0
    %v321 = vsel %vm295, %v271, 0
    %v324 = vsel %vm295, %v272, 0
    %v327 = vsel %vm295, %v273, 0
    %v330 = vsel %vm295, %v274, 0
    %v333 = vsel %vm295, %v275, 0
    %v336 = vsel %vm295, %v276, 0
    %v339 = vsel %vm295, %v277, 0
    %v342 = vsel %vm295, %v278, 0
    %v345 = vsel %vm295, %v279, 0
    %v348 = vsel %vm295, %v280, 0
    %v351 = vsel %vm295, %v281, 0
    %v354 = vsel %vm295, %v282, 0
    %v357 = vsel %vm295, %v283, 0
    %v360 = vsel %vm295, %v284, 0
    %v363 = vsel %vm295, %v285, 0
    %v366 = vsel %vm295, %v286, 0
    %v369 = vsel %vm295, %v287, 0
    %v372 = vsel %vm295, %v288, 0
    %v375 = vsel %vm295, %v289, 0
    %v378 = vsel %vm295, %v290, 0
    %v381 = vsel %vm295, %v291, 0
    %v384 = vsel %vm295, %v292, 0
    %v387 = vsel %vm295, %v293, 0
    %v390 = vsel %vm295, %v294, 0
    %vm392 = vcmask 1041408
    %v394 = vsel %vm392, %v134, 0
    %396 = vmatprep.subr.bf16.mxu0 0
    %397 = vmatpush1.bf16.msra.mxu0 %v394
    %398 = vmatprep.subr.bf16.mxu0 0
    %399 = vmatpush1.bf16.msra.mxu0 0
    %400 = vmatprep.subr.bf16.mxu0 0
    %401 = vmatpush1.bf16.msra.mxu0 0
    %402 = vmatprep.subr.bf16.mxu0 0
    %403 = vmatpush1.bf16.msra.mxu0 0
    %404 = vmatprep.subr.bf16.mxu0 0
    %405 = vmatpush1.bf16.msra.mxu0 0
    %406 = vmatprep.subr.bf16.mxu0 0
    %407 = vmatpush1.bf16.msra.mxu0 0
    %408 = vmatprep.subr.bf16.mxu0 0
    %409 = vmatpush1.bf16.msra.mxu0 0
    %410 = vmatprep.subr.bf16.mxu0 0
    %411 = vmatpush1.bf16.msra.mxu0 0
    %412 = vmatprep.subr.bf16.mxu0 0
    %413 = vmatpush1.bf16.msra.mxu0 0
    %414 = vmatprep.subr.bf16.mxu0 0
    %415 = vmatpush1.bf16.msra.mxu0 0
    %416 = vmatprep.subr.bf16.mxu0 0
    %417 = vmatpush1.bf16.msra.mxu0 0
    %418 = vmatprep.subr.bf16.mxu0 0
    %419 = vmatpush1.bf16.msra.mxu0 0
    %420 = vmatprep.subr.bf16.mxu0 0
    %421 = vmatpush1.bf16.msra.mxu0 0
    %422 = vmatprep.subr.bf16.mxu0 0
    %423 = vmatpush1.bf16.msra.mxu0 0
    %424 = vmatprep.subr.bf16.mxu0 0
    %425 = vmatpush1.bf16.msra.mxu0 0
    %426 = vmatprep.subr.bf16.mxu0 0
    %427 = vmatpush1.bf16.msra.mxu0 0
    %428 = vmatprep.mubr.bf16.mxu0 0
    %429 = vmatmul.mubr.bf16.gmra.mrb[0].mxu0 %v297
    %v430 = vpop.f32.mrb[0].mxu0
    %v431 = vadd.f32 0.0, %v430
    %v432 = vpop.f32.mrb[0].mxu0
    %v433 = vpop.f32.mrb[0].mxu0
    %v434 = vadd.f32 0.0, %v433
    %v435 = vpop.f32.mrb[0].mxu0
    %436 = vmatprep.mubr.bf16.mxu0 0
    %437 = vmatmul.mubr.bf16.gmra.mrb[0].mxu0 %v300
    %v438 = vpop.f32.mrb[0].mxu0
    %v439 = vadd.f32 0.0, %v438
    %v440 = vpop.f32.mrb[0].mxu0
    %v441 = vpop.f32.mrb[0].mxu0
    %v442 = vadd.f32 0.0, %v441
    %v443 = vpop.f32.mrb[0].mxu0
    %444 = vmatprep.mubr.bf16.mxu0 0
    %445 = vmatmul.mubr.bf16.gmra.mrb[0].mxu0 %v303
    %v446 = vpop.f32.mrb[0].mxu0
    %v447 = vadd.f32 0.0, %v446
    %v448 = vpop.f32.mrb[0].mxu0
    %v449 = vpop.f32.mrb[0].mxu0
    %v450 = vadd.f32 0.0, %v449
    %v451 = vpop.f32.mrb[0].mxu0
    %452 = vmatprep.mubr.bf16.mxu0 0
    %453 = vmatmul.mubr.bf16.gmra.mrb[0].mxu0 %v306
    %v454 = vpop.f32.mrb[0].mxu0
    %v455 = vadd.f32 0.0, %v454
    %v456 = vpop.f32.mrb[0].mxu0
    %v457 = vpop.f32.mrb[0].mxu0
    %v458 = vadd.f32 0.0, %v457
    %v459 = vpop.f32.mrb[0].mxu0
    %460 = vmatprep.mubr.bf16.mxu0 0
    %461 = vmatmul.mubr.bf16.gmra.mrb[0].mxu0 %v309
    %v462 = vpop.f32.mrb[0].mxu0
    %v463 = vadd.f32 0.0, %v462
    %v464 = vpop.f32.mrb[0].mxu0
    %v465 = vpop.f32.mrb[0].mxu0
    %v466 = vadd.f32 0.0, %v465
    %v467 = vpop.f32.mrb[0].mxu0
    %468 = vmatprep.mubr.bf16.mxu0 0
    %469 = vmatmul.mubr.bf16.gmra.mrb[0].mxu0 %v312
    %v470 = vpop.f32.mrb[0].mxu0
    %v471 = vadd.f32 0.0, %v470
    %v472 = vpop.f32.mrb[0].mxu0
    %v473 = vpop.f32.mrb[0].mxu0
    %v474 = vadd.f32 0.0, %v473
    %v475 = vpop.f32.mrb[0].mxu0
    %476 = vmatprep.mubr.bf16.mxu0 0
    %477 = vmatmul.mubr.bf16.gmra.mrb[0].mxu0 %v315
    %v478 = vpop.f32.mrb[0].mxu0
    %v479 = vadd.f32 0.0, %v478
    %v480 = vpop.f32.mrb[0].mxu0
    %v481 = vpop.f32.mrb[0].mxu0
    %v482 = vadd.f32 0.0, %v481
    %v483 = vpop.f32.mrb[0].mxu0
    %484 = vmatprep.mubr.bf16.mxu0 0
    %485 = vmatmul.mubr.bf16.gmra.mrb[0].mxu0 %v318
    %v486 = vpop.f32.mrb[0].mxu0
    %v487 = vadd.f32 0.0, %v486
    %v488 = vpop.f32.mrb[0].mxu0
    %v489 = vpop.f32.mrb[0].mxu0
    %v490 = vadd.f32 0.0, %v489
    %v491 = vpop.f32.mrb[0].mxu0
    %492 = vmatprep.mubr.bf16.mxu0 0
    %493 = vmatmul.mubr.bf16.gmra.mrb[0].mxu0 %v321
    %v494 = vpop.f32.mrb[0].mxu0
    %v495 = vadd.f32 0.0, %v494
    %v496 = vpop.f32.mrb[0].mxu0
    %v497 = vpop.f32.mrb[0].mxu0
    %v498 = vadd.f32 0.0, %v497
    %v499 = vpop.f32.mrb[0].mxu0
    %500 = vmatprep.mubr.bf16.mxu0 0
    %501 = vmatmul.mubr.bf16.gmra.mrb[0].mxu0 %v324
    %v502 = vpop.f32.mrb[0].mxu0
    %v503 = vadd.f32 0.0, %v502
    %v504 = vpop.f32.mrb[0].mxu0
    %v505 = vpop.f32.mrb[0].mxu0
    %v506 = vadd.f32 0.0, %v505
    %v507 = vpop.f32.mrb[0].mxu0
    %508 = vmatprep.mubr.bf16.mxu0 0
    %509 = vmatmul.mubr.bf16.gmra.mrb[0].mxu0 %v327
    %v510 = vpop.f32.mrb[0].mxu0
    %v511 = vadd.f32 0.0, %v510
    %v512 = vpop.f32.mrb[0].mxu0
    %v513 = vpop.f32.mrb[0].mxu0
    %v514 = vadd.f32 0.0, %v513
    %v515 = vpop.f32.mrb[0].mxu0
    %516 = vmatprep.mubr.bf16.mxu0 0
    %517 = vmatmul.mubr.bf16.gmra.mrb[0].mxu0 %v330
    %v518 = vpop.f32.mrb[0].mxu0
    %v519 = vadd.f32 0.0, %v518
    %v520 = vpop.f32.mrb[0].mxu0
    %v521 = vpop.f32.mrb[0].mxu0
    %v522 = vadd.f32 0.0, %v521
    %v523 = vpop.f32.mrb[0].mxu0
    %524 = vmatprep.mubr.bf16.mxu0 0
    %525 = vmatmul.mubr.bf16.gmra.mrb[0].mxu0 %v333
    %v526 = vpop.f32.mrb[0].mxu0
    %v527 = vadd.f32 0.0, %v526
    %v528 = vpop.f32.mrb[0].mxu0
    %v529 = vpop.f32.mrb[0].mxu0
    %v530 = vadd.f32 0.0, %v529
    %v531 = vpop.f32.mrb[0].mxu0
    %532 = vmatprep.mubr.bf16.mxu0 0
    %533 = vmatmul.mubr.bf16.gmra.mrb[0].mxu0 %v336
    %v534 = vpop.f32.mrb[0].mxu0
    %v535 = vadd.f32 0.0, %v534
    %v536 = vpop.f32.mrb[0].mxu0
    %v537 = vpop.f32.mrb[0].mxu0
    %v538 = vadd.f32 0.0, %v537
    %v539 = vpop.f32.mrb[0].mxu0
    %540 = vmatprep.mubr.bf16.mxu0 0
    %541 = vmatmul.mubr.bf16.gmra.mrb[0].mxu0 %v339
    %v542 = vpop.f32.mrb[0].mxu0
    %v543 = vadd.f32 0.0, %v542
    %v544 = vpop.f32.mrb[0].mxu0
    %v545 = vpop.f32.mrb[0].mxu0
    %v546 = vadd.f32 0.0, %v545
    %v547 = vpop.f32.mrb[0].mxu0
    %548 = vmatprep.mubr.bf16.mxu0 0
    %549 = vmatmul.mubr.bf16.gmra.mrb[0].mxu0 %v342
    %v550 = vpop.f32.mrb[0].mxu0
    %v551 = vadd.f32 0.0, %v550
    %v552 = vpop.f32.mrb[0].mxu0
    %v553 = vpop.f32.mrb[0].mxu0
    %v554 = vadd.f32 0.0, %v553
    %v555 = vpop.f32.mrb[0].mxu0
    %556 = vmatprep.mubr.bf16.mxu0 0
    %557 = vmatmul.mubr.bf16.gmra.mrb[0].mxu0 %v345
    %v558 = vpop.f32.mrb[0].mxu0
    %v559 = vadd.f32 0.0, %v558
    %v560 = vpop.f32.mrb[0].mxu0
    %v561 = vpop.f32.mrb[0].mxu0
    %v562 = vadd.f32 0.0, %v561
    %v563 = vpop.f32.mrb[0].mxu0
    %564 = vmatprep.mubr.bf16.mxu0 0
    %565 = vmatmul.mubr.bf16.gmra.mrb[0].mxu0 %v348
    %v566 = vpop.f32.mrb[0].mxu0
    %v567 = vadd.f32 0.0, %v566
    %v568 = vpop.f32.mrb[0].mxu0
    %v569 = vpop.f32.mrb[0].mxu0
    %v570 = vadd.f32 0.0, %v569
    %v571 = vpop.f32.mrb[0].mxu0
    %572 = vmatprep.mubr.bf16.mxu0 0
    %573 = vmatmul.mubr.bf16.gmra.mrb[0].mxu0 %v351
    %v574 = vpop.f32.mrb[0].mxu0
    %v575 = vadd.f32 0.0, %v574
    %v576 = vpop.f32.mrb[0].mxu0
    %v577 = vpop.f32.mrb[0].mxu0
    %v578 = vadd.f32 0.0, %v577
    %v579 = vpop.f32.mrb[0].mxu0
    %580 = vmatprep.mubr.bf16.mxu0 0
    %581 = vmatmul.mubr.bf16.gmra.mrb[0].mxu0 %v354
    %v582 = vpop.f32.mrb[0].mxu0
    %v583 = vadd.f32 0.0, %v582
    %v584 = vpop.f32.mrb[0].mxu0
    %v585 = vpop.f32.mrb[0].mxu0
    %v586 = vadd.f32 0.0, %v585
    %v587 = vpop.f32.mrb[0].mxu0
    %588 = vmatprep.mubr.bf16.mxu0 0
    %589 = vmatmul.mubr.bf16.gmra.mrb[0].mxu0 %v357
    %v590 = vpop.f32.mrb[0].mxu0
    %v591 = vadd.f32 0.0, %v590
    %v592 = vpop.f32.mrb[0].mxu0
    %v593 = vpop.f32.mrb[0].mxu0
    %v594 = vadd.f32 0.0, %v593
    %v595 = vpop.f32.mrb[0].mxu0
    %596 = vmatprep.mubr.bf16.mxu0 0
    %597 = vmatmul.mubr.bf16.gmra.mrb[0].mxu0 %v360
    %v598 = vpop.f32.mrb[0].mxu0
    %v599 = vadd.f32 0.0, %v598
    %v600 = vpop.f32.mrb[0].mxu0
    %v601 = vpop.f32.mrb[0].mxu0
    %v602 = vadd.f32 0.0, %v601
    %v603 = vpop.f32.mrb[0].mxu0
    %604 = vmatprep.mubr.bf16.mxu0 0
    %605 = vmatmul.mubr.bf16.gmra.mrb[0].mxu0 %v363
    %v606 = vpop.f32.mrb[0].mxu0
    %v607 = vadd.f32 0.0, %v606
    %v608 = vpop.f32.mrb[0].mxu0
    %v609 = vpop.f32.mrb[0].mxu0
    %v610 = vadd.f32 0.0, %v609
    %v611 = vpop.f32.mrb[0].mxu0
    %612 = vmatprep.mubr.bf16.mxu0 0
    %613 = vmatmul.mubr.bf16.gmra.mrb[0].mxu0 %v366
    %v614 = vpop.f32.mrb[0].mxu0
    %v615 = vadd.f32 0.0, %v614
    %v616 = vpop.f32.mrb[0].mxu0
    %v617 = vpop.f32.mrb[0].mxu0
    %v618 = vadd.f32 0.0, %v617
    %v619 = vpop.f32.mrb[0].mxu0
    %620 = vmatprep.mubr.bf16.mxu0 0
    %621 = vmatmul.mubr.bf16.gmra.mrb[0].mxu0 %v369
    %v622 = vpop.f32.mrb[0].mxu0
    %v623 = vadd.f32 0.0, %v622
    %v624 = vpop.f32.mrb[0].mxu0
    %v625 = vpop.f32.mrb[0].mxu0
    %v626 = vadd.f32 0.0, %v625
    %v627 = vpop.f32.mrb[0].mxu0
    %628 = vmatprep.mubr.bf16.mxu0 0
    %629 = vmatmul.mubr.bf16.gmra.mrb[0].mxu0 %v372
    %v630 = vpop.f32.mrb[0].mxu0
    %v631 = vadd.f32 0.0, %v630
    %v632 = vpop.f32.mrb[0].mxu0
    %v633 = vpop.f32.mrb[0].mxu0
    %v634 = vadd.f32 0.0, %v633
    %v635 = vpop.f32.mrb[0].mxu0
    %636 = vmatprep.mubr.bf16.mxu0 0
    %637 = vmatmul.mubr.bf16.gmra.mrb[0].mxu0 %v375
    %v638 = vpop.f32.mrb[0].mxu0
    %v639 = vadd.f32 0.0, %v638
    %v640 = vpop.f32.mrb[0].mxu0
    %v641 = vpop.f32.mrb[0].mxu0
    %v642 = vadd.f32 0.0, %v641
    %v643 = vpop.f32.mrb[0].mxu0
    %644 = vmatprep.mubr.bf16.mxu0 0
    %645 = vmatmul.mubr.bf16.gmra.mrb[0].mxu0 %v378
    %v646 = vpop.f32.mrb[0].mxu0
    %v647 = vadd.f32 0.0, %v646
    %v648 = vpop.f32.mrb[0].mxu0
    %v649 = vpop.f32.mrb[0].mxu0
    %v650 = vadd.f32 0.0, %v649
    %v651 = vpop.f32.mrb[0].mxu0
    %652 = vmatprep.mubr.bf16.mxu0 0
    %653 = vmatmul.mubr.bf16.gmra.mrb[0].mxu0 %v381
    %v654 = vpop.f32.mrb[0].mxu0
    %v655 = vadd.f32 0.0, %v654
    %v656 = vpop.f32.mrb[0].mxu0
    %v657 = vpop.f32.mrb[0].mxu0
    %v658 = vadd.f32 0.0, %v657
    %v659 = vpop.f32.mrb[0].mxu0
    %660 = vmatprep.mubr.bf16.mxu0 0
    %661 = vmatmul.mubr.bf16.gmra.mrb[0].mxu0 %v384
    %v662 = vpop.f32.mrb[0].mxu0
    %v663 = vadd.f32 0.0, %v662
    %v664 = vpop.f32.mrb[0].mxu0
    %v665 = vpop.f32.mrb[0].mxu0
    %v666 = vadd.f32 0.0, %v665
    %v667 = vpop.f32.mrb[0].mxu0
    %668 = vmatprep.mubr.bf16.mxu0 0
    %669 = vmatmul.mubr.bf16.gmra.mrb[0].mxu0 %v387
    %v670 = vpop.f32.mrb[0].mxu0
    %v671 = vadd.f32 0.0, %v670
    %v672 = vpop.f32.mrb[0].mxu0
    %v673 = vpop.f32.mrb[0].mxu0
    %v674 = vadd.f32 0.0, %v673
    %v675 = vpop.f32.mrb[0].mxu0
    %676 = vmatprep.mubr.bf16.mxu0 0
    %677 = vmatmul.mubr.bf16.gmra.mrb[0].mxu0 %v390
    %v678 = vpop.f32.mrb[0].mxu0
    %v679 = vadd.f32 0.0, %v678
    %v680 = vpop.f32.mrb[0].mxu0
    %v681 = vpop.f32.mrb[0].mxu0
    %v682 = vadd.f32 0.0, %v681
    %v683 = vpop.f32.mrb[0].mxu0
    %684 = vdwg.mxu0
    %vm685 = vcmask 64512
    %686 = vst.msk [vmem:[#allocation2] sm:$0xff] %vm685, %v431
    %687 = vst.msk [vmem:[#allocation2 + $0x8] sm:$0xff] %vm685, %v434
    %688 = vst.msk [vmem:[#allocation2 + $0x10] sm:$0xff] %vm685, %v439
    %689 = vst.msk [vmem:[#allocation2 + $0x18] sm:$0xff] %vm685, %v442
    %690 = vst.msk [vmem:[#allocation2 + $0x20] sm:$0xff] %vm685, %v447
    %691 = vst.msk [vmem:[#allocation2 + $0x28] sm:$0xff] %vm685, %v450
    %692 = vst.msk [vmem:[#allocation2 + $0x30] sm:$0xff] %vm685, %v455
    %693 = vst.msk [vmem:[#allocation2 + $0x38] sm:$0xff] %vm685, %v458
    %694 = vst.msk [vmem:[#allocation2 + $0x40] sm:$0xff] %vm685, %v463
    %695 = vst.msk [vmem:[#allocation2 + $0x48] sm:$0xff] %vm685, %v466
    %696 = vst.msk [vmem:[#allocation2 + $0x50] sm:$0xff] %vm685, %v471
    %697 = vst.msk [vmem:[#allocation2 + $0x58] sm:$0xff] %vm685, %v474
    %698 = vst.msk [vmem:[#allocation2 + $0x60] sm:$0xff] %vm685, %v479
    %699 = vst.msk [vmem:[#allocation2 + $0x68] sm:$0xff] %vm685, %v482
    %700 = vst.msk [vmem:[#allocation2 + $0x70] sm:$0xff] %vm685, %v487
    %701 = vst.msk [vmem:[#allocation2 + $0x78] sm:$0xff] %vm685, %v490
    %702 = vst.msk [vmem:[#allocation2 + $0x80] sm:$0xff] %vm685, %v495
    %703 = vst.msk [vmem:[#allocation2 + $0x88] sm:$0xff] %vm685, %v498
    %704 = vst.msk [vmem:[#allocation2 + $0x90] sm:$0xff] %vm685, %v503
    %705 = vst.msk [vmem:[#allocation2 + $0x98] sm:$0xff] %vm685, %v506
    %706 = vst.msk [vmem:[#allocation2 + $0xa0] sm:$0xff] %vm685, %v511
    %707 = vst.msk [vmem:[#allocation2 + $0xa8] sm:$0xff] %vm685, %v514
    %708 = vst.msk [vmem:[#allocation2 + $0xb0] sm:$0xff] %vm685, %v519
    %709 = vst.msk [vmem:[#allocation2 + $0xb8] sm:$0xff] %vm685, %v522
    %710 = vst.msk [vmem:[#allocation2 + $0xc0] sm:$0xff] %vm685, %v527
    %711 = vst.msk [vmem:[#allocation2 + $0xc8] sm:$0xff] %vm685, %v530
    %712 = vst.msk [vmem:[#allocation2 + $0xd0] sm:$0xff] %vm685, %v535
    %713 = vst.msk [vmem:[#allocation2 + $0xd8] sm:$0xff] %vm685, %v538
    %714 = vst.msk [vmem:[#allocation2 + $0xe0] sm:$0xff] %vm685, %v543
    %715 = vst.msk [vmem:[#allocation2 + $0xe8] sm:$0xff] %vm685, %v546
    %716 = vst.msk [vmem:[#allocation2 + $0xf0] sm:$0xff] %vm685, %v551
    %717 = vst.msk [vmem:[#allocation2 + $0xf8] sm:$0xff] %vm685, %v554
    %718 = vst.msk [vmem:[#allocation2 + $0x100] sm:$0xff] %vm685, %v559
    %719 = vst.msk [vmem:[#allocation2 + $0x108] sm:$0xff] %vm685, %v562
    %720 = vst.msk [vmem:[#allocation2 + $0x110] sm:$0xff] %vm685, %v567
    %721 = vst.msk [vmem:[#allocation2 + $0x118] sm:$0xff] %vm685, %v570
    %722 = vst.msk [vmem:[#allocation2 + $0x120] sm:$0xff] %vm685, %v575
    %723 = vst.msk [vmem:[#allocation2 + $0x128] sm:$0xff] %vm685, %v578
    %724 = vst.msk [vmem:[#allocation2 + $0x130] sm:$0xff] %vm685, %v583
    %725 = vst.msk [vmem:[#allocation2 + $0x138] sm:$0xff] %vm685, %v586
    %726 = vst.msk [vmem:[#allocation2 + $0x140] sm:$0xff] %vm685, %v591
    %727 = vst.msk [vmem:[#allocation2 + $0x148] sm:$0xff] %vm685, %v594
    %728 = vst.msk [vmem:[#allocation2 + $0x150] sm:$0xff] %vm685, %v599
    %729 = vst.msk [vmem:[#allocation2 + $0x158] sm:$0xff] %vm685, %v602
    %730 = vst.msk [vmem:[#allocation2 + $0x160] sm:$0xff] %vm685, %v607
    %731 = vst.msk [vmem:[#allocation2 + $0x168] sm:$0xff] %vm685, %v610
    %732 = vst.msk [vmem:[#allocation2 + $0x170] sm:$0xff] %vm685, %v615
    %733 = vst.msk [vmem:[#allocation2 + $0x178] sm:$0xff] %vm685, %v618
    %734 = vst.msk [vmem:[#allocation2 + $0x180] sm:$0xff] %vm685, %v623
    %735 = vst.msk [vmem:[#allocation2 + $0x188] sm:$0xff] %vm685, %v626
    %736 = vst.msk [vmem:[#allocation2 + $0x190] sm:$0xff] %vm685, %v631
    %737 = vst.msk [vmem:[#allocation2 + $0x198] sm:$0xff] %vm685, %v634
    %738 = vst.msk [vmem:[#allocation2 + $0x1a0] sm:$0xff] %vm685, %v639
    %739 = vst.msk [vmem:[#allocation2 + $0x1a8] sm:$0xff] %vm685, %v642
    %740 = vst.msk [vmem:[#allocation2 + $0x1b0] sm:$0xff] %vm685, %v647
    %741 = vst.msk [vmem:[#allocation2 + $0x1b8] sm:$0xff] %vm685, %v650
    %742 = vst.msk [vmem:[#allocation2 + $0x1c0] sm:$0xff] %vm685, %v655
    %743 = vst.msk [vmem:[#allocation2 + $0x1c8] sm:$0xff] %vm685, %v658
    %744 = vst.msk [vmem:[#allocation2 + $0x1d0] sm:$0xff] %vm685, %v663
    %745 = vst.msk [vmem:[#allocation2 + $0x1d8] sm:$0xff] %vm685, %v666
    %746 = vst.msk [vmem:[#allocation2 + $0x1e0] sm:$0xff] %vm685, %v671
    %747 = vst.msk [vmem:[#allocation2 + $0x1e8] sm:$0xff] %vm685, %v674
    %748 = vst.msk [vmem:[#allocation2 + $0x1f0] sm:$0xff] %vm685, %v679
    %749 = vst.msk [vmem:[#allocation2 + $0x1f8] sm:$0xff] %vm685, %v682
    %v750 = vld [vmem:[#allocation3] sm:$0xf]
    %v751 = vld [vmem:[#allocation3 + $0x4] sm:$0xf]
    %v752 = vld [vmem:[#allocation3 + $0x8] sm:$0x1]
    %v753 = vld [vmem:[#allocation3 + $0xc] sm:$0xf]
    %v754 = vld [vmem:[#allocation3 + $0x10] sm:$0xf]
    %v755 = vld [vmem:[#allocation3 + $0x14] sm:$0x1]
    %v756 = vld [vmem:[#allocation3 + $0x18] sm:$0xf]
    %v757 = vld [vmem:[#allocation3 + $0x1c] sm:$0xf]
    %v758 = vld [vmem:[#allocation3 + $0x20] sm:$0x1]
    %v759 = vld [vmem:[#allocation3 + $0x24] sm:$0xf]
    %v760 = vld [vmem:[#allocation3 + $0x28] sm:$0xf]
    %v761 = vld [vmem:[#allocation3 + $0x2c] sm:$0x1]
    %v762 = vld [vmem:[#allocation3 + $0x30] sm:$0xf]
    %v763 = vld [vmem:[#allocation3 + $0x34] sm:$0xf]
    %v764 = vld [vmem:[#allocation3 + $0x38] sm:$0x1]
    %v765 = vld [vmem:[#allocation3 + $0x3c] sm:$0xf]
    %v766 = vld [vmem:[#allocation3 + $0x40] sm:$0xf]
    %v767 = vld [vmem:[#allocation3 + $0x44] sm:$0x1]
    %v768 = vld [vmem:[#allocation3 + $0x48] sm:$0xf]
    %v769 = vld [vmem:[#allocation3 + $0x4c] sm:$0xf]
    %v770 = vld [vmem:[#allocation3 + $0x50] sm:$0x1]
    %v771 = vld [vmem:[#allocation3 + $0x54] sm:$0xf]
    %v772 = vld [vmem:[#allocation3 + $0x58] sm:$0xf]
    %v773 = vld [vmem:[#allocation3 + $0x5c] sm:$0x1]
    %v774 = vld [vmem:[#allocation3 + $0x60] sm:$0xf]
    %v775 = vld [vmem:[#allocation3 + $0x64] sm:$0xf]
    %v776 = vld [vmem:[#allocation3 + $0x68] sm:$0x1]
    %v777 = vld [vmem:[#allocation3 + $0x6c] sm:$0xf]
    %v778 = vld [vmem:[#allocation3 + $0x70] sm:$0xf]
    %v779 = vld [vmem:[#allocation3 + $0x74] sm:$0x1]
    %v780 = vld [vmem:[#allocation3 + $0x78] sm:$0xf]
    %v781 = vld [vmem:[#allocation3 + $0x7c] sm:$0xf]
    %v782 = vld [vmem:[#allocation3 + $0x80] sm:$0x1]
    %v783 = vld [vmem:[#allocation3 + $0x84] sm:$0xf]
    %v784 = vld [vmem:[#allocation3 + $0x88] sm:$0xf]
    %v785 = vld [vmem:[#allocation3 + $0x8c] sm:$0x1]
    %v786 = vld [vmem:[#allocation3 + $0x90] sm:$0xf]
    %v787 = vld [vmem:[#allocation3 + $0x94] sm:$0xf]
    %v788 = vld [vmem:[#allocation3 + $0x98] sm:$0x1]
    %v789 = vld [vmem:[#allocation3 + $0x9c] sm:$0xf]
    %v790 = vld [vmem:[#allocation3 + $0xa0] sm:$0xf]
    %v791 = vld [vmem:[#allocation3 + $0xa4] sm:$0x1]
    %v792 = vld [vmem:[#allocation3 + $0xa8] sm:$0xf]
    %v793 = vld [vmem:[#allocation3 + $0xac] sm:$0xf]
    %v794 = vld [vmem:[#allocation3 + $0xb0] sm:$0x1]
    %v795 = vld [vmem:[#allocation3 + $0xb4] sm:$0xf]
    %v796 = vld [vmem:[#allocation3 + $0xb8] sm:$0xf]
    %v797 = vld [vmem:[#allocation3 + $0xbc] sm:$0x1]
    %v798 = vld [vmem:[#allocation3 + $0xd8] sm:$0xf]
    %v799 = vld [vmem:[#allocation3 + $0xdc] sm:$0xf]
    %v800 = vld [vmem:[#allocation3 + $0xe0] sm:$0x1]
    %v801 = vld [vmem:[#allocation3 + $0xe4] sm:$0xf]
    %v802 = vld [vmem:[#allocation3 + $0xe8] sm:$0xf]
    %v803 = vld [vmem:[#allocation3 + $0xec] sm:$0x1]
    %v804 = vld [vmem:[#allocation3 + $0xf0] sm:$0xf]
    %v805 = vld [vmem:[#allocation3 + $0xf4] sm:$0xf]
    %v806 = vld [vmem:[#allocation3 + $0xf8] sm:$0x1]
    %v807 = vld [vmem:[#allocation3 + $0xfc] sm:$0xf]
    %v808 = vld [vmem:[#allocation3 + $0x100] sm:$0xf]
    %v809 = vld [vmem:[#allocation3 + $0x104] sm:$0x1]
    %v810 = vld [vmem:[#allocation3 + $0x108] sm:$0xf]
    %v811 = vld [vmem:[#allocation3 + $0x10c] sm:$0xf]
    %v812 = vld [vmem:[#allocation3 + $0x110] sm:$0x1]
    %v813 = vld [vmem:[#allocation3 + $0x114] sm:$0xf]
    %v814 = vld [vmem:[#allocation3 + $0x118] sm:$0xf]
    %v815 = vld [vmem:[#allocation3 + $0x11c] sm:$0x1]
    %v816 = vld [vmem:[#allocation3 + $0x120] sm:$0xf]
    %v817 = vld [vmem:[#allocation3 + $0x124] sm:$0xf]
    %v818 = vld [vmem:[#allocation3 + $0x128] sm:$0x1]
    %v819 = vld [vmem:[#allocation3 + $0x12c] sm:$0xf]
    %v820 = vld [vmem:[#allocation3 + $0x130] sm:$0xf]
    %v821 = vld [vmem:[#allocation3 + $0x134] sm:$0x1]
    %v822 = vld [vmem:[#allocation3 + $0x138] sm:$0xf]
    %v823 = vld [vmem:[#allocation3 + $0x13c] sm:$0xf]
    %v824 = vld [vmem:[#allocation3 + $0x140] sm:$0x1]
    %v825 = vld [vmem:[#allocation3 + $0x144] sm:$0xf]
    %v826 = vld [vmem:[#allocation3 + $0x148] sm:$0xf]
    %v827 = vld [vmem:[#allocation3 + $0x14c] sm:$0x1]
    %v828 = vld [vmem:[#allocation3 + $0x150] sm:$0xf]
    %v829 = vld [vmem:[#allocation3 + $0x154] sm:$0xf]
    %v830 = vld [vmem:[#allocation3 + $0x158] sm:$0x1]
    %v831 = vld [vmem:[#allocation3 + $0x15c] sm:$0xf]
    %v832 = vld [vmem:[#allocation3 + $0x160] sm:$0xf]
    %v833 = vld [vmem:[#allocation3 + $0x164] sm:$0x1]
    %v834 = vld [vmem:[#allocation3 + $0x168] sm:$0xf]
    %v835 = vld [vmem:[#allocation3 + $0x16c] sm:$0xf]
    %v836 = vld [vmem:[#allocation3 + $0x170] sm:$0x1]
    %v837 = vld [vmem:[#allocation3 + $0x174] sm:$0xf]
    %v838 = vld [vmem:[#allocation3 + $0x178] sm:$0xf]
    %v839 = vld [vmem:[#allocation3 + $0x17c] sm:$0x1]
    %v840 = vld [vmem:[#allocation3 + $0x180] sm:$0xf]
    %v841 = vld [vmem:[#allocation3 + $0x184] sm:$0xf]
    %v842 = vld [vmem:[#allocation3 + $0x188] sm:$0x1]
    %v843 = vld [vmem:[#allocation3 + $0x18c] sm:$0xf]
    %v844 = vld [vmem:[#allocation3 + $0x190] sm:$0xf]
    %v845 = vld [vmem:[#allocation3 + $0x194] sm:$0x1]
    %vm846 = vsmask.f32 3328
    %vm847 = vsmask.f32 7440
    %vm848 = vmor %vm846, %vm847
    %v850 = vshrl.u32 %v750, 16
    %v852 = vrot.slane %v850, 4
    %v853 = vshll.u32 %v750, 16
    %v855 = vrot.slane %v853, 5
    %v856 = vor.u32 %v852, %v855
    %v857 = vrot.slane %v856, 4
    %v859 = vshll.u32 %v751, 16
    %v861 = vrot.slane %v859, 5
    %v862 = vsel %vm848, %v857, %v861
    %v863 = vshrl.u32 %v751, 16
    %v865 = vrot.slane %v863, 4
    %v866 = vor.u32 %v865, %v861
    %v867 = vrot.slane %v866, 4
    %v869 = vshll.u32 %v752, 16
    %v871 = vrot.slane %v869, 5
    %v872 = vsel %vm848, %v867, %v871
    %v874 = vshrl.u32 %v753, 16
    %v876 = vrot.slane %v874, 4
    %v877 = vshll.u32 %v753, 16
    %v879 = vrot.slane %v877, 5
    %v880 = vor.u32 %v876, %v879
    %v881 = vrot.slane %v880, 4
    %v883 = vshll.u32 %v754, 16
    %v885 = vrot.slane %v883, 5
    %v886 = vsel %vm848, %v881, %v885
    %v887 = vshrl.u32 %v754, 16
    %v889 = vrot.slane %v887, 4
    %v890 = vor.u32 %v889, %v885
    %v891 = vrot.slane %v890, 4
    %v893 = vshll.u32 %v755, 16
    %v895 = vrot.slane %v893, 5
    %v896 = vsel %vm848, %v891, %v895
    %v898 = vshrl.u32 %v756, 16
    %v900 = vrot.slane %v898, 4
    %v901 = vshll.u32 %v756, 16
    %v903 = vrot.slane %v901, 5
    %v904 = vor.u32 %v900, %v903
    %v905 = vrot.slane %v904, 4
    %v907 = vshll.u32 %v757, 16
    %v909 = vrot.slane %v907, 5
    %v910 = vsel %vm848, %v905, %v909
    %v911 = vshrl.u32 %v757, 16
    %v913 = vrot.slane %v911, 4
    %v914 = vor.u32 %v913, %v909
    %v915 = vrot.slane %v914, 4
    %v917 = vshll.u32 %v758, 16
    %v919 = vrot.slane %v917, 5
    %v920 = vsel %vm848, %v915, %v919
    %v922 = vshrl.u32 %v759, 16
    %v924 = vrot.slane %v922, 4
    %v925 = vshll.u32 %v759, 16
    %v927 = vrot.slane %v925, 5
    %v928 = vor.u32 %v924, %v927
    %v929 = vrot.slane %v928, 4
    %v931 = vshll.u32 %v760, 16
    %v933 = vrot.slane %v931, 5
    %v934 = vsel %vm848, %v929, %v933
    %v935 = vshrl.u32 %v760, 16
    %v937 = vrot.slane %v935, 4
    %v938 = vor.u32 %v937, %v933
    %v939 = vrot.slane %v938, 4
    %v941 = vshll.u32 %v761, 16
    %v943 = vrot.slane %v941, 5
    %v944 = vsel %vm848, %v939, %v943
    %v946 = vshrl.u32 %v762, 16
    %v948 = vrot.slane %v946, 4
    %v949 = vshll.u32 %v762, 16
    %v951 = vrot.slane %v949, 5
    %v952 = vor.u32 %v948, %v951
    %v953 = vrot.slane %v952, 4
    %v955 = vshll.u32 %v763, 16
    %v957 = vrot.slane %v955, 5
    %v958 = vsel %vm848, %v953, %v957
    %v959 = vshrl.u32 %v763, 16
    %v961 = vrot.slane %v959, 4
    %v962 = vor.u32 %v961, %v957
    %v963 = vrot.slane %v962, 4
    %v965 = vshll.u32 %v764, 16
    %v967 = vrot.slane %v965, 5
    %v968 = vsel %vm848, %v963, %v967
    %v970 = vshrl.u32 %v765, 16
    %v972 = vrot.slane %v970, 4
    %v973 = vshll.u32 %v765, 16
    %v975 = vrot.slane %v973, 5
    %v976 = vor.u32 %v972, %v975
    %v977 = vrot.slane %v976, 4
    %v979 = vshll.u32 %v766, 16
    %v981 = vrot.slane %v979, 5
    %v982 = vsel %vm848, %v977, %v981
    %v983 = vshrl.u32 %v766, 16
    %v985 = vrot.slane %v983, 4
    %v986 = vor.u32 %v985, %v981
    %v987 = vrot.slane %v986, 4
    %v989 = vshll.u32 %v767, 16
    %v991 = vrot.slane %v989, 5
    %v992 = vsel %vm848, %v987, %v991
    %v994 = vshrl.u32 %v768, 16
    %v996 = vrot.slane %v994, 4
    %v997 = vshll.u32 %v768, 16
    %v999 = vrot.slane %v997, 5
    %v1000 = vor.u32 %v996, %v999
    %v1001 = vrot.slane %v1000, 4
    %v1003 = vshll.u32 %v769, 16
    %v1005 = vrot.slane %v1003, 5
    %v1006 = vsel %vm848, %v1001, %v1005
    %v1007 = vshrl.u32 %v769, 16
    %v1009 = vrot.slane %v1007, 4
    %v1010 = vor.u32 %v1009, %v1005
    %v1011 = vrot.slane %v1010, 4
    %v1013 = vshll.u32 %v770, 16
    %v1015 = vrot.slane %v1013, 5
    %v1016 = vsel %vm848, %v1011, %v1015
    %v1018 = vshrl.u32 %v771, 16
    %v1020 = vrot.slane %v1018, 4
    %v1021 = vshll.u32 %v771, 16
    %v1023 = vrot.slane %v1021, 5
    %v1024 = vor.u32 %v1020, %v1023
    %v1025 = vrot.slane %v1024, 4
    %v1027 = vshll.u32 %v772, 16
    %v1029 = vrot.slane %v1027, 5
    %v1030 = vsel %vm848, %v1025, %v1029
    %v1031 = vshrl.u32 %v772, 16
    %v1033 = vrot.slane %v1031, 4
    %v1034 = vor.u32 %v1033, %v1029
    %v1035 = vrot.slane %v1034, 4
    %v1037 = vshll.u32 %v773, 16
    %v1039 = vrot.slane %v1037, 5
    %v1040 = vsel %vm848, %v1035, %v1039
    %v1042 = vshrl.u32 %v774, 16
    %v1044 = vrot.slane %v1042, 4
    %v1045 = vshll.u32 %v774, 16
    %v1047 = vrot.slane %v1045, 5
    %v1048 = vor.u32 %v1044, %v1047
    %v1049 = vrot.slane %v1048, 4
    %v1051 = vshll.u32 %v775, 16
    %v1053 = vrot.slane %v1051, 5
    %v1054 = vsel %vm848, %v1049, %v1053
    %v1055 = vshrl.u32 %v775, 16
    %v1057 = vrot.slane %v1055, 4
    %v1058 = vor.u32 %v1057, %v1053
    %v1059 = vrot.slane %v1058, 4
    %v1061 = vshll.u32 %v776, 16
    %v1063 = vrot.slane %v1061, 5
    %v1064 = vsel %vm848, %v1059, %v1063
    %v1066 = vshrl.u32 %v777, 16
    %v1068 = vrot.slane %v1066, 4
    %v1069 = vshll.u32 %v777, 16
    %v1071 = vrot.slane %v1069, 5
    %v1072 = vor.u32 %v1068, %v1071
    %v1073 = vrot.slane %v1072, 4
    %v1075 = vshll.u32 %v778, 16
    %v1077 = vrot.slane %v1075, 5
    %v1078 = vsel %vm848, %v1073, %v1077
    %v1079 = vshrl.u32 %v778, 16
    %v1081 = vrot.slane %v1079, 4
    %v1082 = vor.u32 %v1081, %v1077
    %v1083 = vrot.slane %v1082, 4
    %v1085 = vshll.u32 %v779, 16
    %v1087 = vrot.slane %v1085, 5
    %v1088 = vsel %vm848, %v1083, %v1087
    %v1090 = vshrl.u32 %v780, 16
    %v1092 = vrot.slane %v1090, 4
    %v1093 = vshll.u32 %v780, 16
    %v1095 = vrot.slane %v1093, 5
    %v1096 = vor.u32 %v1092, %v1095
    %v1097 = vrot.slane %v1096, 4
    %v1099 = vshll.u32 %v781, 16
    %v1101 = vrot.slane %v1099, 5
    %v1102 = vsel %vm848, %v1097, %v1101
    %v1103 = vshrl.u32 %v781, 16
    %v1105 = vrot.slane %v1103, 4
    %v1106 = vor.u32 %v1105, %v1101
    %v1107 = vrot.slane %v1106, 4
    %v1109 = vshll.u32 %v782, 16
    %v1111 = vrot.slane %v1109, 5
    %v1112 = vsel %vm848, %v1107, %v1111
    %v1114 = vshrl.u32 %v783, 16
    %v1116 = vrot.slane %v1114, 4
    %v1117 = vshll.u32 %v783, 16
    %v1119 = vrot.slane %v1117, 5
    %v1120 = vor.u32 %v1116, %v1119
    %v1121 = vrot.slane %v1120, 4
    %v1123 = vshll.u32 %v784, 16
    %v1125 = vrot.slane %v1123, 5
    %v1126 = vsel %vm848, %v1121, %v1125
    %v1127 = vshrl.u32 %v784, 16
    %v1129 = vrot.slane %v1127, 4
    %v1130 = vor.u32 %v1129, %v1125
    %v1131 = vrot.slane %v1130, 4
    %v1133 = vshll.u32 %v785, 16
    %v1135 = vrot.slane %v1133, 5
    %v1136 = vsel %vm848, %v1131, %v1135
    %v1138 = vshrl.u32 %v786, 16
    %v1140 = vrot.slane %v1138, 4
    %v1141 = vshll.u32 %v786, 16
    %v1143 = vrot.slane %v1141, 5
    %v1144 = vor.u32 %v1140, %v1143
    %v1145 = vrot.slane %v1144, 4
    %v1147 = vshll.u32 %v787, 16
    %v1149 = vrot.slane %v1147, 5
    %v1150 = vsel %vm848, %v1145, %v1149
    %v1151 = vshrl.u32 %v787, 16
    %v1153 = vrot.slane %v1151, 4
    %v1154 = vor.u32 %v1153, %v1149
    %v1155 = vrot.slane %v1154, 4
    %v1157 = vshll.u32 %v788, 16
    %v1159 = vrot.slane %v1157, 5
    %v1160 = vsel %vm848, %v1155, %v1159
    %v1162 = vshrl.u32 %v789, 16
    %v1164 = vrot.slane %v1162, 4
    %v1165 = vshll.u32 %v789, 16
    %v1167 = vrot.slane %v1165, 5
    %v1168 = vor.u32 %v1164, %v1167
    %v1169 = vrot.slane %v1168, 4
    %v1171 = vshll.u32 %v790, 16
    %v1173 = vrot.slane %v1171, 5
    %v1174 = vsel %vm848, %v1169, %v1173
    %v1175 = vshrl.u32 %v790, 16
    %v1177 = vrot.slane %v1175, 4
    %v1178 = vor.u32 %v1177, %v1173
    %v1179 = vrot.slane %v1178, 4
    %v1181 = vshll.u32 %v791, 16
    %v1183 = vrot.slane %v1181, 5
    %v1184 = vsel %vm848, %v1179, %v1183
    %v1186 = vshrl.u32 %v792, 16
    %v1188 = vrot.slane %v1186, 4
    %v1189 = vshll.u32 %v792, 16
    %v1191 = vrot.slane %v1189, 5
    %v1192 = vor.u32 %v1188, %v1191
    %v1193 = vrot.slane %v1192, 4
    %v1195 = vshll.u32 %v793, 16
    %v1197 = vrot.slane %v1195, 5
    %v1198 = vsel %vm848, %v1193, %v1197
    %v1199 = vshrl.u32 %v793, 16
    %v1201 = vrot.slane %v1199, 4
    %v1202 = vor.u32 %v1201, %v1197
    %v1203 = vrot.slane %v1202, 4
    %v1205 = vshll.u32 %v794, 16
    %v1207 = vrot.slane %v1205, 5
    %v1208 = vsel %vm848, %v1203, %v1207
    %v1210 = vshrl.u32 %v795, 16
    %v1212 = vrot.slane %v1210, 4
    %v1213 = vshll.u32 %v795, 16
    %v1215 = vrot.slane %v1213, 5
    %v1216 = vor.u32 %v1212, %v1215
    %v1217 = vrot.slane %v1216, 4
    %v1219 = vshll.u32 %v796, 16
    %v1221 = vrot.slane %v1219, 5
    %v1222 = vsel %vm848, %v1217, %v1221
    %v1223 = vshrl.u32 %v796, 16
    %v1225 = vrot.slane %v1223, 4
    %v1226 = vor.u32 %v1225, %v1221
    %v1227 = vrot.slane %v1226, 4
    %v1229 = vshll.u32 %v797, 16
    %v1231 = vrot.slane %v1229, 5
    %v1232 = vsel %vm848, %v1227, %v1231
    %v1234 = vshrl.u32 %v798, 16
    %v1236 = vrot.slane %v1234, 4
    %v1237 = vshll.u32 %v798, 16
    %v1239 = vrot.slane %v1237, 5
    %v1240 = vor.u32 %v1236, %v1239
    %v1241 = vrot.slane %v1240, 4
    %v1243 = vshll.u32 %v799, 16
    %v1245 = vrot.slane %v1243, 5
    %v1246 = vsel %vm848, %v1241, %v1245
    %v1247 = vshrl.u32 %v799, 16
    %v1249 = vrot.slane %v1247, 4
    %v1250 = vor.u32 %v1249, %v1245
    %v1251 = vrot.slane %v1250, 4
    %v1253 = vshll.u32 %v800, 16
    %v1255 = vrot.slane %v1253, 5
    %v1256 = vsel %vm848, %v1251, %v1255
    %v1258 = vshrl.u32 %v801, 16
    %v1260 = vrot.slane %v1258, 4
    %v1261 = vshll.u32 %v801, 16
    %v1263 = vrot.slane %v1261, 5
    %v1264 = vor.u32 %v1260, %v1263
    %v1265 = vrot.slane %v1264, 4
    %v1267 = vshll.u32 %v802, 16
    %v1269 = vrot.slane %v1267, 5
    %v1270 = vsel %vm848, %v1265, %v1269
    %v1271 = vshrl.u32 %v802, 16
    %v1273 = vrot.slane %v1271, 4
    %v1274 = vor.u32 %v1273, %v1269
    %v1275 = vrot.slane %v1274, 4
    %v1277 = vshll.u32 %v803, 16
    %v1279 = vrot.slane %v1277, 5
    %v1280 = vsel %vm848, %v1275, %v1279
    %v1282 = vshrl.u32 %v804, 16
    %v1284 = vrot.slane %v1282, 4
    %v1285 = vshll.u32 %v804, 16
    %v1287 = vrot.slane %v1285, 5
    %v1288 = vor.u32 %v1284, %v1287
    %v1289 = vrot.slane %v1288, 4
    %v1291 = vshll.u32 %v805, 16
    %v1293 = vrot.slane %v1291, 5
    %v1294 = vsel %vm848, %v1289, %v1293
    %v1295 = vshrl.u32 %v805, 16
    %v1297 = vrot.slane %v1295, 4
    %v1298 = vor.u32 %v1297, %v1293
    %v1299 = vrot.slane %v1298, 4
    %v1301 = vshll.u32 %v806, 16
    %v1303 = vrot.slane %v1301, 5
    %v1304 = vsel %vm848, %v1299, %v1303
    %v1306 = vshrl.u32 %v807, 16
    %v1308 = vrot.slane %v1306, 4
    %v1309 = vshll.u32 %v807, 16
    %v1311 = vrot.slane %v1309, 5
    %v1312 = vor.u32 %v1308, %v1311
    %v1313 = vrot.slane %v1312, 4
    %v1315 = vshll.u32 %v808, 16
    %v1317 = vrot.slane %v1315, 5
    %v1318 = vsel %vm848, %v1313, %v1317
    %v1319 = vshrl.u32 %v808, 16
    %v1321 = vrot.slane %v1319, 4
    %v1322 = vor.u32 %v1321, %v1317
    %v1323 = vrot.slane %v1322, 4
    %v1325 = vshll.u32 %v809, 16
    %v1327 = vrot.slane %v1325, 5
    %v1328 = vsel %vm848, %v1323, %v1327
    %v1330 = vshrl.u32 %v810, 16
    %v1332 = vrot.slane %v1330, 4
    %v1333 = vshll.u32 %v810, 16
    %v1335 = vrot.slane %v1333, 5
    %v1336 = vor.u32 %v1332, %v1335
    %v1337 = vrot.slane %v1336, 4
    %v1339 = vshll.u32 %v811, 16
    %v1341 = vrot.slane %v1339, 5
    %v1342 = vsel %vm848, %v1337, %v1341
    %v1343 = vshrl.u32 %v811, 16
    %v1345 = vrot.slane %v1343, 4
    %v1346 = vor.u32 %v1345, %v1341
    %v1347 = vrot.slane %v1346, 4
    %v1349 = vshll.u32 %v812, 16
    %v1351 = vrot.slane %v1349, 5
    %v1352 = vsel %vm848, %v1347, %v1351
    %v1354 = vshrl.u32 %v813, 16
    %v1356 = vrot.slane %v1354, 4
    %v1357 = vshll.u32 %v813, 16
    %v1359 = vrot.slane %v1357, 5
    %v1360 = vor.u32 %v1356, %v1359
    %v1361 = vrot.slane %v1360, 4
    %v1363 = vshll.u32 %v814, 16
    %v1365 = vrot.slane %v1363, 5
    %v1366 = vsel %vm848, %v1361, %v1365
    %v1367 = vshrl.u32 %v814, 16
    %v1369 = vrot.slane %v1367, 4
    %v1370 = vor.u32 %v1369, %v1365
    %v1371 = vrot.slane %v1370, 4
    %v1373 = vshll.u32 %v815, 16
    %v1375 = vrot.slane %v1373, 5
    %v1376 = vsel %vm848, %v1371, %v1375
    %v1378 = vshrl.u32 %v816, 16
    %v1380 = vrot.slane %v1378, 4
    %v1381 = vshll.u32 %v816, 16
    %v1383 = vrot.slane %v1381, 5
    %v1384 = vor.u32 %v1380, %v1383
    %v1385 = vrot.slane %v1384, 4
    %v1387 = vshll.u32 %v817, 16
    %v1389 = vrot.slane %v1387, 5
    %v1390 = vsel %vm848, %v1385, %v1389
    %v1391 = vshrl.u32 %v817, 16
    %v1393 = vrot.slane %v1391, 4
    %v1394 = vor.u32 %v1393, %v1389
    %v1395 = vrot.slane %v1394, 4
    %v1397 = vshll.u32 %v818, 16
    %v1399 = vrot.slane %v1397, 5
    %v1400 = vsel %vm848, %v1395, %v1399
    %v1402 = vshrl.u32 %v819, 16
    %v1404 = vrot.slane %v1402, 4
    %v1405 = vshll.u32 %v819, 16
    %v1407 = vrot.slane %v1405, 5
    %v1408 = vor.u32 %v1404, %v1407
    %v1409 = vrot.slane %v1408, 4
    %v1411 = vshll.u32 %v820, 16
    %v1413 = vrot.slane %v1411, 5
    %v1414 = vsel %vm848, %v1409, %v1413
    %v1415 = vshrl.u32 %v820, 16
    %v1417 = vrot.slane %v1415, 4
    %v1418 = vor.u32 %v1417, %v1413
    %v1419 = vrot.slane %v1418, 4
    %v1421 = vshll.u32 %v821, 16
    %v1423 = vrot.slane %v1421, 5
    %v1424 = vsel %vm848, %v1419, %v1423
    %v1426 = vshrl.u32 %v822, 16
    %v1428 = vrot.slane %v1426, 4
    %v1429 = vshll.u32 %v822, 16
    %v1431 = vrot.slane %v1429, 5
    %v1432 = vor.u32 %v1428, %v1431
    %v1433 = vrot.slane %v1432, 4
    %v1435 = vshll.u32 %v823, 16
    %v1437 = vrot.slane %v1435, 5
    %v1438 = vsel %vm848, %v1433, %v1437
    %v1439 = vshrl.u32 %v823, 16
    %v1441 = vrot.slane %v1439, 4
    %v1442 = vor.u32 %v1441, %v1437
    %v1443 = vrot.slane %v1442, 4
    %v1445 = vshll.u32 %v824, 16
    %v1447 = vrot.slane %v1445, 5
    %v1448 = vsel %vm848, %v1443, %v1447
    %v1450 = vshrl.u32 %v825, 16
    %v1452 = vrot.slane %v1450, 4
    %v1453 = vshll.u32 %v825, 16
    %v1455 = vrot.slane %v1453, 5
    %v1456 = vor.u32 %v1452, %v1455
    %v1457 = vrot.slane %v1456, 4
    %v1459 = vshll.u32 %v826, 16
    %v1461 = vrot.slane %v1459, 5
    %v1462 = vsel %vm848, %v1457, %v1461
    %v1463 = vshrl.u32 %v826, 16
    %v1465 = vrot.slane %v1463, 4
    %v1466 = vor.u32 %v1465, %v1461
    %v1467 = vrot.slane %v1466, 4
    %v1469 = vshll.u32 %v827, 16
    %v1471 = vrot.slane %v1469, 5
    %v1472 = vsel %vm848, %v1467, %v1471
    %v1474 = vshrl.u32 %v828, 16
    %v1476 = vrot.slane %v1474, 4
    %v1477 = vshll.u32 %v828, 16
    %v1479 = vrot.slane %v1477, 5
    %v1480 = vor.u32 %v1476, %v1479
    %v1481 = vrot.slane %v1480, 4
    %v1483 = vshll.u32 %v829, 16
    %v1485 = vrot.slane %v1483, 5
    %v1486 = vsel %vm848, %v1481, %v1485
    %v1487 = vshrl.u32 %v829, 16
    %v1489 = vrot.slane %v1487, 4
    %v1490 = vor.u32 %v1489, %v1485
    %v1491 = vrot.slane %v1490, 4
    %v1493 = vshll.u32 %v830, 16
    %v1495 = vrot.slane %v1493, 5
    %v1496 = vsel %vm848, %v1491, %v1495
    %v1498 = vshrl.u32 %v831, 16
    %v1500 = vrot.slane %v1498, 4
    %v1501 = vshll.u32 %v831, 16
    %v1503 = vrot.slane %v1501, 5
    %v1504 = vor.u32 %v1500, %v1503
    %v1505 = vrot.slane %v1504, 4
    %v1507 = vshll.u32 %v832, 16
    %v1509 = vrot.slane %v1507, 5
    %v1510 = vsel %vm848, %v1505, %v1509
    %v1511 = vshrl.u32 %v832, 16
    %v1513 = vrot.slane %v1511, 4
    %v1514 = vor.u32 %v1513, %v1509
    %v1515 = vrot.slane %v1514, 4
    %v1517 = vshll.u32 %v833, 16
    %v1519 = vrot.slane %v1517, 5
    %v1520 = vsel %vm848, %v1515, %v1519
    %v1522 = vshrl.u32 %v834, 16
    %v1524 = vrot.slane %v1522, 4
    %v1525 = vshll.u32 %v834, 16
    %v1527 = vrot.slane %v1525, 5
    %v1528 = vor.u32 %v1524, %v1527
    %v1529 = vrot.slane %v1528, 4
    %v1531 = vshll.u32 %v835, 16
    %v1533 = vrot.slane %v1531, 5
    %v1534 = vsel %vm848, %v1529, %v1533
    %v1535 = vshrl.u32 %v835, 16
    %v1537 = vrot.slane %v1535, 4
    %v1538 = vor.u32 %v1537, %v1533
    %v1539 = vrot.slane %v1538, 4
    %v1541 = vshll.u32 %v836, 16
    %v1543 = vrot.slane %v1541, 5
    %v1544 = vsel %vm848, %v1539, %v1543
    %v1546 = vshrl.u32 %v837, 16
    %v1548 = vrot.slane %v1546, 4
    %v1549 = vshll.u32 %v837, 16
    %v1551 = vrot.slane %v1549, 5
    %v1552 = vor.u32 %v1548, %v1551
    %v1553 = vrot.slane %v1552, 4
    %v1555 = vshll.u32 %v838, 16
    %v1557 = vrot.slane %v1555, 5
    %v1558 = vsel %vm848, %v1553, %v1557
    %v1559 = vshrl.u32 %v838, 16
    %v1561 = vrot.slane %v1559, 4
    %v1562 = vor.u32 %v1561, %v1557
    %v1563 = vrot.slane %v1562, 4
    %v1565 = vshll.u32 %v839, 16
    %v1567 = vrot.slane %v1565, 5
    %v1568 = vsel %vm848, %v1563, %v1567
    %v1570 = vshrl.u32 %v840, 16
    %v1572 = vrot.slane %v1570, 4
    %v1573 = vshll.u32 %v840, 16
    %v1575 = vrot.slane %v1573, 5
    %v1576 = vor.u32 %v1572, %v1575
    %v1577 = vrot.slane %v1576, 4
    %v1579 = vshll.u32 %v841, 16
    %v1581 = vrot.slane %v1579, 5
    %v1582 = vsel %vm848, %v1577, %v1581
    %v1583 = vshrl.u32 %v841, 16
    %v1585 = vrot.slane %v1583, 4
    %v1586 = vor.u32 %v1585, %v1581
    %v1587 = vrot.slane %v1586, 4
    %v1589 = vshll.u32 %v842, 16
    %v1591 = vrot.slane %v1589, 5
    %v1592 = vsel %vm848, %v1587, %v1591
    %v1594 = vshrl.u32 %v843, 16
    %v1596 = vrot.slane %v1594, 4
    %v1597 = vshll.u32 %v843, 16
    %v1599 = vrot.slane %v1597, 5
    %v1600 = vor.u32 %v1596, %v1599
    %v1601 = vrot.slane %v1600, 4
    %v1603 = vshll.u32 %v844, 16
    %v1605 = vrot.slane %v1603, 5
    %v1606 = vsel %vm848, %v1601, %v1605
    %v1607 = vshrl.u32 %v844, 16
    %v1609 = vrot.slane %v1607, 4
    %v1610 = vor.u32 %v1609, %v1605
    %v1611 = vrot.slane %v1610, 4
    %v1613 = vshll.u32 %v845, 16
    %v1615 = vrot.slane %v1613, 5
    %v1616 = vsel %vm848, %v1611, %v1615
    %s1617 = scalar_lea.vmem [#allocation6], 2
    %v1618 = vld [vmem:[%s1617] sm:$0x3]
    %v1619 = vunpack.c.l.b16 %v862
    %v1620 = vunpack.c.l.b16 %v872
    %v1621 = vunpack.c.l.b16 %v886
    %v1622 = vunpack.c.l.b16 %v896
    %v1623 = vunpack.c.l.b16 %v910
    %v1624 = vunpack.c.l.b16 %v920
    %v1625 = vunpack.c.l.b16 %v934
    %v1626 = vunpack.c.l.b16 %v944
    %v1627 = vunpack.c.l.b16 %v958
    %v1628 = vunpack.c.l.b16 %v968
    %v1629 = vunpack.c.l.b16 %v982
    %v1630 = vunpack.c.l.b16 %v992
    %v1631 = vunpack.c.l.b16 %v1006
    %v1632 = vunpack.c.l.b16 %v1016
    %v1633 = vunpack.c.l.b16 %v1030
    %v1634 = vunpack.c.l.b16 %v1040
    %v1635 = vunpack.c.l.b16 %v1054
    %v1636 = vunpack.c.l.b16 %v1064
    %v1637 = vunpack.c.l.b16 %v1078
    %v1638 = vunpack.c.l.b16 %v1088
    %v1639 = vunpack.c.l.b16 %v1102
    %v1640 = vunpack.c.l.b16 %v1112
    %v1641 = vunpack.c.l.b16 %v1126
    %v1642 = vunpack.c.l.b16 %v1136
    %v1643 = vunpack.c.l.b16 %v1150
    %v1644 = vunpack.c.l.b16 %v1160
    %v1645 = vunpack.c.l.b16 %v1174
    %v1646 = vunpack.c.l.b16 %v1184
    %v1647 = vunpack.c.l.b16 %v1198
    %v1648 = vunpack.c.l.b16 %v1208
    %v1649 = vunpack.c.l.b16 %v1222
    %v1650 = vunpack.c.l.b16 %v1232
    %v1651 = vunpack.c.l.b16 %v1246
    %v1652 = vunpack.c.l.b16 %v1256
    %v1653 = vunpack.c.l.b16 %v1270
    %v1654 = vunpack.c.l.b16 %v1280
    %v1655 = vunpack.c.l.b16 %v1294
    %v1656 = vunpack.c.l.b16 %v1304
    %v1657 = vunpack.c.l.b16 %v1318
    %v1658 = vunpack.c.l.b16 %v1328
    %v1659 = vunpack.c.l.b16 %v1342
    %v1660 = vunpack.c.l.b16 %v1352
    %v1661 = vunpack.c.l.b16 %v1366
    %v1662 = vunpack.c.l.b16 %v1376
    %v1663 = vunpack.c.l.b16 %v1390
    %v1664 = vunpack.c.l.b16 %v1400
    %v1665 = vunpack.c.l.b16 %v1414
    %v1666 = vunpack.c.l.b16 %v1424
    %v1667 = vunpack.c.l.b16 %v1438
    %v1668 = vunpack.c.l.b16 %v1448
    %v1669 = vunpack.c.l.b16 %v1462
    %v1670 = vunpack.c.l.b16 %v1472
    %v1671 = vunpack.c.l.b16 %v1486
    %v1672 = vunpack.c.l.b16 %v1496
    %v1673 = vunpack.c.l.b16 %v1510
    %v1674 = vunpack.c.l.b16 %v1520
    %v1675 = vunpack.c.l.b16 %v1534
    %v1676 = vunpack.c.l.b16 %v1544
    %v1677 = vunpack.c.l.b16 %v1558
    %v1678 = vunpack.c.l.b16 %v1568
    %v1679 = vunpack.c.l.b16 %v1582
    %v1680 = vunpack.c.l.b16 %v1592
    %v1681 = vunpack.c.l.b16 %v1606
    %v1682 = vunpack.c.l.b16 %v1616
    %v1683 = vpack.c.b16 %v1620, %v1619
    %v1684 = vpack.c.b16 %v1622, %v1621
    %v1685 = vpack.c.b16 %v1624, %v1623
    %v1686 = vpack.c.b16 %v1626, %v1625
    %v1687 = vpack.c.b16 %v1628, %v1627
    %v1688 = vpack.c.b16 %v1630, %v1629
    %v1689 = vpack.c.b16 %v1632, %v1631
    %v1690 = vpack.c.b16 %v1634, %v1633
    %v1691 = vpack.c.b16 %v1636, %v1635
    %v1692 = vpack.c.b16 %v1638, %v1637
    %v1693 = vpack.c.b16 %v1640, %v1639
    %v1694 = vpack.c.b16 %v1642, %v1641
    %v1695 = vpack.c.b16 %v1644, %v1643
    %v1696 = vpack.c.b16 %v1646, %v1645
    %v1697 = vpack.c.b16 %v1648, %v1647
    %v1698 = vpack.c.b16 %v1650, %v1649
    %v1699 = vpack.c.b16 %v1652, %v1651
    %v1700 = vpack.c.b16 %v1654, %v1653
    %v1701 = vpack.c.b16 %v1656, %v1655
    %v1702 = vpack.c.b16 %v1658, %v1657
    %v1703 = vpack.c.b16 %v1660, %v1659
    %v1704 = vpack.c.b16 %v1662, %v1661
    %v1705 = vpack.c.b16 %v1664, %v1663
    %v1706 = vpack.c.b16 %v1666, %v1665
    %v1707 = vpack.c.b16 %v1668, %v1667
    %v1708 = vpack.c.b16 %v1670, %v1669
    %v1709 = vpack.c.b16 %v1672, %v1671
    %v1710 = vpack.c.b16 %v1674, %v1673
    %v1711 = vpack.c.b16 %v1676, %v1675
    %v1712 = vpack.c.b16 %v1678, %v1677
    %v1713 = vpack.c.b16 %v1680, %v1679
    %v1714 = vpack.c.b16 %v1682, %v1681
    %v1716 = vsel %vm295, %v1683, 0
    %v1719 = vsel %vm295, %v1684, 0
    %v1722 = vsel %vm295, %v1685, 0
    %v1725 = vsel %vm295, %v1686, 0
    %v1728 = vsel %vm295, %v1687, 0
    %v1731 = vsel %vm295, %v1688, 0
    %v1734 = vsel %vm295, %v1689, 0
    %v1737 = vsel %vm295, %v1690, 0
    %v1740 = vsel %vm295, %v1691, 0
    %v1743 = vsel %vm295, %v1692, 0
    %v1746 = vsel %vm295, %v1693, 0
    %v1749 = vsel %vm295, %v1694, 0
    %v1752 = vsel %vm295, %v1695, 0
    %v1755 = vsel %vm295, %v1696, 0
    %v1758 = vsel %vm295, %v1697, 0
    %v1761 = vsel %vm295, %v1698, 0
    %v1764 = vsel %vm295, %v1699, 0
    %v1767 = vsel %vm295, %v1700, 0
    %v1770 = vsel %vm295, %v1701, 0
    %v1773 = vsel %vm295, %v1702, 0
    %v1776 = vsel %vm295, %v1703, 0
    %v1779 = vsel %vm295, %v1704, 0
    %v1782 = vsel %vm295, %v1705, 0
    %v1785 = vsel %vm295, %v1706, 0
    %v1788 = vsel %vm295, %v1707, 0
    %v1791 = vsel %vm295, %v1708, 0
    %v1794 = vsel %vm295, %v1709, 0
    %v1797 = vsel %vm295, %v1710, 0
    %v1800 = vsel %vm295, %v1711, 0
    %v1803 = vsel %vm295, %v1712, 0
    %v1806 = vsel %vm295, %v1713, 0
    %v1809 = vsel %vm295, %v1714, 0
    %v1812 = vsel %vm392, %v1618, 0
    %1814 = vmatprep.subr.bf16.mxu0 0
    %1815 = vmatpush1.bf16.msra.mxu0 %v1812
    %1816 = vmatprep.subr.bf16.mxu0 0
    %1817 = vmatpush1.bf16.msra.mxu0 0
    %1818 = vmatprep.subr.bf16.mxu0 0
    %1819 = vmatpush1.bf16.msra.mxu0 0
    %1820 = vmatprep.subr.bf16.mxu0 0
    %1821 = vmatpush1.bf16.msra.mxu0 0
    %1822 = vmatprep.subr.bf16.mxu0 0
    %1823 = vmatpush1.bf16.msra.mxu0 0
    %1824 = vmatprep.subr.bf16.mxu0 0
    %1825 = vmatpush1.bf16.msra.mxu0 0
    %1826 = vmatprep.subr.bf16.mxu0 0
    %1827 = vmatpush1.bf16.msra.mxu0 0
    %1828 = vmatprep.subr.bf16.mxu0 0
    %1829 = vmatpush1.bf16.msra.mxu0 0
    %1830 = vmatprep.subr.bf16.mxu0 0
    %1831 = vmatpush1.bf16.msra.mxu0 0
    %1832 = vmatprep.subr.bf16.mxu0 0
    %1833 = vmatpush1.bf16.msra.mxu0 0
    %1834 = vmatprep.subr.bf16.mxu0 0
    %1835 = vmatpush1.bf16.msra.mxu0 0
    %1836 = vmatprep.subr.bf16.mxu0 0
    %1837 = vmatpush1.bf16.msra.mxu0 0
    %1838 = vmatprep.subr.bf16.mxu0 0
    %1839 = vmatpush1.bf16.msra.mxu0 0
    %1840 = vmatprep.subr.bf16.mxu0 0
    %1841 = vmatpush1.bf16.msra.mxu0 0
    %1842 = vmatprep.subr.bf16.mxu0 0
    %1843 = vmatpush1.bf16.msra.mxu0 0
    %1844 = vmatprep.subr.bf16.mxu0 0
    %1845 = vmatpush1.bf16.msra.mxu0 0
    %1846 = vmatprep.mubr.bf16.mxu0 0
    %1847 = vmatmul.mubr.bf16.gmra.mrb[0].mxu0 %v1716
    %v1848 = vpop.f32.mrb[0].mxu0
    %v1849 = vadd.f32 0.0, %v1848
    %v1850 = vpop.f32.mrb[0].mxu0
    %v1851 = vpop.f32.mrb[0].mxu0
    %v1852 = vadd.f32 0.0, %v1851
    %v1853 = vpop.f32.mrb[0].mxu0
    %1854 = vmatprep.mubr.bf16.mxu0 0
    %1855 = vmatmul.mubr.bf16.gmra.mrb[0].mxu0 %v1719
    %v1856 = vpop.f32.mrb[0].mxu0
    %v1857 = vadd.f32 0.0, %v1856
    %v1858 = vpop.f32.mrb[0].mxu0
    %v1859 = vpop.f32.mrb[0].mxu0
    %v1860 = vadd.f32 0.0, %v1859
    %v1861 = vpop.f32.mrb[0].mxu0
    %1862 = vmatprep.mubr.bf16.mxu0 0
    %1863 = vmatmul.mubr.bf16.gmra.mrb[0].mxu0 %v1722
    %v1864 = vpop.f32.mrb[0].mxu0
    %v1865 = vadd.f32 0.0, %v1864
    %v1866 = vpop.f32.mrb[0].mxu0
    %v1867 = vpop.f32.mrb[0].mxu0
    %v1868 = vadd.f32 0.0, %v1867
    %v1869 = vpop.f32.mrb[0].mxu0
    %1870 = vmatprep.mubr.bf16.mxu0 0
    %1871 = vmatmul.mubr.bf16.gmra.mrb[0].mxu0 %v1725
    %v1872 = vpop.f32.mrb[0].mxu0
    %v1873 = vadd.f32 0.0, %v1872
    %v1874 = vpop.f32.mrb[0].mxu0
    %v1875 = vpop.f32.mrb[0].mxu0
    %v1876 = vadd.f32 0.0, %v1875
    %v1877 = vpop.f32.mrb[0].mxu0
    %1878 = vmatprep.mubr.bf16.mxu0 0
    %1879 = vmatmul.mubr.bf16.gmra.mrb[0].mxu0 %v1728
    %v1880 = vpop.f32.mrb[0].mxu0
    %v1881 = vadd.f32 0.0, %v1880
    %v1882 = vpop.f32.mrb[0].mxu0
    %v1883 = vpop.f32.mrb[0].mxu0
    %v1884 = vadd.f32 0.0, %v1883
    %v1885 = vpop.f32.mrb[0].mxu0
    %1886 = vmatprep.mubr.bf16.mxu0 0
    %1887 = vmatmul.mubr.bf16.gmra.mrb[0].mxu0 %v1731
    %v1888 = vpop.f32.mrb[0].mxu0
    %v1889 = vadd.f32 0.0, %v1888
    %v1890 = vpop.f32.mrb[0].mxu0
    %v1891 = vpop.f32.mrb[0].mxu0
    %v1892 = vadd.f32 0.0, %v1891
    %v1893 = vpop.f32.mrb[0].mxu0
    %1894 = vmatprep.mubr.bf16.mxu0 0
    %1895 = vmatmul.mubr.bf16.gmra.mrb[0].mxu0 %v1734
    %v1896 = vpop.f32.mrb[0].mxu0
    %v1897 = vadd.f32 0.0, %v1896
    %v1898 = vpop.f32.mrb[0].mxu0
    %v1899 = vpop.f32.mrb[0].mxu0
    %v1900 = vadd.f32 0.0, %v1899
    %v1901 = vpop.f32.mrb[0].mxu0
    %1902 = vmatprep.mubr.bf16.mxu0 0
    %1903 = vmatmul.mubr.bf16.gmra.mrb[0].mxu0 %v1737
    %v1904 = vpop.f32.mrb[0].mxu0
    %v1905 = vadd.f32 0.0, %v1904
    %v1906 = vpop.f32.mrb[0].mxu0
    %v1907 = vpop.f32.mrb[0].mxu0
    %v1908 = vadd.f32 0.0, %v1907
    %v1909 = vpop.f32.mrb[0].mxu0
    %1910 = vmatprep.mubr.bf16.mxu0 0
    %1911 = vmatmul.mubr.bf16.gmra.mrb[0].mxu0 %v1740
    %v1912 = vpop.f32.mrb[0].mxu0
    %v1913 = vadd.f32 0.0, %v1912
    %v1914 = vpop.f32.mrb[0].mxu0
    %v1915 = vpop.f32.mrb[0].mxu0
    %v1916 = vadd.f32 0.0, %v1915
    %v1917 = vpop.f32.mrb[0].mxu0
    %1918 = vmatprep.mubr.bf16.mxu0 0
    %1919 = vmatmul.mubr.bf16.gmra.mrb[0].mxu0 %v1743
    %v1920 = vpop.f32.mrb[0].mxu0
    %v1921 = vadd.f32 0.0, %v1920
    %v1922 = vpop.f32.mrb[0].mxu0
    %v1923 = vpop.f32.mrb[0].mxu0
    %v1924 = vadd.f32 0.0, %v1923
    %v1925 = vpop.f32.mrb[0].mxu0
    %1926 = vmatprep.mubr.bf16.mxu0 0
    %1927 = vmatmul.mubr.bf16.gmra.mrb[0].mxu0 %v1746
    %v1928 = vpop.f32.mrb[0].mxu0
    %v1929 = vadd.f32 0.0, %v1928
    %v1930 = vpop.f32.mrb[0].mxu0
    %v1931 = vpop.f32.mrb[0].mxu0
    %v1932 = vadd.f32 0.0, %v1931
    %v1933 = vpop.f32.mrb[0].mxu0
    %1934 = vmatprep.mubr.bf16.mxu0 0
    %1935 = vmatmul.mubr.bf16.gmra.mrb[0].mxu0 %v1749
    %v1936 = vpop.f32.mrb[0].mxu0
    %v1937 = vadd.f32 0.0, %v1936
    %v1938 = vpop.f32.mrb[0].mxu0
    %v1939 = vpop.f32.mrb[0].mxu0
    %v1940 = vadd.f32 0.0, %v1939
    %v1941 = vpop.f32.mrb[0].mxu0
    %1942 = vmatprep.mubr.bf16.mxu0 0
    %1943 = vmatmul.mubr.bf16.gmra.mrb[0].mxu0 %v1752
    %v1944 = vpop.f32.mrb[0].mxu0
    %v1945 = vadd.f32 0.0, %v1944
    %v1946 = vpop.f32.mrb[0].mxu0
    %v1947 = vpop.f32.mrb[0].mxu0
    %v1948 = vadd.f32 0.0, %v1947
    %v1949 = vpop.f32.mrb[0].mxu0
    %1950 = vmatprep.mubr.bf16.mxu0 0
    %1951 = vmatmul.mubr.bf16.gmra.mrb[0].mxu0 %v1755
    %v1952 = vpop.f32.mrb[0].mxu0
    %v1953 = vadd.f32 0.0, %v1952
    %v1954 = vpop.f32.mrb[0].mxu0
    %v1955 = vpop.f32.mrb[0].mxu0
    %v1956 = vadd.f32 0.0, %v1955
    %v1957 = vpop.f32.mrb[0].mxu0
    %1958 = vmatprep.mubr.bf16.mxu0 0
    %1959 = vmatmul.mubr.bf16.gmra.mrb[0].mxu0 %v1758
    %v1960 = vpop.f32.mrb[0].mxu0
    %v1961 = vadd.f32 0.0, %v1960
    %v1962 = vpop.f32.mrb[0].mxu0
    %v1963 = vpop.f32.mrb[0].mxu0
    %v1964 = vadd.f32 0.0, %v1963
    %v1965 = vpop.f32.mrb[0].mxu0
    %1966 = vmatprep.mubr.bf16.mxu0 0
    %1967 = vmatmul.mubr.bf16.gmra.mrb[0].mxu0 %v1761
    %v1968 = vpop.f32.mrb[0].mxu0
    %v1969 = vadd.f32 0.0, %v1968
    %v1970 = vpop.f32.mrb[0].mxu0
    %v1971 = vpop.f32.mrb[0].mxu0
    %v1972 = vadd.f32 0.0, %v1971
    %v1973 = vpop.f32.mrb[0].mxu0
    %1974 = vmatprep.mubr.bf16.mxu0 0
    %1975 = vmatmul.mubr.bf16.gmra.mrb[0].mxu0 %v1764
    %v1976 = vpop.f32.mrb[0].mxu0
    %v1977 = vadd.f32 0.0, %v1976
    %v1978 = vpop.f32.mrb[0].mxu0
    %v1979 = vpop.f32.mrb[0].mxu0
    %v1980 = vadd.f32 0.0, %v1979
    %v1981 = vpop.f32.mrb[0].mxu0
    %1982 = vmatprep.mubr.bf16.mxu0 0
    %1983 = vmatmul.mubr.bf16.gmra.mrb[0].mxu0 %v1767
    %v1984 = vpop.f32.mrb[0].mxu0
    %v1985 = vadd.f32 0.0, %v1984
    %v1986 = vpop.f32.mrb[0].mxu0
    %v1987 = vpop.f32.mrb[0].mxu0
    %v1988 = vadd.f32 0.0, %v1987
    %v1989 = vpop.f32.mrb[0].mxu0
    %1990 = vmatprep.mubr.bf16.mxu0 0
    %1991 = vmatmul.mubr.bf16.gmra.mrb[0].mxu0 %v1770
    %v1992 = vpop.f32.mrb[0].mxu0
    %v1993 = vadd.f32 0.0, %v1992
    %v1994 = vpop.f32.mrb[0].mxu0
    %v1995 = vpop.f32.mrb[0].mxu0
    %v1996 = vadd.f32 0.0, %v1995
    %v1997 = vpop.f32.mrb[0].mxu0
    %1998 = vmatprep.mubr.bf16.mxu0 0
    %1999 = vmatmul.mubr.bf16.gmra.mrb[0].mxu0 %v1773
    %v2000 = vpop.f32.mrb[0].mxu0
    %v2001 = vadd.f32 0.0, %v2000
    %v2002 = vpop.f32.mrb[0].mxu0
    %v2003 = vpop.f32.mrb[0].mxu0
    %v2004 = vadd.f32 0.0, %v2003
    %v2005 = vpop.f32.mrb[0].mxu0
    %2006 = vmatprep.mubr.bf16.mxu0 0
    %2007 = vmatmul.mubr.bf16.gmra.mrb[0].mxu0 %v1776
    %v2008 = vpop.f32.mrb[0].mxu0
    %v2009 = vadd.f32 0.0, %v2008
    %v2010 = vpop.f32.mrb[0].mxu0
    %v2011 = vpop.f32.mrb[0].mxu0
    %v2012 = vadd.f32 0.0, %v2011
    %v2013 = vpop.f32.mrb[0].mxu0
    %2014 = vmatprep.mubr.bf16.mxu0 0
    %2015 = vmatmul.mubr.bf16.gmra.mrb[0].mxu0 %v1779
    %v2016 = vpop.f32.mrb[0].mxu0
    %v2017 = vadd.f32 0.0, %v2016
    %v2018 = vpop.f32.mrb[0].mxu0
    %v2019 = vpop.f32.mrb[0].mxu0
    %v2020 = vadd.f32 0.0, %v2019
    %v2021 = vpop.f32.mrb[0].mxu0
    %2022 = vmatprep.mubr.bf16.mxu0 0
    %2023 = vmatmul.mubr.bf16.gmra.mrb[0].mxu0 %v1782
    %v2024 = vpop.f32.mrb[0].mxu0
    %v2025 = vadd.f32 0.0, %v2024
    %v2026 = vpop.f32.mrb[0].mxu0
    %v2027 = vpop.f32.mrb[0].mxu0
    %v2028 = vadd.f32 0.0, %v2027
    %v2029 = vpop.f32.mrb[0].mxu0
    %2030 = vmatprep.mubr.bf16.mxu0 0
    %2031 = vmatmul.mubr.bf16.gmra.mrb[0].mxu0 %v1785
    %v2032 = vpop.f32.mrb[0].mxu0
    %v2033 = vadd.f32 0.0, %v2032
    %v2034 = vpop.f32.mrb[0].mxu0
    %v2035 = vpop.f32.mrb[0].mxu0
    %v2036 = vadd.f32 0.0, %v2035
    %v2037 = vpop.f32.mrb[0].mxu0
    %2038 = vmatprep.mubr.bf16.mxu0 0
    %2039 = vmatmul.mubr.bf16.gmra.mrb[0].mxu0 %v1788
    %v2040 = vpop.f32.mrb[0].mxu0
    %v2041 = vadd.f32 0.0, %v2040
    %v2042 = vpop.f32.mrb[0].mxu0
    %v2043 = vpop.f32.mrb[0].mxu0
    %v2044 = vadd.f32 0.0, %v2043
    %v2045 = vpop.f32.mrb[0].mxu0
    %2046 = vmatprep.mubr.bf16.mxu0 0
    %2047 = vmatmul.mubr.bf16.gmra.mrb[0].mxu0 %v1791
    %v2048 = vpop.f32.mrb[0].mxu0
    %v2049 = vadd.f32 0.0, %v2048
    %v2050 = vpop.f32.mrb[0].mxu0
    %v2051 = vpop.f32.mrb[0].mxu0
    %v2052 = vadd.f32 0.0, %v2051
    %v2053 = vpop.f32.mrb[0].mxu0
    %2054 = vmatprep.mubr.bf16.mxu0 0
    %2055 = vmatmul.mubr.bf16.gmra.mrb[0].mxu0 %v1794
    %v2056 = vpop.f32.mrb[0].mxu0
    %v2057 = vadd.f32 0.0, %v2056
    %v2058 = vpop.f32.mrb[0].mxu0
    %v2059 = vpop.f32.mrb[0].mxu0
    %v2060 = vadd.f32 0.0, %v2059
    %v2061 = vpop.f32.mrb[0].mxu0
    %2062 = vmatprep.mubr.bf16.mxu0 0
    %2063 = vmatmul.mubr.bf16.gmra.mrb[0].mxu0 %v1797
    %v2064 = vpop.f32.mrb[0].mxu0
    %v2065 = vadd.f32 0.0, %v2064
    %v2066 = vpop.f32.mrb[0].mxu0
    %v2067 = vpop.f32.mrb[0].mxu0
    %v2068 = vadd.f32 0.0, %v2067
    %v2069 = vpop.f32.mrb[0].mxu0
    %2070 = vmatprep.mubr.bf16.mxu0 0
    %2071 = vmatmul.mubr.bf16.gmra.mrb[0].mxu0 %v1800
    %v2072 = vpop.f32.mrb[0].mxu0
    %v2073 = vadd.f32 0.0, %v2072
    %v2074 = vpop.f32.mrb[0].mxu0
    %v2075 = vpop.f32.mrb[0].mxu0
    %v2076 = vadd.f32 0.0, %v2075
    %v2077 = vpop.f32.mrb[0].mxu0
    %2078 = vmatprep.mubr.bf16.mxu0 0
    %2079 = vmatmul.mubr.bf16.gmra.mrb[0].mxu0 %v1803
    %v2080 = vpop.f32.mrb[0].mxu0
    %v2081 = vadd.f32 0.0, %v2080
    %v2082 = vpop.f32.mrb[0].mxu0
    %v2083 = vpop.f32.mrb[0].mxu0
    %v2084 = vadd.f32 0.0, %v2083
    %v2085 = vpop.f32.mrb[0].mxu0
    %2086 = vmatprep.mubr.bf16.mxu0 0
    %2087 = vmatmul.mubr.bf16.gmra.mrb[0].mxu0 %v1806
    %v2088 = vpop.f32.mrb[0].mxu0
    %v2089 = vadd.f32 0.0, %v2088
    %v2090 = vpop.f32.mrb[0].mxu0
    %v2091 = vpop.f32.mrb[0].mxu0
    %v2092 = vadd.f32 0.0, %v2091
    %v2093 = vpop.f32.mrb[0].mxu0
    %2094 = vmatprep.mubr.bf16.mxu0 0
    %2095 = vmatmul.mubr.bf16.gmra.mrb[0].mxu0 %v1809
    %v2096 = vpop.f32.mrb[0].mxu0
    %v2097 = vadd.f32 0.0, %v2096
    %v2098 = vpop.f32.mrb[0].mxu0
    %v2099 = vpop.f32.mrb[0].mxu0
    %v2100 = vadd.f32 0.0, %v2099
    %v2101 = vpop.f32.mrb[0].mxu0
    %2102 = vdwg.mxu0
    %v2103 = vld [vmem:[#allocation2] sm:$0xff]
    %v2104 = vld [vmem:[#allocation2 + $0x8] sm:$0xff]
    %v2105 = vld [vmem:[#allocation2 + $0x10] sm:$0xff]
    %v2106 = vld [vmem:[#allocation2 + $0x18] sm:$0xff]
    %v2107 = vld [vmem:[#allocation2 + $0x20] sm:$0xff]
    %v2108 = vld [vmem:[#allocation2 + $0x28] sm:$0xff]
    %v2109 = vld [vmem:[#allocation2 + $0x30] sm:$0xff]
    %v2110 = vld [vmem:[#allocation2 + $0x38] sm:$0xff]
    %v2111 = vld [vmem:[#allocation2 + $0x40] sm:$0xff]
    %v2112 = vld [vmem:[#allocation2 + $0x48] sm:$0xff]
    %v2113 = vld [vmem:[#allocation2 + $0x50] sm:$0xff]
    %v2114 = vld [vmem:[#allocation2 + $0x58] sm:$0xff]
    %v2115 = vld [vmem:[#allocation2 + $0x60] sm:$0xff]
    %v2116 = vld [vmem:[#allocation2 + $0x68] sm:$0xff]
    %v2117 = vld [vmem:[#allocation2 + $0x70] sm:$0xff]
    %v2118 = vld [vmem:[#allocation2 + $0x78] sm:$0xff]
    %v2119 = vld [vmem:[#allocation2 + $0x80] sm:$0xff]
    %v2120 = vld [vmem:[#allocation2 + $0x88] sm:$0xff]
    %v2121 = vld [vmem:[#allocation2 + $0x90] sm:$0xff]
    %v2122 = vld [vmem:[#allocation2 + $0x98] sm:$0xff]
    %v2123 = vld [vmem:[#allocation2 + $0xa0] sm:$0xff]
    %v2124 = vld [vmem:[#allocation2 + $0xa8] sm:$0xff]
    %v2125 = vld [vmem:[#allocation2 + $0xb0] sm:$0xff]
    %v2126 = vld [vmem:[#allocation2 + $0xb8] sm:$0xff]
    %v2127 = vld [vmem:[#allocation2 + $0xc0] sm:$0xff]
    %v2128 = vld [vmem:[#allocation2 + $0xc8] sm:$0xff]
    %v2129 = vld [vmem:[#allocation2 + $0xd0] sm:$0xff]
    %v2130 = vld [vmem:[#allocation2 + $0xd8] sm:$0xff]
    %v2131 = vld [vmem:[#allocation2 + $0xe0] sm:$0xff]
    %v2132 = vld [vmem:[#allocation2 + $0xe8] sm:$0xff]
    %v2133 = vld [vmem:[#allocation2 + $0xf0] sm:$0xff]
    %v2134 = vld [vmem:[#allocation2 + $0xf8] sm:$0xff]
    %v2135 = vld [vmem:[#allocation2 + $0x100] sm:$0xff]
    %v2136 = vld [vmem:[#allocation2 + $0x108] sm:$0xff]
    %v2137 = vld [vmem:[#allocation2 + $0x110] sm:$0xff]
    %v2138 = vld [vmem:[#allocation2 + $0x118] sm:$0xff]
    %v2139 = vld [vmem:[#allocation2 + $0x120] sm:$0xff]
    %v2140 = vld [vmem:[#allocation2 + $0x128] sm:$0xff]
    %v2141 = vld [vmem:[#allocation2 + $0x130] sm:$0xff]
    %v2142 = vld [vmem:[#allocation2 + $0x138] sm:$0xff]
    %v2143 = vld [vmem:[#allocation2 + $0x140] sm:$0xff]
    %v2144 = vld [vmem:[#allocation2 + $0x148] sm:$0xff]
    %v2145 = vld [vmem:[#allocation2 + $0x150] sm:$0xff]
    %v2146 = vld [vmem:[#allocation2 + $0x158] sm:$0xff]
    %v2147 = vld [vmem:[#allocation2 + $0x160] sm:$0xff]
    %v2148 = vld [vmem:[#allocation2 + $0x168] sm:$0xff]
    %v2149 = vld [vmem:[#allocation2 + $0x170] sm:$0xff]
    %v2150 = vld [vmem:[#allocation2 + $0x178] sm:$0xff]
    %v2151 = vld [vmem:[#allocation2 + $0x180] sm:$0xff]
    %v2152 = vld [vmem:[#allocation2 + $0x188] sm:$0xff]
    %v2153 = vld [vmem:[#allocation2 + $0x190] sm:$0xff]
    %v2154 = vld [vmem:[#allocation2 + $0x198] sm:$0xff]
    %v2155 = vld [vmem:[#allocation2 + $0x1a0] sm:$0xff]
    %v2156 = vld [vmem:[#allocation2 + $0x1a8] sm:$0xff]
    %v2157 = vld [vmem:[#allocation2 + $0x1b0] sm:$0xff]
    %v2158 = vld [vmem:[#allocation2 + $0x1b8] sm:$0xff]
    %v2159 = vld [vmem:[#allocation2 + $0x1c0] sm:$0xff]
    %v2160 = vld [vmem:[#allocation2 + $0x1c8] sm:$0xff]
    %v2161 = vld [vmem:[#allocation2 + $0x1d0] sm:$0xff]
    %v2162 = vld [vmem:[#allocation2 + $0x1d8] sm:$0xff]
    %v2163 = vld [vmem:[#allocation2 + $0x1e0] sm:$0xff]
    %v2164 = vld [vmem:[#allocation2 + $0x1e8] sm:$0xff]
    %v2165 = vld [vmem:[#allocation2 + $0x1f0] sm:$0xff]
    %v2166 = vld [vmem:[#allocation2 + $0x1f8] sm:$0xff]
    %v2167 = vadd.f32 %v2103, %v1849
    %v2168 = vadd.f32 %v2104, %v1852
    %v2169 = vadd.f32 %v2105, %v1857
    %v2170 = vadd.f32 %v2106, %v1860
    %v2171 = vadd.f32 %v2107, %v1865
    %v2172 = vadd.f32 %v2108, %v1868
    %v2173 = vadd.f32 %v2109, %v1873
    %v2174 = vadd.f32 %v2110, %v1876
    %v2175 = vadd.f32 %v2111, %v1881
    %v2176 = vadd.f32 %v2112, %v1884
    %v2177 = vadd.f32 %v2113, %v1889
    %v2178 = vadd.f32 %v2114, %v1892
    %v2179 = vadd.f32 %v2115, %v1897
    %v2180 = vadd.f32 %v2116, %v1900
    %v2181 = vadd.f32 %v2117, %v1905
    %v2182 = vadd.f32 %v2118, %v1908
    %v2183 = vadd.f32 %v2119, %v1913
    %v2184 = vadd.f32 %v2120, %v1916
    %v2185 = vadd.f32 %v2121, %v1921
    %v2186 = vadd.f32 %v2122, %v1924
    %v2187 = vadd.f32 %v2123, %v1929
    %v2188 = vadd.f32 %v2124, %v1932
    %v2189 = vadd.f32 %v2125, %v1937
    %v2190 = vadd.f32 %v2126, %v1940
    %v2191 = vadd.f32 %v2127, %v1945
    %v2192 = vadd.f32 %v2128, %v1948
    %v2193 = vadd.f32 %v2129, %v1953
    %v2194 = vadd.f32 %v2130, %v1956
    %v2195 = vadd.f32 %v2131, %v1961
    %v2196 = vadd.f32 %v2132, %v1964
    %v2197 = vadd.f32 %v2133, %v1969
    %v2198 = vadd.f32 %v2134, %v1972
    %v2199 = vadd.f32 %v2135, %v1977
    %v2200 = vadd.f32 %v2136, %v1980
    %v2201 = vadd.f32 %v2137, %v1985
    %v2202 = vadd.f32 %v2138, %v1988
    %v2203 = vadd.f32 %v2139, %v1993
    %v2204 = vadd.f32 %v2140, %v1996
    %v2205 = vadd.f32 %v2141, %v2001
    %v2206 = vadd.f32 %v2142, %v2004
    %v2207 = vadd.f32 %v2143, %v2009
    %v2208 = vadd.f32 %v2144, %v2012
    %v2209 = vadd.f32 %v2145, %v2017
    %v2210 = vadd.f32 %v2146, %v2020
    %v2211 = vadd.f32 %v2147, %v2025
    %v2212 = vadd.f32 %v2148, %v2028
    %v2213 = vadd.f32 %v2149, %v2033
    %v2214 = vadd.f32 %v2150, %v2036
    %v2215 = vadd.f32 %v2151, %v2041
    %v2216 = vadd.f32 %v2152, %v2044
    %v2217 = vadd.f32 %v2153, %v2049
    %v2218 = vadd.f32 %v2154, %v2052
    %v2219 = vadd.f32 %v2155, %v2057
    %v2220 = vadd.f32 %v2156, %v2060
    %v2221 = vadd.f32 %v2157, %v2065
    %v2222 = vadd.f32 %v2158, %v2068
    %v2223 = vadd.f32 %v2159, %v2073
    %v2224 = vadd.f32 %v2160, %v2076
    %v2225 = vadd.f32 %v2161, %v2081
    %v2226 = vadd.f32 %v2162, %v2084
    %v2227 = vadd.f32 %v2163, %v2089
    %v2228 = vadd.f32 %v2164, %v2092
    %v2229 = vadd.f32 %v2165, %v2097
    %v2230 = vadd.f32 %v2166, %v2100
    %2231 = vst.msk [vmem:[#allocation2] sm:$0xff] %vm685, %v2167
    %2232 = vst.msk [vmem:[#allocation2 + $0x8] sm:$0xff] %vm685, %v2168
    %2233 = vst.msk [vmem:[#allocation2 + $0x10] sm:$0xff] %vm685, %v2169
    %2234 = vst.msk [vmem:[#allocation2 + $0x18] sm:$0xff] %vm685, %v2170
    %2235 = vst.msk [vmem:[#allocation2 + $0x20] sm:$0xff] %vm685, %v2171
    %2236 = vst.msk [vmem:[#allocation2 + $0x28] sm:$0xff] %vm685, %v2172
    %2237 = vst.msk [vmem:[#allocation2 + $0x30] sm:$0xff] %vm685, %v2173
    %2238 = vst.msk [vmem:[#allocation2 + $0x38] sm:$0xff] %vm685, %v2174
    %2239 = vst.msk [vmem:[#allocation2 + $0x40] sm:$0xff] %vm685, %v2175
    %2240 = vst.msk [vmem:[#allocation2 + $0x48] sm:$0xff] %vm685, %v2176
    %2241 = vst.msk [vmem:[#allocation2 + $0x50] sm:$0xff] %vm685, %v2177
    %2242 = vst.msk [vmem:[#allocation2 + $0x58] sm:$0xff] %vm685, %v2178
    %2243 = vst.msk [vmem:[#allocation2 + $0x60] sm:$0xff] %vm685, %v2179
    %2244 = vst.msk [vmem:[#allocation2 + $0x68] sm:$0xff] %vm685, %v2180
    %2245 = vst.msk [vmem:[#allocation2 + $0x70] sm:$0xff] %vm685, %v2181
    %2246 = vst.msk [vmem:[#allocation2 + $0x78] sm:$0xff] %vm685, %v2182
    %2247 = vst.msk [vmem:[#allocation2 + $0x80] sm:$0xff] %vm685, %v2183
    %2248 = vst.msk [vmem:[#allocation2 + $0x88] sm:$0xff] %vm685, %v2184
    %2249 = vst.msk [vmem:[#allocation2 + $0x90] sm:$0xff] %vm685, %v2185
    %2250 = vst.msk [vmem:[#allocation2 + $0x98] sm:$0xff] %vm685, %v2186
    %2251 = vst.msk [vmem:[#allocation2 + $0xa0] sm:$0xff] %vm685, %v2187
    %2252 = vst.msk [vmem:[#allocation2 + $0xa8] sm:$0xff] %vm685, %v2188
    %2253 = vst.msk [vmem:[#allocation2 + $0xb0] sm:$0xff] %vm685, %v2189
    %2254 = vst.msk [vmem:[#allocation2 + $0xb8] sm:$0xff] %vm685, %v2190
    %2255 = vst.msk [vmem:[#allocation2 + $0xc0] sm:$0xff] %vm685, %v2191
    %2256 = vst.msk [vmem:[#allocation2 + $0xc8] sm:$0xff] %vm685, %v2192
    %2257 = vst.msk [vmem:[#allocation2 + $0xd0] sm:$0xff] %vm685, %v2193
    %2258 = vst.msk [vmem:[#allocation2 + $0xd8] sm:$0xff] %vm685, %v2194
    %2259 = vst.msk [vmem:[#allocation2 + $0xe0] sm:$0xff] %vm685, %v2195
    %2260 = vst.msk [vmem:[#allocation2 + $0xe8] sm:$0xff] %vm685, %v2196
    %2261 = vst.msk [vmem:[#allocation2 + $0xf0] sm:$0xff] %vm685, %v2197
    %2262 = vst.msk [vmem:[#allocation2 + $0xf8] sm:$0xff] %vm685, %v2198
    %2263 = vst.msk [vmem:[#allocation2 + $0x100] sm:$0xff] %vm685, %v2199
    %2264 = vst.msk [vmem:[#allocation2 + $0x108] sm:$0xff] %vm685, %v2200
    %2265 = vst.msk [vmem:[#allocation2 + $0x110] sm:$0xff] %vm685, %v2201
    %2266 = vst.msk [vmem:[#allocation2 + $0x118] sm:$0xff] %vm685, %v2202
    %2267 = vst.msk [vmem:[#allocation2 + $0x120] sm:$0xff] %vm685, %v2203
    %2268 = vst.msk [vmem:[#allocation2 + $0x128] sm:$0xff] %vm685, %v2204
    %2269 = vst.msk [vmem:[#allocation2 + $0x130] sm:$0xff] %vm685, %v2205
    %2270 = vst.msk [vmem:[#allocation2 + $0x138] sm:$0xff] %vm685, %v2206
    %2271 = vst.msk [vmem:[#allocation2 + $0x140] sm:$0xff] %vm685, %v2207
    %2272 = vst.msk [vmem:[#allocation2 + $0x148] sm:$0xff] %vm685, %v2208
    %2273 = vst.msk [vmem:[#allocation2 + $0x150] sm:$0xff] %vm685, %v2209
    %2274 = vst.msk [vmem:[#allocation2 + $0x158] sm:$0xff] %vm685, %v2210
    %2275 = vst.msk [vmem:[#allocation2 + $0x160] sm:$0xff] %vm685, %v2211
    %2276 = vst.msk [vmem:[#allocation2 + $0x168] sm:$0xff] %vm685, %v2212
    %2277 = vst.msk [vmem:[#allocation2 + $0x170] sm:$0xff] %vm685, %v2213
    %2278 = vst.msk [vmem:[#allocation2 + $0x178] sm:$0xff] %vm685, %v2214
    %2279 = vst.msk [vmem:[#allocation2 + $0x180] sm:$0xff] %vm685, %v2215
    %2280 = vst.msk [vmem:[#allocation2 + $0x188] sm:$0xff] %vm685, %v2216
    %2281 = vst.msk [vmem:[#allocation2 + $0x190] sm:$0xff] %vm685, %v2217
    %2282 = vst.msk [vmem:[#allocation2 + $0x198] sm:$0xff] %vm685, %v2218
    %2283 = vst.msk [vmem:[#allocation2 + $0x1a0] sm:$0xff] %vm685, %v2219
    %2284 = vst.msk [vmem:[#allocation2 + $0x1a8] sm:$0xff] %vm685, %v2220
    %2285 = vst.msk [vmem:[#allocation2 + $0x1b0] sm:$0xff] %vm685, %v2221
    %2286 = vst.msk [vmem:[#allocation2 + $0x1b8] sm:$0xff] %vm685, %v2222
    %2287 = vst.msk [vmem:[#allocation2 + $0x1c0] sm:$0xff] %vm685, %v2223
    %2288 = vst.msk [vmem:[#allocation2 + $0x1c8] sm:$0xff] %vm685, %v2224
    %2289 = vst.msk [vmem:[#allocation2 + $0x1d0] sm:$0xff] %vm685, %v2225
    %2290 = vst.msk [vmem:[#allocation2 + $0x1d8] sm:$0xff] %vm685, %v2226
    %2291 = vst.msk [vmem:[#allocation2 + $0x1e0] sm:$0xff] %vm685, %v2227
    %2292 = vst.msk [vmem:[#allocation2 + $0x1e8] sm:$0xff] %vm685, %v2228
    %2293 = vst.msk [vmem:[#allocation2 + $0x1f0] sm:$0xff] %vm685, %v2229
    %2294 = vst.msk [vmem:[#allocation2 + $0x1f8] sm:$0xff] %vm685, %v2230
    %v2295 = vld [vmem:[#allocation3] sm:$0xe]
    %v2296 = vld [vmem:[#allocation3 + $0x4] sm:$0xf]
    %v2297 = vld [vmem:[#allocation3 + $0x8] sm:$0x1]
    %v2298 = vld [vmem:[#allocation3 + $0xc] sm:$0xe]
    %v2299 = vld [vmem:[#allocation3 + $0x10] sm:$0xf]
    %v2300 = vld [vmem:[#allocation3 + $0x14] sm:$0x1]
    %v2301 = vld [vmem:[#allocation3 + $0x18] sm:$0xe]
    %v2302 = vld [vmem:[#allocation3 + $0x1c] sm:$0xf]
    %v2303 = vld [vmem:[#allocation3 + $0x20] sm:$0x1]
    %v2304 = vld [vmem:[#allocation3 + $0x24] sm:$0xe]
    %v2305 = vld [vmem:[#allocation3 + $0x28] sm:$0xf]
    %v2306 = vld [vmem:[#allocation3 + $0x2c] sm:$0x1]
    %v2307 = vld [vmem:[#allocation3 + $0x30] sm:$0xe]
    %v2308 = vld [vmem:[#allocation3 + $0x34] sm:$0xf]
    %v2309 = vld [vmem:[#allocation3 + $0x38] sm:$0x1]
    %v2310 = vld [vmem:[#allocation3 + $0x3c] sm:$0xe]
    %v2311 = vld [vmem:[#allocation3 + $0x40] sm:$0xf]
    %v2312 = vld [vmem:[#allocation3 + $0x44] sm:$0x1]
    %v2313 = vld [vmem:[#allocation3 + $0x48] sm:$0xe]
    %v2314 = vld [vmem:[#allocation3 + $0x4c] sm:$0xf]
    %v2315 = vld [vmem:[#allocation3 + $0x50] sm:$0x1]
    %v2316 = vld [vmem:[#allocation3 + $0x54] sm:$0xe]
    %v2317 = vld [vmem:[#allocation3 + $0x58] sm:$0xf]
    %v2318 = vld [vmem:[#allocation3 + $0x5c] sm:$0x1]
    %v2319 = vld [vmem:[#allocation3 + $0x60] sm:$0xe]
    %v2320 = vld [vmem:[#allocation3 + $0x64] sm:$0xf]
    %v2321 = vld [vmem:[#allocation3 + $0x68] sm:$0x1]
    %v2322 = vld [vmem:[#allocation3 + $0x6c] sm:$0xe]
    %v2323 = vld [vmem:[#allocation3 + $0x70] sm:$0xf]
    %v2324 = vld [vmem:[#allocation3 + $0x74] sm:$0x1]
    %v2325 = vld [vmem:[#allocation3 + $0x78] sm:$0xe]
    %v2326 = vld [vmem:[#allocation3 + $0x7c] sm:$0xf]
    %v2327 = vld [vmem:[#allocation3 + $0x80] sm:$0x1]
    %v2328 = vld [vmem:[#allocation3 + $0x84] sm:$0xe]
    %v2329 = vld [vmem:[#allocation3 + $0x88] sm:$0xf]
    %v2330 = vld [vmem:[#allocation3 + $0x8c] sm:$0x1]
    %v2331 = vld [vmem:[#allocation3 + $0x90] sm:$0xe]
    %v2332 = vld [vmem:[#allocation3 + $0x94] sm:$0xf]
    %v2333 = vld [vmem:[#allocation3 + $0x98] sm:$0x1]
    %v2334 = vld [vmem:[#allocation3 + $0x9c] sm:$0xe]
    %v2335 = vld [vmem:[#allocation3 + $0xa0] sm:$0xf]
    %v2336 = vld [vmem:[#allocation3 + $0xa4] sm:$0x1]
    %v2337 = vld [vmem:[#allocation3 + $0xa8] sm:$0xe]
    %v2338 = vld [vmem:[#allocation3 + $0xac] sm:$0xf]
    %v2339 = vld [vmem:[#allocation3 + $0xb0] sm:$0x1]
    %v2340 = vld [vmem:[#allocation3 + $0xb4] sm:$0xe]
    %v2341 = vld [vmem:[#allocation3 + $0xb8] sm:$0xf]
    %v2342 = vld [vmem:[#allocation3 + $0xbc] sm:$0x1]
    %v2343 = vld [vmem:[#allocation3 + $0xd8] sm:$0xe]
    %v2344 = vld [vmem:[#allocation3 + $0xdc] sm:$0xf]
    %v2345 = vld [vmem:[#allocation3 + $0xe0] sm:$0x1]
    %v2346 = vld [vmem:[#allocation3 + $0xe4] sm:$0xe]
    %v2347 = vld [vmem:[#allocation3 + $0xe8] sm:$0xf]
    %v2348 = vld [vmem:[#allocation3 + $0xec] sm:$0x1]
    %v2349 = vld [vmem:[#allocation3 + $0xf0] sm:$0xe]
    %v2350 = vld [vmem:[#allocation3 + $0xf4] sm:$0xf]
    %v2351 = vld [vmem:[#allocation3 + $0xf8] sm:$0x1]
    %v2352 = vld [vmem:[#allocation3 + $0xfc] sm:$0xe]
    %v2353 = vld [vmem:[#allocation3 + $0x100] sm:$0xf]
    %v2354 = vld [vmem:[#allocation3 + $0x104] sm:$0x1]
    %v2355 = vld [vmem:[#allocation3 + $0x108] sm:$0xe]
    %v2356 = vld [vmem:[#allocation3 + $0x10c] sm:$0xf]
    %v2357 = vld [vmem:[#allocation3 + $0x110] sm:$0x1]
    %v2358 = vld [vmem:[#allocation3 + $0x114] sm:$0xe]
    %v2359 = vld [vmem:[#allocation3 + $0x118] sm:$0xf]
    %v2360 = vld [vmem:[#allocation3 + $0x11c] sm:$0x1]
    %v2361 = vld [vmem:[#allocation3 + $0x120] sm:$0xe]
    %v2362 = vld [vmem:[#allocation3 + $0x124] sm:$0xf]
    %v2363 = vld [vmem:[#allocation3 + $0x128] sm:$0x1]
    %v2364 = vld [vmem:[#allocation3 + $0x12c] sm:$0xe]
    %v2365 = vld [vmem:[#allocation3 + $0x130] sm:$0xf]
    %v2366 = vld [vmem:[#allocation3 + $0x134] sm:$0x1]
    %v2367 = vld [vmem:[#allocation3 + $0x138] sm:$0xe]
    %v2368 = vld [vmem:[#allocation3 + $0x13c] sm:$0xf]
    %v2369 = vld [vmem:[#allocation3 + $0x140] sm:$0x1]
    %v2370 = vld [vmem:[#allocation3 + $0x144] sm:$0xe]
    %v2371 = vld [vmem:[#allocation3 + $0x148] sm:$0xf]
    %v2372 = vld [vmem:[#allocation3 + $0x14c] sm:$0x1]
    %v2373 = vld [vmem:[#allocation3 + $0x150] sm:$0xe]
    %v2374 = vld [vmem:[#allocation3 + $0x154] sm:$0xf]
    %v2375 = vld [vmem:[#allocation3 + $0x158] sm:$0x1]
    %v2376 = vld [vmem:[#allocation3 + $0x15c] sm:$0xe]
    %v2377 = vld [vmem:[#allocation3 + $0x160] sm:$0xf]
    %v2378 = vld [vmem:[#allocation3 + $0x164] sm:$0x1]
    %v2379 = vld [vmem:[#allocation3 + $0x168] sm:$0xe]
    %v2380 = vld [vmem:[#allocation3 + $0x16c] sm:$0xf]
    %v2381 = vld [vmem:[#allocation3 + $0x170] sm:$0x1]
    %v2382 = vld [vmem:[#allocation3 + $0x174] sm:$0xe]
    %v2383 = vld [vmem:[#allocation3 + $0x178] sm:$0xf]
    %v2384 = vld [vmem:[#allocation3 + $0x17c] sm:$0x1]
    %v2385 = vld [vmem:[#allocation3 + $0x180] sm:$0xe]
    %v2386 = vld [vmem:[#allocation3 + $0x184] sm:$0xf]
    %v2387 = vld [vmem:[#allocation3 + $0x188] sm:$0x1]
    %v2388 = vld [vmem:[#allocation3 + $0x18c] sm:$0xe]
    %v2389 = vld [vmem:[#allocation3 + $0x190] sm:$0xf]
    %v2390 = vld [vmem:[#allocation3 + $0x194] sm:$0x1]
    %vm2487 = vcmask 1042432
    %vm2488 = vcmask 1046532
    %vm2489 = vmor %vm2487, %vm2488
    %v2490 = vrot.slane %v2295, 5
    %v2491 = vrot.slane %v2490, 4
    %v2492 = vrot.slane %v2296, 5
    %v2493 = vsel %vm2489, %v2491, %v2492
    %v2494 = vrot.slane %v2492, 4
    %v2495 = vrot.slane %v2297, 5
    %v2496 = vsel %vm2489, %v2494, %v2495
    %v2497 = vrot.slane %v2298, 5
    %v2498 = vrot.slane %v2497, 4
    %v2499 = vrot.slane %v2299, 5
    %v2500 = vsel %vm2489, %v2498, %v2499
    %v2501 = vrot.slane %v2499, 4
    %v2502 = vrot.slane %v2300, 5
    %v2503 = vsel %vm2489, %v2501, %v2502
    %v2504 = vrot.slane %v2301, 5
    %v2505 = vrot.slane %v2504, 4
    %v2506 = vrot.slane %v2302, 5
    %v2507 = vsel %vm2489, %v2505, %v2506
    %v2508 = vrot.slane %v2506, 4
    %v2509 = vrot.slane %v2303, 5
    %v2510 = vsel %vm2489, %v2508, %v2509
    %v2511 = vrot.slane %v2304, 5
    %v2512 = vrot.slane %v2511, 4
    %v2513 = vrot.slane %v2305, 5
    %v2514 = vsel %vm2489, %v2512, %v2513
    %v2515 = vrot.slane %v2513, 4
    %v2516 = vrot.slane %v2306, 5
    %v2517 = vsel %vm2489, %v2515, %v2516
    %v2518 = vrot.slane %v2307, 5
    %v2519 = vrot.slane %v2518, 4
    %v2520 = vrot.slane %v2308, 5
    %v2521 = vsel %vm2489, %v2519, %v2520
    %v2522 = vrot.slane %v2520, 4
    %v2523 = vrot.slane %v2309, 5
    %v2524 = vsel %vm2489, %v2522, %v2523
    %v2525 = vrot.slane %v2310, 5
    %v2526 = vrot.slane %v2525, 4
    %v2527 = vrot.slane %v2311, 5
    %v2528 = vsel %vm2489, %v2526, %v2527
    %v2529 = vrot.slane %v2527, 4
    %v2530 = vrot.slane %v2312, 5
    %v2531 = vsel %vm2489, %v2529, %v2530
    %v2532 = vrot.slane %v2313, 5
    %v2533 = vrot.slane %v2532, 4
    %v2534 = vrot.slane %v2314, 5
    %v2535 = vsel %vm2489, %v2533, %v2534
    %v2536 = vrot.slane %v2534, 4
    %v2537 = vrot.slane %v2315, 5
    %v2538 = vsel %vm2489, %v2536, %v2537
    %v2539 = vrot.slane %v2316, 5
    %v2540 = vrot.slane %v2539, 4
    %v2541 = vrot.slane %v2317, 5
    %v2542 = vsel %vm2489, %v2540, %v2541
    %v2543 = vrot.slane %v2541, 4
    %v2544 = vrot.slane %v2318, 5
    %v2545 = vsel %vm2489, %v2543, %v2544
    %v2546 = vrot.slane %v2319, 5
    %v2547 = vrot.slane %v2546, 4
    %v2548 = vrot.slane %v2320, 5
    %v2549 = vsel %vm2489, %v2547, %v2548
    %v2550 = vrot.slane %v2548, 4
    %v2551 = vrot.slane %v2321, 5
    %v2552 = vsel %vm2489, %v2550, %v2551
    %v2553 = vrot.slane %v2322, 5
    %v2554 = vrot.slane %v2553, 4
    %v2555 = vrot.slane %v2323, 5
    %v2556 = vsel %vm2489, %v2554, %v2555
    %v2557 = vrot.slane %v2555, 4
    %v2558 = vrot.slane %v2324, 5
    %v2559 = vsel %vm2489, %v2557, %v2558
    %v2560 = vrot.slane %v2325, 5
    %v2561 = vrot.slane %v2560, 4
    %v2562 = vrot.slane %v2326, 5
    %v2563 = vsel %vm2489, %v2561, %v2562
    %v2564 = vrot.slane %v2562, 4
    %v2565 = vrot.slane %v2327, 5
    %v2566 = vsel %vm2489, %v2564, %v2565
    %v2567 = vrot.slane %v2328, 5
    %v2568 = vrot.slane %v2567, 4
    %v2569 = vrot.slane %v2329, 5
    %v2570 = vsel %vm2489, %v2568, %v2569
    %v2571 = vrot.slane %v2569, 4
    %v2572 = vrot.slane %v2330, 5
    %v2573 = vsel %vm2489, %v2571, %v2572
    %v2574 = vrot.slane %v2331, 5
    %v2575 = vrot.slane %v2574, 4
    %v2576 = vrot.slane %v2332, 5
    %v2577 = vsel %vm2489, %v2575, %v2576
    %v2578 = vrot.slane %v2576, 4
    %v2579 = vrot.slane %v2333, 5
    %v2580 = vsel %vm2489, %v2578, %v2579
    %v2581 = vrot.slane %v2334, 5
    %v2582 = vrot.slane %v2581, 4
    %v2583 = vrot.slane %v2335, 5
    %v2584 = vsel %vm2489, %v2582, %v2583
    %v2585 = vrot.slane %v2583, 4
    %v2586 = vrot.slane %v2336, 5
    %v2587 = vsel %vm2489, %v2585, %v2586
    %v2588 = vrot.slane %v2337, 5
    %v2589 = vrot.slane %v2588, 4
    %v2590 = vrot.slane %v2338, 5
    %v2591 = vsel %vm2489, %v2589, %v2590
    %v2592 = vrot.slane %v2590, 4
    %v2593 = vrot.slane %v2339, 5
    %v2594 = vsel %vm2489, %v2592, %v2593
    %v2595 = vrot.slane %v2340, 5
    %v2596 = vrot.slane %v2595, 4
    %v2597 = vrot.slane %v2341, 5
    %v2598 = vsel %vm2489, %v2596, %v2597
    %v2599 = vrot.slane %v2597, 4
    %v2600 = vrot.slane %v2342, 5
    %v2601 = vsel %vm2489, %v2599, %v2600
    %v2602 = vrot.slane %v2343, 5
    %v2603 = vrot.slane %v2602, 4
    %v2604 = vrot.slane %v2344, 5
    %v2605 = vsel %vm2489, %v2603, %v2604
    %v2606 = vrot.slane %v2604, 4
    %v2607 = vrot.slane %v2345, 5
    %v2608 = vsel %vm2489, %v2606, %v2607
    %v2609 = vrot.slane %v2346, 5
    %v2610 = vrot.slane %v2609, 4
    %v2611 = vrot.slane %v2347, 5
    %v2612 = vsel %vm2489, %v2610, %v2611
    %v2613 = vrot.slane %v2611, 4
    %v2614 = vrot.slane %v2348, 5
    %v2615 = vsel %vm2489, %v2613, %v2614
    %v2616 = vrot.slane %v2349, 5
    %v2617 = vrot.slane %v2616, 4
    %v2618 = vrot.slane %v2350, 5
    %v2619 = vsel %vm2489, %v2617, %v2618
    %v2620 = vrot.slane %v2618, 4
    %v2621 = vrot.slane %v2351, 5
    %v2622 = vsel %vm2489, %v2620, %v2621
    %v2623 = vrot.slane %v2352, 5
    %v2624 = vrot.slane %v2623, 4
    %v2625 = vrot.slane %v2353, 5
    %v2626 = vsel %vm2489, %v2624, %v2625
    %v2627 = vrot.slane %v2625, 4
    %v2628 = vrot.slane %v2354, 5
    %v2629 = vsel %vm2489, %v2627, %v2628
    %v2630 = vrot.slane %v2355, 5
    %v2631 = vrot.slane %v2630, 4
    %v2632 = vrot.slane %v2356, 5
    %v2633 = vsel %vm2489, %v2631, %v2632
    %v2634 = vrot.slane %v2632, 4
    %v2635 = vrot.slane %v2357, 5
    %v2636 = vsel %vm2489, %v2634, %v2635
    %v2637 = vrot.slane %v2358, 5
    %v2638 = vrot.slane %v2637, 4
    %v2639 = vrot.slane %v2359, 5
    %v2640 = vsel %vm2489, %v2638, %v2639
    %v2641 = vrot.slane %v2639, 4
    %v2642 = vrot.slane %v2360, 5
    %v2643 = vsel %vm2489, %v2641, %v2642
    %v2644 = vrot.slane %v2361, 5
    %v2645 = vrot.slane %v2644, 4
    %v2646 = vrot.slane %v2362, 5
    %v2647 = vsel %vm2489, %v2645, %v2646
    %v2648 = vrot.slane %v2646, 4
    %v2649 = vrot.slane %v2363, 5
    %v2650 = vsel %vm2489, %v2648, %v2649
    %v2651 = vrot.slane %v2364, 5
    %v2652 = vrot.slane %v2651, 4
    %v2653 = vrot.slane %v2365, 5
    %v2654 = vsel %vm2489, %v2652, %v2653
    %v2655 = vrot.slane %v2653, 4
    %v2656 = vrot.slane %v2366, 5
    %v2657 = vsel %vm2489, %v2655, %v2656
    %v2658 = vrot.slane %v2367, 5
    %v2659 = vrot.slane %v2658, 4
    %v2660 = vrot.slane %v2368, 5
    %v2661 = vsel %vm2489, %v2659, %v2660
    %v2662 = vrot.slane %v2660, 4
    %v2663 = vrot.slane %v2369, 5
    %v2664 = vsel %vm2489, %v2662, %v2663
    %v2665 = vrot.slane %v2370, 5
    %v2666 = vrot.slane %v2665, 4
    %v2667 = vrot.slane %v2371, 5
    %v2668 = vsel %vm2489, %v2666, %v2667
    %v2669 = vrot.slane %v2667, 4
    %v2670 = vrot.slane %v2372, 5
    %v2671 = vsel %vm2489, %v2669, %v2670
    %v2672 = vrot.slane %v2373, 5
    %v2673 = vrot.slane %v2672, 4
    %v2674 = vrot.slane %v2374, 5
    %v2675 = vsel %vm2489, %v2673, %v2674
    %v2676 = vrot.slane %v2674, 4
    %v2677 = vrot.slane %v2375, 5
    %v2678 = vsel %vm2489, %v2676, %v2677
    %v2679 = vrot.slane %v2376, 5
    %v2680 = vrot.slane %v2679, 4
    %v2681 = vrot.slane %v2377, 5
    %v2682 = vsel %vm2489, %v2680, %v2681
    %v2683 = vrot.slane %v2681, 4
    %v2684 = vrot.slane %v2378, 5
    %v2685 = vsel %vm2489, %v2683, %v2684
    %v2686 = vrot.slane %v2379, 5
    %v2687 = vrot.slane %v2686, 4
    %v2688 = vrot.slane %v2380, 5
    %v2689 = vsel %vm2489, %v2687, %v2688
    %v2690 = vrot.slane %v2688, 4
    %v2691 = vrot.slane %v2381, 5
    %v2692 = vsel %vm2489, %v2690, %v2691
    %v2693 = vrot.slane %v2382, 5
    %v2694 = vrot.slane %v2693, 4
    %v2695 = vrot.slane %v2383, 5
    %v2696 = vsel %vm2489, %v2694, %v2695
    %v2697 = vrot.slane %v2695, 4
    %v2698 = vrot.slane %v2384, 5
    %v2699 = vsel %vm2489, %v2697, %v2698
    %v2700 = vrot.slane %v2385, 5
    %v2701 = vrot.slane %v2700, 4
    %v2702 = vrot.slane %v2386, 5
    %v2703 = vsel %vm2489, %v2701, %v2702
    %v2704 = vrot.slane %v2702, 4
    %v2705 = vrot.slane %v2387, 5
    %v2706 = vsel %vm2489, %v2704, %v2705
    %v2707 = vrot.slane %v2388, 5
    %v2708 = vrot.slane %v2707, 4
    %v2709 = vrot.slane %v2389, 5
    %v2710 = vsel %vm2489, %v2708, %v2709
    %v2711 = vrot.slane %v2709, 4
    %v2712 = vrot.slane %v2390, 5
    %v2713 = vsel %vm2489, %v2711, %v2712
    %s2714 = scalar_lea.vmem [#allocation6], 4
    %v2715 = vld [vmem:[%s2714] sm:$0x3]
    %v2716 = vunpack.c.l.b16 %v2493
    %v2717 = vunpack.c.l.b16 %v2496
    %v2718 = vunpack.c.l.b16 %v2500
    %v2719 = vunpack.c.l.b16 %v2503
    %v2720 = vunpack.c.l.b16 %v2507
    %v2721 = vunpack.c.l.b16 %v2510
    %v2722 = vunpack.c.l.b16 %v2514
    %v2723 = vunpack.c.l.b16 %v2517
    %v2724 = vunpack.c.l.b16 %v2521
    %v2725 = vunpack.c.l.b16 %v2524
    %v2726 = vunpack.c.l.b16 %v2528
    %v2727 = vunpack.c.l.b16 %v2531
    %v2728 = vunpack.c.l.b16 %v2535
    %v2729 = vunpack.c.l.b16 %v2538
    %v2730 = vunpack.c.l.b16 %v2542
    %v2731 = vunpack.c.l.b16 %v2545
    %v2732 = vunpack.c.l.b16 %v2549
    %v2733 = vunpack.c.l.b16 %v2552
    %v2734 = vunpack.c.l.b16 %v2556
    %v2735 = vunpack.c.l.b16 %v2559
    %v2736 = vunpack.c.l.b16 %v2563
    %v2737 = vunpack.c.l.b16 %v2566
    %v2738 = vunpack.c.l.b16 %v2570
    %v2739 = vunpack.c.l.b16 %v2573
    %v2740 = vunpack.c.l.b16 %v2577
    %v2741 = vunpack.c.l.b16 %v2580
    %v2742 = vunpack.c.l.b16 %v2584
    %v2743 = vunpack.c.l.b16 %v2587
    %v2744 = vunpack.c.l.b16 %v2591
    %v2745 = vunpack.c.l.b16 %v2594
    %v2746 = vunpack.c.l.b16 %v2598
    %v2747 = vunpack.c.l.b16 %v2601
    %v2748 = vunpack.c.l.b16 %v2605
    %v2749 = vunpack.c.l.b16 %v2608
    %v2750 = vunpack.c.l.b16 %v2612
    %v2751 = vunpack.c.l.b16 %v2615
    %v2752 = vunpack.c.l.b16 %v2619
    %v2753 = vunpack.c.l.b16 %v2622
    %v2754 = vunpack.c.l.b16 %v2626
    %v2755 = vunpack.c.l.b16 %v2629
    %v2756 = vunpack.c.l.b16 %v2633
    %v2757 = vunpack.c.l.b16 %v2636
    %v2758 = vunpack.c.l.b16 %v2640
    %v2759 = vunpack.c.l.b16 %v2643
    %v2760 = vunpack.c.l.b16 %v2647
    %v2761 = vunpack.c.l.b16 %v2650
    %v2762 = vunpack.c.l.b16 %v2654
    %v2763 = vunpack.c.l.b16 %v2657
    %v2764 = vunpack.c.l.b16 %v2661
    %v2765 = vunpack.c.l.b16 %v2664
    %v2766 = vunpack.c.l.b16 %v2668
    %v2767 = vunpack.c.l.b16 %v2671
    %v2768 = vunpack.c.l.b16 %v2675
    %v2769 = vunpack.c.l.b16 %v2678
    %v2770 = vunpack.c.l.b16 %v2682
    %v2771 = vunpack.c.l.b16 %v2685
    %v2772 = vunpack.c.l.b16 %v2689
    %v2773 = vunpack.c.l.b16 %v2692
    %v2774 = vunpack.c.l.b16 %v2696
    %v2775 = vunpack.c.l.b16 %v2699
    %v2776 = vunpack.c.l.b16 %v2703
    %v2777 = vunpack.c.l.b16 %v2706
    %v2778 = vunpack.c.l.b16 %v2710
    %v2779 = vunpack.c.l.b16 %v2713
    %v2780 = vpack.c.b16 %v2717, %v2716
    %v2781 = vpack.c.b16 %v2719, %v2718
    %v2782 = vpack.c.b16 %v2721, %v2720
    %v2783 = vpack.c.b16 %v2723, %v2722
    %v2784 = vpack.c.b16 %v2725, %v2724
    %v2785 = vpack.c.b16 %v2727, %v2726
    %v2786 = vpack.c.b16 %v2729, %v2728
    %v2787 = vpack.c.b16 %v2731, %v2730
    %v2788 = vpack.c.b16 %v2733, %v2732
    %v2789 = vpack.c.b16 %v2735, %v2734
    %v2790 = vpack.c.b16 %v2737, %v2736
    %v2791 = vpack.c.b16 %v2739, %v2738
    %v2792 = vpack.c.b16 %v2741, %v2740
    %v2793 = vpack.c.b16 %v2743, %v2742
    %v2794 = vpack.c.b16 %v2745, %v2744
    %v2795 = vpack.c.b16 %v2747, %v2746
    %v2796 = vpack.c.b16 %v2749, %v2748
    %v2797 = vpack.c.b16 %v2751, %v2750
    %v2798 = vpack.c.b16 %v2753, %v2752
    %v2799 = vpack.c.b16 %v2755, %v2754
    %v2800 = vpack.c.b16 %v2757, %v2756
    %v2801 = vpack.c.b16 %v2759, %v2758
    %v2802 = vpack.c.b16 %v2761, %v2760
    %v2803 = vpack.c.b16 %v2763, %v2762
    %v2804 = vpack.c.b16 %v2765, %v2764
    %v2805 = vpack.c.b16 %v2767, %v2766
    %v2806 = vpack.c.b16 %v2769, %v2768
    %v2807 = vpack.c.b16 %v2771, %v2770
    %v2808 = vpack.c.b16 %v2773, %v2772
    %v2809 = vpack.c.b16 %v2775, %v2774
    %v2810 = vpack.c.b16 %v2777, %v2776
    %v2811 = vpack.c.b16 %v2779, %v2778
    %v2813 = vsel %vm295, %v2780, 0
    %v2816 = vsel %vm295, %v2781, 0
    %v2819 = vsel %vm295, %v2782, 0
    %v2822 = vsel %vm295, %v2783, 0
    %v2825 = vsel %vm295, %v2784, 0
    %v2828 = vsel %vm295, %v2785, 0
    %v2831 = vsel %vm295, %v2786, 0
    %v2834 = vsel %vm295, %v2787, 0
    %v2837 = vsel %vm295, %v2788, 0
    %v2840 = vsel %vm295, %v2789, 0
    %v2843 = vsel %vm295, %v2790, 0
    %v2846 = vsel %vm295, %v2791, 0
    %v2849 = vsel %vm295, %v2792, 0
    %v2852 = vsel %vm295, %v2793, 0
    %v2855 = vsel %vm295, %v2794, 0
    %v2858 = vsel %vm295, %v2795, 0
    %v2861 = vsel %vm295, %v2796, 0
    %v2864 = vsel %vm295, %v2797, 0
    %v2867 = vsel %vm295, %v2798, 0
    %v2870 = vsel %vm295, %v2799, 0
    %v2873 = vsel %vm295, %v2800, 0
    %v2876 = vsel %vm295, %v2801, 0
    %v2879 = vsel %vm295, %v2802, 0
    %v2882 = vsel %vm295, %v2803, 0
    %v2885 = vsel %vm295, %v2804, 0
    %v2888 = vsel %vm295, %v2805, 0
    %v2891 = vsel %vm295, %v2806, 0
    %v2894 = vsel %vm295, %v2807, 0
    %v2897 = vsel %vm295, %v2808, 0
    %v2900 = vsel %vm295, %v2809, 0
    %v2903 = vsel %vm295, %v2810, 0
    %v2906 = vsel %vm295, %v2811, 0
    %v2909 = vsel %vm392, %v2715, 0
    %2911 = vmatprep.subr.bf16.mxu0 0
    %2912 = vmatpush1.bf16.msra.mxu0 %v2909
    %2913 = vmatprep.subr.bf16.mxu0 0
    %2914 = vmatpush1.bf16.msra.mxu0 0
    %2915 = vmatprep.subr.bf16.mxu0 0
    %2916 = vmatpush1.bf16.msra.mxu0 0
    %2917 = vmatprep.subr.bf16.mxu0 0
    %2918 = vmatpush1.bf16.msra.mxu0 0
    %2919 = vmatprep.subr.bf16.mxu0 0
    %2920 = vmatpush1.bf16.msra.mxu0 0
    %2921 = vmatprep.subr.bf16.mxu0 0
    %2922 = vmatpush1.bf16.msra.mxu0 0
    %2923 = vmatprep.subr.bf16.mxu0 0
    %2924 = vmatpush1.bf16.msra.mxu0 0
    %2925 = vmatprep.subr.bf16.mxu0 0
    %2926 = vmatpush1.bf16.msra.mxu0 0
    %2927 = vmatprep.subr.bf16.mxu0 0
    %2928 = vmatpush1.bf16.msra.mxu0 0
    %2929 = vmatprep.subr.bf16.mxu0 0
    %2930 = vmatpush1.bf16.msra.mxu0 0
    %2931 = vmatprep.subr.bf16.mxu0 0
    %2932 = vmatpush1.bf16.msra.mxu0 0
    %2933 = vmatprep.subr.bf16.mxu0 0
    %2934 = vmatpush1.bf16.msra.mxu0 0
    %2935 = vmatprep.subr.bf16.mxu0 0
    %2936 = vmatpush1.bf16.msra.mxu0 0
    %2937 = vmatprep.subr.bf16.mxu0 0
    %2938 = vmatpush1.bf16.msra.mxu0 0
    %2939 = vmatprep.subr.bf16.mxu0 0
    %2940 = vmatpush1.bf16.msra.mxu0 0
    %2941 = vmatprep.subr.bf16.mxu0 0
    %2942 = vmatpush1.bf16.msra.mxu0 0
    %2943 = vmatprep.mubr.bf16.mxu0 0
    %2944 = vmatmul.mubr.bf16.gmra.mrb[0].mxu0 %v2813
    %v2945 = vpop.f32.mrb[0].mxu0
    %v2946 = vadd.f32 0.0, %v2945
    %v2947 = vpop.f32.mrb[0].mxu0
    %v2948 = vpop.f32.mrb[0].mxu0
    %v2949 = vadd.f32 0.0, %v2948
    %v2950 = vpop.f32.mrb[0].mxu0
    %2951 = vmatprep.mubr.bf16.mxu0 0
    %2952 = vmatmul.mubr.bf16.gmra.mrb[0].mxu0 %v2816
    %v2953 = vpop.f32.mrb[0].mxu0
    %v2954 = vadd.f32 0.0, %v2953
    %v2955 = vpop.f32.mrb[0].mxu0
    %v2956 = vpop.f32.mrb[0].mxu0
    %v2957 = vadd.f32 0.0, %v2956
    %v2958 = vpop.f32.mrb[0].mxu0
    %2959 = vmatprep.mubr.bf16.mxu0 0
    %2960 = vmatmul.mubr.bf16.gmra.mrb[0].mxu0 %v2819
    %v2961 = vpop.f32.mrb[0].mxu0
    %v2962 = vadd.f32 0.0, %v2961
    %v2963 = vpop.f32.mrb[0].mxu0
    %v2964 = vpop.f32.mrb[0].mxu0
    %v2965 = vadd.f32 0.0, %v2964
    %v2966 = vpop.f32.mrb[0].mxu0
    %2967 = vmatprep.mubr.bf16.mxu0 0
    %2968 = vmatmul.mubr.bf16.gmra.mrb[0].mxu0 %v2822
    %v2969 = vpop.f32.mrb[0].mxu0
    %v2970 = vadd.f32 0.0, %v2969
    %v2971 = vpop.f32.mrb[0].mxu0
    %v2972 = vpop.f32.mrb[0].mxu0
    %v2973 = vadd.f32 0.0, %v2972
    %v2974 = vpop.f32.mrb[0].mxu0
    %2975 = vmatprep.mubr.bf16.mxu0 0
    %2976 = vmatmul.mubr.bf16.gmra.mrb[0].mxu0 %v2825
    %v2977 = vpop.f32.mrb[0].mxu0
    %v2978 = vadd.f32 0.0, %v2977
    %v2979 = vpop.f32.mrb[0].mxu0
    %v2980 = vpop.f32.mrb[0].mxu0
    %v2981 = vadd.f32 0.0, %v2980
    %v2982 = vpop.f32.mrb[0].mxu0
    %2983 = vmatprep.mubr.bf16.mxu0 0
    %2984 = vmatmul.mubr.bf16.gmra.mrb[0].mxu0 %v2828
    %v2985 = vpop.f32.mrb[0].mxu0
    %v2986 = vadd.f32 0.0, %v2985
    %v2987 = vpop.f32.mrb[0].mxu0
    %v2988 = vpop.f32.mrb[0].mxu0
    %v2989 = vadd.f32 0.0, %v2988
    %v2990 = vpop.f32.mrb[0].mxu0
    %2991 = vmatprep.mubr.bf16.mxu0 0
    %2992 = vmatmul.mubr.bf16.gmra.mrb[0].mxu0 %v2831
    %v2993 = vpop.f32.mrb[0].mxu0
    %v2994 = vadd.f32 0.0, %v2993
    %v2995 = vpop.f32.mrb[0].mxu0
    %v2996 = vpop.f32.mrb[0].mxu0
    %v2997 = vadd.f32 0.0, %v2996
    %v2998 = vpop.f32.mrb[0].mxu0
    %2999 = vmatprep.mubr.bf16.mxu0 0
    %3000 = vmatmul.mubr.bf16.gmra.mrb[0].mxu0 %v2834
    %v3001 = vpop.f32.mrb[0].mxu0
    %v3002 = vadd.f32 0.0, %v3001
    %v3003 = vpop.f32.mrb[0].mxu0
    %v3004 = vpop.f32.mrb[0].mxu0
    %v3005 = vadd.f32 0.0, %v3004
    %v3006 = vpop.f32.mrb[0].mxu0
    %3007 = vmatprep.mubr.bf16.mxu0 0
    %3008 = vmatmul.mubr.bf16.gmra.mrb[0].mxu0 %v2837
    %v3009 = vpop.f32.mrb[0].mxu0
    %v3010 = vadd.f32 0.0, %v3009
    %v3011 = vpop.f32.mrb[0].mxu0
    %v3012 = vpop.f32.mrb[0].mxu0
    %v3013 = vadd.f32 0.0, %v3012
    %v3014 = vpop.f32.mrb[0].mxu0
    %3015 = vmatprep.mubr.bf16.mxu0 0
    %3016 = vmatmul.mubr.bf16.gmra.mrb[0].mxu0 %v2840
    %v3017 = vpop.f32.mrb[0].mxu0
    %v3018 = vadd.f32 0.0, %v3017
    %v3019 = vpop.f32.mrb[0].mxu0
    %v3020 = vpop.f32.mrb[0].mxu0
    %v3021 = vadd.f32 0.0, %v3020
    %v3022 = vpop.f32.mrb[0].mxu0
    %3023 = vmatprep.mubr.bf16.mxu0 0
    %3024 = vmatmul.mubr.bf16.gmra.mrb[0].mxu0 %v2843
    %v3025 = vpop.f32.mrb[0].mxu0
    %v3026 = vadd.f32 0.0, %v3025
    %v3027 = vpop.f32.mrb[0].mxu0
    %v3028 = vpop.f32.mrb[0].mxu0
    %v3029 = vadd.f32 0.0, %v3028
    %v3030 = vpop.f32.mrb[0].mxu0
    %3031 = vmatprep.mubr.bf16.mxu0 0
    %3032 = vmatmul.mubr.bf16.gmra.mrb[0].mxu0 %v2846
    %v3033 = vpop.f32.mrb[0].mxu0
    %v3034 = vadd.f32 0.0, %v3033
    %v3035 = vpop.f32.mrb[0].mxu0
    %v3036 = vpop.f32.mrb[0].mxu0
    %v3037 = vadd.f32 0.0, %v3036
    %v3038 = vpop.f32.mrb[0].mxu0
    %3039 = vmatprep.mubr.bf16.mxu0 0
    %3040 = vmatmul.mubr.bf16.gmra.mrb[0].mxu0 %v2849
    %v3041 = vpop.f32.mrb[0].mxu0
    %v3042 = vadd.f32 0.0, %v3041
    %v3043 = vpop.f32.mrb[0].mxu0
    %v3044 = vpop.f32.mrb[0].mxu0
    %v3045 = vadd.f32 0.0, %v3044
    %v3046 = vpop.f32.mrb[0].mxu0
    %3047 = vmatprep.mubr.bf16.mxu0 0
    %3048 = vmatmul.mubr.bf16.gmra.mrb[0].mxu0 %v2852
    %v3049 = vpop.f32.mrb[0].mxu0
    %v3050 = vadd.f32 0.0, %v3049
    %v3051 = vpop.f32.mrb[0].mxu0
    %v3052 = vpop.f32.mrb[0].mxu0
    %v3053 = vadd.f32 0.0, %v3052
    %v3054 = vpop.f32.mrb[0].mxu0
    %3055 = vmatprep.mubr.bf16.mxu0 0
    %3056 = vmatmul.mubr.bf16.gmra.mrb[0].mxu0 %v2855
    %v3057 = vpop.f32.mrb[0].mxu0
    %v3058 = vadd.f32 0.0, %v3057
    %v3059 = vpop.f32.mrb[0].mxu0
    %v3060 = vpop.f32.mrb[0].mxu0
    %v3061 = vadd.f32 0.0, %v3060
    %v3062 = vpop.f32.mrb[0].mxu0
    %3063 = vmatprep.mubr.bf16.mxu0 0
    %3064 = vmatmul.mubr.bf16.gmra.mrb[0].mxu0 %v2858
    %v3065 = vpop.f32.mrb[0].mxu0
    %v3066 = vadd.f32 0.0, %v3065
    %v3067 = vpop.f32.mrb[0].mxu0
    %v3068 = vpop.f32.mrb[0].mxu0
    %v3069 = vadd.f32 0.0, %v3068
    %v3070 = vpop.f32.mrb[0].mxu0
    %3071 = vmatprep.mubr.bf16.mxu0 0
    %3072 = vmatmul.mubr.bf16.gmra.mrb[0].mxu0 %v2861
    %v3073 = vpop.f32.mrb[0].mxu0
    %v3074 = vadd.f32 0.0, %v3073
    %v3075 = vpop.f32.mrb[0].mxu0
    %v3076 = vpop.f32.mrb[0].mxu0
    %v3077 = vadd.f32 0.0, %v3076
    %v3078 = vpop.f32.mrb[0].mxu0
    %3079 = vmatprep.mubr.bf16.mxu0 0
    %3080 = vmatmul.mubr.bf16.gmra.mrb[0].mxu0 %v2864
    %v3081 = vpop.f32.mrb[0].mxu0
    %v3082 = vadd.f32 0.0, %v3081
    %v3083 = vpop.f32.mrb[0].mxu0
    %v3084 = vpop.f32.mrb[0].mxu0
    %v3085 = vadd.f32 0.0, %v3084
    %v3086 = vpop.f32.mrb[0].mxu0
    %3087 = vmatprep.mubr.bf16.mxu0 0
    %3088 = vmatmul.mubr.bf16.gmra.mrb[0].mxu0 %v2867
    %v3089 = vpop.f32.mrb[0].mxu0
    %v3090 = vadd.f32 0.0, %v3089
    %v3091 = vpop.f32.mrb[0].mxu0
    %v3092 = vpop.f32.mrb[0].mxu0
    %v3093 = vadd.f32 0.0, %v3092
    %v3094 = vpop.f32.mrb[0].mxu0
    %3095 = vmatprep.mubr.bf16.mxu0 0
    %3096 = vmatmul.mubr.bf16.gmra.mrb[0].mxu0 %v2870
    %v3097 = vpop.f32.mrb[0].mxu0
    %v3098 = vadd.f32 0.0, %v3097
    %v3099 = vpop.f32.mrb[0].mxu0
    %v3100 = vpop.f32.mrb[0].mxu0
    %v3101 = vadd.f32 0.0, %v3100
    %v3102 = vpop.f32.mrb[0].mxu0
    %3103 = vmatprep.mubr.bf16.mxu0 0
    %3104 = vmatmul.mubr.bf16.gmra.mrb[0].mxu0 %v2873
    %v3105 = vpop.f32.mrb[0].mxu0
    %v3106 = vadd.f32 0.0, %v3105
    %v3107 = vpop.f32.mrb[0].mxu0
    %v3108 = vpop.f32.mrb[0].mxu0
    %v3109 = vadd.f32 0.0, %v3108
    %v3110 = vpop.f32.mrb[0].mxu0
    %3111 = vmatprep.mubr.bf16.mxu0 0
    %3112 = vmatmul.mubr.bf16.gmra.mrb[0].mxu0 %v2876
    %v3113 = vpop.f32.mrb[0].mxu0
    %v3114 = vadd.f32 0.0, %v3113
    %v3115 = vpop.f32.mrb[0].mxu0
    %v3116 = vpop.f32.mrb[0].mxu0
    %v3117 = vadd.f32 0.0, %v3116
    %v3118 = vpop.f32.mrb[0].mxu0
    %3119 = vmatprep.mubr.bf16.mxu0 0
    %3120 = vmatmul.mubr.bf16.gmra.mrb[0].mxu0 %v2879
    %v3121 = vpop.f32.mrb[0].mxu0
    %v3122 = vadd.f32 0.0, %v3121
    %v3123 = vpop.f32.mrb[0].mxu0
    %v3124 = vpop.f32.mrb[0].mxu0
    %v3125 = vadd.f32 0.0, %v3124
    %v3126 = vpop.f32.mrb[0].mxu0
    %3127 = vmatprep.mubr.bf16.mxu0 0
    %3128 = vmatmul.mubr.bf16.gmra.mrb[0].mxu0 %v2882
    %v3129 = vpop.f32.mrb[0].mxu0
    %v3130 = vadd.f32 0.0, %v3129
    %v3131 = vpop.f32.mrb[0].mxu0
    %v3132 = vpop.f32.mrb[0].mxu0
    %v3133 = vadd.f32 0.0, %v3132
    %v3134 = vpop.f32.mrb[0].mxu0
    %3135 = vmatprep.mubr.bf16.mxu0 0
    %3136 = vmatmul.mubr.bf16.gmra.mrb[0].mxu0 %v2885
    %v3137 = vpop.f32.mrb[0].mxu0
    %v3138 = vadd.f32 0.0, %v3137
    %v3139 = vpop.f32.mrb[0].mxu0
    %v3140 = vpop.f32.mrb[0].mxu0
    %v3141 = vadd.f32 0.0, %v3140
    %v3142 = vpop.f32.mrb[0].mxu0
    %3143 = vmatprep.mubr.bf16.mxu0 0
    %3144 = vmatmul.mubr.bf16.gmra.mrb[0].mxu0 %v2888
    %v3145 = vpop.f32.mrb[0].mxu0
    %v3146 = vadd.f32 0.0, %v3145
    %v3147 = vpop.f32.mrb[0].mxu0
    %v3148 = vpop.f32.mrb[0].mxu0
    %v3149 = vadd.f32 0.0, %v3148
    %v3150 = vpop.f32.mrb[0].mxu0
    %3151 = vmatprep.mubr.bf16.mxu0 0
    %3152 = vmatmul.mubr.bf16.gmra.mrb[0].mxu0 %v2891
    %v3153 = vpop.f32.mrb[0].mxu0
    %v3154 = vadd.f32 0.0, %v3153
    %v3155 = vpop.f32.mrb[0].mxu0
    %v3156 = vpop.f32.mrb[0].mxu0
    %v3157 = vadd.f32 0.0, %v3156
    %v3158 = vpop.f32.mrb[0].mxu0
    %3159 = vmatprep.mubr.bf16.mxu0 0
    %3160 = vmatmul.mubr.bf16.gmra.mrb[0].mxu0 %v2894
    %v3161 = vpop.f32.mrb[0].mxu0
    %v3162 = vadd.f32 0.0, %v3161
    %v3163 = vpop.f32.mrb[0].mxu0
    %v3164 = vpop.f32.mrb[0].mxu0
    %v3165 = vadd.f32 0.0, %v3164
    %v3166 = vpop.f32.mrb[0].mxu0
    %3167 = vmatprep.mubr.bf16.mxu0 0
    %3168 = vmatmul.mubr.bf16.gmra.mrb[0].mxu0 %v2897
    %v3169 = vpop.f32.mrb[0].mxu0
    %v3170 = vadd.f32 0.0, %v3169
    %v3171 = vpop.f32.mrb[0].mxu0
    %v3172 = vpop.f32.mrb[0].mxu0
    %v3173 = vadd.f32 0.0, %v3172
    %v3174 = vpop.f32.mrb[0].mxu0
    %3175 = vmatprep.mubr.bf16.mxu0 0
    %3176 = vmatmul.mubr.bf16.gmra.mrb[0].mxu0 %v2900
    %v3177 = vpop.f32.mrb[0].mxu0
    %v3178 = vadd.f32 0.0, %v3177
    %v3179 = vpop.f32.mrb[0].mxu0
    %v3180 = vpop.f32.mrb[0].mxu0
    %v3181 = vadd.f32 0.0, %v3180
    %v3182 = vpop.f32.mrb[0].mxu0
    %3183 = vmatprep.mubr.bf16.mxu0 0
    %3184 = vmatmul.mubr.bf16.gmra.mrb[0].mxu0 %v2903
    %v3185 = vpop.f32.mrb[0].mxu0
    %v3186 = vadd.f32 0.0, %v3185
    %v3187 = vpop.f32.mrb[0].mxu0
    %v3188 = vpop.f32.mrb[0].mxu0
    %v3189 = vadd.f32 0.0, %v3188
    %v3190 = vpop.f32.mrb[0].mxu0
    %3191 = vmatprep.mubr.bf16.mxu0 0
    %3192 = vmatmul.mubr.bf16.gmra.mrb[0].mxu0 %v2906
    %v3193 = vpop.f32.mrb[0].mxu0
    %v3194 = vadd.f32 0.0, %v3193
    %v3195 = vpop.f32.mrb[0].mxu0
    %v3196 = vpop.f32.mrb[0].mxu0
    %v3197 = vadd.f32 0.0, %v3196
    %v3198 = vpop.f32.mrb[0].mxu0
    %3199 = vdwg.mxu0
    %v3200 = vld [vmem:[#allocation2] sm:$0xff]
    %v3201 = vld [vmem:[#allocation2 + $0x8] sm:$0xff]
    %v3202 = vld [vmem:[#allocation2 + $0x10] sm:$0xff]
    %v3203 = vld [vmem:[#allocation2 + $0x18] sm:$0xff]
    %v3204 = vld [vmem:[#allocation2 + $0x20] sm:$0xff]
    %v3205 = vld [vmem:[#allocation2 + $0x28] sm:$0xff]
    %v3206 = vld [vmem:[#allocation2 + $0x30] sm:$0xff]
    %v3207 = vld [vmem:[#allocation2 + $0x38] sm:$0xff]
    %v3208 = vld [vmem:[#allocation2 + $0x40] sm:$0xff]
    %v3209 = vld [vmem:[#allocation2 + $0x48] sm:$0xff]
    %v3210 = vld [vmem:[#allocation2 + $0x50] sm:$0xff]
    %v3211 = vld [vmem:[#allocation2 + $0x58] sm:$0xff]
    %v3212 = vld [vmem:[#allocation2 + $0x60] sm:$0xff]
    %v3213 = vld [vmem:[#allocation2 + $0x68] sm:$0xff]
    %v3214 = vld [vmem:[#allocation2 + $0x70] sm:$0xff]
    %v3215 = vld [vmem:[#allocation2 + $0x78] sm:$0xff]
    %v3216 = vld [vmem:[#allocation2 + $0x80] sm:$0xff]
    %v3217 = vld [vmem:[#allocation2 + $0x88] sm:$0xff]
    %v3218 = vld [vmem:[#allocation2 + $0x90] sm:$0xff]
    %v3219 = vld [vmem:[#allocation2 + $0x98] sm:$0xff]
    %v3220 = vld [vmem:[#allocation2 + $0xa0] sm:$0xff]
    %v3221 = vld [vmem:[#allocation2 + $0xa8] sm:$0xff]
    %v3222 = vld [vmem:[#allocation2 + $0xb0] sm:$0xff]
    %v3223 = vld [vmem:[#allocation2 + $0xb8] sm:$0xff]
    %v3224 = vld [vmem:[#allocation2 + $0xc0] sm:$0xff]
    %v3225 = vld [vmem:[#allocation2 + $0xc8] sm:$0xff]
    %v3226 = vld [vmem:[#allocation2 + $0xd0] sm:$0xff]
    %v3227 = vld [vmem:[#allocation2 + $0xd8] sm:$0xff]
    %v3228 = vld [vmem:[#allocation2 + $0xe0] sm:$0xff]
    %v3229 = vld [vmem:[#allocation2 + $0xe8] sm:$0xff]
    %v3230 = vld [vmem:[#allocation2 + $0xf0] sm:$0xff]
    %v3231 = vld [vmem:[#allocation2 + $0xf8] sm:$0xff]
    %v3232 = vld [vmem:[#allocation2 + $0x100] sm:$0xff]
    %v3233 = vld [vmem:[#allocation2 + $0x108] sm:$0xff]
    %v3234 = vld [vmem:[#allocation2 + $0x110] sm:$0xff]
    %v3235 = vld [vmem:[#allocation2 + $0x118] sm:$0xff]
    %v3236 = vld [vmem:[#allocation2 + $0x120] sm:$0xff]
    %v3237 = vld [vmem:[#allocation2 + $0x128] sm:$0xff]
    %v3238 = vld [vmem:[#allocation2 + $0x130] sm:$0xff]
    %v3239 = vld [vmem:[#allocation2 + $0x138] sm:$0xff]
    %v3240 = vld [vmem:[#allocation2 + $0x140] sm:$0xff]
    %v3241 = vld [vmem:[#allocation2 + $0x148] sm:$0xff]
    %v3242 = vld [vmem:[#allocation2 + $0x150] sm:$0xff]
    %v3243 = vld [vmem:[#allocation2 + $0x158] sm:$0xff]
    %v3244 = vld [vmem:[#allocation2 + $0x160] sm:$0xff]
    %v3245 = vld [vmem:[#allocation2 + $0x168] sm:$0xff]
    %v3246 = vld [vmem:[#allocation2 + $0x170] sm:$0xff]
    %v3247 = vld [vmem:[#allocation2 + $0x178] sm:$0xff]
    %v3248 = vld [vmem:[#allocation2 + $0x180] sm:$0xff]
    %v3249 = vld [vmem:[#allocation2 + $0x188] sm:$0xff]
    %v3250 = vld [vmem:[#allocation2 + $0x190] sm:$0xff]
    %v3251 = vld [vmem:[#allocation2 + $0x198] sm:$0xff]
    %v3252 = vld [vmem:[#allocation2 + $0x1a0] sm:$0xff]
    %v3253 = vld [vmem:[#allocation2 + $0x1a8] sm:$0xff]
    %v3254 = vld [vmem:[#allocation2 + $0x1b0] sm:$0xff]
    %v3255 = vld [vmem:[#allocation2 + $0x1b8] sm:$0xff]
    %v3256 = vld [vmem:[#allocation2 + $0x1c0] sm:$0xff]
    %v3257 = vld [vmem:[#allocation2 + $0x1c8] sm:$0xff]
    %v3258 = vld [vmem:[#allocation2 + $0x1d0] sm:$0xff]
    %v3259 = vld [vmem:[#allocation2 + $0x1d8] sm:$0xff]
    %v3260 = vld [vmem:[#allocation2 + $0x1e0] sm:$0xff]
    %v3261 = vld [vmem:[#allocation2 + $0x1e8] sm:$0xff]
    %v3262 = vld [vmem:[#allocation2 + $0x1f0] sm:$0xff]
    %v3263 = vld [vmem:[#allocation2 + $0x1f8] sm:$0xff]
    %v3264 = vadd.f32 %v3200, %v2946
    %v3265 = vadd.f32 %v3201, %v2949
    %v3266 = vadd.f32 %v3202, %v2954
    %v3267 = vadd.f32 %v3203, %v2957
    %v3268 = vadd.f32 %v3204, %v2962
    %v3269 = vadd.f32 %v3205, %v2965
    %v3270 = vadd.f32 %v3206, %v2970
    %v3271 = vadd.f32 %v3207, %v2973
    %v3272 = vadd.f32 %v3208, %v2978
    %v3273 = vadd.f32 %v3209, %v2981
    %v3274 = vadd.f32 %v3210, %v2986
    %v3275 = vadd.f32 %v3211, %v2989
    %v3276 = vadd.f32 %v3212, %v2994
    %v3277 = vadd.f32 %v3213, %v2997
    %v3278 = vadd.f32 %v3214, %v3002
    %v3279 = vadd.f32 %v3215, %v3005
    %v3280 = vadd.f32 %v3216, %v3010
    %v3281 = vadd.f32 %v3217, %v3013
    %v3282 = vadd.f32 %v3218, %v3018
    %v3283 = vadd.f32 %v3219, %v3021
    %v3284 = vadd.f32 %v3220, %v3026
    %v3285 = vadd.f32 %v3221, %v3029
    %v3286 = vadd.f32 %v3222, %v3034
    %v3287 = vadd.f32 %v3223, %v3037
    %v3288 = vadd.f32 %v3224, %v3042
    %v3289 = vadd.f32 %v3225, %v3045
    %v3290 = vadd.f32 %v3226, %v3050
    %v3291 = vadd.f32 %v3227, %v3053
    %v3292 = vadd.f32 %v3228, %v3058
    %v3293 = vadd.f32 %v3229, %v3061
    %v3294 = vadd.f32 %v3230, %v3066
    %v3295 = vadd.f32 %v3231, %v3069
    %v3296 = vadd.f32 %v3232, %v3074
    %v3297 = vadd.f32 %v3233, %v3077
    %v3298 = vadd.f32 %v3234, %v3082
    %v3299 = vadd.f32 %v3235, %v3085
    %v3300 = vadd.f32 %v3236, %v3090
    %v3301 = vadd.f32 %v3237, %v3093
    %v3302 = vadd.f32 %v3238, %v3098
    %v3303 = vadd.f32 %v3239, %v3101
    %v3304 = vadd.f32 %v3240, %v3106
    %v3305 = vadd.f32 %v3241, %v3109
    %v3306 = vadd.f32 %v3242, %v3114
    %v3307 = vadd.f32 %v3243, %v3117
    %v3308 = vadd.f32 %v3244, %v3122
    %v3309 = vadd.f32 %v3245, %v3125
    %v3310 = vadd.f32 %v3246, %v3130
    %v3311 = vadd.f32 %v3247, %v3133
    %v3312 = vadd.f32 %v3248, %v3138
    %v3313 = vadd.f32 %v3249, %v3141
    %v3314 = vadd.f32 %v3250, %v3146
    %v3315 = vadd.f32 %v3251, %v3149
    %v3316 = vadd.f32 %v3252, %v3154
    %v3317 = vadd.f32 %v3253, %v3157
    %v3318 = vadd.f32 %v3254, %v3162
    %v3319 = vadd.f32 %v3255, %v3165
    %v3320 = vadd.f32 %v3256, %v3170
    %v3321 = vadd.f32 %v3257, %v3173
    %v3322 = vadd.f32 %v3258, %v3178
    %v3323 = vadd.f32 %v3259, %v3181
    %v3324 = vadd.f32 %v3260, %v3186
    %v3325 = vadd.f32 %v3261, %v3189
    %v3326 = vadd.f32 %v3262, %v3194
    %v3327 = vadd.f32 %v3263, %v3197
    %3328 = vst.msk [vmem:[#allocation2] sm:$0xff] %vm685, %v3264
    %3329 = vst.msk [vmem:[#allocation2 + $0x8] sm:$0xff] %vm685, %v3265
    %3330 = vst.msk [vmem:[#allocation2 + $0x10] sm:$0xff] %vm685, %v3266
    %3331 = vst.msk [vmem:[#allocation2 + $0x18] sm:$0xff] %vm685, %v3267
    %3332 = vst.msk [vmem:[#allocation2 + $0x20] sm:$0xff] %vm685, %v3268
    %3333 = vst.msk [vmem:[#allocation2 + $0x28] sm:$0xff] %vm685, %v3269
    %3334 = vst.msk [vmem:[#allocation2 + $0x30] sm:$0xff] %vm685, %v3270
    %3335 = vst.msk [vmem:[#allocation2 + $0x38] sm:$0xff] %vm685, %v3271
    %3336 = vst.msk [vmem:[#allocation2 + $0x40] sm:$0xff] %vm685, %v3272
    %3337 = vst.msk [vmem:[#allocation2 + $0x48] sm:$0xff] %vm685, %v3273
    %3338 = vst.msk [vmem:[#allocation2 + $0x50] sm:$0xff] %vm685, %v3274
    %3339 = vst.msk [vmem:[#allocation2 + $0x58] sm:$0xff] %vm685, %v3275
    %3340 = vst.msk [vmem:[#allocation2 + $0x60] sm:$0xff] %vm685, %v3276
    %3341 = vst.msk [vmem:[#allocation2 + $0x68] sm:$0xff] %vm685, %v3277
    %3342 = vst.msk [vmem:[#allocation2 + $0x70] sm:$0xff] %vm685, %v3278
    %3343 = vst.msk [vmem:[#allocation2 + $0x78] sm:$0xff] %vm685, %v3279
    %3344 = vst.msk [vmem:[#allocation2 + $0x80] sm:$0xff] %vm685, %v3280
    %3345 = vst.msk [vmem:[#allocation2 + $0x88] sm:$0xff] %vm685, %v3281
    %3346 = vst.msk [vmem:[#allocation2 + $0x90] sm:$0xff] %vm685, %v3282
    %3347 = vst.msk [vmem:[#allocation2 + $0x98] sm:$0xff] %vm685, %v3283
    %3348 = vst.msk [vmem:[#allocation2 + $0xa0] sm:$0xff] %vm685, %v3284
    %3349 = vst.msk [vmem:[#allocation2 + $0xa8] sm:$0xff] %vm685, %v3285
    %3350 = vst.msk [vmem:[#allocation2 + $0xb0] sm:$0xff] %vm685, %v3286
    %3351 = vst.msk [vmem:[#allocation2 + $0xb8] sm:$0xff] %vm685, %v3287
    %3352 = vst.msk [vmem:[#allocation2 + $0xc0] sm:$0xff] %vm685, %v3288
    %3353 = vst.msk [vmem:[#allocation2 + $0xc8] sm:$0xff] %vm685, %v3289
    %3354 = vst.msk [vmem:[#allocation2 + $0xd0] sm:$0xff] %vm685, %v3290
    %3355 = vst.msk [vmem:[#allocation2 + $0xd8] sm:$0xff] %vm685, %v3291
    %3356 = vst.msk [vmem:[#allocation2 + $0xe0] sm:$0xff] %vm685, %v3292
    %3357 = vst.msk [vmem:[#allocation2 + $0xe8] sm:$0xff] %vm685, %v3293
    %3358 = vst.msk [vmem:[#allocation2 + $0xf0] sm:$0xff] %vm685, %v3294
    %3359 = vst.msk [vmem:[#allocation2 + $0xf8] sm:$0xff] %vm685, %v3295
    %3360 = vst.msk [vmem:[#allocation2 + $0x100] sm:$0xff] %vm685, %v3296
    %3361 = vst.msk [vmem:[#allocation2 + $0x108] sm:$0xff] %vm685, %v3297
    %3362 = vst.msk [vmem:[#allocation2 + $0x110] sm:$0xff] %vm685, %v3298
    %3363 = vst.msk [vmem:[#allocation2 + $0x118] sm:$0xff] %vm685, %v3299
    %3364 = vst.msk [vmem:[#allocation2 + $0x120] sm:$0xff] %vm685, %v3300
    %3365 = vst.msk [vmem:[#allocation2 + $0x128] sm:$0xff] %vm685, %v3301
    %3366 = vst.msk [vmem:[#allocation2 + $0x130] sm:$0xff] %vm685, %v3302
    %3367 = vst.msk [vmem:[#allocation2 + $0x138] sm:$0xff] %vm685, %v3303
    %3368 = vst.msk [vmem:[#allocation2 + $0x140] sm:$0xff] %vm685, %v3304
    %3369 = vst.msk [vmem:[#allocation2 + $0x148] sm:$0xff] %vm685, %v3305
    %3370 = vst.msk [vmem:[#allocation2 + $0x150] sm:$0xff] %vm685, %v3306
    %3371 = vst.msk [vmem:[#allocation2 + $0x158] sm:$0xff] %vm685, %v3307
    %3372 = vst.msk [vmem:[#allocation2 + $0x160] sm:$0xff] %vm685, %v3308
    %3373 = vst.msk [vmem:[#allocation2 + $0x168] sm:$0xff] %vm685, %v3309
    %3374 = vst.msk [vmem:[#allocation2 + $0x170] sm:$0xff] %vm685, %v3310
    %3375 = vst.msk [vmem:[#allocation2 + $0x178] sm:$0xff] %vm685, %v3311
    %3376 = vst.msk [vmem:[#allocation2 + $0x180] sm:$0xff] %vm685, %v3312
    %3377 = vst.msk [vmem:[#allocation2 + $0x188] sm:$0xff] %vm685, %v3313
    %3378 = vst.msk [vmem:[#allocation2 + $0x190] sm:$0xff] %vm685, %v3314
    %3379 = vst.msk [vmem:[#allocation2 + $0x198] sm:$0xff] %vm685, %v3315
    %3380 = vst.msk [vmem:[#allocation2 + $0x1a0] sm:$0xff] %vm685, %v3316
    %3381 = vst.msk [vmem:[#allocation2 + $0x1a8] sm:$0xff] %vm685, %v3317
    %3382 = vst.msk [vmem:[#allocation2 + $0x1b0] sm:$0xff] %vm685, %v3318
    %3383 = vst.msk [vmem:[#allocation2 + $0x1b8] sm:$0xff] %vm685, %v3319
    %3384 = vst.msk [vmem:[#allocation2 + $0x1c0] sm:$0xff] %vm685, %v3320
    %3385 = vst.msk [vmem:[#allocation2 + $0x1c8] sm:$0xff] %vm685, %v3321
    %3386 = vst.msk [vmem:[#allocation2 + $0x1d0] sm:$0xff] %vm685, %v3322
    %3387 = vst.msk [vmem:[#allocation2 + $0x1d8] sm:$0xff] %vm685, %v3323
    %3388 = vst.msk [vmem:[#allocation2 + $0x1e0] sm:$0xff] %vm685, %v3324
    %3389 = vst.msk [vmem:[#allocation2 + $0x1e8] sm:$0xff] %vm685, %v3325
    %3390 = vst.msk [vmem:[#allocation2 + $0x1f0] sm:$0xff] %vm685, %v3326
    %3391 = vst.msk [vmem:[#allocation2 + $0x1f8] sm:$0xff] %vm685, %v3327
    %s3392 = scalar_lea.vmem [#allocation3], 12
    %v3393 = vld [vmem:[%s3392] sm:$0xf]
    %v3394 = vld [vmem:[%s3392 + $0x4] sm:$0xf]
    %v3395 = vld [vmem:[%s3392 + $0xc] sm:$0xf]
    %v3396 = vld [vmem:[%s3392 + $0x10] sm:$0xf]
    %v3397 = vld [vmem:[%s3392 + $0x18] sm:$0xf]
    %v3398 = vld [vmem:[%s3392 + $0x1c] sm:$0xf]
    %v3399 = vld [vmem:[%s3392 + $0x24] sm:$0xf]
    %v3400 = vld [vmem:[%s3392 + $0x28] sm:$0xf]
    %v3401 = vld [vmem:[%s3392 + $0x30] sm:$0xf]
    %v3402 = vld [vmem:[%s3392 + $0x34] sm:$0xf]
    %v3403 = vld [vmem:[%s3392 + $0x3c] sm:$0xf]
    %v3404 = vld [vmem:[%s3392 + $0x40] sm:$0xf]
    %v3405 = vld [vmem:[%s3392 + $0x48] sm:$0xf]
    %v3406 = vld [vmem:[%s3392 + $0x4c] sm:$0xf]
    %v3407 = vld [vmem:[%s3392 + $0x54] sm:$0xf]
    %v3408 = vld [vmem:[%s3392 + $0x58] sm:$0xf]
    %v3409 = vld [vmem:[%s3392 + $0x60] sm:$0xf]
    %v3410 = vld [vmem:[%s3392 + $0x64] sm:$0xf]
    %v3411 = vld [vmem:[%s3392 + $0x6c] sm:$0xf]
    %v3412 = vld [vmem:[%s3392 + $0x70] sm:$0xf]
    %v3413 = vld [vmem:[%s3392 + $0x78] sm:$0xf]
    %v3414 = vld [vmem:[%s3392 + $0x7c] sm:$0xf]
    %v3415 = vld [vmem:[%s3392 + $0x84] sm:$0xf]
    %v3416 = vld [vmem:[%s3392 + $0x88] sm:$0xf]
    %v3417 = vld [vmem:[%s3392 + $0x90] sm:$0xf]
    %v3418 = vld [vmem:[%s3392 + $0x94] sm:$0xf]
    %v3419 = vld [vmem:[%s3392 + $0x9c] sm:$0xf]
    %v3420 = vld [vmem:[%s3392 + $0xa0] sm:$0xf]
    %v3421 = vld [vmem:[%s3392 + $0xa8] sm:$0xf]
    %v3422 = vld [vmem:[%s3392 + $0xac] sm:$0xf]
    %v3423 = vld [vmem:[%s3392 + $0xb4] sm:$0xf]
    %v3424 = vld [vmem:[%s3392 + $0xb8] sm:$0xf]
    %v3425 = vld [vmem:[%s3392 + $0xd8] sm:$0xf]
    %v3426 = vld [vmem:[%s3392 + $0xdc] sm:$0xf]
    %v3427 = vld [vmem:[%s3392 + $0xe4] sm:$0xf]
    %v3428 = vld [vmem:[%s3392 + $0xe8] sm:$0xf]
    %v3429 = vld [vmem:[%s3392 + $0xf0] sm:$0xf]
    %v3430 = vld [vmem:[%s3392 + $0xf4] sm:$0xf]
    %v3431 = vld [vmem:[%s3392 + $0xfc] sm:$0xf]
    %v3432 = vld [vmem:[%s3392 + $0x100] sm:$0xf]
    %v3433 = vld [vmem:[%s3392 + $0x108] sm:$0xf]
    %v3434 = vld [vmem:[%s3392 + $0x10c] sm:$0xf]
    %v3435 = vld [vmem:[%s3392 + $0x114] sm:$0xf]
    %v3436 = vld [vmem:[%s3392 + $0x118] sm:$0xf]
    %v3437 = vld [vmem:[%s3392 + $0x120] sm:$0xf]
    %v3438 = vld [vmem:[%s3392 + $0x124] sm:$0xf]
    %v3439 = vld [vmem:[%s3392 + $0x12c] sm:$0xf]
    %v3440 = vld [vmem:[%s3392 + $0x130] sm:$0xf]
    %v3441 = vld [vmem:[%s3392 + $0x138] sm:$0xf]
    %v3442 = vld [vmem:[%s3392 + $0x13c] sm:$0xf]
    %v3443 = vld [vmem:[%s3392 + $0x144] sm:$0xf]
    %v3444 = vld [vmem:[%s3392 + $0x148] sm:$0xf]
    %v3445 = vld [vmem:[%s3392 + $0x150] sm:$0xf]
    %v3446 = vld [vmem:[%s3392 + $0x154] sm:$0xf]
    %v3447 = vld [vmem:[%s3392 + $0x15c] sm:$0xf]
    %v3448 = vld [vmem:[%s3392 + $0x160] sm:$0xf]
    %v3449 = vld [vmem:[%s3392 + $0x168] sm:$0xf]
    %v3450 = vld [vmem:[%s3392 + $0x16c] sm:$0xf]
    %v3451 = vld [vmem:[%s3392 + $0x174] sm:$0xf]
    %v3452 = vld [vmem:[%s3392 + $0x178] sm:$0xf]
    %v3453 = vld [vmem:[%s3392 + $0x180] sm:$0xf]
    %v3454 = vld [vmem:[%s3392 + $0x184] sm:$0xf]
    %v3455 = vld [vmem:[%s3392 + $0x18c] sm:$0xf]
    %v3456 = vld [vmem:[%s3392 + $0x190] sm:$0xf]
    %s3457 = scalar_lea.vmem [#allocation6], 6
    %v3458 = vld [vmem:[%s3457] sm:$0x3]
    %v3523 = vunpack.c.l.b16 %v3393
    %v3524 = vunpack.c.l.b16 %v3394
    %v3525 = vunpack.c.l.b16 %v3395
    %v3526 = vunpack.c.l.b16 %v3396
    %v3527 = vunpack.c.l.b16 %v3397
    %v3528 = vunpack.c.l.b16 %v3398
    %v3529 = vunpack.c.l.b16 %v3399
    %v3530 = vunpack.c.l.b16 %v3400
    %v3531 = vunpack.c.l.b16 %v3401
    %v3532 = vunpack.c.l.b16 %v3402
    %v3533 = vunpack.c.l.b16 %v3403
    %v3534 = vunpack.c.l.b16 %v3404
    %v3535 = vunpack.c.l.b16 %v3405
    %v3536 = vunpack.c.l.b16 %v3406
    %v3537 = vunpack.c.l.b16 %v3407
    %v3538 = vunpack.c.l.b16 %v3408
    %v3539 = vunpack.c.l.b16 %v3409
    %v3540 = vunpack.c.l.b16 %v3410
    %v3541 = vunpack.c.l.b16 %v3411
    %v3542 = vunpack.c.l.b16 %v3412
    %v3543 = vunpack.c.l.b16 %v3413
    %v3544 = vunpack.c.l.b16 %v3414
    %v3545 = vunpack.c.l.b16 %v3415
    %v3546 = vunpack.c.l.b16 %v3416
    %v3547 = vunpack.c.l.b16 %v3417
    %v3548 = vunpack.c.l.b16 %v3418
    %v3549 = vunpack.c.l.b16 %v3419
    %v3550 = vunpack.c.l.b16 %v3420
    %v3551 = vunpack.c.l.b16 %v3421
    %v3552 = vunpack.c.l.b16 %v3422
    %v3553 = vunpack.c.l.b16 %v3423
    %v3554 = vunpack.c.l.b16 %v3424
    %v3555 = vunpack.c.l.b16 %v3425
    %v3556 = vunpack.c.l.b16 %v3426
    %v3557 = vunpack.c.l.b16 %v3427
    %v3558 = vunpack.c.l.b16 %v3428
    %v3559 = vunpack.c.l.b16 %v3429
    %v3560 = vunpack.c.l.b16 %v3430
    %v3561 = vunpack.c.l.b16 %v3431
    %v3562 = vunpack.c.l.b16 %v3432
    %v3563 = vunpack.c.l.b16 %v3433
    %v3564 = vunpack.c.l.b16 %v3434
    %v3565 = vunpack.c.l.b16 %v3435
    %v3566 = vunpack.c.l.b16 %v3436
    %v3567 = vunpack.c.l.b16 %v3437
    %v3568 = vunpack.c.l.b16 %v3438
    %v3569 = vunpack.c.l.b16 %v3439
    %v3570 = vunpack.c.l.b16 %v3440
    %v3571 = vunpack.c.l.b16 %v3441
    %v3572 = vunpack.c.l.b16 %v3442
    %v3573 = vunpack.c.l.b16 %v3443
    %v3574 = vunpack.c.l.b16 %v3444
    %v3575 = vunpack.c.l.b16 %v3445
    %v3576 = vunpack.c.l.b16 %v3446
    %v3577 = vunpack.c.l.b16 %v3447
    %v3578 = vunpack.c.l.b16 %v3448
    %v3579 = vunpack.c.l.b16 %v3449
    %v3580 = vunpack.c.l.b16 %v3450
    %v3581 = vunpack.c.l.b16 %v3451
    %v3582 = vunpack.c.l.b16 %v3452
    %v3583 = vunpack.c.l.b16 %v3453
    %v3584 = vunpack.c.l.b16 %v3454
    %v3585 = vunpack.c.l.b16 %v3455
    %v3586 = vunpack.c.l.b16 %v3456
    %v3587 = vpack.c.b16 %v3524, %v3523
    %v3588 = vpack.c.b16 %v3526, %v3525
    %v3589 = vpack.c.b16 %v3528, %v3527
    %v3590 = vpack.c.b16 %v3530, %v3529
    %v3591 = vpack.c.b16 %v3532, %v3531
    %v3592 = vpack.c.b16 %v3534, %v3533
    %v3593 = vpack.c.b16 %v3536, %v3535
    %v3594 = vpack.c.b16 %v3538, %v3537
    %v3595 = vpack.c.b16 %v3540, %v3539
    %v3596 = vpack.c.b16 %v3542, %v3541
    %v3597 = vpack.c.b16 %v3544, %v3543
    %v3598 = vpack.c.b16 %v3546, %v3545
    %v3599 = vpack.c.b16 %v3548, %v3547
    %v3600 = vpack.c.b16 %v3550, %v3549
    %v3601 = vpack.c.b16 %v3552, %v3551
    %v3602 = vpack.c.b16 %v3554, %v3553
    %v3603 = vpack.c.b16 %v3556, %v3555
    %v3604 = vpack.c.b16 %v3558, %v3557
    %v3605 = vpack.c.b16 %v3560, %v3559
    %v3606 = vpack.c.b16 %v3562, %v3561
    %v3607 = vpack.c.b16 %v3564, %v3563
    %v3608 = vpack.c.b16 %v3566, %v3565
    %v3609 = vpack.c.b16 %v3568, %v3567
    %v3610 = vpack.c.b16 %v3570, %v3569
    %v3611 = vpack.c.b16 %v3572, %v3571
    %v3612 = vpack.c.b16 %v3574, %v3573
    %v3613 = vpack.c.b16 %v3576, %v3575
    %v3614 = vpack.c.b16 %v3578, %v3577
    %v3615 = vpack.c.b16 %v3580, %v3579
    %v3616 = vpack.c.b16 %v3582, %v3581
    %v3617 = vpack.c.b16 %v3584, %v3583
    %v3618 = vpack.c.b16 %v3586, %v3585
    %v3620 = vsel %vm295, %v3587, 0
    %v3623 = vsel %vm295, %v3588, 0
    %v3626 = vsel %vm295, %v3589, 0
    %v3629 = vsel %vm295, %v3590, 0
    %v3632 = vsel %vm295, %v3591, 0
    %v3635 = vsel %vm295, %v3592, 0
    %v3638 = vsel %vm295, %v3593, 0
    %v3641 = vsel %vm295, %v3594, 0
    %v3644 = vsel %vm295, %v3595, 0
    %v3647 = vsel %vm295, %v3596, 0
    %v3650 = vsel %vm295, %v3597, 0
    %v3653 = vsel %vm295, %v3598, 0
    %v3656 = vsel %vm295, %v3599, 0
    %v3659 = vsel %vm295, %v3600, 0
    %v3662 = vsel %vm295, %v3601, 0
    %v3665 = vsel %vm295, %v3602, 0
    %v3668 = vsel %vm295, %v3603, 0
    %v3671 = vsel %vm295, %v3604, 0
    %v3674 = vsel %vm295, %v3605, 0
    %v3677 = vsel %vm295, %v3606, 0
    %v3680 = vsel %vm295, %v3607, 0
    %v3683 = vsel %vm295, %v3608, 0
    %v3686 = vsel %vm295, %v3609, 0
    %v3689 = vsel %vm295, %v3610, 0
    %v3692 = vsel %vm295, %v3611, 0
    %v3695 = vsel %vm295, %v3612, 0
    %v3698 = vsel %vm295, %v3613, 0
    %v3701 = vsel %vm295, %v3614, 0
    %v3704 = vsel %vm295, %v3615, 0
    %v3707 = vsel %vm295, %v3616, 0
    %v3710 = vsel %vm295, %v3617, 0
    %v3713 = vsel %vm295, %v3618, 0
    %v3716 = vsel %vm392, %v3458, 0
    %3718 = vmatprep.subr.bf16.mxu0 0
    %3719 = vmatpush1.bf16.msra.mxu0 %v3716
    %3720 = vmatprep.subr.bf16.mxu0 0
    %3721 = vmatpush1.bf16.msra.mxu0 0
    %3722 = vmatprep.subr.bf16.mxu0 0
    %3723 = vmatpush1.bf16.msra.mxu0 0
    %3724 = vmatprep.subr.bf16.mxu0 0
    %3725 = vmatpush1.bf16.msra.mxu0 0
    %3726 = vmatprep.subr.bf16.mxu0 0
    %3727 = vmatpush1.bf16.msra.mxu0 0
    %3728 = vmatprep.subr.bf16.mxu0 0
    %3729 = vmatpush1.bf16.msra.mxu0 0
    %3730 = vmatprep.subr.bf16.mxu0 0
    %3731 = vmatpush1.bf16.msra.mxu0 0
    %3732 = vmatprep.subr.bf16.mxu0 0
    %3733 = vmatpush1.bf16.msra.mxu0 0
    %3734 = vmatprep.subr.bf16.mxu0 0
    %3735 = vmatpush1.bf16.msra.mxu0 0
    %3736 = vmatprep.subr.bf16.mxu0 0
    %3737 = vmatpush1.bf16.msra.mxu0 0
    %3738 = vmatprep.subr.bf16.mxu0 0
    %3739 = vmatpush1.bf16.msra.mxu0 0
    %3740 = vmatprep.subr.bf16.mxu0 0
    %3741 = vmatpush1.bf16.msra.mxu0 0
    %3742 = vmatprep.subr.bf16.mxu0 0
    %3743 = vmatpush1.bf16.msra.mxu0 0
    %3744 = vmatprep.subr.bf16.mxu0 0
    %3745 = vmatpush1.bf16.msra.mxu0 0
    %3746 = vmatprep.subr.bf16.mxu0 0
    %3747 = vmatpush1.bf16.msra.mxu0 0
    %3748 = vmatprep.subr.bf16.mxu0 0
    %3749 = vmatpush1.bf16.msra.mxu0 0
    %3750 = vmatprep.mubr.bf16.mxu0 0
    %3751 = vmatmul.mubr.bf16.gmra.mrb[0].mxu0 %v3620
    %v3752 = vpop.f32.mrb[0].mxu0
    %v3753 = vadd.f32 0.0, %v3752
    %v3754 = vpop.f32.mrb[0].mxu0
    %v3755 = vpop.f32.mrb[0].mxu0
    %v3756 = vadd.f32 0.0, %v3755
    %v3757 = vpop.f32.mrb[0].mxu0
    %3758 = vmatprep.mubr.bf16.mxu0 0
    %3759 = vmatmul.mubr.bf16.gmra.mrb[0].mxu0 %v3623
    %v3760 = vpop.f32.mrb[0].mxu0
    %v3761 = vadd.f32 0.0, %v3760
    %v3762 = vpop.f32.mrb[0].mxu0
    %v3763 = vpop.f32.mrb[0].mxu0
    %v3764 = vadd.f32 0.0, %v3763
    %v3765 = vpop.f32.mrb[0].mxu0
    %3766 = vmatprep.mubr.bf16.mxu0 0
    %3767 = vmatmul.mubr.bf16.gmra.mrb[0].mxu0 %v3626
    %v3768 = vpop.f32.mrb[0].mxu0
    %v3769 = vadd.f32 0.0, %v3768
    %v3770 = vpop.f32.mrb[0].mxu0
    %v3771 = vpop.f32.mrb[0].mxu0
    %v3772 = vadd.f32 0.0, %v3771
    %v3773 = vpop.f32.mrb[0].mxu0
    %3774 = vmatprep.mubr.bf16.mxu0 0
    %3775 = vmatmul.mubr.bf16.gmra.mrb[0].mxu0 %v3629
    %v3776 = vpop.f32.mrb[0].mxu0
    %v3777 = vadd.f32 0.0, %v3776
    %v3778 = vpop.f32.mrb[0].mxu0
    %v3779 = vpop.f32.mrb[0].mxu0
    %v3780 = vadd.f32 0.0, %v3779
    %v3781 = vpop.f32.mrb[0].mxu0
    %3782 = vmatprep.mubr.bf16.mxu0 0
    %3783 = vmatmul.mubr.bf16.gmra.mrb[0].mxu0 %v3632
    %v3784 = vpop.f32.mrb[0].mxu0
    %v3785 = vadd.f32 0.0, %v3784
    %v3786 = vpop.f32.mrb[0].mxu0
    %v3787 = vpop.f32.mrb[0].mxu0
    %v3788 = vadd.f32 0.0, %v3787
    %v3789 = vpop.f32.mrb[0].mxu0
    %3790 = vmatprep.mubr.bf16.mxu0 0
    %3791 = vmatmul.mubr.bf16.gmra.mrb[0].mxu0 %v3635
    %v3792 = vpop.f32.mrb[0].mxu0
    %v3793 = vadd.f32 0.0, %v3792
    %v3794 = vpop.f32.mrb[0].mxu0
    %v3795 = vpop.f32.mrb[0].mxu0
    %v3796 = vadd.f32 0.0, %v3795
    %v3797 = vpop.f32.mrb[0].mxu0
    %3798 = vmatprep.mubr.bf16.mxu0 0
    %3799 = vmatmul.mubr.bf16.gmra.mrb[0].mxu0 %v3638
    %v3800 = vpop.f32.mrb[0].mxu0
    %v3801 = vadd.f32 0.0, %v3800
    %v3802 = vpop.f32.mrb[0].mxu0
    %v3803 = vpop.f32.mrb[0].mxu0
    %v3804 = vadd.f32 0.0, %v3803
    %v3805 = vpop.f32.mrb[0].mxu0
    %3806 = vmatprep.mubr.bf16.mxu0 0
    %3807 = vmatmul.mubr.bf16.gmra.mrb[0].mxu0 %v3641
    %v3808 = vpop.f32.mrb[0].mxu0
    %v3809 = vadd.f32 0.0, %v3808
    %v3810 = vpop.f32.mrb[0].mxu0
    %v3811 = vpop.f32.mrb[0].mxu0
    %v3812 = vadd.f32 0.0, %v3811
    %v3813 = vpop.f32.mrb[0].mxu0
    %3814 = vmatprep.mubr.bf16.mxu0 0
    %3815 = vmatmul.mubr.bf16.gmra.mrb[0].mxu0 %v3644
    %v3816 = vpop.f32.mrb[0].mxu0
    %v3817 = vadd.f32 0.0, %v3816
    %v3818 = vpop.f32.mrb[0].mxu0
    %v3819 = vpop.f32.mrb[0].mxu0
    %v3820 = vadd.f32 0.0, %v3819
    %v3821 = vpop.f32.mrb[0].mxu0
    %3822 = vmatprep.mubr.bf16.mxu0 0
    %3823 = vmatmul.mubr.bf16.gmra.mrb[0].mxu0 %v3647
    %v3824 = vpop.f32.mrb[0].mxu0
    %v3825 = vadd.f32 0.0, %v3824
    %v3826 = vpop.f32.mrb[0].mxu0
    %v3827 = vpop.f32.mrb[0].mxu0
    %v3828 = vadd.f32 0.0, %v3827
    %v3829 = vpop.f32.mrb[0].mxu0
    %3830 = vmatprep.mubr.bf16.mxu0 0
    %3831 = vmatmul.mubr.bf16.gmra.mrb[0].mxu0 %v3650
    %v3832 = vpop.f32.mrb[0].mxu0
    %v3833 = vadd.f32 0.0, %v3832
    %v3834 = vpop.f32.mrb[0].mxu0
    %v3835 = vpop.f32.mrb[0].mxu0
    %v3836 = vadd.f32 0.0, %v3835
    %v3837 = vpop.f32.mrb[0].mxu0
    %3838 = vmatprep.mubr.bf16.mxu0 0
    %3839 = vmatmul.mubr.bf16.gmra.mrb[0].mxu0 %v3653
    %v3840 = vpop.f32.mrb[0].mxu0
    %v3841 = vadd.f32 0.0, %v3840
    %v3842 = vpop.f32.mrb[0].mxu0
    %v3843 = vpop.f32.mrb[0].mxu0
    %v3844 = vadd.f32 0.0, %v3843
    %v3845 = vpop.f32.mrb[0].mxu0
    %3846 = vmatprep.mubr.bf16.mxu0 0
    %3847 = vmatmul.mubr.bf16.gmra.mrb[0].mxu0 %v3656
    %v3848 = vpop.f32.mrb[0].mxu0
    %v3849 = vadd.f32 0.0, %v3848
    %v3850 = vpop.f32.mrb[0].mxu0
    %v3851 = vpop.f32.mrb[0].mxu0
    %v3852 = vadd.f32 0.0, %v3851
    %v3853 = vpop.f32.mrb[0].mxu0
    %3854 = vmatprep.mubr.bf16.mxu0 0
    %3855 = vmatmul.mubr.bf16.gmra.mrb[0].mxu0 %v3659
    %v3856 = vpop.f32.mrb[0].mxu0
    %v3857 = vadd.f32 0.0, %v3856
    %v3858 = vpop.f32.mrb[0].mxu0
    %v3859 = vpop.f32.mrb[0].mxu0
    %v3860 = vadd.f32 0.0, %v3859
    %v3861 = vpop.f32.mrb[0].mxu0
    %3862 = vmatprep.mubr.bf16.mxu0 0
    %3863 = vmatmul.mubr.bf16.gmra.mrb[0].mxu0 %v3662
    %v3864 = vpop.f32.mrb[0].mxu0
    %v3865 = vadd.f32 0.0, %v3864
    %v3866 = vpop.f32.mrb[0].mxu0
    %v3867 = vpop.f32.mrb[0].mxu0
    %v3868 = vadd.f32 0.0, %v3867
    %v3869 = vpop.f32.mrb[0].mxu0
    %3870 = vmatprep.mubr.bf16.mxu0 0
    %3871 = vmatmul.mubr.bf16.gmra.mrb[0].mxu0 %v3665
    %v3872 = vpop.f32.mrb[0].mxu0
    %v3873 = vadd.f32 0.0, %v3872
    %v3874 = vpop.f32.mrb[0].mxu0
    %v3875 = vpop.f32.mrb[0].mxu0
    %v3876 = vadd.f32 0.0, %v3875
    %v3877 = vpop.f32.mrb[0].mxu0
    %3878 = vmatprep.mubr.bf16.mxu0 0
    %3879 = vmatmul.mubr.bf16.gmra.mrb[0].mxu0 %v3668
    %v3880 = vpop.f32.mrb[0].mxu0
    %v3881 = vadd.f32 0.0, %v3880
    %v3882 = vpop.f32.mrb[0].mxu0
    %v3883 = vpop.f32.mrb[0].mxu0
    %v3884 = vadd.f32 0.0, %v3883
    %v3885 = vpop.f32.mrb[0].mxu0
    %3886 = vmatprep.mubr.bf16.mxu0 0
    %3887 = vmatmul.mubr.bf16.gmra.mrb[0].mxu0 %v3671
    %v3888 = vpop.f32.mrb[0].mxu0
    %v3889 = vadd.f32 0.0, %v3888
    %v3890 = vpop.f32.mrb[0].mxu0
    %v3891 = vpop.f32.mrb[0].mxu0
    %v3892 = vadd.f32 0.0, %v3891
    %v3893 = vpop.f32.mrb[0].mxu0
    %3894 = vmatprep.mubr.bf16.mxu0 0
    %3895 = vmatmul.mubr.bf16.gmra.mrb[0].mxu0 %v3674
    %v3896 = vpop.f32.mrb[0].mxu0
    %v3897 = vadd.f32 0.0, %v3896
    %v3898 = vpop.f32.mrb[0].mxu0
    %v3899 = vpop.f32.mrb[0].mxu0
    %v3900 = vadd.f32 0.0, %v3899
    %v3901 = vpop.f32.mrb[0].mxu0
    %3902 = vmatprep.mubr.bf16.mxu0 0
    %3903 = vmatmul.mubr.bf16.gmra.mrb[0].mxu0 %v3677
    %v3904 = vpop.f32.mrb[0].mxu0
    %v3905 = vadd.f32 0.0, %v3904
    %v3906 = vpop.f32.mrb[0].mxu0
    %v3907 = vpop.f32.mrb[0].mxu0
    %v3908 = vadd.f32 0.0, %v3907
    %v3909 = vpop.f32.mrb[0].mxu0
    %3910 = vmatprep.mubr.bf16.mxu0 0
    %3911 = vmatmul.mubr.bf16.gmra.mrb[0].mxu0 %v3680
    %v3912 = vpop.f32.mrb[0].mxu0
    %v3913 = vadd.f32 0.0, %v3912
    %v3914 = vpop.f32.mrb[0].mxu0
    %v3915 = vpop.f32.mrb[0].mxu0
    %v3916 = vadd.f32 0.0, %v3915
    %v3917 = vpop.f32.mrb[0].mxu0
    %3918 = vmatprep.mubr.bf16.mxu0 0
    %3919 = vmatmul.mubr.bf16.gmra.mrb[0].mxu0 %v3683
    %v3920 = vpop.f32.mrb[0].mxu0
    %v3921 = vadd.f32 0.0, %v3920
    %v3922 = vpop.f32.mrb[0].mxu0
    %v3923 = vpop.f32.mrb[0].mxu0
    %v3924 = vadd.f32 0.0, %v3923
    %v3925 = vpop.f32.mrb[0].mxu0
    %3926 = vmatprep.mubr.bf16.mxu0 0
    %3927 = vmatmul.mubr.bf16.gmra.mrb[0].mxu0 %v3686
    %v3928 = vpop.f32.mrb[0].mxu0
    %v3929 = vadd.f32 0.0, %v3928
    %v3930 = vpop.f32.mrb[0].mxu0
    %v3931 = vpop.f32.mrb[0].mxu0
    %v3932 = vadd.f32 0.0, %v3931
    %v3933 = vpop.f32.mrb[0].mxu0
    %3934 = vmatprep.mubr.bf16.mxu0 0
    %3935 = vmatmul.mubr.bf16.gmra.mrb[0].mxu0 %v3689
    %v3936 = vpop.f32.mrb[0].mxu0
    %v3937 = vadd.f32 0.0, %v3936
    %v3938 = vpop.f32.mrb[0].mxu0
    %v3939 = vpop.f32.mrb[0].mxu0
    %v3940 = vadd.f32 0.0, %v3939
    %v3941 = vpop.f32.mrb[0].mxu0
    %3942 = vmatprep.mubr.bf16.mxu0 0
    %3943 = vmatmul.mubr.bf16.gmra.mrb[0].mxu0 %v3692
    %v3944 = vpop.f32.mrb[0].mxu0
    %v3945 = vadd.f32 0.0, %v3944
    %v3946 = vpop.f32.mrb[0].mxu0
    %v3947 = vpop.f32.mrb[0].mxu0
    %v3948 = vadd.f32 0.0, %v3947
    %v3949 = vpop.f32.mrb[0].mxu0
    %3950 = vmatprep.mubr.bf16.mxu0 0
    %3951 = vmatmul.mubr.bf16.gmra.mrb[0].mxu0 %v3695
    %v3952 = vpop.f32.mrb[0].mxu0
    %v3953 = vadd.f32 0.0, %v3952
    %v3954 = vpop.f32.mrb[0].mxu0
    %v3955 = vpop.f32.mrb[0].mxu0
    %v3956 = vadd.f32 0.0, %v3955
    %v3957 = vpop.f32.mrb[0].mxu0
    %3958 = vmatprep.mubr.bf16.mxu0 0
    %3959 = vmatmul.mubr.bf16.gmra.mrb[0].mxu0 %v3698
    %v3960 = vpop.f32.mrb[0].mxu0
    %v3961 = vadd.f32 0.0, %v3960
    %v3962 = vpop.f32.mrb[0].mxu0
    %v3963 = vpop.f32.mrb[0].mxu0
    %v3964 = vadd.f32 0.0, %v3963
    %v3965 = vpop.f32.mrb[0].mxu0
    %3966 = vmatprep.mubr.bf16.mxu0 0
    %3967 = vmatmul.mubr.bf16.gmra.mrb[0].mxu0 %v3701
    %v3968 = vpop.f32.mrb[0].mxu0
    %v3969 = vadd.f32 0.0, %v3968
    %v3970 = vpop.f32.mrb[0].mxu0
    %v3971 = vpop.f32.mrb[0].mxu0
    %v3972 = vadd.f32 0.0, %v3971
    %v3973 = vpop.f32.mrb[0].mxu0
    %3974 = vmatprep.mubr.bf16.mxu0 0
    %3975 = vmatmul.mubr.bf16.gmra.mrb[0].mxu0 %v3704
    %v3976 = vpop.f32.mrb[0].mxu0
    %v3977 = vadd.f32 0.0, %v3976
    %v3978 = vpop.f32.mrb[0].mxu0
    %v3979 = vpop.f32.mrb[0].mxu0
    %v3980 = vadd.f32 0.0, %v3979
    %v3981 = vpop.f32.mrb[0].mxu0
    %3982 = vmatprep.mubr.bf16.mxu0 0
    %3983 = vmatmul.mubr.bf16.gmra.mrb[0].mxu0 %v3707
    %v3984 = vpop.f32.mrb[0].mxu0
    %v3985 = vadd.f32 0.0, %v3984
    %v3986 = vpop.f32.mrb[0].mxu0
    %v3987 = vpop.f32.mrb[0].mxu0
    %v3988 = vadd.f32 0.0, %v3987
    %v3989 = vpop.f32.mrb[0].mxu0
    %3990 = vmatprep.mubr.bf16.mxu0 0
    %3991 = vmatmul.mubr.bf16.gmra.mrb[0].mxu0 %v3710
    %v3992 = vpop.f32.mrb[0].mxu0
    %v3993 = vadd.f32 0.0, %v3992
    %v3994 = vpop.f32.mrb[0].mxu0
    %v3995 = vpop.f32.mrb[0].mxu0
    %v3996 = vadd.f32 0.0, %v3995
    %v3997 = vpop.f32.mrb[0].mxu0
    %3998 = vmatprep.mubr.bf16.mxu0 0
    %3999 = vmatmul.mubr.bf16.gmra.mrb[0].mxu0 %v3713
    %v4000 = vpop.f32.mrb[0].mxu0
    %v4001 = vadd.f32 0.0, %v4000
    %v4002 = vpop.f32.mrb[0].mxu0
    %v4003 = vpop.f32.mrb[0].mxu0
    %v4004 = vadd.f32 0.0, %v4003
    %v4005 = vpop.f32.mrb[0].mxu0
    %4006 = vdwg.mxu0
    %v4007 = vld [vmem:[#allocation2] sm:$0xff]
    %v4008 = vld [vmem:[#allocation2 + $0x8] sm:$0xff]
    %v4009 = vld [vmem:[#allocation2 + $0x10] sm:$0xff]
    %v4010 = vld [vmem:[#allocation2 + $0x18] sm:$0xff]
    %v4011 = vld [vmem:[#allocation2 + $0x20] sm:$0xff]
    %v4012 = vld [vmem:[#allocation2 + $0x28] sm:$0xff]
    %v4013 = vld [vmem:[#allocation2 + $0x30] sm:$0xff]
    %v4014 = vld [vmem:[#allocation2 + $0x38] sm:$0xff]
    %v4015 = vld [vmem:[#allocation2 + $0x40] sm:$0xff]
    %v4016 = vld [vmem:[#allocation2 + $0x48] sm:$0xff]
    %v4017 = vld [vmem:[#allocation2 + $0x50] sm:$0xff]
    %v4018 = vld [vmem:[#allocation2 + $0x58] sm:$0xff]
    %v4019 = vld [vmem:[#allocation2 + $0x60] sm:$0xff]
    %v4020 = vld [vmem:[#allocation2 + $0x68] sm:$0xff]
    %v4021 = vld [vmem:[#allocation2 + $0x70] sm:$0xff]
    %v4022 = vld [vmem:[#allocation2 + $0x78] sm:$0xff]
    %v4023 = vld [vmem:[#allocation2 + $0x80] sm:$0xff]
    %v4024 = vld [vmem:[#allocation2 + $0x88] sm:$0xff]
    %v4025 = vld [vmem:[#allocation2 + $0x90] sm:$0xff]
    %v4026 = vld [vmem:[#allocation2 + $0x98] sm:$0xff]
    %v4027 = vld [vmem:[#allocation2 + $0xa0] sm:$0xff]
    %v4028 = vld [vmem:[#allocation2 + $0xa8] sm:$0xff]
    %v4029 = vld [vmem:[#allocation2 + $0xb0] sm:$0xff]
    %v4030 = vld [vmem:[#allocation2 + $0xb8] sm:$0xff]
    %v4031 = vld [vmem:[#allocation2 + $0xc0] sm:$0xff]
    %v4032 = vld [vmem:[#allocation2 + $0xc8] sm:$0xff]
    %v4033 = vld [vmem:[#allocation2 + $0xd0] sm:$0xff]
    %v4034 = vld [vmem:[#allocation2 + $0xd8] sm:$0xff]
    %v4035 = vld [vmem:[#allocation2 + $0xe0] sm:$0xff]
    %v4036 = vld [vmem:[#allocation2 + $0xe8] sm:$0xff]
    %v4037 = vld [vmem:[#allocation2 + $0xf0] sm:$0xff]
    %v4038 = vld [vmem:[#allocation2 + $0xf8] sm:$0xff]
    %v4039 = vld [vmem:[#allocation2 + $0x100] sm:$0xff]
    %v4040 = vld [vmem:[#allocation2 + $0x108] sm:$0xff]
    %v4041 = vld [vmem:[#allocation2 + $0x110] sm:$0xff]
    %v4042 = vld [vmem:[#allocation2 + $0x118] sm:$0xff]
    %v4043 = vld [vmem:[#allocation2 + $0x120] sm:$0xff]
    %v4044 = vld [vmem:[#allocation2 + $0x128] sm:$0xff]
    %v4045 = vld [vmem:[#allocation2 + $0x130] sm:$0xff]
    %v4046 = vld [vmem:[#allocation2 + $0x138] sm:$0xff]
    %v4047 = vld [vmem:[#allocation2 + $0x140] sm:$0xff]
    %v4048 = vld [vmem:[#allocation2 + $0x148] sm:$0xff]
    %v4049 = vld [vmem:[#allocation2 + $0x150] sm:$0xff]
    %v4050 = vld [vmem:[#allocation2 + $0x158] sm:$0xff]
    %v4051 = vld [vmem:[#allocation2 + $0x160] sm:$0xff]
    %v4052 = vld [vmem:[#allocation2 + $0x168] sm:$0xff]
    %v4053 = vld [vmem:[#allocation2 + $0x170] sm:$0xff]
    %v4054 = vld [vmem:[#allocation2 + $0x178] sm:$0xff]
    %v4055 = vld [vmem:[#allocation2 + $0x180] sm:$0xff]
    %v4056 = vld [vmem:[#allocation2 + $0x188] sm:$0xff]
    %v4057 = vld [vmem:[#allocation2 + $0x190] sm:$0xff]
    %v4058 = vld [vmem:[#allocation2 + $0x198] sm:$0xff]
    %v4059 = vld [vmem:[#allocation2 + $0x1a0] sm:$0xff]
    %v4060 = vld [vmem:[#allocation2 + $0x1a8] sm:$0xff]
    %v4061 = vld [vmem:[#allocation2 + $0x1b0] sm:$0xff]
    %v4062 = vld [vmem:[#allocation2 + $0x1b8] sm:$0xff]
    %v4063 = vld [vmem:[#allocation2 + $0x1c0] sm:$0xff]
    %v4064 = vld [vmem:[#allocation2 + $0x1c8] sm:$0xff]
    %v4065 = vld [vmem:[#allocation2 + $0x1d0] sm:$0xff]
    %v4066 = vld [vmem:[#allocation2 + $0x1d8] sm:$0xff]
    %v4067 = vld [vmem:[#allocation2 + $0x1e0] sm:$0xff]
    %v4068 = vld [vmem:[#allocation2 + $0x1e8] sm:$0xff]
    %v4069 = vld [vmem:[#allocation2 + $0x1f0] sm:$0xff]
    %v4070 = vld [vmem:[#allocation2 + $0x1f8] sm:$0xff]
    %v4071 = vadd.f32 %v4007, %v3753
    %v4072 = vadd.f32 %v4008, %v3756
    %v4073 = vadd.f32 %v4009, %v3761
    %v4074 = vadd.f32 %v4010, %v3764
    %v4075 = vadd.f32 %v4011, %v3769
    %v4076 = vadd.f32 %v4012, %v3772
    %v4077 = vadd.f32 %v4013, %v3777
    %v4078 = vadd.f32 %v4014, %v3780
    %v4079 = vadd.f32 %v4015, %v3785
    %v4080 = vadd.f32 %v4016, %v3788
    %v4081 = vadd.f32 %v4017, %v3793
    %v4082 = vadd.f32 %v4018, %v3796
    %v4083 = vadd.f32 %v4019, %v3801
    %v4084 = vadd.f32 %v4020, %v3804
    %v4085 = vadd.f32 %v4021, %v3809
    %v4086 = vadd.f32 %v4022, %v3812
    %v4087 = vadd.f32 %v4023, %v3817
    %v4088 = vadd.f32 %v4024, %v3820
    %v4089 = vadd.f32 %v4025, %v3825
    %v4090 = vadd.f32 %v4026, %v3828
    %v4091 = vadd.f32 %v4027, %v3833
    %v4092 = vadd.f32 %v4028, %v3836
    %v4093 = vadd.f32 %v4029, %v3841
    %v4094 = vadd.f32 %v4030, %v3844
    %v4095 = vadd.f32 %v4031, %v3849
    %v4096 = vadd.f32 %v4032, %v3852
    %v4097 = vadd.f32 %v4033, %v3857
    %v4098 = vadd.f32 %v4034, %v3860
    %v4099 = vadd.f32 %v4035, %v3865
    %v4100 = vadd.f32 %v4036, %v3868
    %v4101 = vadd.f32 %v4037, %v3873
    %v4102 = vadd.f32 %v4038, %v3876
    %v4103 = vadd.f32 %v4039, %v3881
    %v4104 = vadd.f32 %v4040, %v3884
    %v4105 = vadd.f32 %v4041, %v3889
    %v4106 = vadd.f32 %v4042, %v3892
    %v4107 = vadd.f32 %v4043, %v3897
    %v4108 = vadd.f32 %v4044, %v3900
    %v4109 = vadd.f32 %v4045, %v3905
    %v4110 = vadd.f32 %v4046, %v3908
    %v4111 = vadd.f32 %v4047, %v3913
    %v4112 = vadd.f32 %v4048, %v3916
    %v4113 = vadd.f32 %v4049, %v3921
    %v4114 = vadd.f32 %v4050, %v3924
    %v4115 = vadd.f32 %v4051, %v3929
    %v4116 = vadd.f32 %v4052, %v3932
    %v4117 = vadd.f32 %v4053, %v3937
    %v4118 = vadd.f32 %v4054, %v3940
    %v4119 = vadd.f32 %v4055, %v3945
    %v4120 = vadd.f32 %v4056, %v3948
    %v4121 = vadd.f32 %v4057, %v3953
    %v4122 = vadd.f32 %v4058, %v3956
    %v4123 = vadd.f32 %v4059, %v3961
    %v4124 = vadd.f32 %v4060, %v3964
    %v4125 = vadd.f32 %v4061, %v3969
    %v4126 = vadd.f32 %v4062, %v3972
    %v4127 = vadd.f32 %v4063, %v3977
    %v4128 = vadd.f32 %v4064, %v3980
    %v4129 = vadd.f32 %v4065, %v3985
    %v4130 = vadd.f32 %v4066, %v3988
    %v4131 = vadd.f32 %v4067, %v3993
    %v4132 = vadd.f32 %v4068, %v3996
    %v4133 = vadd.f32 %v4069, %v4001
    %v4134 = vadd.f32 %v4070, %v4004
    %4135 = vst.msk [vmem:[#allocation2] sm:$0xff] %vm685, %v4071
    %4136 = vst.msk [vmem:[#allocation2 + $0x8] sm:$0xff] %vm685, %v4072
    %4137 = vst.msk [vmem:[#allocation2 + $0x10] sm:$0xff] %vm685, %v4073
    %4138 = vst.msk [vmem:[#allocation2 + $0x18] sm:$0xff] %vm685, %v4074
    %4139 = vst.msk [vmem:[#allocation2 + $0x20] sm:$0xff] %vm685, %v4075
    %4140 = vst.msk [vmem:[#allocation2 + $0x28] sm:$0xff] %vm685, %v4076
    %4141 = vst.msk [vmem:[#allocation2 + $0x30] sm:$0xff] %vm685, %v4077
    %4142 = vst.msk [vmem:[#allocation2 + $0x38] sm:$0xff] %vm685, %v4078
    %4143 = vst.msk [vmem:[#allocation2 + $0x40] sm:$0xff] %vm685, %v4079
    %4144 = vst.msk [vmem:[#allocation2 + $0x48] sm:$0xff] %vm685, %v4080
    %4145 = vst.msk [vmem:[#allocation2 + $0x50] sm:$0xff] %vm685, %v4081
    %4146 = vst.msk [vmem:[#allocation2 + $0x58] sm:$0xff] %vm685, %v4082
    %4147 = vst.msk [vmem:[#allocation2 + $0x60] sm:$0xff] %vm685, %v4083
    %4148 = vst.msk [vmem:[#allocation2 + $0x68] sm:$0xff] %vm685, %v4084
    %4149 = vst.msk [vmem:[#allocation2 + $0x70] sm:$0xff] %vm685, %v4085
    %4150 = vst.msk [vmem:[#allocation2 + $0x78] sm:$0xff] %vm685, %v4086
    %4151 = vst.msk [vmem:[#allocation2 + $0x80] sm:$0xff] %vm685, %v4087
    %4152 = vst.msk [vmem:[#allocation2 + $0x88] sm:$0xff] %vm685, %v4088
    %4153 = vst.msk [vmem:[#allocation2 + $0x90] sm:$0xff] %vm685, %v4089
    %4154 = vst.msk [vmem:[#allocation2 + $0x98] sm:$0xff] %vm685, %v4090
    %4155 = vst.msk [vmem:[#allocation2 + $0xa0] sm:$0xff] %vm685, %v4091
    %4156 = vst.msk [vmem:[#allocation2 + $0xa8] sm:$0xff] %vm685, %v4092
    %4157 = vst.msk [vmem:[#allocation2 + $0xb0] sm:$0xff] %vm685, %v4093
    %4158 = vst.msk [vmem:[#allocation2 + $0xb8] sm:$0xff] %vm685, %v4094
    %4159 = vst.msk [vmem:[#allocation2 + $0xc0] sm:$0xff] %vm685, %v4095
    %4160 = vst.msk [vmem:[#allocation2 + $0xc8] sm:$0xff] %vm685, %v4096
    %4161 = vst.msk [vmem:[#allocation2 + $0xd0] sm:$0xff] %vm685, %v4097
    %4162 = vst.msk [vmem:[#allocation2 + $0xd8] sm:$0xff] %vm685, %v4098
    %4163 = vst.msk [vmem:[#allocation2 + $0xe0] sm:$0xff] %vm685, %v4099
    %4164 = vst.msk [vmem:[#allocation2 + $0xe8] sm:$0xff] %vm685, %v4100
    %4165 = vst.msk [vmem:[#allocation2 + $0xf0] sm:$0xff] %vm685, %v4101
    %4166 = vst.msk [vmem:[#allocation2 + $0xf8] sm:$0xff] %vm685, %v4102
    %4167 = vst.msk [vmem:[#allocation2 + $0x100] sm:$0xff] %vm685, %v4103
    %4168 = vst.msk [vmem:[#allocation2 + $0x108] sm:$0xff] %vm685, %v4104
    %4169 = vst.msk [vmem:[#allocation2 + $0x110] sm:$0xff] %vm685, %v4105
    %4170 = vst.msk [vmem:[#allocation2 + $0x118] sm:$0xff] %vm685, %v4106
    %4171 = vst.msk [vmem:[#allocation2 + $0x120] sm:$0xff] %vm685, %v4107
    %4172 = vst.msk [vmem:[#allocation2 + $0x128] sm:$0xff] %vm685, %v4108
    %4173 = vst.msk [vmem:[#allocation2 + $0x130] sm:$0xff] %vm685, %v4109
    %4174 = vst.msk [vmem:[#allocation2 + $0x138] sm:$0xff] %vm685, %v4110
    %4175 = vst.msk [vmem:[#allocation2 + $0x140] sm:$0xff] %vm685, %v4111
    %4176 = vst.msk [vmem:[#allocation2 + $0x148] sm:$0xff] %vm685, %v4112
    %4177 = vst.msk [vmem:[#allocation2 + $0x150] sm:$0xff] %vm685, %v4113
    %4178 = vst.msk [vmem:[#allocation2 + $0x158] sm:$0xff] %vm685, %v4114
    %4179 = vst.msk [vmem:[#allocation2 + $0x160] sm:$0xff] %vm685, %v4115
    %4180 = vst.msk [vmem:[#allocation2 + $0x168] sm:$0xff] %vm685, %v4116
    %4181 = vst.msk [vmem:[#allocation2 + $0x170] sm:$0xff] %vm685, %v4117
    %4182 = vst.msk [vmem:[#allocation2 + $0x178] sm:$0xff] %vm685, %v4118
    %4183 = vst.msk [vmem:[#allocation2 + $0x180] sm:$0xff] %vm685, %v4119
    %4184 = vst.msk [vmem:[#allocation2 + $0x188] sm:$0xff] %vm685, %v4120
    %4185 = vst.msk [vmem:[#allocation2 + $0x190] sm:$0xff] %vm685, %v4121
    %4186 = vst.msk [vmem:[#allocation2 + $0x198] sm:$0xff] %vm685, %v4122
    %4187 = vst.msk [vmem:[#allocation2 + $0x1a0] sm:$0xff] %vm685, %v4123
    %4188 = vst.msk [vmem:[#allocation2 + $0x1a8] sm:$0xff] %vm685, %v4124
    %4189 = vst.msk [vmem:[#allocation2 + $0x1b0] sm:$0xff] %vm685, %v4125
    %4190 = vst.msk [vmem:[#allocation2 + $0x1b8] sm:$0xff] %vm685, %v4126
    %4191 = vst.msk [vmem:[#allocation2 + $0x1c0] sm:$0xff] %vm685, %v4127
    %4192 = vst.msk [vmem:[#allocation2 + $0x1c8] sm:$0xff] %vm685, %v4128
    %4193 = vst.msk [vmem:[#allocation2 + $0x1d0] sm:$0xff] %vm685, %v4129
    %4194 = vst.msk [vmem:[#allocation2 + $0x1d8] sm:$0xff] %vm685, %v4130
    %4195 = vst.msk [vmem:[#allocation2 + $0x1e0] sm:$0xff] %vm685, %v4131
    %4196 = vst.msk [vmem:[#allocation2 + $0x1e8] sm:$0xff] %vm685, %v4132
    %4197 = vst.msk [vmem:[#allocation2 + $0x1f0] sm:$0xff] %vm685, %v4133
    %4198 = vst.msk [vmem:[#allocation2 + $0x1f8] sm:$0xff] %vm685, %v4134
    %v4199 = vld [vmem:[%s3392] sm:$0xf]
    %v4200 = vld [vmem:[%s3392 + $0x4] sm:$0xf]
    %v4201 = vld [vmem:[%s3392 + $0x8] sm:$0x1]
    %v4202 = vld [vmem:[%s3392 + $0xc] sm:$0xf]
    %v4203 = vld [vmem:[%s3392 + $0x10] sm:$0xf]
    %v4204 = vld [vmem:[%s3392 + $0x14] sm:$0x1]
    %v4205 = vld [vmem:[%s3392 + $0x18] sm:$0xf]
    %v4206 = vld [vmem:[%s3392 + $0x1c] sm:$0xf]
    %v4207 = vld [vmem:[%s3392 + $0x20] sm:$0x1]
    %v4208 = vld [vmem:[%s3392 + $0x24] sm:$0xf]
    %v4209 = vld [vmem:[%s3392 + $0x28] sm:$0xf]
    %v4210 = vld [vmem:[%s3392 + $0x2c] sm:$0x1]
    %v4211 = vld [vmem:[%s3392 + $0x30] sm:$0xf]
    %v4212 = vld [vmem:[%s3392 + $0x34] sm:$0xf]
    %v4213 = vld [vmem:[%s3392 + $0x38] sm:$0x1]
    %v4214 = vld [vmem:[%s3392 + $0x3c] sm:$0xf]
    %v4215 = vld [vmem:[%s3392 + $0x40] sm:$0xf]
    %v4216 = vld [vmem:[%s3392 + $0x44] sm:$0x1]
    %v4217 = vld [vmem:[%s3392 + $0x48] sm:$0xf]
    %v4218 = vld [vmem:[%s3392 + $0x4c] sm:$0xf]
    %v4219 = vld [vmem:[%s3392 + $0x50] sm:$0x1]
    %v4220 = vld [vmem:[%s3392 + $0x54] sm:$0xf]
    %v4221 = vld [vmem:[%s3392 + $0x58] sm:$0xf]
    %v4222 = vld [vmem:[%s3392 + $0x5c] sm:$0x1]
    %v4223 = vld [vmem:[%s3392 + $0x60] sm:$0xf]
    %v4224 = vld [vmem:[%s3392 + $0x64] sm:$0xf]
    %v4225 = vld [vmem:[%s3392 + $0x68] sm:$0x1]
    %v4226 = vld [vmem:[%s3392 + $0x6c] sm:$0xf]
    %v4227 = vld [vmem:[%s3392 + $0x70] sm:$0xf]
    %v4228 = vld [vmem:[%s3392 + $0x74] sm:$0x1]
    %v4229 = vld [vmem:[%s3392 + $0x78] sm:$0xf]
    %v4230 = vld [vmem:[%s3392 + $0x7c] sm:$0xf]
    %v4231 = vld [vmem:[%s3392 + $0x80] sm:$0x1]
    %v4232 = vld [vmem:[%s3392 + $0x84] sm:$0xf]
    %v4233 = vld [vmem:[%s3392 + $0x88] sm:$0xf]
    %v4234 = vld [vmem:[%s3392 + $0x8c] sm:$0x1]
    %v4235 = vld [vmem:[%s3392 + $0x90] sm:$0xf]
    %v4236 = vld [vmem:[%s3392 + $0x94] sm:$0xf]
    %v4237 = vld [vmem:[%s3392 + $0x98] sm:$0x1]
    %v4238 = vld [vmem:[%s3392 + $0x9c] sm:$0xf]
    %v4239 = vld [vmem:[%s3392 + $0xa0] sm:$0xf]
    %v4240 = vld [vmem:[%s3392 + $0xa4] sm:$0x1]
    %v4241 = vld [vmem:[%s3392 + $0xa8] sm:$0xf]
    %v4242 = vld [vmem:[%s3392 + $0xac] sm:$0xf]
    %v4243 = vld [vmem:[%s3392 + $0xb0] sm:$0x1]
    %v4244 = vld [vmem:[%s3392 + $0xb4] sm:$0xf]
    %v4245 = vld [vmem:[%s3392 + $0xb8] sm:$0xf]
    %v4246 = vld [vmem:[%s3392 + $0xbc] sm:$0x1]
    %v4247 = vld [vmem:[%s3392 + $0xd8] sm:$0xf]
    %v4248 = vld [vmem:[%s3392 + $0xdc] sm:$0xf]
    %v4249 = vld [vmem:[%s3392 + $0xe0] sm:$0x1]
    %v4250 = vld [vmem:[%s3392 + $0xe4] sm:$0xf]
    %v4251 = vld [vmem:[%s3392 + $0xe8] sm:$0xf]
    %v4252 = vld [vmem:[%s3392 + $0xec] sm:$0x1]
    %v4253 = vld [vmem:[%s3392 + $0xf0] sm:$0xf]
    %v4254 = vld [vmem:[%s3392 + $0xf4] sm:$0xf]
    %v4255 = vld [vmem:[%s3392 + $0xf8] sm:$0x1]
    %v4256 = vld [vmem:[%s3392 + $0xfc] sm:$0xf]
    %v4257 = vld [vmem:[%s3392 + $0x100] sm:$0xf]
    %v4258 = vld [vmem:[%s3392 + $0x104] sm:$0x1]
    %v4259 = vld [vmem:[%s3392 + $0x108] sm:$0xf]
    %v4260 = vld [vmem:[%s3392 + $0x10c] sm:$0xf]
    %v4261 = vld [vmem:[%s3392 + $0x110] sm:$0x1]
    %v4262 = vld [vmem:[%s3392 + $0x114] sm:$0xf]
    %v4263 = vld [vmem:[%s3392 + $0x118] sm:$0xf]
    %v4264 = vld [vmem:[%s3392 + $0x11c] sm:$0x1]
    %v4265 = vld [vmem:[%s3392 + $0x120] sm:$0xf]
    %v4266 = vld [vmem:[%s3392 + $0x124] sm:$0xf]
    %v4267 = vld [vmem:[%s3392 + $0x128] sm:$0x1]
    %v4268 = vld [vmem:[%s3392 + $0x12c] sm:$0xf]
    %v4269 = vld [vmem:[%s3392 + $0x130] sm:$0xf]
    %v4270 = vld [vmem:[%s3392 + $0x134] sm:$0x1]
    %v4271 = vld [vmem:[%s3392 + $0x138] sm:$0xf]
    %v4272 = vld [vmem:[%s3392 + $0x13c] sm:$0xf]
    %v4273 = vld [vmem:[%s3392 + $0x140] sm:$0x1]
    %v4274 = vld [vmem:[%s3392 + $0x144] sm:$0xf]
    %v4275 = vld [vmem:[%s3392 + $0x148] sm:$0xf]
    %v4276 = vld [vmem:[%s3392 + $0x14c] sm:$0x1]
    %v4277 = vld [vmem:[%s3392 + $0x150] sm:$0xf]
    %v4278 = vld [vmem:[%s3392 + $0x154] sm:$0xf]
    %v4279 = vld [vmem:[%s3392 + $0x158] sm:$0x1]
    %v4280 = vld [vmem:[%s3392 + $0x15c] sm:$0xf]
    %v4281 = vld [vmem:[%s3392 + $0x160] sm:$0xf]
    %v4282 = vld [vmem:[%s3392 + $0x164] sm:$0x1]
    %v4283 = vld [vmem:[%s3392 + $0x168] sm:$0xf]
    %v4284 = vld [vmem:[%s3392 + $0x16c] sm:$0xf]
    %v4285 = vld [vmem:[%s3392 + $0x170] sm:$0x1]
    %v4286 = vld [vmem:[%s3392 + $0x174] sm:$0xf]
    %v4287 = vld [vmem:[%s3392 + $0x178] sm:$0xf]
    %v4288 = vld [vmem:[%s3392 + $0x17c] sm:$0x1]
    %v4289 = vld [vmem:[%s3392 + $0x180] sm:$0xf]
    %v4290 = vld [vmem:[%s3392 + $0x184] sm:$0xf]
    %v4291 = vld [vmem:[%s3392 + $0x188] sm:$0x1]
    %v4292 = vld [vmem:[%s3392 + $0x18c] sm:$0xf]
    %v4293 = vld [vmem:[%s3392 + $0x190] sm:$0xf]
    %v4294 = vld [vmem:[%s3392 + $0x194] sm:$0x1]
    %v4296 = vshrl.u32 %v4199, 16
    %v4298 = vrot.slane %v4296, 4
    %v4299 = vshll.u32 %v4199, 16
    %v4301 = vrot.slane %v4299, 5
    %v4302 = vor.u32 %v4298, %v4301
    %v4303 = vrot.slane %v4302, 4
    %v4305 = vshll.u32 %v4200, 16
    %v4307 = vrot.slane %v4305, 5
    %v4308 = vsel %vm848, %v4303, %v4307
    %v4309 = vshrl.u32 %v4200, 16
    %v4311 = vrot.slane %v4309, 4
    %v4312 = vor.u32 %v4311, %v4307
    %v4313 = vrot.slane %v4312, 4
    %v4315 = vshll.u32 %v4201, 16
    %v4317 = vrot.slane %v4315, 5
    %v4318 = vsel %vm848, %v4313, %v4317
    %v4320 = vshrl.u32 %v4202, 16
    %v4322 = vrot.slane %v4320, 4
    %v4323 = vshll.u32 %v4202, 16
    %v4325 = vrot.slane %v4323, 5
    %v4326 = vor.u32 %v4322, %v4325
    %v4327 = vrot.slane %v4326, 4
    %v4329 = vshll.u32 %v4203, 16
    %v4331 = vrot.slane %v4329, 5
    %v4332 = vsel %vm848, %v4327, %v4331
    %v4333 = vshrl.u32 %v4203, 16
    %v4335 = vrot.slane %v4333, 4
    %v4336 = vor.u32 %v4335, %v4331
    %v4337 = vrot.slane %v4336, 4
    %v4339 = vshll.u32 %v4204, 16
    %v4341 = vrot.slane %v4339, 5
    %v4342 = vsel %vm848, %v4337, %v4341
    %v4344 = vshrl.u32 %v4205, 16
    %v4346 = vrot.slane %v4344, 4
    %v4347 = vshll.u32 %v4205, 16
    %v4349 = vrot.slane %v4347, 5
    %v4350 = vor.u32 %v4346, %v4349
    %v4351 = vrot.slane %v4350, 4
    %v4353 = vshll.u32 %v4206, 16
    %v4355 = vrot.slane %v4353, 5
    %v4356 = vsel %vm848, %v4351, %v4355
    %v4357 = vshrl.u32 %v4206, 16
    %v4359 = vrot.slane %v4357, 4
    %v4360 = vor.u32 %v4359, %v4355
    %v4361 = vrot.slane %v4360, 4
    %v4363 = vshll.u32 %v4207, 16
    %v4365 = vrot.slane %v4363, 5
    %v4366 = vsel %vm848, %v4361, %v4365
    %v4368 = vshrl.u32 %v4208, 16
    %v4370 = vrot.slane %v4368, 4
    %v4371 = vshll.u32 %v4208, 16
    %v4373 = vrot.slane %v4371, 5
    %v4374 = vor.u32 %v4370, %v4373
    %v4375 = vrot.slane %v4374, 4
    %v4377 = vshll.u32 %v4209, 16
    %v4379 = vrot.slane %v4377, 5
    %v4380 = vsel %vm848, %v4375, %v4379
    %v4381 = vshrl.u32 %v4209, 16
    %v4383 = vrot.slane %v4381, 4
    %v4384 = vor.u32 %v4383, %v4379
    %v4385 = vrot.slane %v4384, 4
    %v4387 = vshll.u32 %v4210, 16
    %v4389 = vrot.slane %v4387, 5
    %v4390 = vsel %vm848, %v4385, %v4389
    %v4392 = vshrl.u32 %v4211, 16
    %v4394 = vrot.slane %v4392, 4
    %v4395 = vshll.u32 %v4211, 16
    %v4397 = vrot.slane %v4395, 5
    %v4398 = vor.u32 %v4394, %v4397
    %v4399 = vrot.slane %v4398, 4
    %v4401 = vshll.u32 %v4212, 16
    %v4403 = vrot.slane %v4401, 5
    %v4404 = vsel %vm848, %v4399, %v4403
    %v4405 = vshrl.u32 %v4212, 16
    %v4407 = vrot.slane %v4405, 4
    %v4408 = vor.u32 %v4407, %v4403
    %v4409 = vrot.slane %v4408, 4
    %v4411 = vshll.u32 %v4213, 16
    %v4413 = vrot.slane %v4411, 5
    %v4414 = vsel %vm848, %v4409, %v4413
    %v4416 = vshrl.u32 %v4214, 16
    %v4418 = vrot.slane %v4416, 4
    %v4419 = vshll.u32 %v4214, 16
    %v4421 = vrot.slane %v4419, 5
    %v4422 = vor.u32 %v4418, %v4421
    %v4423 = vrot.slane %v4422, 4
    %v4425 = vshll.u32 %v4215, 16
    %v4427 = vrot.slane %v4425, 5
    %v4428 = vsel %vm848, %v4423, %v4427
    %v4429 = vshrl.u32 %v4215, 16
    %v4431 = vrot.slane %v4429, 4
    %v4432 = vor.u32 %v4431, %v4427
    %v4433 = vrot.slane %v4432, 4
    %v4435 = vshll.u32 %v4216, 16
    %v4437 = vrot.slane %v4435, 5
    %v4438 = vsel %vm848, %v4433, %v4437
    %v4440 = vshrl.u32 %v4217, 16
    %v4442 = vrot.slane %v4440, 4
    %v4443 = vshll.u32 %v4217, 16
    %v4445 = vrot.slane %v4443, 5
    %v4446 = vor.u32 %v4442, %v4445
    %v4447 = vrot.slane %v4446, 4
    %v4449 = vshll.u32 %v4218, 16
    %v4451 = vrot.slane %v4449, 5
    %v4452 = vsel %vm848, %v4447, %v4451
    %v4453 = vshrl.u32 %v4218, 16
    %v4455 = vrot.slane %v4453, 4
    %v4456 = vor.u32 %v4455, %v4451
    %v4457 = vrot.slane %v4456, 4
    %v4459 = vshll.u32 %v4219, 16
    %v4461 = vrot.slane %v4459, 5
    %v4462 = vsel %vm848, %v4457, %v4461
    %v4464 = vshrl.u32 %v4220, 16
    %v4466 = vrot.slane %v4464, 4
    %v4467 = vshll.u32 %v4220, 16
    %v4469 = vrot.slane %v4467, 5
    %v4470 = vor.u32 %v4466, %v4469
    %v4471 = vrot.slane %v4470, 4
    %v4473 = vshll.u32 %v4221, 16
    %v4475 = vrot.slane %v4473, 5
    %v4476 = vsel %vm848, %v4471, %v4475
    %v4477 = vshrl.u32 %v4221, 16
    %v4479 = vrot.slane %v4477, 4
    %v4480 = vor.u32 %v4479, %v4475
    %v4481 = vrot.slane %v4480, 4
    %v4483 = vshll.u32 %v4222, 16
    %v4485 = vrot.slane %v4483, 5
    %v4486 = vsel %vm848, %v4481, %v4485
    %v4488 = vshrl.u32 %v4223, 16
    %v4490 = vrot.slane %v4488, 4
    %v4491 = vshll.u32 %v4223, 16
    %v4493 = vrot.slane %v4491, 5
    %v4494 = vor.u32 %v4490, %v4493
    %v4495 = vrot.slane %v4494, 4
    %v4497 = vshll.u32 %v4224, 16
    %v4499 = vrot.slane %v4497, 5
    %v4500 = vsel %vm848, %v4495, %v4499
    %v4501 = vshrl.u32 %v4224, 16
    %v4503 = vrot.slane %v4501, 4
    %v4504 = vor.u32 %v4503, %v4499
    %v4505 = vrot.slane %v4504, 4
    %v4507 = vshll.u32 %v4225, 16
    %v4509 = vrot.slane %v4507, 5
    %v4510 = vsel %vm848, %v4505, %v4509
    %v4512 = vshrl.u32 %v4226, 16
    %v4514 = vrot.slane %v4512, 4
    %v4515 = vshll.u32 %v4226, 16
    %v4517 = vrot.slane %v4515, 5
    %v4518 = vor.u32 %v4514, %v4517
    %v4519 = vrot.slane %v4518, 4
    %v4521 = vshll.u32 %v4227, 16
    %v4523 = vrot.slane %v4521, 5
    %v4524 = vsel %vm848, %v4519, %v4523
    %v4525 = vshrl.u32 %v4227, 16
    %v4527 = vrot.slane %v4525, 4
    %v4528 = vor.u32 %v4527, %v4523
    %v4529 = vrot.slane %v4528, 4
    %v4531 = vshll.u32 %v4228, 16
    %v4533 = vrot.slane %v4531, 5
    %v4534 = vsel %vm848, %v4529, %v4533
    %v4536 = vshrl.u32 %v4229, 16
    %v4538 = vrot.slane %v4536, 4
    %v4539 = vshll.u32 %v4229, 16
    %v4541 = vrot.slane %v4539, 5
    %v4542 = vor.u32 %v4538, %v4541
    %v4543 = vrot.slane %v4542, 4
    %v4545 = vshll.u32 %v4230, 16
    %v4547 = vrot.slane %v4545, 5
    %v4548 = vsel %vm848, %v4543, %v4547
    %v4549 = vshrl.u32 %v4230, 16
    %v4551 = vrot.slane %v4549, 4
    %v4552 = vor.u32 %v4551, %v4547
    %v4553 = vrot.slane %v4552, 4
    %v4555 = vshll.u32 %v4231, 16
    %v4557 = vrot.slane %v4555, 5
    %v4558 = vsel %vm848, %v4553, %v4557
    %v4560 = vshrl.u32 %v4232, 16
    %v4562 = vrot.slane %v4560, 4
    %v4563 = vshll.u32 %v4232, 16
    %v4565 = vrot.slane %v4563, 5
    %v4566 = vor.u32 %v4562, %v4565
    %v4567 = vrot.slane %v4566, 4
    %v4569 = vshll.u32 %v4233, 16
    %v4571 = vrot.slane %v4569, 5
    %v4572 = vsel %vm848, %v4567, %v4571
    %v4573 = vshrl.u32 %v4233, 16
    %v4575 = vrot.slane %v4573, 4
    %v4576 = vor.u32 %v4575, %v4571
    %v4577 = vrot.slane %v4576, 4
    %v4579 = vshll.u32 %v4234, 16
    %v4581 = vrot.slane %v4579, 5
    %v4582 = vsel %vm848, %v4577, %v4581
    %v4584 = vshrl.u32 %v4235, 16
    %v4586 = vrot.slane %v4584, 4
    %v4587 = vshll.u32 %v4235, 16
    %v4589 = vrot.slane %v4587, 5
    %v4590 = vor.u32 %v4586, %v4589
    %v4591 = vrot.slane %v4590, 4
    %v4593 = vshll.u32 %v4236, 16
    %v4595 = vrot.slane %v4593, 5
    %v4596 = vsel %vm848, %v4591, %v4595
    %v4597 = vshrl.u32 %v4236, 16
    %v4599 = vrot.slane %v4597, 4
    %v4600 = vor.u32 %v4599, %v4595
    %v4601 = vrot.slane %v4600, 4
    %v4603 = vshll.u32 %v4237, 16
    %v4605 = vrot.slane %v4603, 5
    %v4606 = vsel %vm848, %v4601, %v4605
    %v4608 = vshrl.u32 %v4238, 16
    %v4610 = vrot.slane %v4608, 4
    %v4611 = vshll.u32 %v4238, 16
    %v4613 = vrot.slane %v4611, 5
    %v4614 = vor.u32 %v4610, %v4613
    %v4615 = vrot.slane %v4614, 4
    %v4617 = vshll.u32 %v4239, 16
    %v4619 = vrot.slane %v4617, 5
    %v4620 = vsel %vm848, %v4615, %v4619
    %v4621 = vshrl.u32 %v4239, 16
    %v4623 = vrot.slane %v4621, 4
    %v4624 = vor.u32 %v4623, %v4619
    %v4625 = vrot.slane %v4624, 4
    %v4627 = vshll.u32 %v4240, 16
    %v4629 = vrot.slane %v4627, 5
    %v4630 = vsel %vm848, %v4625, %v4629
    %v4632 = vshrl.u32 %v4241, 16
    %v4634 = vrot.slane %v4632, 4
    %v4635 = vshll.u32 %v4241, 16
    %v4637 = vrot.slane %v4635, 5
    %v4638 = vor.u32 %v4634, %v4637
    %v4639 = vrot.slane %v4638, 4
    %v4641 = vshll.u32 %v4242, 16
    %v4643 = vrot.slane %v4641, 5
    %v4644 = vsel %vm848, %v4639, %v4643
    %v4645 = vshrl.u32 %v4242, 16
    %v4647 = vrot.slane %v4645, 4
    %v4648 = vor.u32 %v4647, %v4643
    %v4649 = vrot.slane %v4648, 4
    %v4651 = vshll.u32 %v4243, 16
    %v4653 = vrot.slane %v4651, 5
    %v4654 = vsel %vm848, %v4649, %v4653
    %v4656 = vshrl.u32 %v4244, 16
    %v4658 = vrot.slane %v4656, 4
    %v4659 = vshll.u32 %v4244, 16
    %v4661 = vrot.slane %v4659, 5
    %v4662 = vor.u32 %v4658, %v4661
    %v4663 = vrot.slane %v4662, 4
    %v4665 = vshll.u32 %v4245, 16
    %v4667 = vrot.slane %v4665, 5
    %v4668 = vsel %vm848, %v4663, %v4667
    %v4669 = vshrl.u32 %v4245, 16
    %v4671 = vrot.slane %v4669, 4
    %v4672 = vor.u32 %v4671, %v4667
    %v4673 = vrot.slane %v4672, 4
    %v4675 = vshll.u32 %v4246, 16
    %v4677 = vrot.slane %v4675, 5
    %v4678 = vsel %vm848, %v4673, %v4677
    %v4680 = vshrl.u32 %v4247, 16
    %v4682 = vrot.slane %v4680, 4
    %v4683 = vshll.u32 %v4247, 16
    %v4685 = vrot.slane %v4683, 5
    %v4686 = vor.u32 %v4682, %v4685
    %v4687 = vrot.slane %v4686, 4
    %v4689 = vshll.u32 %v4248, 16
    %v4691 = vrot.slane %v4689, 5
    %v4692 = vsel %vm848, %v4687, %v4691
    %v4693 = vshrl.u32 %v4248, 16
    %v4695 = vrot.slane %v4693, 4
    %v4696 = vor.u32 %v4695, %v4691
    %v4697 = vrot.slane %v4696, 4
    %v4699 = vshll.u32 %v4249, 16
    %v4701 = vrot.slane %v4699, 5
    %v4702 = vsel %vm848, %v4697, %v4701
    %v4704 = vshrl.u32 %v4250, 16
    %v4706 = vrot.slane %v4704, 4
    %v4707 = vshll.u32 %v4250, 16
    %v4709 = vrot.slane %v4707, 5
    %v4710 = vor.u32 %v4706, %v4709
    %v4711 = vrot.slane %v4710, 4
    %v4713 = vshll.u32 %v4251, 16
    %v4715 = vrot.slane %v4713, 5
    %v4716 = vsel %vm848, %v4711, %v4715
    %v4717 = vshrl.u32 %v4251, 16
    %v4719 = vrot.slane %v4717, 4
    %v4720 = vor.u32 %v4719, %v4715
    %v4721 = vrot.slane %v4720, 4
    %v4723 = vshll.u32 %v4252, 16
    %v4725 = vrot.slane %v4723, 5
    %v4726 = vsel %vm848, %v4721, %v4725
    %v4728 = vshrl.u32 %v4253, 16
    %v4730 = vrot.slane %v4728, 4
    %v4731 = vshll.u32 %v4253, 16
    %v4733 = vrot.slane %v4731, 5
    %v4734 = vor.u32 %v4730, %v4733
    %v4735 = vrot.slane %v4734, 4
    %v4737 = vshll.u32 %v4254, 16
    %v4739 = vrot.slane %v4737, 5
    %v4740 = vsel %vm848, %v4735, %v4739
    %v4741 = vshrl.u32 %v4254, 16
    %v4743 = vrot.slane %v4741, 4
    %v4744 = vor.u32 %v4743, %v4739
    %v4745 = vrot.slane %v4744, 4
    %v4747 = vshll.u32 %v4255, 16
    %v4749 = vrot.slane %v4747, 5
    %v4750 = vsel %vm848, %v4745, %v4749
    %v4752 = vshrl.u32 %v4256, 16
    %v4754 = vrot.slane %v4752, 4
    %v4755 = vshll.u32 %v4256, 16
    %v4757 = vrot.slane %v4755, 5
    %v4758 = vor.u32 %v4754, %v4757
    %v4759 = vrot.slane %v4758, 4
    %v4761 = vshll.u32 %v4257, 16
    %v4763 = vrot.slane %v4761, 5
    %v4764 = vsel %vm848, %v4759, %v4763
    %v4765 = vshrl.u32 %v4257, 16
    %v4767 = vrot.slane %v4765, 4
    %v4768 = vor.u32 %v4767, %v4763
    %v4769 = vrot.slane %v4768, 4
    %v4771 = vshll.u32 %v4258, 16
    %v4773 = vrot.slane %v4771, 5
    %v4774 = vsel %vm848, %v4769, %v4773
    %v4776 = vshrl.u32 %v4259, 16
    %v4778 = vrot.slane %v4776, 4
    %v4779 = vshll.u32 %v4259, 16
    %v4781 = vrot.slane %v4779, 5
    %v4782 = vor.u32 %v4778, %v4781
    %v4783 = vrot.slane %v4782, 4
    %v4785 = vshll.u32 %v4260, 16
    %v4787 = vrot.slane %v4785, 5
    %v4788 = vsel %vm848, %v4783, %v4787
    %v4789 = vshrl.u32 %v4260, 16
    %v4791 = vrot.slane %v4789, 4
    %v4792 = vor.u32 %v4791, %v4787
    %v4793 = vrot.slane %v4792, 4
    %v4795 = vshll.u32 %v4261, 16
    %v4797 = vrot.slane %v4795, 5
    %v4798 = vsel %vm848, %v4793, %v4797
    %v4800 = vshrl.u32 %v4262, 16
    %v4802 = vrot.slane %v4800, 4
    %v4803 = vshll.u32 %v4262, 16
    %v4805 = vrot.slane %v4803, 5
    %v4806 = vor.u32 %v4802, %v4805
    %v4807 = vrot.slane %v4806, 4
    %v4809 = vshll.u32 %v4263, 16
    %v4811 = vrot.slane %v4809, 5
    %v4812 = vsel %vm848, %v4807, %v4811
    %v4813 = vshrl.u32 %v4263, 16
    %v4815 = vrot.slane %v4813, 4
    %v4816 = vor.u32 %v4815, %v4811
    %v4817 = vrot.slane %v4816, 4
    %v4819 = vshll.u32 %v4264, 16
    %v4821 = vrot.slane %v4819, 5
    %v4822 = vsel %vm848, %v4817, %v4821
    %v4824 = vshrl.u32 %v4265, 16
    %v4826 = vrot.slane %v4824, 4
    %v4827 = vshll.u32 %v4265, 16
    %v4829 = vrot.slane %v4827, 5
    %v4830 = vor.u32 %v4826, %v4829
    %v4831 = vrot.slane %v4830, 4
    %v4833 = vshll.u32 %v4266, 16
    %v4835 = vrot.slane %v4833, 5
    %v4836 = vsel %vm848, %v4831, %v4835
    %v4837 = vshrl.u32 %v4266, 16
    %v4839 = vrot.slane %v4837, 4
    %v4840 = vor.u32 %v4839, %v4835
    %v4841 = vrot.slane %v4840, 4
    %v4843 = vshll.u32 %v4267, 16
    %v4845 = vrot.slane %v4843, 5
    %v4846 = vsel %vm848, %v4841, %v4845
    %v4848 = vshrl.u32 %v4268, 16
    %v4850 = vrot.slane %v4848, 4
    %v4851 = vshll.u32 %v4268, 16
    %v4853 = vrot.slane %v4851, 5
    %v4854 = vor.u32 %v4850, %v4853
    %v4855 = vrot.slane %v4854, 4
    %v4857 = vshll.u32 %v4269, 16
    %v4859 = vrot.slane %v4857, 5
    %v4860 = vsel %vm848, %v4855, %v4859
    %v4861 = vshrl.u32 %v4269, 16
    %v4863 = vrot.slane %v4861, 4
    %v4864 = vor.u32 %v4863, %v4859
    %v4865 = vrot.slane %v4864, 4
    %v4867 = vshll.u32 %v4270, 16
    %v4869 = vrot.slane %v4867, 5
    %v4870 = vsel %vm848, %v4865, %v4869
    %v4872 = vshrl.u32 %v4271, 16
    %v4874 = vrot.slane %v4872, 4
    %v4875 = vshll.u32 %v4271, 16
    %v4877 = vrot.slane %v4875, 5
    %v4878 = vor.u32 %v4874, %v4877
    %v4879 = vrot.slane %v4878, 4
    %v4881 = vshll.u32 %v4272, 16
    %v4883 = vrot.slane %v4881, 5
    %v4884 = vsel %vm848, %v4879, %v4883
    %v4885 = vshrl.u32 %v4272, 16
    %v4887 = vrot.slane %v4885, 4
    %v4888 = vor.u32 %v4887, %v4883
    %v4889 = vrot.slane %v4888, 4
    %v4891 = vshll.u32 %v4273, 16
    %v4893 = vrot.slane %v4891, 5
    %v4894 = vsel %vm848, %v4889, %v4893
    %v4896 = vshrl.u32 %v4274, 16
    %v4898 = vrot.slane %v4896, 4
    %v4899 = vshll.u32 %v4274, 16
    %v4901 = vrot.slane %v4899, 5
    %v4902 = vor.u32 %v4898, %v4901
    %v4903 = vrot.slane %v4902, 4
    %v4905 = vshll.u32 %v4275, 16
    %v4907 = vrot.slane %v4905, 5
    %v4908 = vsel %vm848, %v4903, %v4907
    %v4909 = vshrl.u32 %v4275, 16
    %v4911 = vrot.slane %v4909, 4
    %v4912 = vor.u32 %v4911, %v4907
    %v4913 = vrot.slane %v4912, 4
    %v4915 = vshll.u32 %v4276, 16
    %v4917 = vrot.slane %v4915, 5
    %v4918 = vsel %vm848, %v4913, %v4917
    %v4920 = vshrl.u32 %v4277, 16
    %v4922 = vrot.slane %v4920, 4
    %v4923 = vshll.u32 %v4277, 16
    %v4925 = vrot.slane %v4923, 5
    %v4926 = vor.u32 %v4922, %v4925
    %v4927 = vrot.slane %v4926, 4
    %v4929 = vshll.u32 %v4278, 16
    %v4931 = vrot.slane %v4929, 5
    %v4932 = vsel %vm848, %v4927, %v4931
    %v4933 = vshrl.u32 %v4278, 16
    %v4935 = vrot.slane %v4933, 4
    %v4936 = vor.u32 %v4935, %v4931
    %v4937 = vrot.slane %v4936, 4
    %v4939 = vshll.u32 %v4279, 16
    %v4941 = vrot.slane %v4939, 5
    %v4942 = vsel %vm848, %v4937, %v4941
    %v4944 = vshrl.u32 %v4280, 16
    %v4946 = vrot.slane %v4944, 4
    %v4947 = vshll.u32 %v4280, 16
    %v4949 = vrot.slane %v4947, 5
    %v4950 = vor.u32 %v4946, %v4949
    %v4951 = vrot.slane %v4950, 4
    %v4953 = vshll.u32 %v4281, 16
    %v4955 = vrot.slane %v4953, 5
    %v4956 = vsel %vm848, %v4951, %v4955
    %v4957 = vshrl.u32 %v4281, 16
    %v4959 = vrot.slane %v4957, 4
    %v4960 = vor.u32 %v4959, %v4955
    %v4961 = vrot.slane %v4960, 4
    %v4963 = vshll.u32 %v4282, 16
    %v4965 = vrot.slane %v4963, 5
    %v4966 = vsel %vm848, %v4961, %v4965
    %v4968 = vshrl.u32 %v4283, 16
    %v4970 = vrot.slane %v4968, 4
    %v4971 = vshll.u32 %v4283, 16
    %v4973 = vrot.slane %v4971, 5
    %v4974 = vor.u32 %v4970, %v4973
    %v4975 = vrot.slane %v4974, 4
    %v4977 = vshll.u32 %v4284, 16
    %v4979 = vrot.slane %v4977, 5
    %v4980 = vsel %vm848, %v4975, %v4979
    %v4981 = vshrl.u32 %v4284, 16
    %v4983 = vrot.slane %v4981, 4
    %v4984 = vor.u32 %v4983, %v4979
    %v4985 = vrot.slane %v4984, 4
    %v4987 = vshll.u32 %v4285, 16
    %v4989 = vrot.slane %v4987, 5
    %v4990 = vsel %vm848, %v4985, %v4989
    %v4992 = vshrl.u32 %v4286, 16
    %v4994 = vrot.slane %v4992, 4
    %v4995 = vshll.u32 %v4286, 16
    %v4997 = vrot.slane %v4995, 5
    %v4998 = vor.u32 %v4994, %v4997
    %v4999 = vrot.slane %v4998, 4
    %v5001 = vshll.u32 %v4287, 16
    %v5003 = vrot.slane %v5001, 5
    %v5004 = vsel %vm848, %v4999, %v5003
    %v5005 = vshrl.u32 %v4287, 16
    %v5007 = vrot.slane %v5005, 4
    %v5008 = vor.u32 %v5007, %v5003
    %v5009 = vrot.slane %v5008, 4
    %v5011 = vshll.u32 %v4288, 16
    %v5013 = vrot.slane %v5011, 5
    %v5014 = vsel %vm848, %v5009, %v5013
    %v5016 = vshrl.u32 %v4289, 16
    %v5018 = vrot.slane %v5016, 4
    %v5019 = vshll.u32 %v4289, 16
    %v5021 = vrot.slane %v5019, 5
    %v5022 = vor.u32 %v5018, %v5021
    %v5023 = vrot.slane %v5022, 4
    %v5025 = vshll.u32 %v4290, 16
    %v5027 = vrot.slane %v5025, 5
    %v5028 = vsel %vm848, %v5023, %v5027
    %v5029 = vshrl.u32 %v4290, 16
    %v5031 = vrot.slane %v5029, 4
    %v5032 = vor.u32 %v5031, %v5027
    %v5033 = vrot.slane %v5032, 4
    %v5035 = vshll.u32 %v4291, 16
    %v5037 = vrot.slane %v5035, 5
    %v5038 = vsel %vm848, %v5033, %v5037
    %v5040 = vshrl.u32 %v4292, 16
    %v5042 = vrot.slane %v5040, 4
    %v5043 = vshll.u32 %v4292, 16
    %v5045 = vrot.slane %v5043, 5
    %v5046 = vor.u32 %v5042, %v5045
    %v5047 = vrot.slane %v5046, 4
    %v5049 = vshll.u32 %v4293, 16
    %v5051 = vrot.slane %v5049, 5
    %v5052 = vsel %vm848, %v5047, %v5051
    %v5053 = vshrl.u32 %v4293, 16
    %v5055 = vrot.slane %v5053, 4
    %v5056 = vor.u32 %v5055, %v5051
    %v5057 = vrot.slane %v5056, 4
    %v5059 = vshll.u32 %v4294, 16
    %v5061 = vrot.slane %v5059, 5
    %v5062 = vsel %vm848, %v5057, %v5061
    %s5063 = scalar_lea.vmem [#allocation6], 8
    %v5064 = vld [vmem:[%s5063] sm:$0x3]
    %v5065 = vunpack.c.l.b16 %v4308
    %v5066 = vunpack.c.l.b16 %v4318
    %v5067 = vunpack.c.l.b16 %v4332
    %v5068 = vunpack.c.l.b16 %v4342
    %v5069 = vunpack.c.l.b16 %v4356
    %v5070 = vunpack.c.l.b16 %v4366
    %v5071 = vunpack.c.l.b16 %v4380
    %v5072 = vunpack.c.l.b16 %v4390
    %v5073 = vunpack.c.l.b16 %v4404
    %v5074 = vunpack.c.l.b16 %v4414
    %v5075 = vunpack.c.l.b16 %v4428
    %v5076 = vunpack.c.l.b16 %v4438
    %v5077 = vunpack.c.l.b16 %v4452
    %v5078 = vunpack.c.l.b16 %v4462
    %v5079 = vunpack.c.l.b16 %v4476
    %v5080 = vunpack.c.l.b16 %v4486
    %v5081 = vunpack.c.l.b16 %v4500
    %v5082 = vunpack.c.l.b16 %v4510
    %v5083 = vunpack.c.l.b16 %v4524
    %v5084 = vunpack.c.l.b16 %v4534
    %v5085 = vunpack.c.l.b16 %v4548
    %v5086 = vunpack.c.l.b16 %v4558
    %v5087 = vunpack.c.l.b16 %v4572
    %v5088 = vunpack.c.l.b16 %v4582
    %v5089 = vunpack.c.l.b16 %v4596
    %v5090 = vunpack.c.l.b16 %v4606
    %v5091 = vunpack.c.l.b16 %v4620
    %v5092 = vunpack.c.l.b16 %v4630
    %v5093 = vunpack.c.l.b16 %v4644
    %v5094 = vunpack.c.l.b16 %v4654
    %v5095 = vunpack.c.l.b16 %v4668
    %v5096 = vunpack.c.l.b16 %v4678
    %v5097 = vunpack.c.l.b16 %v4692
    %v5098 = vunpack.c.l.b16 %v4702
    %v5099 = vunpack.c.l.b16 %v4716
    %v5100 = vunpack.c.l.b16 %v4726
    %v5101 = vunpack.c.l.b16 %v4740
    %v5102 = vunpack.c.l.b16 %v4750
    %v5103 = vunpack.c.l.b16 %v4764
    %v5104 = vunpack.c.l.b16 %v4774
    %v5105 = vunpack.c.l.b16 %v4788
    %v5106 = vunpack.c.l.b16 %v4798
    %v5107 = vunpack.c.l.b16 %v4812
    %v5108 = vunpack.c.l.b16 %v4822
    %v5109 = vunpack.c.l.b16 %v4836
    %v5110 = vunpack.c.l.b16 %v4846
    %v5111 = vunpack.c.l.b16 %v4860
    %v5112 = vunpack.c.l.b16 %v4870
    %v5113 = vunpack.c.l.b16 %v4884
    %v5114 = vunpack.c.l.b16 %v4894
    %v5115 = vunpack.c.l.b16 %v4908
    %v5116 = vunpack.c.l.b16 %v4918
    %v5117 = vunpack.c.l.b16 %v4932
    %v5118 = vunpack.c.l.b16 %v4942
    %v5119 = vunpack.c.l.b16 %v4956
    %v5120 = vunpack.c.l.b16 %v4966
    %v5121 = vunpack.c.l.b16 %v4980
    %v5122 = vunpack.c.l.b16 %v4990
    %v5123 = vunpack.c.l.b16 %v5004
    %v5124 = vunpack.c.l.b16 %v5014
    %v5125 = vunpack.c.l.b16 %v5028
    %v5126 = vunpack.c.l.b16 %v5038
    %v5127 = vunpack.c.l.b16 %v5052
    %v5128 = vunpack.c.l.b16 %v5062
    %v5129 = vpack.c.b16 %v5066, %v5065
    %v5130 = vpack.c.b16 %v5068, %v5067
    %v5131 = vpack.c.b16 %v5070, %v5069
    %v5132 = vpack.c.b16 %v5072, %v5071
    %v5133 = vpack.c.b16 %v5074, %v5073
    %v5134 = vpack.c.b16 %v5076, %v5075
    %v5135 = vpack.c.b16 %v5078, %v5077
    %v5136 = vpack.c.b16 %v5080, %v5079
    %v5137 = vpack.c.b16 %v5082, %v5081
    %v5138 = vpack.c.b16 %v5084, %v5083
    %v5139 = vpack.c.b16 %v5086, %v5085
    %v5140 = vpack.c.b16 %v5088, %v5087
    %v5141 = vpack.c.b16 %v5090, %v5089
    %v5142 = vpack.c.b16 %v5092, %v5091
    %v5143 = vpack.c.b16 %v5094, %v5093
    %v5144 = vpack.c.b16 %v5096, %v5095
    %v5145 = vpack.c.b16 %v5098, %v5097
    %v5146 = vpack.c.b16 %v5100, %v5099
    %v5147 = vpack.c.b16 %v5102, %v5101
    %v5148 = vpack.c.b16 %v5104, %v5103
    %v5149 = vpack.c.b16 %v5106, %v5105
    %v5150 = vpack.c.b16 %v5108, %v5107
    %v5151 = vpack.c.b16 %v5110, %v5109
    %v5152 = vpack.c.b16 %v5112, %v5111
    %v5153 = vpack.c.b16 %v5114, %v5113
    %v5154 = vpack.c.b16 %v5116, %v5115
    %v5155 = vpack.c.b16 %v5118, %v5117
    %v5156 = vpack.c.b16 %v5120, %v5119
    %v5157 = vpack.c.b16 %v5122, %v5121
    %v5158 = vpack.c.b16 %v5124, %v5123
    %v5159 = vpack.c.b16 %v5126, %v5125
    %v5160 = vpack.c.b16 %v5128, %v5127
    %v5162 = vsel %vm295, %v5129, 0
    %v5165 = vsel %vm295, %v5130, 0
    %v5168 = vsel %vm295, %v5131, 0
    %v5171 = vsel %vm295, %v5132, 0
    %v5174 = vsel %vm295, %v5133, 0
    %v5177 = vsel %vm295, %v5134, 0
    %v5180 = vsel %vm295, %v5135, 0
    %v5183 = vsel %vm295, %v5136, 0
    %v5186 = vsel %vm295, %v5137, 0
    %v5189 = vsel %vm295, %v5138, 0
    %v5192 = vsel %vm295, %v5139, 0
    %v5195 = vsel %vm295, %v5140, 0
    %v5198 = vsel %vm295, %v5141, 0
    %v5201 = vsel %vm295, %v5142, 0
    %v5204 = vsel %vm295, %v5143, 0
    %v5207 = vsel %vm295, %v5144, 0
    %v5210 = vsel %vm295, %v5145, 0
    %v5213 = vsel %vm295, %v5146, 0
    %v5216 = vsel %vm295, %v5147, 0
    %v5219 = vsel %vm295, %v5148, 0
    %v5222 = vsel %vm295, %v5149, 0
    %v5225 = vsel %vm295, %v5150, 0
    %v5228 = vsel %vm295, %v5151, 0
    %v5231 = vsel %vm295, %v5152, 0
    %v5234 = vsel %vm295, %v5153, 0
    %v5237 = vsel %vm295, %v5154, 0
    %v5240 = vsel %vm295, %v5155, 0
    %v5243 = vsel %vm295, %v5156, 0
    %v5246 = vsel %vm295, %v5157, 0
    %v5249 = vsel %vm295, %v5158, 0
    %v5252 = vsel %vm295, %v5159, 0
    %v5255 = vsel %vm295, %v5160, 0
    %v5258 = vsel %vm392, %v5064, 0
    %5260 = vmatprep.subr.bf16.mxu0 0
    %5261 = vmatpush1.bf16.msra.mxu0 %v5258
    %5262 = vmatprep.subr.bf16.mxu0 0
    %5263 = vmatpush1.bf16.msra.mxu0 0
    %5264 = vmatprep.subr.bf16.mxu0 0
    %5265 = vmatpush1.bf16.msra.mxu0 0
    %5266 = vmatprep.subr.bf16.mxu0 0
    %5267 = vmatpush1.bf16.msra.mxu0 0
    %5268 = vmatprep.subr.bf16.mxu0 0
    %5269 = vmatpush1.bf16.msra.mxu0 0
    %5270 = vmatprep.subr.bf16.mxu0 0
    %5271 = vmatpush1.bf16.msra.mxu0 0
    %5272 = vmatprep.subr.bf16.mxu0 0
    %5273 = vmatpush1.bf16.msra.mxu0 0
    %5274 = vmatprep.subr.bf16.mxu0 0
    %5275 = vmatpush1.bf16.msra.mxu0 0
    %5276 = vmatprep.subr.bf16.mxu0 0
    %5277 = vmatpush1.bf16.msra.mxu0 0
    %5278 = vmatprep.subr.bf16.mxu0 0
    %5279 = vmatpush1.bf16.msra.mxu0 0
    %5280 = vmatprep.subr.bf16.mxu0 0
    %5281 = vmatpush1.bf16.msra.mxu0 0
    %5282 = vmatprep.subr.bf16.mxu0 0
    %5283 = vmatpush1.bf16.msra.mxu0 0
    %5284 = vmatprep.subr.bf16.mxu0 0
    %5285 = vmatpush1.bf16.msra.mxu0 0
    %5286 = vmatprep.subr.bf16.mxu0 0
    %5287 = vmatpush1.bf16.msra.mxu0 0
    %5288 = vmatprep.subr.bf16.mxu0 0
    %5289 = vmatpush1.bf16.msra.mxu0 0
    %5290 = vmatprep.subr.bf16.mxu0 0
    %5291 = vmatpush1.bf16.msra.mxu0 0
    %5292 = vmatprep.mubr.bf16.mxu0 0
    %5293 = vmatmul.mubr.bf16.gmra.mrb[0].mxu0 %v5162
    %v5294 = vpop.f32.mrb[0].mxu0
    %v5295 = vadd.f32 0.0, %v5294
    %v5296 = vpop.f32.mrb[0].mxu0
    %v5297 = vpop.f32.mrb[0].mxu0
    %v5298 = vadd.f32 0.0, %v5297
    %v5299 = vpop.f32.mrb[0].mxu0
    %5300 = vmatprep.mubr.bf16.mxu0 0
    %5301 = vmatmul.mubr.bf16.gmra.mrb[0].mxu0 %v5165
    %v5302 = vpop.f32.mrb[0].mxu0
    %v5303 = vadd.f32 0.0, %v5302
    %v5304 = vpop.f32.mrb[0].mxu0
    %v5305 = vpop.f32.mrb[0].mxu0
    %v5306 = vadd.f32 0.0, %v5305
    %v5307 = vpop.f32.mrb[0].mxu0
    %5308 = vmatprep.mubr.bf16.mxu0 0
    %5309 = vmatmul.mubr.bf16.gmra.mrb[0].mxu0 %v5168
    %v5310 = vpop.f32.mrb[0].mxu0
    %v5311 = vadd.f32 0.0, %v5310
    %v5312 = vpop.f32.mrb[0].mxu0
    %v5313 = vpop.f32.mrb[0].mxu0
    %v5314 = vadd.f32 0.0, %v5313
    %v5315 = vpop.f32.mrb[0].mxu0
    %5316 = vmatprep.mubr.bf16.mxu0 0
    %5317 = vmatmul.mubr.bf16.gmra.mrb[0].mxu0 %v5171
    %v5318 = vpop.f32.mrb[0].mxu0
    %v5319 = vadd.f32 0.0, %v5318
    %v5320 = vpop.f32.mrb[0].mxu0
    %v5321 = vpop.f32.mrb[0].mxu0
    %v5322 = vadd.f32 0.0, %v5321
    %v5323 = vpop.f32.mrb[0].mxu0
    %5324 = vmatprep.mubr.bf16.mxu0 0
    %5325 = vmatmul.mubr.bf16.gmra.mrb[0].mxu0 %v5174
    %v5326 = vpop.f32.mrb[0].mxu0
    %v5327 = vadd.f32 0.0, %v5326
    %v5328 = vpop.f32.mrb[0].mxu0
    %v5329 = vpop.f32.mrb[0].mxu0
    %v5330 = vadd.f32 0.0, %v5329
    %v5331 = vpop.f32.mrb[0].mxu0
    %5332 = vmatprep.mubr.bf16.mxu0 0
    %5333 = vmatmul.mubr.bf16.gmra.mrb[0].mxu0 %v5177
    %v5334 = vpop.f32.mrb[0].mxu0
    %v5335 = vadd.f32 0.0, %v5334
    %v5336 = vpop.f32.mrb[0].mxu0
    %v5337 = vpop.f32.mrb[0].mxu0
    %v5338 = vadd.f32 0.0, %v5337
    %v5339 = vpop.f32.mrb[0].mxu0
    %5340 = vmatprep.mubr.bf16.mxu0 0
    %5341 = vmatmul.mubr.bf16.gmra.mrb[0].mxu0 %v5180
    %v5342 = vpop.f32.mrb[0].mxu0
    %v5343 = vadd.f32 0.0, %v5342
    %v5344 = vpop.f32.mrb[0].mxu0
    %v5345 = vpop.f32.mrb[0].mxu0
    %v5346 = vadd.f32 0.0, %v5345
    %v5347 = vpop.f32.mrb[0].mxu0
    %5348 = vmatprep.mubr.bf16.mxu0 0
    %5349 = vmatmul.mubr.bf16.gmra.mrb[0].mxu0 %v5183
    %v5350 = vpop.f32.mrb[0].mxu0
    %v5351 = vadd.f32 0.0, %v5350
    %v5352 = vpop.f32.mrb[0].mxu0
    %v5353 = vpop.f32.mrb[0].mxu0
    %v5354 = vadd.f32 0.0, %v5353
    %v5355 = vpop.f32.mrb[0].mxu0
    %5356 = vmatprep.mubr.bf16.mxu0 0
    %5357 = vmatmul.mubr.bf16.gmra.mrb[0].mxu0 %v5186
    %v5358 = vpop.f32.mrb[0].mxu0
    %v5359 = vadd.f32 0.0, %v5358
    %v5360 = vpop.f32.mrb[0].mxu0
    %v5361 = vpop.f32.mrb[0].mxu0
    %v5362 = vadd.f32 0.0, %v5361
    %v5363 = vpop.f32.mrb[0].mxu0
    %5364 = vmatprep.mubr.bf16.mxu0 0
    %5365 = vmatmul.mubr.bf16.gmra.mrb[0].mxu0 %v5189
    %v5366 = vpop.f32.mrb[0].mxu0
    %v5367 = vadd.f32 0.0, %v5366
    %v5368 = vpop.f32.mrb[0].mxu0
    %v5369 = vpop.f32.mrb[0].mxu0
    %v5370 = vadd.f32 0.0, %v5369
    %v5371 = vpop.f32.mrb[0].mxu0
    %5372 = vmatprep.mubr.bf16.mxu0 0
    %5373 = vmatmul.mubr.bf16.gmra.mrb[0].mxu0 %v5192
    %v5374 = vpop.f32.mrb[0].mxu0
    %v5375 = vadd.f32 0.0, %v5374
    %v5376 = vpop.f32.mrb[0].mxu0
    %v5377 = vpop.f32.mrb[0].mxu0
    %v5378 = vadd.f32 0.0, %v5377
    %v5379 = vpop.f32.mrb[0].mxu0
    %5380 = vmatprep.mubr.bf16.mxu0 0
    %5381 = vmatmul.mubr.bf16.gmra.mrb[0].mxu0 %v5195
    %v5382 = vpop.f32.mrb[0].mxu0
    %v5383 = vadd.f32 0.0, %v5382
    %v5384 = vpop.f32.mrb[0].mxu0
    %v5385 = vpop.f32.mrb[0].mxu0
    %v5386 = vadd.f32 0.0, %v5385
    %v5387 = vpop.f32.mrb[0].mxu0
    %5388 = vmatprep.mubr.bf16.mxu0 0
    %5389 = vmatmul.mubr.bf16.gmra.mrb[0].mxu0 %v5198
    %v5390 = vpop.f32.mrb[0].mxu0
    %v5391 = vadd.f32 0.0, %v5390
    %v5392 = vpop.f32.mrb[0].mxu0
    %v5393 = vpop.f32.mrb[0].mxu0
    %v5394 = vadd.f32 0.0, %v5393
    %v5395 = vpop.f32.mrb[0].mxu0
    %5396 = vmatprep.mubr.bf16.mxu0 0
    %5397 = vmatmul.mubr.bf16.gmra.mrb[0].mxu0 %v5201
    %v5398 = vpop.f32.mrb[0].mxu0
    %v5399 = vadd.f32 0.0, %v5398
    %v5400 = vpop.f32.mrb[0].mxu0
    %v5401 = vpop.f32.mrb[0].mxu0
    %v5402 = vadd.f32 0.0, %v5401
    %v5403 = vpop.f32.mrb[0].mxu0
    %5404 = vmatprep.mubr.bf16.mxu0 0
    %5405 = vmatmul.mubr.bf16.gmra.mrb[0].mxu0 %v5204
    %v5406 = vpop.f32.mrb[0].mxu0
    %v5407 = vadd.f32 0.0, %v5406
    %v5408 = vpop.f32.mrb[0].mxu0
    %v5409 = vpop.f32.mrb[0].mxu0
    %v5410 = vadd.f32 0.0, %v5409
    %v5411 = vpop.f32.mrb[0].mxu0
    %5412 = vmatprep.mubr.bf16.mxu0 0
    %5413 = vmatmul.mubr.bf16.gmra.mrb[0].mxu0 %v5207
    %v5414 = vpop.f32.mrb[0].mxu0
    %v5415 = vadd.f32 0.0, %v5414
    %v5416 = vpop.f32.mrb[0].mxu0
    %v5417 = vpop.f32.mrb[0].mxu0
    %v5418 = vadd.f32 0.0, %v5417
    %v5419 = vpop.f32.mrb[0].mxu0
    %5420 = vmatprep.mubr.bf16.mxu0 0
    %5421 = vmatmul.mubr.bf16.gmra.mrb[0].mxu0 %v5210
    %v5422 = vpop.f32.mrb[0].mxu0
    %v5423 = vadd.f32 0.0, %v5422
    %v5424 = vpop.f32.mrb[0].mxu0
    %v5425 = vpop.f32.mrb[0].mxu0
    %v5426 = vadd.f32 0.0, %v5425
    %v5427 = vpop.f32.mrb[0].mxu0
    %5428 = vmatprep.mubr.bf16.mxu0 0
    %5429 = vmatmul.mubr.bf16.gmra.mrb[0].mxu0 %v5213
    %v5430 = vpop.f32.mrb[0].mxu0
    %v5431 = vadd.f32 0.0, %v5430
    %v5432 = vpop.f32.mrb[0].mxu0
    %v5433 = vpop.f32.mrb[0].mxu0
    %v5434 = vadd.f32 0.0, %v5433
    %v5435 = vpop.f32.mrb[0].mxu0
    %5436 = vmatprep.mubr.bf16.mxu0 0
    %5437 = vmatmul.mubr.bf16.gmra.mrb[0].mxu0 %v5216
    %v5438 = vpop.f32.mrb[0].mxu0
    %v5439 = vadd.f32 0.0, %v5438
    %v5440 = vpop.f32.mrb[0].mxu0
    %v5441 = vpop.f32.mrb[0].mxu0
    %v5442 = vadd.f32 0.0, %v5441
    %v5443 = vpop.f32.mrb[0].mxu0
    %5444 = vmatprep.mubr.bf16.mxu0 0
    %5445 = vmatmul.mubr.bf16.gmra.mrb[0].mxu0 %v5219
    %v5446 = vpop.f32.mrb[0].mxu0
    %v5447 = vadd.f32 0.0, %v5446
    %v5448 = vpop.f32.mrb[0].mxu0
    %v5449 = vpop.f32.mrb[0].mxu0
    %v5450 = vadd.f32 0.0, %v5449
    %v5451 = vpop.f32.mrb[0].mxu0
    %5452 = vmatprep.mubr.bf16.mxu0 0
    %5453 = vmatmul.mubr.bf16.gmra.mrb[0].mxu0 %v5222
    %v5454 = vpop.f32.mrb[0].mxu0
    %v5455 = vadd.f32 0.0, %v5454
    %v5456 = vpop.f32.mrb[0].mxu0
    %v5457 = vpop.f32.mrb[0].mxu0
    %v5458 = vadd.f32 0.0, %v5457
    %v5459 = vpop.f32.mrb[0].mxu0
    %5460 = vmatprep.mubr.bf16.mxu0 0
    %5461 = vmatmul.mubr.bf16.gmra.mrb[0].mxu0 %v5225
    %v5462 = vpop.f32.mrb[0].mxu0
    %v5463 = vadd.f32 0.0, %v5462
    %v5464 = vpop.f32.mrb[0].mxu0
    %v5465 = vpop.f32.mrb[0].mxu0
    %v5466 = vadd.f32 0.0, %v5465
    %v5467 = vpop.f32.mrb[0].mxu0
    %5468 = vmatprep.mubr.bf16.mxu0 0
    %5469 = vmatmul.mubr.bf16.gmra.mrb[0].mxu0 %v5228
    %v5470 = vpop.f32.mrb[0].mxu0
    %v5471 = vadd.f32 0.0, %v5470
    %v5472 = vpop.f32.mrb[0].mxu0
    %v5473 = vpop.f32.mrb[0].mxu0
    %v5474 = vadd.f32 0.0, %v5473
    %v5475 = vpop.f32.mrb[0].mxu0
    %5476 = vmatprep.mubr.bf16.mxu0 0
    %5477 = vmatmul.mubr.bf16.gmra.mrb[0].mxu0 %v5231
    %v5478 = vpop.f32.mrb[0].mxu0
    %v5479 = vadd.f32 0.0, %v5478
    %v5480 = vpop.f32.mrb[0].mxu0
    %v5481 = vpop.f32.mrb[0].mxu0
    %v5482 = vadd.f32 0.0, %v5481
    %v5483 = vpop.f32.mrb[0].mxu0
    %5484 = vmatprep.mubr.bf16.mxu0 0
    %5485 = vmatmul.mubr.bf16.gmra.mrb[0].mxu0 %v5234
    %v5486 = vpop.f32.mrb[0].mxu0
    %v5487 = vadd.f32 0.0, %v5486
    %v5488 = vpop.f32.mrb[0].mxu0
    %v5489 = vpop.f32.mrb[0].mxu0
    %v5490 = vadd.f32 0.0, %v5489
    %v5491 = vpop.f32.mrb[0].mxu0
    %5492 = vmatprep.mubr.bf16.mxu0 0
    %5493 = vmatmul.mubr.bf16.gmra.mrb[0].mxu0 %v5237
    %v5494 = vpop.f32.mrb[0].mxu0
    %v5495 = vadd.f32 0.0, %v5494
    %v5496 = vpop.f32.mrb[0].mxu0
    %v5497 = vpop.f32.mrb[0].mxu0
    %v5498 = vadd.f32 0.0, %v5497
    %v5499 = vpop.f32.mrb[0].mxu0
    %5500 = vmatprep.mubr.bf16.mxu0 0
    %5501 = vmatmul.mubr.bf16.gmra.mrb[0].mxu0 %v5240
    %v5502 = vpop.f32.mrb[0].mxu0
    %v5503 = vadd.f32 0.0, %v5502
    %v5504 = vpop.f32.mrb[0].mxu0
    %v5505 = vpop.f32.mrb[0].mxu0
    %v5506 = vadd.f32 0.0, %v5505
    %v5507 = vpop.f32.mrb[0].mxu0
    %5508 = vmatprep.mubr.bf16.mxu0 0
    %5509 = vmatmul.mubr.bf16.gmra.mrb[0].mxu0 %v5243
    %v5510 = vpop.f32.mrb[0].mxu0
    %v5511 = vadd.f32 0.0, %v5510
    %v5512 = vpop.f32.mrb[0].mxu0
    %v5513 = vpop.f32.mrb[0].mxu0
    %v5514 = vadd.f32 0.0, %v5513
    %v5515 = vpop.f32.mrb[0].mxu0
    %5516 = vmatprep.mubr.bf16.mxu0 0
    %5517 = vmatmul.mubr.bf16.gmra.mrb[0].mxu0 %v5246
    %v5518 = vpop.f32.mrb[0].mxu0
    %v5519 = vadd.f32 0.0, %v5518
    %v5520 = vpop.f32.mrb[0].mxu0
    %v5521 = vpop.f32.mrb[0].mxu0
    %v5522 = vadd.f32 0.0, %v5521
    %v5523 = vpop.f32.mrb[0].mxu0
    %5524 = vmatprep.mubr.bf16.mxu0 0
    %5525 = vmatmul.mubr.bf16.gmra.mrb[0].mxu0 %v5249
    %v5526 = vpop.f32.mrb[0].mxu0
    %v5527 = vadd.f32 0.0, %v5526
    %v5528 = vpop.f32.mrb[0].mxu0
    %v5529 = vpop.f32.mrb[0].mxu0
    %v5530 = vadd.f32 0.0, %v5529
    %v5531 = vpop.f32.mrb[0].mxu0
    %5532 = vmatprep.mubr.bf16.mxu0 0
    %5533 = vmatmul.mubr.bf16.gmra.mrb[0].mxu0 %v5252
    %v5534 = vpop.f32.mrb[0].mxu0
    %v5535 = vadd.f32 0.0, %v5534
    %v5536 = vpop.f32.mrb[0].mxu0
    %v5537 = vpop.f32.mrb[0].mxu0
    %v5538 = vadd.f32 0.0, %v5537
    %v5539 = vpop.f32.mrb[0].mxu0
    %5540 = vmatprep.mubr.bf16.mxu0 0
    %5541 = vmatmul.mubr.bf16.gmra.mrb[0].mxu0 %v5255
    %v5542 = vpop.f32.mrb[0].mxu0
    %v5543 = vadd.f32 0.0, %v5542
    %v5544 = vpop.f32.mrb[0].mxu0
    %v5545 = vpop.f32.mrb[0].mxu0
    %v5546 = vadd.f32 0.0, %v5545
    %v5547 = vpop.f32.mrb[0].mxu0
    %5548 = vdwg.mxu0
    %v5549 = vld [vmem:[#allocation2] sm:$0xff]
    %v5550 = vld [vmem:[#allocation2 + $0x8] sm:$0xff]
    %v5551 = vld [vmem:[#allocation2 + $0x10] sm:$0xff]
    %v5552 = vld [vmem:[#allocation2 + $0x18] sm:$0xff]
    %v5553 = vld [vmem:[#allocation2 + $0x20] sm:$0xff]
    %v5554 = vld [vmem:[#allocation2 + $0x28] sm:$0xff]
    %v5555 = vld [vmem:[#allocation2 + $0x30] sm:$0xff]
    %v5556 = vld [vmem:[#allocation2 + $0x38] sm:$0xff]
    %v5557 = vld [vmem:[#allocation2 + $0x40] sm:$0xff]
    %v5558 = vld [vmem:[#allocation2 + $0x48] sm:$0xff]
    %v5559 = vld [vmem:[#allocation2 + $0x50] sm:$0xff]
    %v5560 = vld [vmem:[#allocation2 + $0x58] sm:$0xff]
    %v5561 = vld [vmem:[#allocation2 + $0x60] sm:$0xff]
    %v5562 = vld [vmem:[#allocation2 + $0x68] sm:$0xff]
    %v5563 = vld [vmem:[#allocation2 + $0x70] sm:$0xff]
    %v5564 = vld [vmem:[#allocation2 + $0x78] sm:$0xff]
    %v5565 = vld [vmem:[#allocation2 + $0x80] sm:$0xff]
    %v5566 = vld [vmem:[#allocation2 + $0x88] sm:$0xff]
    %v5567 = vld [vmem:[#allocation2 + $0x90] sm:$0xff]
    %v5568 = vld [vmem:[#allocation2 + $0x98] sm:$0xff]
    %v5569 = vld [vmem:[#allocation2 + $0xa0] sm:$0xff]
    %v5570 = vld [vmem:[#allocation2 + $0xa8] sm:$0xff]
    %v5571 = vld [vmem:[#allocation2 + $0xb0] sm:$0xff]
    %v5572 = vld [vmem:[#allocation2 + $0xb8] sm:$0xff]
    %v5573 = vld [vmem:[#allocation2 + $0xc0] sm:$0xff]
    %v5574 = vld [vmem:[#allocation2 + $0xc8] sm:$0xff]
    %v5575 = vld [vmem:[#allocation2 + $0xd0] sm:$0xff]
    %v5576 = vld [vmem:[#allocation2 + $0xd8] sm:$0xff]
    %v5577 = vld [vmem:[#allocation2 + $0xe0] sm:$0xff]
    %v5578 = vld [vmem:[#allocation2 + $0xe8] sm:$0xff]
    %v5579 = vld [vmem:[#allocation2 + $0xf0] sm:$0xff]
    %v5580 = vld [vmem:[#allocation2 + $0xf8] sm:$0xff]
    %v5581 = vld [vmem:[#allocation2 + $0x100] sm:$0xff]
    %v5582 = vld [vmem:[#allocation2 + $0x108] sm:$0xff]
    %v5583 = vld [vmem:[#allocation2 + $0x110] sm:$0xff]
    %v5584 = vld [vmem:[#allocation2 + $0x118] sm:$0xff]
    %v5585 = vld [vmem:[#allocation2 + $0x120] sm:$0xff]
    %v5586 = vld [vmem:[#allocation2 + $0x128] sm:$0xff]
    %v5587 = vld [vmem:[#allocation2 + $0x130] sm:$0xff]
    %v5588 = vld [vmem:[#allocation2 + $0x138] sm:$0xff]
    %v5589 = vld [vmem:[#allocation2 + $0x140] sm:$0xff]
    %v5590 = vld [vmem:[#allocation2 + $0x148] sm:$0xff]
    %v5591 = vld [vmem:[#allocation2 + $0x150] sm:$0xff]
    %v5592 = vld [vmem:[#allocation2 + $0x158] sm:$0xff]
    %v5593 = vld [vmem:[#allocation2 + $0x160] sm:$0xff]
    %v5594 = vld [vmem:[#allocation2 + $0x168] sm:$0xff]
    %v5595 = vld [vmem:[#allocation2 + $0x170] sm:$0xff]
    %v5596 = vld [vmem:[#allocation2 + $0x178] sm:$0xff]
    %v5597 = vld [vmem:[#allocation2 + $0x180] sm:$0xff]
    %v5598 = vld [vmem:[#allocation2 + $0x188] sm:$0xff]
    %v5599 = vld [vmem:[#allocation2 + $0x190] sm:$0xff]
    %v5600 = vld [vmem:[#allocation2 + $0x198] sm:$0xff]
    %v5601 = vld [vmem:[#allocation2 + $0x1a0] sm:$0xff]
    %v5602 = vld [vmem:[#allocation2 + $0x1a8] sm:$0xff]
    %v5603 = vld [vmem:[#allocation2 + $0x1b0] sm:$0xff]
    %v5604 = vld [vmem:[#allocation2 + $0x1b8] sm:$0xff]
    %v5605 = vld [vmem:[#allocation2 + $0x1c0] sm:$0xff]
    %v5606 = vld [vmem:[#allocation2 + $0x1c8] sm:$0xff]
    %v5607 = vld [vmem:[#allocation2 + $0x1d0] sm:$0xff]
    %v5608 = vld [vmem:[#allocation2 + $0x1d8] sm:$0xff]
    %v5609 = vld [vmem:[#allocation2 + $0x1e0] sm:$0xff]
    %v5610 = vld [vmem:[#allocation2 + $0x1e8] sm:$0xff]
    %v5611 = vld [vmem:[#allocation2 + $0x1f0] sm:$0xff]
    %v5612 = vld [vmem:[#allocation2 + $0x1f8] sm:$0xff]
    %v5613 = vadd.f32 %v5549, %v5295
    %v5614 = vadd.f32 %v5550, %v5298
    %v5615 = vadd.f32 %v5551, %v5303
    %v5616 = vadd.f32 %v5552, %v5306
    %v5617 = vadd.f32 %v5553, %v5311
    %v5618 = vadd.f32 %v5554, %v5314
    %v5619 = vadd.f32 %v5555, %v5319
    %v5620 = vadd.f32 %v5556, %v5322
    %v5621 = vadd.f32 %v5557, %v5327
    %v5622 = vadd.f32 %v5558, %v5330
    %v5623 = vadd.f32 %v5559, %v5335
    %v5624 = vadd.f32 %v5560, %v5338
    %v5625 = vadd.f32 %v5561, %v5343
    %v5626 = vadd.f32 %v5562, %v5346
    %v5627 = vadd.f32 %v5563, %v5351
    %v5628 = vadd.f32 %v5564, %v5354
    %v5629 = vadd.f32 %v5565, %v5359
    %v5630 = vadd.f32 %v5566, %v5362
    %v5631 = vadd.f32 %v5567, %v5367
    %v5632 = vadd.f32 %v5568, %v5370
    %v5633 = vadd.f32 %v5569, %v5375
    %v5634 = vadd.f32 %v5570, %v5378
    %v5635 = vadd.f32 %v5571, %v5383
    %v5636 = vadd.f32 %v5572, %v5386
    %v5637 = vadd.f32 %v5573, %v5391
    %v5638 = vadd.f32 %v5574, %v5394
    %v5639 = vadd.f32 %v5575, %v5399
    %v5640 = vadd.f32 %v5576, %v5402
    %v5641 = vadd.f32 %v5577, %v5407
    %v5642 = vadd.f32 %v5578, %v5410
    %v5643 = vadd.f32 %v5579, %v5415
    %v5644 = vadd.f32 %v5580, %v5418
    %v5645 = vadd.f32 %v5581, %v5423
    %v5646 = vadd.f32 %v5582, %v5426
    %v5647 = vadd.f32 %v5583, %v5431
    %v5648 = vadd.f32 %v5584, %v5434
    %v5649 = vadd.f32 %v5585, %v5439
    %v5650 = vadd.f32 %v5586, %v5442
    %v5651 = vadd.f32 %v5587, %v5447
    %v5652 = vadd.f32 %v5588, %v5450
    %v5653 = vadd.f32 %v5589, %v5455
    %v5654 = vadd.f32 %v5590, %v5458
    %v5655 = vadd.f32 %v5591, %v5463
    %v5656 = vadd.f32 %v5592, %v5466
    %v5657 = vadd.f32 %v5593, %v5471
    %v5658 = vadd.f32 %v5594, %v5474
    %v5659 = vadd.f32 %v5595, %v5479
    %v5660 = vadd.f32 %v5596, %v5482
    %v5661 = vadd.f32 %v5597, %v5487
    %v5662 = vadd.f32 %v5598, %v5490
    %v5663 = vadd.f32 %v5599, %v5495
    %v5664 = vadd.f32 %v5600, %v5498
    %v5665 = vadd.f32 %v5601, %v5503
    %v5666 = vadd.f32 %v5602, %v5506
    %v5667 = vadd.f32 %v5603, %v5511
    %v5668 = vadd.f32 %v5604, %v5514
    %v5669 = vadd.f32 %v5605, %v5519
    %v5670 = vadd.f32 %v5606, %v5522
    %v5671 = vadd.f32 %v5607, %v5527
    %v5672 = vadd.f32 %v5608, %v5530
    %v5673 = vadd.f32 %v5609, %v5535
    %v5674 = vadd.f32 %v5610, %v5538
    %v5675 = vadd.f32 %v5611, %v5543
    %v5676 = vadd.f32 %v5612, %v5546
    %5677 = vst.msk [vmem:[#allocation2] sm:$0xff] %vm685, %v5613
    %5678 = vst.msk [vmem:[#allocation2 + $0x8] sm:$0xff] %vm685, %v5614
    %5679 = vst.msk [vmem:[#allocation2 + $0x10] sm:$0xff] %vm685, %v5615
    %5680 = vst.msk [vmem:[#allocation2 + $0x18] sm:$0xff] %vm685, %v5616
    %5681 = vst.msk [vmem:[#allocation2 + $0x20] sm:$0xff] %vm685, %v5617
    %5682 = vst.msk [vmem:[#allocation2 + $0x28] sm:$0xff] %vm685, %v5618
    %5683 = vst.msk [vmem:[#allocation2 + $0x30] sm:$0xff] %vm685, %v5619
    %5684 = vst.msk [vmem:[#allocation2 + $0x38] sm:$0xff] %vm685, %v5620
    %5685 = vst.msk [vmem:[#allocation2 + $0x40] sm:$0xff] %vm685, %v5621
    %5686 = vst.msk [vmem:[#allocation2 + $0x48] sm:$0xff] %vm685, %v5622
    %5687 = vst.msk [vmem:[#allocation2 + $0x50] sm:$0xff] %vm685, %v5623
    %5688 = vst.msk [vmem:[#allocation2 + $0x58] sm:$0xff] %vm685, %v5624
    %5689 = vst.msk [vmem:[#allocation2 + $0x60] sm:$0xff] %vm685, %v5625
    %5690 = vst.msk [vmem:[#allocation2 + $0x68] sm:$0xff] %vm685, %v5626
    %5691 = vst.msk [vmem:[#allocation2 + $0x70] sm:$0xff] %vm685, %v5627
    %5692 = vst.msk [vmem:[#allocation2 + $0x78] sm:$0xff] %vm685, %v5628
    %5693 = vst.msk [vmem:[#allocation2 + $0x80] sm:$0xff] %vm685, %v5629
    %5694 = vst.msk [vmem:[#allocation2 + $0x88] sm:$0xff] %vm685, %v5630
    %5695 = vst.msk [vmem:[#allocation2 + $0x90] sm:$0xff] %vm685, %v5631
    %5696 = vst.msk [vmem:[#allocation2 + $0x98] sm:$0xff] %vm685, %v5632
    %5697 = vst.msk [vmem:[#allocation2 + $0xa0] sm:$0xff] %vm685, %v5633
    %5698 = vst.msk [vmem:[#allocation2 + $0xa8] sm:$0xff] %vm685, %v5634
    %5699 = vst.msk [vmem:[#allocation2 + $0xb0] sm:$0xff] %vm685, %v5635
    %5700 = vst.msk [vmem:[#allocation2 + $0xb8] sm:$0xff] %vm685, %v5636
    %5701 = vst.msk [vmem:[#allocation2 + $0xc0] sm:$0xff] %vm685, %v5637
    %5702 = vst.msk [vmem:[#allocation2 + $0xc8] sm:$0xff] %vm685, %v5638
    %5703 = vst.msk [vmem:[#allocation2 + $0xd0] sm:$0xff] %vm685, %v5639
    %5704 = vst.msk [vmem:[#allocation2 + $0xd8] sm:$0xff] %vm685, %v5640
    %5705 = vst.msk [vmem:[#allocation2 + $0xe0] sm:$0xff] %vm685, %v5641
    %5706 = vst.msk [vmem:[#allocation2 + $0xe8] sm:$0xff] %vm685, %v5642
    %5707 = vst.msk [vmem:[#allocation2 + $0xf0] sm:$0xff] %vm685, %v5643
    %5708 = vst.msk [vmem:[#allocation2 + $0xf8] sm:$0xff] %vm685, %v5644
    %5709 = vst.msk [vmem:[#allocation2 + $0x100] sm:$0xff] %vm685, %v5645
    %5710 = vst.msk [vmem:[#allocation2 + $0x108] sm:$0xff] %vm685, %v5646
    %5711 = vst.msk [vmem:[#allocation2 + $0x110] sm:$0xff] %vm685, %v5647
    %5712 = vst.msk [vmem:[#allocation2 + $0x118] sm:$0xff] %vm685, %v5648
    %5713 = vst.msk [vmem:[#allocation2 + $0x120] sm:$0xff] %vm685, %v5649
    %5714 = vst.msk [vmem:[#allocation2 + $0x128] sm:$0xff] %vm685, %v5650
    %5715 = vst.msk [vmem:[#allocation2 + $0x130] sm:$0xff] %vm685, %v5651
    %5716 = vst.msk [vmem:[#allocation2 + $0x138] sm:$0xff] %vm685, %v5652
    %5717 = vst.msk [vmem:[#allocation2 + $0x140] sm:$0xff] %vm685, %v5653
    %5718 = vst.msk [vmem:[#allocation2 + $0x148] sm:$0xff] %vm685, %v5654
    %5719 = vst.msk [vmem:[#allocation2 + $0x150] sm:$0xff] %vm685, %v5655
    %5720 = vst.msk [vmem:[#allocation2 + $0x158] sm:$0xff] %vm685, %v5656
    %5721 = vst.msk [vmem:[#allocation2 + $0x160] sm:$0xff] %vm685, %v5657
    %5722 = vst.msk [vmem:[#allocation2 + $0x168] sm:$0xff] %vm685, %v5658
    %5723 = vst.msk [vmem:[#allocation2 + $0x170] sm:$0xff] %vm685, %v5659
    %5724 = vst.msk [vmem:[#allocation2 + $0x178] sm:$0xff] %vm685, %v5660
    %5725 = vst.msk [vmem:[#allocation2 + $0x180] sm:$0xff] %vm685, %v5661
    %5726 = vst.msk [vmem:[#allocation2 + $0x188] sm:$0xff] %vm685, %v5662
    %5727 = vst.msk [vmem:[#allocation2 + $0x190] sm:$0xff] %vm685, %v5663
    %5728 = vst.msk [vmem:[#allocation2 + $0x198] sm:$0xff] %vm685, %v5664
    %5729 = vst.msk [vmem:[#allocation2 + $0x1a0] sm:$0xff] %vm685, %v5665
    %5730 = vst.msk [vmem:[#allocation2 + $0x1a8] sm:$0xff] %vm685, %v5666
    %5731 = vst.msk [vmem:[#allocation2 + $0x1b0] sm:$0xff] %vm685, %v5667
    %5732 = vst.msk [vmem:[#allocation2 + $0x1b8] sm:$0xff] %vm685, %v5668
    %5733 = vst.msk [vmem:[#allocation2 + $0x1c0] sm:$0xff] %vm685, %v5669
    %5734 = vst.msk [vmem:[#allocation2 + $0x1c8] sm:$0xff] %vm685, %v5670
    %5735 = vst.msk [vmem:[#allocation2 + $0x1d0] sm:$0xff] %vm685, %v5671
    %5736 = vst.msk [vmem:[#allocation2 + $0x1d8] sm:$0xff] %vm685, %v5672
    %5737 = vst.msk [vmem:[#allocation2 + $0x1e0] sm:$0xff] %vm685, %v5673
    %5738 = vst.msk [vmem:[#allocation2 + $0x1e8] sm:$0xff] %vm685, %v5674
    %5739 = vst.msk [vmem:[#allocation2 + $0x1f0] sm:$0xff] %vm685, %v5675
    %5740 = vst.msk [vmem:[#allocation2 + $0x1f8] sm:$0xff] %vm685, %v5676
    %v5741 = vld [vmem:[%s3392] sm:$0xe]
    %v5742 = vld [vmem:[%s3392 + $0x4] sm:$0xf]
    %v5743 = vld [vmem:[%s3392 + $0x8] sm:$0x1]
    %v5744 = vld [vmem:[%s3392 + $0xc] sm:$0xe]
    %v5745 = vld [vmem:[%s3392 + $0x10] sm:$0xf]
    %v5746 = vld [vmem:[%s3392 + $0x14] sm:$0x1]
    %v5747 = vld [vmem:[%s3392 + $0x18] sm:$0xe]
    %v5748 = vld [vmem:[%s3392 + $0x1c] sm:$0xf]
    %v5749 = vld [vmem:[%s3392 + $0x20] sm:$0x1]
    %v5750 = vld [vmem:[%s3392 + $0x24] sm:$0xe]
    %v5751 = vld [vmem:[%s3392 + $0x28] sm:$0xf]
    %v5752 = vld [vmem:[%s3392 + $0x2c] sm:$0x1]
    %v5753 = vld [vmem:[%s3392 + $0x30] sm:$0xe]
    %v5754 = vld [vmem:[%s3392 + $0x34] sm:$0xf]
    %v5755 = vld [vmem:[%s3392 + $0x38] sm:$0x1]
    %v5756 = vld [vmem:[%s3392 + $0x3c] sm:$0xe]
    %v5757 = vld [vmem:[%s3392 + $0x40] sm:$0xf]
    %v5758 = vld [vmem:[%s3392 + $0x44] sm:$0x1]
    %v5759 = vld [vmem:[%s3392 + $0x48] sm:$0xe]
    %v5760 = vld [vmem:[%s3392 + $0x4c] sm:$0xf]
    %v5761 = vld [vmem:[%s3392 + $0x50] sm:$0x1]
    %v5762 = vld [vmem:[%s3392 + $0x54] sm:$0xe]
    %v5763 = vld [vmem:[%s3392 + $0x58] sm:$0xf]
    %v5764 = vld [vmem:[%s3392 + $0x5c] sm:$0x1]
    %v5765 = vld [vmem:[%s3392 + $0x60] sm:$0xe]
    %v5766 = vld [vmem:[%s3392 + $0x64] sm:$0xf]
    %v5767 = vld [vmem:[%s3392 + $0x68] sm:$0x1]
    %v5768 = vld [vmem:[%s3392 + $0x6c] sm:$0xe]
    %v5769 = vld [vmem:[%s3392 + $0x70] sm:$0xf]
    %v5770 = vld [vmem:[%s3392 + $0x74] sm:$0x1]
    %v5771 = vld [vmem:[%s3392 + $0x78] sm:$0xe]
    %v5772 = vld [vmem:[%s3392 + $0x7c] sm:$0xf]
    %v5773 = vld [vmem:[%s3392 + $0x80] sm:$0x1]
    %v5774 = vld [vmem:[%s3392 + $0x84] sm:$0xe]
    %v5775 = vld [vmem:[%s3392 + $0x88] sm:$0xf]
    %v5776 = vld [vmem:[%s3392 + $0x8c] sm:$0x1]
    %v5777 = vld [vmem:[%s3392 + $0x90] sm:$0xe]
    %v5778 = vld [vmem:[%s3392 + $0x94] sm:$0xf]
    %v5779 = vld [vmem:[%s3392 + $0x98] sm:$0x1]
    %v5780 = vld [vmem:[%s3392 + $0x9c] sm:$0xe]
    %v5781 = vld [vmem:[%s3392 + $0xa0] sm:$0xf]
    %v5782 = vld [vmem:[%s3392 + $0xa4] sm:$0x1]
    %v5783 = vld [vmem:[%s3392 + $0xa8] sm:$0xe]
    %v5784 = vld [vmem:[%s3392 + $0xac] sm:$0xf]
    %v5785 = vld [vmem:[%s3392 + $0xb0] sm:$0x1]
    %v5786 = vld [vmem:[%s3392 + $0xb4] sm:$0xe]
    %v5787 = vld [vmem:[%s3392 + $0xb8] sm:$0xf]
    %v5788 = vld [vmem:[%s3392 + $0xbc] sm:$0x1]
    %v5789 = vld [vmem:[%s3392 + $0xd8] sm:$0xe]
    %v5790 = vld [vmem:[%s3392 + $0xdc] sm:$0xf]
    %v5791 = vld [vmem:[%s3392 + $0xe0] sm:$0x1]
    %v5792 = vld [vmem:[%s3392 + $0xe4] sm:$0xe]
    %v5793 = vld [vmem:[%s3392 + $0xe8] sm:$0xf]
    %v5794 = vld [vmem:[%s3392 + $0xec] sm:$0x1]
    %v5795 = vld [vmem:[%s3392 + $0xf0] sm:$0xe]
    %v5796 = vld [vmem:[%s3392 + $0xf4] sm:$0xf]
    %v5797 = vld [vmem:[%s3392 + $0xf8] sm:$0x1]
    %v5798 = vld [vmem:[%s3392 + $0xfc] sm:$0xe]
    %v5799 = vld [vmem:[%s3392 + $0x100] sm:$0xf]
    %v5800 = vld [vmem:[%s3392 + $0x104] sm:$0x1]
    %v5801 = vld [vmem:[%s3392 + $0x108] sm:$0xe]
    %v5802 = vld [vmem:[%s3392 + $0x10c] sm:$0xf]
    %v5803 = vld [vmem:[%s3392 + $0x110] sm:$0x1]
    %v5804 = vld [vmem:[%s3392 + $0x114] sm:$0xe]
    %v5805 = vld [vmem:[%s3392 + $0x118] sm:$0xf]
    %v5806 = vld [vmem:[%s3392 + $0x11c] sm:$0x1]
    %v5807 = vld [vmem:[%s3392 + $0x120] sm:$0xe]
    %v5808 = vld [vmem:[%s3392 + $0x124] sm:$0xf]
    %v5809 = vld [vmem:[%s3392 + $0x128] sm:$0x1]
    %v5810 = vld [vmem:[%s3392 + $0x12c] sm:$0xe]
    %v5811 = vld [vmem:[%s3392 + $0x130] sm:$0xf]
    %v5812 = vld [vmem:[%s3392 + $0x134] sm:$0x1]
    %v5813 = vld [vmem:[%s3392 + $0x138] sm:$0xe]
    %v5814 = vld [vmem:[%s3392 + $0x13c] sm:$0xf]
    %v5815 = vld [vmem:[%s3392 + $0x140] sm:$0x1]
    %v5816 = vld [vmem:[%s3392 + $0x144] sm:$0xe]
    %v5817 = vld [vmem:[%s3392 + $0x148] sm:$0xf]
    %v5818 = vld [vmem:[%s3392 + $0x14c] sm:$0x1]
    %v5819 = vld [vmem:[%s3392 + $0x150] sm:$0xe]
    %v5820 = vld [vmem:[%s3392 + $0x154] sm:$0xf]
    %v5821 = vld [vmem:[%s3392 + $0x158] sm:$0x1]
    %v5822 = vld [vmem:[%s3392 + $0x15c] sm:$0xe]
    %v5823 = vld [vmem:[%s3392 + $0x160] sm:$0xf]
    %v5824 = vld [vmem:[%s3392 + $0x164] sm:$0x1]
    %v5825 = vld [vmem:[%s3392 + $0x168] sm:$0xe]
    %v5826 = vld [vmem:[%s3392 + $0x16c] sm:$0xf]
    %v5827 = vld [vmem:[%s3392 + $0x170] sm:$0x1]
    %v5828 = vld [vmem:[%s3392 + $0x174] sm:$0xe]
    %v5829 = vld [vmem:[%s3392 + $0x178] sm:$0xf]
    %v5830 = vld [vmem:[%s3392 + $0x17c] sm:$0x1]
    %v5831 = vld [vmem:[%s3392 + $0x180] sm:$0xe]
    %v5832 = vld [vmem:[%s3392 + $0x184] sm:$0xf]
    %v5833 = vld [vmem:[%s3392 + $0x188] sm:$0x1]
    %v5834 = vld [vmem:[%s3392 + $0x18c] sm:$0xe]
    %v5835 = vld [vmem:[%s3392 + $0x190] sm:$0xf]
    %v5836 = vld [vmem:[%s3392 + $0x194] sm:$0x1]
    %v5933 = vrot.slane %v5741, 5
    %v5934 = vrot.slane %v5933, 4
    %v5935 = vrot.slane %v5742, 5
    %v5936 = vsel %vm2489, %v5934, %v5935
    %v5937 = vrot.slane %v5935, 4
    %v5938 = vrot.slane %v5743, 5
    %v5939 = vsel %vm2489, %v5937, %v5938
    %v5940 = vrot.slane %v5744, 5
    %v5941 = vrot.slane %v5940, 4
    %v5942 = vrot.slane %v5745, 5
    %v5943 = vsel %vm2489, %v5941, %v5942
    %v5944 = vrot.slane %v5942, 4
    %v5945 = vrot.slane %v5746, 5
    %v5946 = vsel %vm2489, %v5944, %v5945
    %v5947 = vrot.slane %v5747, 5
    %v5948 = vrot.slane %v5947, 4
    %v5949 = vrot.slane %v5748, 5
    %v5950 = vsel %vm2489, %v5948, %v5949
    %v5951 = vrot.slane %v5949, 4
    %v5952 = vrot.slane %v5749, 5
    %v5953 = vsel %vm2489, %v5951, %v5952
    %v5954 = vrot.slane %v5750, 5
    %v5955 = vrot.slane %v5954, 4
    %v5956 = vrot.slane %v5751, 5
    %v5957 = vsel %vm2489, %v5955, %v5956
    %v5958 = vrot.slane %v5956, 4
    %v5959 = vrot.slane %v5752, 5
    %v5960 = vsel %vm2489, %v5958, %v5959
    %v5961 = vrot.slane %v5753, 5
    %v5962 = vrot.slane %v5961, 4
    %v5963 = vrot.slane %v5754, 5
    %v5964 = vsel %vm2489, %v5962, %v5963
    %v5965 = vrot.slane %v5963, 4
    %v5966 = vrot.slane %v5755, 5
    %v5967 = vsel %vm2489, %v5965, %v5966
    %v5968 = vrot.slane %v5756, 5
    %v5969 = vrot.slane %v5968, 4
    %v5970 = vrot.slane %v5757, 5
    %v5971 = vsel %vm2489, %v5969, %v5970
    %v5972 = vrot.slane %v5970, 4
    %v5973 = vrot.slane %v5758, 5
    %v5974 = vsel %vm2489, %v5972, %v5973
    %v5975 = vrot.slane %v5759, 5
    %v5976 = vrot.slane %v5975, 4
    %v5977 = vrot.slane %v5760, 5
    %v5978 = vsel %vm2489, %v5976, %v5977
    %v5979 = vrot.slane %v5977, 4
    %v5980 = vrot.slane %v5761, 5
    %v5981 = vsel %vm2489, %v5979, %v5980
    %v5982 = vrot.slane %v5762, 5
    %v5983 = vrot.slane %v5982, 4
    %v5984 = vrot.slane %v5763, 5
    %v5985 = vsel %vm2489, %v5983, %v5984
    %v5986 = vrot.slane %v5984, 4
    %v5987 = vrot.slane %v5764, 5
    %v5988 = vsel %vm2489, %v5986, %v5987
    %v5989 = vrot.slane %v5765, 5
    %v5990 = vrot.slane %v5989, 4
    %v5991 = vrot.slane %v5766, 5
    %v5992 = vsel %vm2489, %v5990, %v5991
    %v5993 = vrot.slane %v5991, 4
    %v5994 = vrot.slane %v5767, 5
    %v5995 = vsel %vm2489, %v5993, %v5994
    %v5996 = vrot.slane %v5768, 5
    %v5997 = vrot.slane %v5996, 4
    %v5998 = vrot.slane %v5769, 5
    %v5999 = vsel %vm2489, %v5997, %v5998
    %v6000 = vrot.slane %v5998, 4
    %v6001 = vrot.slane %v5770, 5
    %v6002 = vsel %vm2489, %v6000, %v6001
    %v6003 = vrot.slane %v5771, 5
    %v6004 = vrot.slane %v6003, 4
    %v6005 = vrot.slane %v5772, 5
    %v6006 = vsel %vm2489, %v6004, %v6005
    %v6007 = vrot.slane %v6005, 4
    %v6008 = vrot.slane %v5773, 5
    %v6009 = vsel %vm2489, %v6007, %v6008
    %v6010 = vrot.slane %v5774, 5
    %v6011 = vrot.slane %v6010, 4
    %v6012 = vrot.slane %v5775, 5
    %v6013 = vsel %vm2489, %v6011, %v6012
    %v6014 = vrot.slane %v6012, 4
    %v6015 = vrot.slane %v5776, 5
    %v6016 = vsel %vm2489, %v6014, %v6015
    %v6017 = vrot.slane %v5777, 5
    %v6018 = vrot.slane %v6017, 4
    %v6019 = vrot.slane %v5778, 5
    %v6020 = vsel %vm2489, %v6018, %v6019
    %v6021 = vrot.slane %v6019, 4
    %v6022 = vrot.slane %v5779, 5
    %v6023 = vsel %vm2489, %v6021, %v6022
    %v6024 = vrot.slane %v5780, 5
    %v6025 = vrot.slane %v6024, 4
    %v6026 = vrot.slane %v5781, 5
    %v6027 = vsel %vm2489, %v6025, %v6026
    %v6028 = vrot.slane %v6026, 4
    %v6029 = vrot.slane %v5782, 5
    %v6030 = vsel %vm2489, %v6028, %v6029
    %v6031 = vrot.slane %v5783, 5
    %v6032 = vrot.slane %v6031, 4
    %v6033 = vrot.slane %v5784, 5
    %v6034 = vsel %vm2489, %v6032, %v6033
    %v6035 = vrot.slane %v6033, 4
    %v6036 = vrot.slane %v5785, 5
    %v6037 = vsel %vm2489, %v6035, %v6036
    %v6038 = vrot.slane %v5786, 5
    %v6039 = vrot.slane %v6038, 4
    %v6040 = vrot.slane %v5787, 5
    %v6041 = vsel %vm2489, %v6039, %v6040
    %v6042 = vrot.slane %v6040, 4
    %v6043 = vrot.slane %v5788, 5
    %v6044 = vsel %vm2489, %v6042, %v6043
    %v6045 = vrot.slane %v5789, 5
    %v6046 = vrot.slane %v6045, 4
    %v6047 = vrot.slane %v5790, 5
    %v6048 = vsel %vm2489, %v6046, %v6047
    %v6049 = vrot.slane %v6047, 4
    %v6050 = vrot.slane %v5791, 5
    %v6051 = vsel %vm2489, %v6049, %v6050
    %v6052 = vrot.slane %v5792, 5
    %v6053 = vrot.slane %v6052, 4
    %v6054 = vrot.slane %v5793, 5
    %v6055 = vsel %vm2489, %v6053, %v6054
    %v6056 = vrot.slane %v6054, 4
    %v6057 = vrot.slane %v5794, 5
    %v6058 = vsel %vm2489, %v6056, %v6057
    %v6059 = vrot.slane %v5795, 5
    %v6060 = vrot.slane %v6059, 4
    %v6061 = vrot.slane %v5796, 5
    %v6062 = vsel %vm2489, %v6060, %v6061
    %v6063 = vrot.slane %v6061, 4
    %v6064 = vrot.slane %v5797, 5
    %v6065 = vsel %vm2489, %v6063, %v6064
    %v6066 = vrot.slane %v5798, 5
    %v6067 = vrot.slane %v6066, 4
    %v6068 = vrot.slane %v5799, 5
    %v6069 = vsel %vm2489, %v6067, %v6068
    %v6070 = vrot.slane %v6068, 4
    %v6071 = vrot.slane %v5800, 5
    %v6072 = vsel %vm2489, %v6070, %v6071
    %v6073 = vrot.slane %v5801, 5
    %v6074 = vrot.slane %v6073, 4
    %v6075 = vrot.slane %v5802, 5
    %v6076 = vsel %vm2489, %v6074, %v6075
    %v6077 = vrot.slane %v6075, 4
    %v6078 = vrot.slane %v5803, 5
    %v6079 = vsel %vm2489, %v6077, %v6078
    %v6080 = vrot.slane %v5804, 5
    %v6081 = vrot.slane %v6080, 4
    %v6082 = vrot.slane %v5805, 5
    %v6083 = vsel %vm2489, %v6081, %v6082
    %v6084 = vrot.slane %v6082, 4
    %v6085 = vrot.slane %v5806, 5
    %v6086 = vsel %vm2489, %v6084, %v6085
    %v6087 = vrot.slane %v5807, 5
    %v6088 = vrot.slane %v6087, 4
    %v6089 = vrot.slane %v5808, 5
    %v6090 = vsel %vm2489, %v6088, %v6089
    %v6091 = vrot.slane %v6089, 4
    %v6092 = vrot.slane %v5809, 5
    %v6093 = vsel %vm2489, %v6091, %v6092
    %v6094 = vrot.slane %v5810, 5
    %v6095 = vrot.slane %v6094, 4
    %v6096 = vrot.slane %v5811, 5
    %v6097 = vsel %vm2489, %v6095, %v6096
    %v6098 = vrot.slane %v6096, 4
    %v6099 = vrot.slane %v5812, 5
    %v6100 = vsel %vm2489, %v6098, %v6099
    %v6101 = vrot.slane %v5813, 5
    %v6102 = vrot.slane %v6101, 4
    %v6103 = vrot.slane %v5814, 5
    %v6104 = vsel %vm2489, %v6102, %v6103
    %v6105 = vrot.slane %v6103, 4
    %v6106 = vrot.slane %v5815, 5
    %v6107 = vsel %vm2489, %v6105, %v6106
    %v6108 = vrot.slane %v5816, 5
    %v6109 = vrot.slane %v6108, 4
    %v6110 = vrot.slane %v5817, 5
    %v6111 = vsel %vm2489, %v6109, %v6110
    %v6112 = vrot.slane %v6110, 4
    %v6113 = vrot.slane %v5818, 5
    %v6114 = vsel %vm2489, %v6112, %v6113
    %v6115 = vrot.slane %v5819, 5
    %v6116 = vrot.slane %v6115, 4
    %v6117 = vrot.slane %v5820, 5
    %v6118 = vsel %vm2489, %v6116, %v6117
    %v6119 = vrot.slane %v6117, 4
    %v6120 = vrot.slane %v5821, 5
    %v6121 = vsel %vm2489, %v6119, %v6120
    %v6122 = vrot.slane %v5822, 5
    %v6123 = vrot.slane %v6122, 4
    %v6124 = vrot.slane %v5823, 5
    %v6125 = vsel %vm2489, %v6123, %v6124
    %v6126 = vrot.slane %v6124, 4
    %v6127 = vrot.slane %v5824, 5
    %v6128 = vsel %vm2489, %v6126, %v6127
    %v6129 = vrot.slane %v5825, 5
    %v6130 = vrot.slane %v6129, 4
    %v6131 = vrot.slane %v5826, 5
    %v6132 = vsel %vm2489, %v6130, %v6131
    %v6133 = vrot.slane %v6131, 4
    %v6134 = vrot.slane %v5827, 5
    %v6135 = vsel %vm2489, %v6133, %v6134
    %v6136 = vrot.slane %v5828, 5
    %v6137 = vrot.slane %v6136, 4
    %v6138 = vrot.slane %v5829, 5
    %v6139 = vsel %vm2489, %v6137, %v6138
    %v6140 = vrot.slane %v6138, 4
    %v6141 = vrot.slane %v5830, 5
    %v6142 = vsel %vm2489, %v6140, %v6141
    %v6143 = vrot.slane %v5831, 5
    %v6144 = vrot.slane %v6143, 4
    %v6145 = vrot.slane %v5832, 5
    %v6146 = vsel %vm2489, %v6144, %v6145
    %v6147 = vrot.slane %v6145, 4
    %v6148 = vrot.slane %v5833, 5
    %v6149 = vsel %vm2489, %v6147, %v6148
    %v6150 = vrot.slane %v5834, 5
    %v6151 = vrot.slane %v6150, 4
    %v6152 = vrot.slane %v5835, 5
    %v6153 = vsel %vm2489, %v6151, %v6152
    %v6154 = vrot.slane %v6152, 4
    %v6155 = vrot.slane %v5836, 5
    %v6156 = vsel %vm2489, %v6154, %v6155
    %s6157 = scalar_lea.vmem [#allocation6], 10
    %v6158 = vld [vmem:[%s6157] sm:$0x3]
    %v6159 = vunpack.c.l.b16 %v5936
    %v6160 = vunpack.c.l.b16 %v5939
    %v6161 = vunpack.c.l.b16 %v5943
    %v6162 = vunpack.c.l.b16 %v5946
    %v6163 = vunpack.c.l.b16 %v5950
    %v6164 = vunpack.c.l.b16 %v5953
    %v6165 = vunpack.c.l.b16 %v5957
    %v6166 = vunpack.c.l.b16 %v5960
    %v6167 = vunpack.c.l.b16 %v5964
    %v6168 = vunpack.c.l.b16 %v5967
    %v6169 = vunpack.c.l.b16 %v5971
    %v6170 = vunpack.c.l.b16 %v5974
    %v6171 = vunpack.c.l.b16 %v5978
    %v6172 = vunpack.c.l.b16 %v5981
    %v6173 = vunpack.c.l.b16 %v5985
    %v6174 = vunpack.c.l.b16 %v5988
    %v6175 = vunpack.c.l.b16 %v5992
    %v6176 = vunpack.c.l.b16 %v5995
    %v6177 = vunpack.c.l.b16 %v5999
    %v6178 = vunpack.c.l.b16 %v6002
    %v6179 = vunpack.c.l.b16 %v6006
    %v6180 = vunpack.c.l.b16 %v6009
    %v6181 = vunpack.c.l.b16 %v6013
    %v6182 = vunpack.c.l.b16 %v6016
    %v6183 = vunpack.c.l.b16 %v6020
    %v6184 = vunpack.c.l.b16 %v6023
    %v6185 = vunpack.c.l.b16 %v6027
    %v6186 = vunpack.c.l.b16 %v6030
    %v6187 = vunpack.c.l.b16 %v6034
    %v6188 = vunpack.c.l.b16 %v6037
    %v6189 = vunpack.c.l.b16 %v6041
    %v6190 = vunpack.c.l.b16 %v6044
    %v6191 = vunpack.c.l.b16 %v6048
    %v6192 = vunpack.c.l.b16 %v6051
    %v6193 = vunpack.c.l.b16 %v6055
    %v6194 = vunpack.c.l.b16 %v6058
    %v6195 = vunpack.c.l.b16 %v6062
    %v6196 = vunpack.c.l.b16 %v6065
    %v6197 = vunpack.c.l.b16 %v6069
    %v6198 = vunpack.c.l.b16 %v6072
    %v6199 = vunpack.c.l.b16 %v6076
    %v6200 = vunpack.c.l.b16 %v6079
    %v6201 = vunpack.c.l.b16 %v6083
    %v6202 = vunpack.c.l.b16 %v6086
    %v6203 = vunpack.c.l.b16 %v6090
    %v6204 = vunpack.c.l.b16 %v6093
    %v6205 = vunpack.c.l.b16 %v6097
    %v6206 = vunpack.c.l.b16 %v6100
    %v6207 = vunpack.c.l.b16 %v6104
    %v6208 = vunpack.c.l.b16 %v6107
    %v6209 = vunpack.c.l.b16 %v6111
    %v6210 = vunpack.c.l.b16 %v6114
    %v6211 = vunpack.c.l.b16 %v6118
    %v6212 = vunpack.c.l.b16 %v6121
    %v6213 = vunpack.c.l.b16 %v6125
    %v6214 = vunpack.c.l.b16 %v6128
    %v6215 = vunpack.c.l.b16 %v6132
    %v6216 = vunpack.c.l.b16 %v6135
    %v6217 = vunpack.c.l.b16 %v6139
    %v6218 = vunpack.c.l.b16 %v6142
    %v6219 = vunpack.c.l.b16 %v6146
    %v6220 = vunpack.c.l.b16 %v6149
    %v6221 = vunpack.c.l.b16 %v6153
    %v6222 = vunpack.c.l.b16 %v6156
    %v6223 = vpack.c.b16 %v6160, %v6159
    %v6224 = vpack.c.b16 %v6162, %v6161
    %v6225 = vpack.c.b16 %v6164, %v6163
    %v6226 = vpack.c.b16 %v6166, %v6165
    %v6227 = vpack.c.b16 %v6168, %v6167
    %v6228 = vpack.c.b16 %v6170, %v6169
    %v6229 = vpack.c.b16 %v6172, %v6171
    %v6230 = vpack.c.b16 %v6174, %v6173
    %v6231 = vpack.c.b16 %v6176, %v6175
    %v6232 = vpack.c.b16 %v6178, %v6177
    %v6233 = vpack.c.b16 %v6180, %v6179
    %v6234 = vpack.c.b16 %v6182, %v6181
    %v6235 = vpack.c.b16 %v6184, %v6183
    %v6236 = vpack.c.b16 %v6186, %v6185
    %v6237 = vpack.c.b16 %v6188, %v6187
    %v6238 = vpack.c.b16 %v6190, %v6189
    %v6239 = vpack.c.b16 %v6192, %v6191
    %v6240 = vpack.c.b16 %v6194, %v6193
    %v6241 = vpack.c.b16 %v6196, %v6195
    %v6242 = vpack.c.b16 %v6198, %v6197
    %v6243 = vpack.c.b16 %v6200, %v6199
    %v6244 = vpack.c.b16 %v6202, %v6201
    %v6245 = vpack.c.b16 %v6204, %v6203
    %v6246 = vpack.c.b16 %v6206, %v6205
    %v6247 = vpack.c.b16 %v6208, %v6207
    %v6248 = vpack.c.b16 %v6210, %v6209
    %v6249 = vpack.c.b16 %v6212, %v6211
    %v6250 = vpack.c.b16 %v6214, %v6213
    %v6251 = vpack.c.b16 %v6216, %v6215
    %v6252 = vpack.c.b16 %v6218, %v6217
    %v6253 = vpack.c.b16 %v6220, %v6219
    %v6254 = vpack.c.b16 %v6222, %v6221
    %v6256 = vsel %vm295, %v6223, 0
    %v6259 = vsel %vm295, %v6224, 0
    %v6262 = vsel %vm295, %v6225, 0
    %v6265 = vsel %vm295, %v6226, 0
    %v6268 = vsel %vm295, %v6227, 0
    %v6271 = vsel %vm295, %v6228, 0
    %v6274 = vsel %vm295, %v6229, 0
    %v6277 = vsel %vm295, %v6230, 0
    %v6280 = vsel %vm295, %v6231, 0
    %v6283 = vsel %vm295, %v6232, 0
    %v6286 = vsel %vm295, %v6233, 0
    %v6289 = vsel %vm295, %v6234, 0
    %v6292 = vsel %vm295, %v6235, 0
    %v6295 = vsel %vm295, %v6236, 0
    %v6298 = vsel %vm295, %v6237, 0
    %v6301 = vsel %vm295, %v6238, 0
    %v6304 = vsel %vm295, %v6239, 0
    %v6307 = vsel %vm295, %v6240, 0
    %v6310 = vsel %vm295, %v6241, 0
    %v6313 = vsel %vm295, %v6242, 0
    %v6316 = vsel %vm295, %v6243, 0
    %v6319 = vsel %vm295, %v6244, 0
    %v6322 = vsel %vm295, %v6245, 0
    %v6325 = vsel %vm295, %v6246, 0
    %v6328 = vsel %vm295, %v6247, 0
    %v6331 = vsel %vm295, %v6248, 0
    %v6334 = vsel %vm295, %v6249, 0
    %v6337 = vsel %vm295, %v6250, 0
    %v6340 = vsel %vm295, %v6251, 0
    %v6343 = vsel %vm295, %v6252, 0
    %v6346 = vsel %vm295, %v6253, 0
    %v6349 = vsel %vm295, %v6254, 0
    %v6352 = vsel %vm392, %v6158, 0
    %6354 = vmatprep.subr.bf16.mxu0 0
    %6355 = vmatpush1.bf16.msra.mxu0 %v6352
    %6356 = vmatprep.subr.bf16.mxu0 0
    %6357 = vmatpush1.bf16.msra.mxu0 0
    %6358 = vmatprep.subr.bf16.mxu0 0
    %6359 = vmatpush1.bf16.msra.mxu0 0
    %6360 = vmatprep.subr.bf16.mxu0 0
    %6361 = vmatpush1.bf16.msra.mxu0 0
    %6362 = vmatprep.subr.bf16.mxu0 0
    %6363 = vmatpush1.bf16.msra.mxu0 0
    %6364 = vmatprep.subr.bf16.mxu0 0
    %6365 = vmatpush1.bf16.msra.mxu0 0
    %6366 = vmatprep.subr.bf16.mxu0 0
    %6367 = vmatpush1.bf16.msra.mxu0 0
    %6368 = vmatprep.subr.bf16.mxu0 0
    %6369 = vmatpush1.bf16.msra.mxu0 0
    %6370 = vmatprep.subr.bf16.mxu0 0
    %6371 = vmatpush1.bf16.msra.mxu0 0
    %6372 = vmatprep.subr.bf16.mxu0 0
    %6373 = vmatpush1.bf16.msra.mxu0 0
    %6374 = vmatprep.subr.bf16.mxu0 0
    %6375 = vmatpush1.bf16.msra.mxu0 0
    %6376 = vmatprep.subr.bf16.mxu0 0
    %6377 = vmatpush1.bf16.msra.mxu0 0
    %6378 = vmatprep.subr.bf16.mxu0 0
    %6379 = vmatpush1.bf16.msra.mxu0 0
    %6380 = vmatprep.subr.bf16.mxu0 0
    %6381 = vmatpush1.bf16.msra.mxu0 0
    %6382 = vmatprep.subr.bf16.mxu0 0
    %6383 = vmatpush1.bf16.msra.mxu0 0
    %6384 = vmatprep.subr.bf16.mxu0 0
    %6385 = vmatpush1.bf16.msra.mxu0 0
    %6386 = vmatprep.mubr.bf16.mxu0 0
    %6387 = vmatmul.mubr.bf16.gmra.mrb[0].mxu0 %v6256
    %v6388 = vpop.f32.mrb[0].mxu0
    %v6389 = vadd.f32 0.0, %v6388
    %v6390 = vpop.f32.mrb[0].mxu0
    %v6391 = vpop.f32.mrb[0].mxu0
    %v6392 = vadd.f32 0.0, %v6391
    %v6393 = vpop.f32.mrb[0].mxu0
    %6394 = vmatprep.mubr.bf16.mxu0 0
    %6395 = vmatmul.mubr.bf16.gmra.mrb[0].mxu0 %v6259
    %v6396 = vpop.f32.mrb[0].mxu0
    %v6397 = vadd.f32 0.0, %v6396
    %v6398 = vpop.f32.mrb[0].mxu0
    %v6399 = vpop.f32.mrb[0].mxu0
    %v6400 = vadd.f32 0.0, %v6399
    %v6401 = vpop.f32.mrb[0].mxu0
    %6402 = vmatprep.mubr.bf16.mxu0 0
    %6403 = vmatmul.mubr.bf16.gmra.mrb[0].mxu0 %v6262
    %v6404 = vpop.f32.mrb[0].mxu0
    %v6405 = vadd.f32 0.0, %v6404
    %v6406 = vpop.f32.mrb[0].mxu0
    %v6407 = vpop.f32.mrb[0].mxu0
    %v6408 = vadd.f32 0.0, %v6407
    %v6409 = vpop.f32.mrb[0].mxu0
    %6410 = vmatprep.mubr.bf16.mxu0 0
    %6411 = vmatmul.mubr.bf16.gmra.mrb[0].mxu0 %v6265
    %v6412 = vpop.f32.mrb[0].mxu0
    %v6413 = vadd.f32 0.0, %v6412
    %v6414 = vpop.f32.mrb[0].mxu0
    %v6415 = vpop.f32.mrb[0].mxu0
    %v6416 = vadd.f32 0.0, %v6415
    %v6417 = vpop.f32.mrb[0].mxu0
    %6418 = vmatprep.mubr.bf16.mxu0 0
    %6419 = vmatmul.mubr.bf16.gmra.mrb[0].mxu0 %v6268
    %v6420 = vpop.f32.mrb[0].mxu0
    %v6421 = vadd.f32 0.0, %v6420
    %v6422 = vpop.f32.mrb[0].mxu0
    %v6423 = vpop.f32.mrb[0].mxu0
    %v6424 = vadd.f32 0.0, %v6423
    %v6425 = vpop.f32.mrb[0].mxu0
    %6426 = vmatprep.mubr.bf16.mxu0 0
    %6427 = vmatmul.mubr.bf16.gmra.mrb[0].mxu0 %v6271
    %v6428 = vpop.f32.mrb[0].mxu0
    %v6429 = vadd.f32 0.0, %v6428
    %v6430 = vpop.f32.mrb[0].mxu0
    %v6431 = vpop.f32.mrb[0].mxu0
    %v6432 = vadd.f32 0.0, %v6431
    %v6433 = vpop.f32.mrb[0].mxu0
    %6434 = vmatprep.mubr.bf16.mxu0 0
    %6435 = vmatmul.mubr.bf16.gmra.mrb[0].mxu0 %v6274
    %v6436 = vpop.f32.mrb[0].mxu0
    %v6437 = vadd.f32 0.0, %v6436
    %v6438 = vpop.f32.mrb[0].mxu0
    %v6439 = vpop.f32.mrb[0].mxu0
    %v6440 = vadd.f32 0.0, %v6439
    %v6441 = vpop.f32.mrb[0].mxu0
    %6442 = vmatprep.mubr.bf16.mxu0 0
    %6443 = vmatmul.mubr.bf16.gmra.mrb[0].mxu0 %v6277
    %v6444 = vpop.f32.mrb[0].mxu0
    %v6445 = vadd.f32 0.0, %v6444
    %v6446 = vpop.f32.mrb[0].mxu0
    %v6447 = vpop.f32.mrb[0].mxu0
    %v6448 = vadd.f32 0.0, %v6447
    %v6449 = vpop.f32.mrb[0].mxu0
    %6450 = vmatprep.mubr.bf16.mxu0 0
    %6451 = vmatmul.mubr.bf16.gmra.mrb[0].mxu0 %v6280
    %v6452 = vpop.f32.mrb[0].mxu0
    %v6453 = vadd.f32 0.0, %v6452
    %v6454 = vpop.f32.mrb[0].mxu0
    %v6455 = vpop.f32.mrb[0].mxu0
    %v6456 = vadd.f32 0.0, %v6455
    %v6457 = vpop.f32.mrb[0].mxu0
    %6458 = vmatprep.mubr.bf16.mxu0 0
    %6459 = vmatmul.mubr.bf16.gmra.mrb[0].mxu0 %v6283
    %v6460 = vpop.f32.mrb[0].mxu0
    %v6461 = vadd.f32 0.0, %v6460
    %v6462 = vpop.f32.mrb[0].mxu0
    %v6463 = vpop.f32.mrb[0].mxu0
    %v6464 = vadd.f32 0.0, %v6463
    %v6465 = vpop.f32.mrb[0].mxu0
    %6466 = vmatprep.mubr.bf16.mxu0 0
    %6467 = vmatmul.mubr.bf16.gmra.mrb[0].mxu0 %v6286
    %v6468 = vpop.f32.mrb[0].mxu0
    %v6469 = vadd.f32 0.0, %v6468
    %v6470 = vpop.f32.mrb[0].mxu0
    %v6471 = vpop.f32.mrb[0].mxu0
    %v6472 = vadd.f32 0.0, %v6471
    %v6473 = vpop.f32.mrb[0].mxu0
    %6474 = vmatprep.mubr.bf16.mxu0 0
    %6475 = vmatmul.mubr.bf16.gmra.mrb[0].mxu0 %v6289
    %v6476 = vpop.f32.mrb[0].mxu0
    %v6477 = vadd.f32 0.0, %v6476
    %v6478 = vpop.f32.mrb[0].mxu0
    %v6479 = vpop.f32.mrb[0].mxu0
    %v6480 = vadd.f32 0.0, %v6479
    %v6481 = vpop.f32.mrb[0].mxu0
    %6482 = vmatprep.mubr.bf16.mxu0 0
    %6483 = vmatmul.mubr.bf16.gmra.mrb[0].mxu0 %v6292
    %v6484 = vpop.f32.mrb[0].mxu0
    %v6485 = vadd.f32 0.0, %v6484
    %v6486 = vpop.f32.mrb[0].mxu0
    %v6487 = vpop.f32.mrb[0].mxu0
    %v6488 = vadd.f32 0.0, %v6487
    %v6489 = vpop.f32.mrb[0].mxu0
    %6490 = vmatprep.mubr.bf16.mxu0 0
    %6491 = vmatmul.mubr.bf16.gmra.mrb[0].mxu0 %v6295
    %v6492 = vpop.f32.mrb[0].mxu0
    %v6493 = vadd.f32 0.0, %v6492
    %v6494 = vpop.f32.mrb[0].mxu0
    %v6495 = vpop.f32.mrb[0].mxu0
    %v6496 = vadd.f32 0.0, %v6495
    %v6497 = vpop.f32.mrb[0].mxu0
    %6498 = vmatprep.mubr.bf16.mxu0 0
    %6499 = vmatmul.mubr.bf16.gmra.mrb[0].mxu0 %v6298
    %v6500 = vpop.f32.mrb[0].mxu0
    %v6501 = vadd.f32 0.0, %v6500
    %v6502 = vpop.f32.mrb[0].mxu0
    %v6503 = vpop.f32.mrb[0].mxu0
    %v6504 = vadd.f32 0.0, %v6503
    %v6505 = vpop.f32.mrb[0].mxu0
    %6506 = vmatprep.mubr.bf16.mxu0 0
    %6507 = vmatmul.mubr.bf16.gmra.mrb[0].mxu0 %v6301
    %v6508 = vpop.f32.mrb[0].mxu0
    %v6509 = vadd.f32 0.0, %v6508
    %v6510 = vpop.f32.mrb[0].mxu0
    %v6511 = vpop.f32.mrb[0].mxu0
    %v6512 = vadd.f32 0.0, %v6511
    %v6513 = vpop.f32.mrb[0].mxu0
    %6514 = vmatprep.mubr.bf16.mxu0 0
    %6515 = vmatmul.mubr.bf16.gmra.mrb[0].mxu0 %v6304
    %v6516 = vpop.f32.mrb[0].mxu0
    %v6517 = vadd.f32 0.0, %v6516
    %v6518 = vpop.f32.mrb[0].mxu0
    %v6519 = vpop.f32.mrb[0].mxu0
    %v6520 = vadd.f32 0.0, %v6519
    %v6521 = vpop.f32.mrb[0].mxu0
    %6522 = vmatprep.mubr.bf16.mxu0 0
    %6523 = vmatmul.mubr.bf16.gmra.mrb[0].mxu0 %v6307
    %v6524 = vpop.f32.mrb[0].mxu0
    %v6525 = vadd.f32 0.0, %v6524
    %v6526 = vpop.f32.mrb[0].mxu0
    %v6527 = vpop.f32.mrb[0].mxu0
    %v6528 = vadd.f32 0.0, %v6527
    %v6529 = vpop.f32.mrb[0].mxu0
    %6530 = vmatprep.mubr.bf16.mxu0 0
    %6531 = vmatmul.mubr.bf16.gmra.mrb[0].mxu0 %v6310
    %v6532 = vpop.f32.mrb[0].mxu0
    %v6533 = vadd.f32 0.0, %v6532
    %v6534 = vpop.f32.mrb[0].mxu0
    %v6535 = vpop.f32.mrb[0].mxu0
    %v6536 = vadd.f32 0.0, %v6535
    %v6537 = vpop.f32.mrb[0].mxu0
    %6538 = vmatprep.mubr.bf16.mxu0 0
    %6539 = vmatmul.mubr.bf16.gmra.mrb[0].mxu0 %v6313
    %v6540 = vpop.f32.mrb[0].mxu0
    %v6541 = vadd.f32 0.0, %v6540
    %v6542 = vpop.f32.mrb[0].mxu0
    %v6543 = vpop.f32.mrb[0].mxu0
    %v6544 = vadd.f32 0.0, %v6543
    %v6545 = vpop.f32.mrb[0].mxu0
    %6546 = vmatprep.mubr.bf16.mxu0 0
    %6547 = vmatmul.mubr.bf16.gmra.mrb[0].mxu0 %v6316
    %v6548 = vpop.f32.mrb[0].mxu0
    %v6549 = vadd.f32 0.0, %v6548
    %v6550 = vpop.f32.mrb[0].mxu0
    %v6551 = vpop.f32.mrb[0].mxu0
    %v6552 = vadd.f32 0.0, %v6551
    %v6553 = vpop.f32.mrb[0].mxu0
    %6554 = vmatprep.mubr.bf16.mxu0 0
    %6555 = vmatmul.mubr.bf16.gmra.mrb[0].mxu0 %v6319
    %v6556 = vpop.f32.mrb[0].mxu0
    %v6557 = vadd.f32 0.0, %v6556
    %v6558 = vpop.f32.mrb[0].mxu0
    %v6559 = vpop.f32.mrb[0].mxu0
    %v6560 = vadd.f32 0.0, %v6559
    %v6561 = vpop.f32.mrb[0].mxu0
    %6562 = vmatprep.mubr.bf16.mxu0 0
    %6563 = vmatmul.mubr.bf16.gmra.mrb[0].mxu0 %v6322
    %v6564 = vpop.f32.mrb[0].mxu0
    %v6565 = vadd.f32 0.0, %v6564
    %v6566 = vpop.f32.mrb[0].mxu0
    %v6567 = vpop.f32.mrb[0].mxu0
    %v6568 = vadd.f32 0.0, %v6567
    %v6569 = vpop.f32.mrb[0].mxu0
    %6570 = vmatprep.mubr.bf16.mxu0 0
    %6571 = vmatmul.mubr.bf16.gmra.mrb[0].mxu0 %v6325
    %v6572 = vpop.f32.mrb[0].mxu0
    %v6573 = vadd.f32 0.0, %v6572
    %v6574 = vpop.f32.mrb[0].mxu0
    %v6575 = vpop.f32.mrb[0].mxu0
    %v6576 = vadd.f32 0.0, %v6575
    %v6577 = vpop.f32.mrb[0].mxu0
    %6578 = vmatprep.mubr.bf16.mxu0 0
    %6579 = vmatmul.mubr.bf16.gmra.mrb[0].mxu0 %v6328
    %v6580 = vpop.f32.mrb[0].mxu0
    %v6581 = vadd.f32 0.0, %v6580
    %v6582 = vpop.f32.mrb[0].mxu0
    %v6583 = vpop.f32.mrb[0].mxu0
    %v6584 = vadd.f32 0.0, %v6583
    %v6585 = vpop.f32.mrb[0].mxu0
    %6586 = vmatprep.mubr.bf16.mxu0 0
    %6587 = vmatmul.mubr.bf16.gmra.mrb[0].mxu0 %v6331
    %v6588 = vpop.f32.mrb[0].mxu0
    %v6589 = vadd.f32 0.0, %v6588
    %v6590 = vpop.f32.mrb[0].mxu0
    %v6591 = vpop.f32.mrb[0].mxu0
    %v6592 = vadd.f32 0.0, %v6591
    %v6593 = vpop.f32.mrb[0].mxu0
    %6594 = vmatprep.mubr.bf16.mxu0 0
    %6595 = vmatmul.mubr.bf16.gmra.mrb[0].mxu0 %v6334
    %v6596 = vpop.f32.mrb[0].mxu0
    %v6597 = vadd.f32 0.0, %v6596
    %v6598 = vpop.f32.mrb[0].mxu0
    %v6599 = vpop.f32.mrb[0].mxu0
    %v6600 = vadd.f32 0.0, %v6599
    %v6601 = vpop.f32.mrb[0].mxu0
    %6602 = vmatprep.mubr.bf16.mxu0 0
    %6603 = vmatmul.mubr.bf16.gmra.mrb[0].mxu0 %v6337
    %v6604 = vpop.f32.mrb[0].mxu0
    %v6605 = vadd.f32 0.0, %v6604
    %v6606 = vpop.f32.mrb[0].mxu0
    %v6607 = vpop.f32.mrb[0].mxu0
    %v6608 = vadd.f32 0.0, %v6607
    %v6609 = vpop.f32.mrb[0].mxu0
    %6610 = vmatprep.mubr.bf16.mxu0 0
    %6611 = vmatmul.mubr.bf16.gmra.mrb[0].mxu0 %v6340
    %v6612 = vpop.f32.mrb[0].mxu0
    %v6613 = vadd.f32 0.0, %v6612
    %v6614 = vpop.f32.mrb[0].mxu0
    %v6615 = vpop.f32.mrb[0].mxu0
    %v6616 = vadd.f32 0.0, %v6615
    %v6617 = vpop.f32.mrb[0].mxu0
    %6618 = vmatprep.mubr.bf16.mxu0 0
    %6619 = vmatmul.mubr.bf16.gmra.mrb[0].mxu0 %v6343
    %v6620 = vpop.f32.mrb[0].mxu0
    %v6621 = vadd.f32 0.0, %v6620
    %v6622 = vpop.f32.mrb[0].mxu0
    %v6623 = vpop.f32.mrb[0].mxu0
    %v6624 = vadd.f32 0.0, %v6623
    %v6625 = vpop.f32.mrb[0].mxu0
    %6626 = vmatprep.mubr.bf16.mxu0 0
    %6627 = vmatmul.mubr.bf16.gmra.mrb[0].mxu0 %v6346
    %v6628 = vpop.f32.mrb[0].mxu0
    %v6629 = vadd.f32 0.0, %v6628
    %v6630 = vpop.f32.mrb[0].mxu0
    %v6631 = vpop.f32.mrb[0].mxu0
    %v6632 = vadd.f32 0.0, %v6631
    %v6633 = vpop.f32.mrb[0].mxu0
    %6634 = vmatprep.mubr.bf16.mxu0 0
    %6635 = vmatmul.mubr.bf16.gmra.mrb[0].mxu0 %v6349
    %v6636 = vpop.f32.mrb[0].mxu0
    %v6637 = vadd.f32 0.0, %v6636
    %v6638 = vpop.f32.mrb[0].mxu0
    %v6639 = vpop.f32.mrb[0].mxu0
    %v6640 = vadd.f32 0.0, %v6639
    %v6641 = vpop.f32.mrb[0].mxu0
    %6642 = vdwg.mxu0
    %v6643 = vld [vmem:[#allocation2] sm:$0xff]
    %v6644 = vld [vmem:[#allocation2 + $0x8] sm:$0xff]
    %v6645 = vld [vmem:[#allocation2 + $0x10] sm:$0xff]
    %v6646 = vld [vmem:[#allocation2 + $0x18] sm:$0xff]
    %v6647 = vld [vmem:[#allocation2 + $0x20] sm:$0xff]
    %v6648 = vld [vmem:[#allocation2 + $0x28] sm:$0xff]
    %v6649 = vld [vmem:[#allocation2 + $0x30] sm:$0xff]
    %v6650 = vld [vmem:[#allocation2 + $0x38] sm:$0xff]
    %v6651 = vld [vmem:[#allocation2 + $0x40] sm:$0xff]
    %v6652 = vld [vmem:[#allocation2 + $0x48] sm:$0xff]
    %v6653 = vld [vmem:[#allocation2 + $0x50] sm:$0xff]
    %v6654 = vld [vmem:[#allocation2 + $0x58] sm:$0xff]
    %v6655 = vld [vmem:[#allocation2 + $0x60] sm:$0xff]
    %v6656 = vld [vmem:[#allocation2 + $0x68] sm:$0xff]
    %v6657 = vld [vmem:[#allocation2 + $0x70] sm:$0xff]
    %v6658 = vld [vmem:[#allocation2 + $0x78] sm:$0xff]
    %v6659 = vld [vmem:[#allocation2 + $0x80] sm:$0xff]
    %v6660 = vld [vmem:[#allocation2 + $0x88] sm:$0xff]
    %v6661 = vld [vmem:[#allocation2 + $0x90] sm:$0xff]
    %v6662 = vld [vmem:[#allocation2 + $0x98] sm:$0xff]
    %v6663 = vld [vmem:[#allocation2 + $0xa0] sm:$0xff]
    %v6664 = vld [vmem:[#allocation2 + $0xa8] sm:$0xff]
    %v6665 = vld [vmem:[#allocation2 + $0xb0] sm:$0xff]
    %v6666 = vld [vmem:[#allocation2 + $0xb8] sm:$0xff]
    %v6667 = vld [vmem:[#allocation2 + $0xc0] sm:$0xff]
    %v6668 = vld [vmem:[#allocation2 + $0xc8] sm:$0xff]
    %v6669 = vld [vmem:[#allocation2 + $0xd0] sm:$0xff]
    %v6670 = vld [vmem:[#allocation2 + $0xd8] sm:$0xff]
    %v6671 = vld [vmem:[#allocation2 + $0xe0] sm:$0xff]
    %v6672 = vld [vmem:[#allocation2 + $0xe8] sm:$0xff]
    %v6673 = vld [vmem:[#allocation2 + $0xf0] sm:$0xff]
    %v6674 = vld [vmem:[#allocation2 + $0xf8] sm:$0xff]
    %v6675 = vld [vmem:[#allocation2 + $0x100] sm:$0xff]
    %v6676 = vld [vmem:[#allocation2 + $0x108] sm:$0xff]
    %v6677 = vld [vmem:[#allocation2 + $0x110] sm:$0xff]
    %v6678 = vld [vmem:[#allocation2 + $0x118] sm:$0xff]
    %v6679 = vld [vmem:[#allocation2 + $0x120] sm:$0xff]
    %v6680 = vld [vmem:[#allocation2 + $0x128] sm:$0xff]
    %v6681 = vld [vmem:[#allocation2 + $0x130] sm:$0xff]
    %v6682 = vld [vmem:[#allocation2 + $0x138] sm:$0xff]
    %v6683 = vld [vmem:[#allocation2 + $0x140] sm:$0xff]
    %v6684 = vld [vmem:[#allocation2 + $0x148] sm:$0xff]
    %v6685 = vld [vmem:[#allocation2 + $0x150] sm:$0xff]
    %v6686 = vld [vmem:[#allocation2 + $0x158] sm:$0xff]
    %v6687 = vld [vmem:[#allocation2 + $0x160] sm:$0xff]
    %v6688 = vld [vmem:[#allocation2 + $0x168] sm:$0xff]
    %v6689 = vld [vmem:[#allocation2 + $0x170] sm:$0xff]
    %v6690 = vld [vmem:[#allocation2 + $0x178] sm:$0xff]
    %v6691 = vld [vmem:[#allocation2 + $0x180] sm:$0xff]
    %v6692 = vld [vmem:[#allocation2 + $0x188] sm:$0xff]
    %v6693 = vld [vmem:[#allocation2 + $0x190] sm:$0xff]
    %v6694 = vld [vmem:[#allocation2 + $0x198] sm:$0xff]
    %v6695 = vld [vmem:[#allocation2 + $0x1a0] sm:$0xff]
    %v6696 = vld [vmem:[#allocation2 + $0x1a8] sm:$0xff]
    %v6697 = vld [vmem:[#allocation2 + $0x1b0] sm:$0xff]
    %v6698 = vld [vmem:[#allocation2 + $0x1b8] sm:$0xff]
    %v6699 = vld [vmem:[#allocation2 + $0x1c0] sm:$0xff]
    %v6700 = vld [vmem:[#allocation2 + $0x1c8] sm:$0xff]
    %v6701 = vld [vmem:[#allocation2 + $0x1d0] sm:$0xff]
    %v6702 = vld [vmem:[#allocation2 + $0x1d8] sm:$0xff]
    %v6703 = vld [vmem:[#allocation2 + $0x1e0] sm:$0xff]
    %v6704 = vld [vmem:[#allocation2 + $0x1e8] sm:$0xff]
    %v6705 = vld [vmem:[#allocation2 + $0x1f0] sm:$0xff]
    %v6706 = vld [vmem:[#allocation2 + $0x1f8] sm:$0xff]
    %v6707 = vadd.f32 %v6643, %v6389
    %v6708 = vadd.f32 %v6644, %v6392
    %v6709 = vadd.f32 %v6645, %v6397
    %v6710 = vadd.f32 %v6646, %v6400
    %v6711 = vadd.f32 %v6647, %v6405
    %v6712 = vadd.f32 %v6648, %v6408
    %v6713 = vadd.f32 %v6649, %v6413
    %v6714 = vadd.f32 %v6650, %v6416
    %v6715 = vadd.f32 %v6651, %v6421
    %v6716 = vadd.f32 %v6652, %v6424
    %v6717 = vadd.f32 %v6653, %v6429
    %v6718 = vadd.f32 %v6654, %v6432
    %v6719 = vadd.f32 %v6655, %v6437
    %v6720 = vadd.f32 %v6656, %v6440
    %v6721 = vadd.f32 %v6657, %v6445
    %v6722 = vadd.f32 %v6658, %v6448
    %v6723 = vadd.f32 %v6659, %v6453
    %v6724 = vadd.f32 %v6660, %v6456
    %v6725 = vadd.f32 %v6661, %v6461
    %v6726 = vadd.f32 %v6662, %v6464
    %v6727 = vadd.f32 %v6663, %v6469
    %v6728 = vadd.f32 %v6664, %v6472
    %v6729 = vadd.f32 %v6665, %v6477
    %v6730 = vadd.f32 %v6666, %v6480
    %v6731 = vadd.f32 %v6667, %v6485
    %v6732 = vadd.f32 %v6668, %v6488
    %v6733 = vadd.f32 %v6669, %v6493
    %v6734 = vadd.f32 %v6670, %v6496
    %v6735 = vadd.f32 %v6671, %v6501
    %v6736 = vadd.f32 %v6672, %v6504
    %v6737 = vadd.f32 %v6673, %v6509
    %v6738 = vadd.f32 %v6674, %v6512
    %v6739 = vadd.f32 %v6675, %v6517
    %v6740 = vadd.f32 %v6676, %v6520
    %v6741 = vadd.f32 %v6677, %v6525
    %v6742 = vadd.f32 %v6678, %v6528
    %v6743 = vadd.f32 %v6679, %v6533
    %v6744 = vadd.f32 %v6680, %v6536
    %v6745 = vadd.f32 %v6681, %v6541
    %v6746 = vadd.f32 %v6682, %v6544
    %v6747 = vadd.f32 %v6683, %v6549
    %v6748 = vadd.f32 %v6684, %v6552
    %v6749 = vadd.f32 %v6685, %v6557
    %v6750 = vadd.f32 %v6686, %v6560
    %v6751 = vadd.f32 %v6687, %v6565
    %v6752 = vadd.f32 %v6688, %v6568
    %v6753 = vadd.f32 %v6689, %v6573
    %v6754 = vadd.f32 %v6690, %v6576
    %v6755 = vadd.f32 %v6691, %v6581
    %v6756 = vadd.f32 %v6692, %v6584
    %v6757 = vadd.f32 %v6693, %v6589
    %v6758 = vadd.f32 %v6694, %v6592
    %v6759 = vadd.f32 %v6695, %v6597
    %v6760 = vadd.f32 %v6696, %v6600
    %v6761 = vadd.f32 %v6697, %v6605
    %v6762 = vadd.f32 %v6698, %v6608
    %v6763 = vadd.f32 %v6699, %v6613
    %v6764 = vadd.f32 %v6700, %v6616
    %v6765 = vadd.f32 %v6701, %v6621
    %v6766 = vadd.f32 %v6702, %v6624
    %v6767 = vadd.f32 %v6703, %v6629
    %v6768 = vadd.f32 %v6704, %v6632
    %v6769 = vadd.f32 %v6705, %v6637
    %v6770 = vadd.f32 %v6706, %v6640
    %6771 = vst.msk [vmem:[#allocation2] sm:$0xff] %vm685, %v6707
    %6772 = vst.msk [vmem:[#allocation2 + $0x8] sm:$0xff] %vm685, %v6708
    %6773 = vst.msk [vmem:[#allocation2 + $0x10] sm:$0xff] %vm685, %v6709
    %6774 = vst.msk [vmem:[#allocation2 + $0x18] sm:$0xff] %vm685, %v6710
    %6775 = vst.msk [vmem:[#allocation2 + $0x20] sm:$0xff] %vm685, %v6711
    %6776 = vst.msk [vmem:[#allocation2 + $0x28] sm:$0xff] %vm685, %v6712
    %6777 = vst.msk [vmem:[#allocation2 + $0x30] sm:$0xff] %vm685, %v6713
    %6778 = vst.msk [vmem:[#allocation2 + $0x38] sm:$0xff] %vm685, %v6714
    %6779 = vst.msk [vmem:[#allocation2 + $0x40] sm:$0xff] %vm685, %v6715
    %6780 = vst.msk [vmem:[#allocation2 + $0x48] sm:$0xff] %vm685, %v6716
    %6781 = vst.msk [vmem:[#allocation2 + $0x50] sm:$0xff] %vm685, %v6717
    %6782 = vst.msk [vmem:[#allocation2 + $0x58] sm:$0xff] %vm685, %v6718
    %6783 = vst.msk [vmem:[#allocation2 + $0x60] sm:$0xff] %vm685, %v6719
    %6784 = vst.msk [vmem:[#allocation2 + $0x68] sm:$0xff] %vm685, %v6720
    %6785 = vst.msk [vmem:[#allocation2 + $0x70] sm:$0xff] %vm685, %v6721
    %6786 = vst.msk [vmem:[#allocation2 + $0x78] sm:$0xff] %vm685, %v6722
    %6787 = vst.msk [vmem:[#allocation2 + $0x80] sm:$0xff] %vm685, %v6723
    %6788 = vst.msk [vmem:[#allocation2 + $0x88] sm:$0xff] %vm685, %v6724
    %6789 = vst.msk [vmem:[#allocation2 + $0x90] sm:$0xff] %vm685, %v6725
    %6790 = vst.msk [vmem:[#allocation2 + $0x98] sm:$0xff] %vm685, %v6726
    %6791 = vst.msk [vmem:[#allocation2 + $0xa0] sm:$0xff] %vm685, %v6727
    %6792 = vst.msk [vmem:[#allocation2 + $0xa8] sm:$0xff] %vm685, %v6728
    %6793 = vst.msk [vmem:[#allocation2 + $0xb0] sm:$0xff] %vm685, %v6729
    %6794 = vst.msk [vmem:[#allocation2 + $0xb8] sm:$0xff] %vm685, %v6730
    %6795 = vst.msk [vmem:[#allocation2 + $0xc0] sm:$0xff] %vm685, %v6731
    %6796 = vst.msk [vmem:[#allocation2 + $0xc8] sm:$0xff] %vm685, %v6732
    %6797 = vst.msk [vmem:[#allocation2 + $0xd0] sm:$0xff] %vm685, %v6733
    %6798 = vst.msk [vmem:[#allocation2 + $0xd8] sm:$0xff] %vm685, %v6734
    %6799 = vst.msk [vmem:[#allocation2 + $0xe0] sm:$0xff] %vm685, %v6735
    %6800 = vst.msk [vmem:[#allocation2 + $0xe8] sm:$0xff] %vm685, %v6736
    %6801 = vst.msk [vmem:[#allocation2 + $0xf0] sm:$0xff] %vm685, %v6737
    %6802 = vst.msk [vmem:[#allocation2 + $0xf8] sm:$0xff] %vm685, %v6738
    %6803 = vst.msk [vmem:[#allocation2 + $0x100] sm:$0xff] %vm685, %v6739
    %6804 = vst.msk [vmem:[#allocation2 + $0x108] sm:$0xff] %vm685, %v6740
    %6805 = vst.msk [vmem:[#allocation2 + $0x110] sm:$0xff] %vm685, %v6741
    %6806 = vst.msk [vmem:[#allocation2 + $0x118] sm:$0xff] %vm685, %v6742
    %6807 = vst.msk [vmem:[#allocation2 + $0x120] sm:$0xff] %vm685, %v6743
    %6808 = vst.msk [vmem:[#allocation2 + $0x128] sm:$0xff] %vm685, %v6744
    %6809 = vst.msk [vmem:[#allocation2 + $0x130] sm:$0xff] %vm685, %v6745
    %6810 = vst.msk [vmem:[#allocation2 + $0x138] sm:$0xff] %vm685, %v6746
    %6811 = vst.msk [vmem:[#allocation2 + $0x140] sm:$0xff] %vm685, %v6747
    %6812 = vst.msk [vmem:[#allocation2 + $0x148] sm:$0xff] %vm685, %v6748
    %6813 = vst.msk [vmem:[#allocation2 + $0x150] sm:$0xff] %vm685, %v6749
    %6814 = vst.msk [vmem:[#allocation2 + $0x158] sm:$0xff] %vm685, %v6750
    %6815 = vst.msk [vmem:[#allocation2 + $0x160] sm:$0xff] %vm685, %v6751
    %6816 = vst.msk [vmem:[#allocation2 + $0x168] sm:$0xff] %vm685, %v6752
    %6817 = vst.msk [vmem:[#allocation2 + $0x170] sm:$0xff] %vm685, %v6753
    %6818 = vst.msk [vmem:[#allocation2 + $0x178] sm:$0xff] %vm685, %v6754
    %6819 = vst.msk [vmem:[#allocation2 + $0x180] sm:$0xff] %vm685, %v6755
    %6820 = vst.msk [vmem:[#allocation2 + $0x188] sm:$0xff] %vm685, %v6756
    %6821 = vst.msk [vmem:[#allocation2 + $0x190] sm:$0xff] %vm685, %v6757
    %6822 = vst.msk [vmem:[#allocation2 + $0x198] sm:$0xff] %vm685, %v6758
    %6823 = vst.msk [vmem:[#allocation2 + $0x1a0] sm:$0xff] %vm685, %v6759
    %6824 = vst.msk [vmem:[#allocation2 + $0x1a8] sm:$0xff] %vm685, %v6760
    %6825 = vst.msk [vmem:[#allocation2 + $0x1b0] sm:$0xff] %vm685, %v6761
    %6826 = vst.msk [vmem:[#allocation2 + $0x1b8] sm:$0xff] %vm685, %v6762
    %6827 = vst.msk [vmem:[#allocation2 + $0x1c0] sm:$0xff] %vm685, %v6763
    %6828 = vst.msk [vmem:[#allocation2 + $0x1c8] sm:$0xff] %vm685, %v6764
    %6829 = vst.msk [vmem:[#allocation2 + $0x1d0] sm:$0xff] %vm685, %v6765
    %6830 = vst.msk [vmem:[#allocation2 + $0x1d8] sm:$0xff] %vm685, %v6766
    %6831 = vst.msk [vmem:[#allocation2 + $0x1e0] sm:$0xff] %vm685, %v6767
    %6832 = vst.msk [vmem:[#allocation2 + $0x1e8] sm:$0xff] %vm685, %v6768
    %6833 = vst.msk [vmem:[#allocation2 + $0x1f0] sm:$0xff] %vm685, %v6769
    %6834 = vst.msk [vmem:[#allocation2 + $0x1f8] sm:$0xff] %vm685, %v6770
    %s6835 = scalar_lea.vmem [#allocation3], 24
    %v6836 = vld [vmem:[%s6835] sm:$0xf]
    %v6837 = vld [vmem:[%s6835 + $0x4] sm:$0xf]
    %v6838 = vld [vmem:[%s6835 + $0xc] sm:$0xf]
    %v6839 = vld [vmem:[%s6835 + $0x10] sm:$0xf]
    %v6840 = vld [vmem:[%s6835 + $0x18] sm:$0xf]
    %v6841 = vld [vmem:[%s6835 + $0x1c] sm:$0xf]
    %v6842 = vld [vmem:[%s6835 + $0x24] sm:$0xf]
    %v6843 = vld [vmem:[%s6835 + $0x28] sm:$0xf]
    %v6844 = vld [vmem:[%s6835 + $0x30] sm:$0xf]
    %v6845 = vld [vmem:[%s6835 + $0x34] sm:$0xf]
    %v6846 = vld [vmem:[%s6835 + $0x3c] sm:$0xf]
    %v6847 = vld [vmem:[%s6835 + $0x40] sm:$0xf]
    %v6848 = vld [vmem:[%s6835 + $0x48] sm:$0xf]
    %v6849 = vld [vmem:[%s6835 + $0x4c] sm:$0xf]
    %v6850 = vld [vmem:[%s6835 + $0x54] sm:$0xf]
    %v6851 = vld [vmem:[%s6835 + $0x58] sm:$0xf]
    %v6852 = vld [vmem:[%s6835 + $0x60] sm:$0xf]
    %v6853 = vld [vmem:[%s6835 + $0x64] sm:$0xf]
    %v6854 = vld [vmem:[%s6835 + $0x6c] sm:$0xf]
    %v6855 = vld [vmem:[%s6835 + $0x70] sm:$0xf]
    %v6856 = vld [vmem:[%s6835 + $0x78] sm:$0xf]
    %v6857 = vld [vmem:[%s6835 + $0x7c] sm:$0xf]
    %v6858 = vld [vmem:[%s6835 + $0x84] sm:$0xf]
    %v6859 = vld [vmem:[%s6835 + $0x88] sm:$0xf]
    %v6860 = vld [vmem:[%s6835 + $0x90] sm:$0xf]
    %v6861 = vld [vmem:[%s6835 + $0x94] sm:$0xf]
    %v6862 = vld [vmem:[%s6835 + $0x9c] sm:$0xf]
    %v6863 = vld [vmem:[%s6835 + $0xa0] sm:$0xf]
    %v6864 = vld [vmem:[%s6835 + $0xa8] sm:$0xf]
    %v6865 = vld [vmem:[%s6835 + $0xac] sm:$0xf]
    %v6866 = vld [vmem:[%s6835 + $0xb4] sm:$0xf]
    %v6867 = vld [vmem:[%s6835 + $0xb8] sm:$0xf]
    %v6868 = vld [vmem:[%s6835 + $0xd8] sm:$0xf]
    %v6869 = vld [vmem:[%s6835 + $0xdc] sm:$0xf]
    %v6870 = vld [vmem:[%s6835 + $0xe4] sm:$0xf]
    %v6871 = vld [vmem:[%s6835 + $0xe8] sm:$0xf]
    %v6872 = vld [vmem:[%s6835 + $0xf0] sm:$0xf]
    %v6873 = vld [vmem:[%s6835 + $0xf4] sm:$0xf]
    %v6874 = vld [vmem:[%s6835 + $0xfc] sm:$0xf]
    %v6875 = vld [vmem:[%s6835 + $0x100] sm:$0xf]
    %v6876 = vld [vmem:[%s6835 + $0x108] sm:$0xf]
    %v6877 = vld [vmem:[%s6835 + $0x10c] sm:$0xf]
    %v6878 = vld [vmem:[%s6835 + $0x114] sm:$0xf]
    %v6879 = vld [vmem:[%s6835 + $0x118] sm:$0xf]
    %v6880 = vld [vmem:[%s6835 + $0x120] sm:$0xf]
    %v6881 = vld [vmem:[%s6835 + $0x124] sm:$0xf]
    %v6882 = vld [vmem:[%s6835 + $0x12c] sm:$0xf]
    %v6883 = vld [vmem:[%s6835 + $0x130] sm:$0xf]
    %v6884 = vld [vmem:[%s6835 + $0x138] sm:$0xf]
    %v6885 = vld [vmem:[%s6835 + $0x13c] sm:$0xf]
    %v6886 = vld [vmem:[%s6835 + $0x144] sm:$0xf]
    %v6887 = vld [vmem:[%s6835 + $0x148] sm:$0xf]
    %v6888 = vld [vmem:[%s6835 + $0x150] sm:$0xf]
    %v6889 = vld [vmem:[%s6835 + $0x154] sm:$0xf]
    %v6890 = vld [vmem:[%s6835 + $0x15c] sm:$0xf]
    %v6891 = vld [vmem:[%s6835 + $0x160] sm:$0xf]
    %v6892 = vld [vmem:[%s6835 + $0x168] sm:$0xf]
    %v6893 = vld [vmem:[%s6835 + $0x16c] sm:$0xf]
    %v6894 = vld [vmem:[%s6835 + $0x174] sm:$0xf]
    %v6895 = vld [vmem:[%s6835 + $0x178] sm:$0xf]
    %v6896 = vld [vmem:[%s6835 + $0x180] sm:$0xf]
    %v6897 = vld [vmem:[%s6835 + $0x184] sm:$0xf]
    %v6898 = vld [vmem:[%s6835 + $0x18c] sm:$0xf]
    %v6899 = vld [vmem:[%s6835 + $0x190] sm:$0xf]
    %s6900 = scalar_lea.vmem [#allocation6], 12
    %v6901 = vld [vmem:[%s6900] sm:$0x3]
    %v6966 = vunpack.c.l.b16 %v6836
    %v6967 = vunpack.c.l.b16 %v6837
    %v6968 = vunpack.c.l.b16 %v6838
    %v6969 = vunpack.c.l.b16 %v6839
    %v6970 = vunpack.c.l.b16 %v6840
    %v6971 = vunpack.c.l.b16 %v6841
    %v6972 = vunpack.c.l.b16 %v6842
    %v6973 = vunpack.c.l.b16 %v6843
    %v6974 = vunpack.c.l.b16 %v6844
    %v6975 = vunpack.c.l.b16 %v6845
    %v6976 = vunpack.c.l.b16 %v6846
    %v6977 = vunpack.c.l.b16 %v6847
    %v6978 = vunpack.c.l.b16 %v6848
    %v6979 = vunpack.c.l.b16 %v6849
    %v6980 = vunpack.c.l.b16 %v6850
    %v6981 = vunpack.c.l.b16 %v6851
    %v6982 = vunpack.c.l.b16 %v6852
    %v6983 = vunpack.c.l.b16 %v6853
    %v6984 = vunpack.c.l.b16 %v6854
    %v6985 = vunpack.c.l.b16 %v6855
    %v6986 = vunpack.c.l.b16 %v6856
    %v6987 = vunpack.c.l.b16 %v6857
    %v6988 = vunpack.c.l.b16 %v6858
    %v6989 = vunpack.c.l.b16 %v6859
    %v6990 = vunpack.c.l.b16 %v6860
    %v6991 = vunpack.c.l.b16 %v6861
    %v6992 = vunpack.c.l.b16 %v6862
    %v6993 = vunpack.c.l.b16 %v6863
    %v6994 = vunpack.c.l.b16 %v6864
    %v6995 = vunpack.c.l.b16 %v6865
    %v6996 = vunpack.c.l.b16 %v6866
    %v6997 = vunpack.c.l.b16 %v6867
    %v6998 = vunpack.c.l.b16 %v6868
    %v6999 = vunpack.c.l.b16 %v6869
    %v7000 = vunpack.c.l.b16 %v6870
    %v7001 = vunpack.c.l.b16 %v6871
    %v7002 = vunpack.c.l.b16 %v6872
    %v7003 = vunpack.c.l.b16 %v6873
    %v7004 = vunpack.c.l.b16 %v6874
    %v7005 = vunpack.c.l.b16 %v6875
    %v7006 = vunpack.c.l.b16 %v6876
    %v7007 = vunpack.c.l.b16 %v6877
    %v7008 = vunpack.c.l.b16 %v6878
    %v7009 = vunpack.c.l.b16 %v6879
    %v7010 = vunpack.c.l.b16 %v6880
    %v7011 = vunpack.c.l.b16 %v6881
    %v7012 = vunpack.c.l.b16 %v6882
    %v7013 = vunpack.c.l.b16 %v6883
    %v7014 = vunpack.c.l.b16 %v6884
    %v7015 = vunpack.c.l.b16 %v6885
    %v7016 = vunpack.c.l.b16 %v6886
    %v7017 = vunpack.c.l.b16 %v6887
    %v7018 = vunpack.c.l.b16 %v6888
    %v7019 = vunpack.c.l.b16 %v6889
    %v7020 = vunpack.c.l.b16 %v6890
    %v7021 = vunpack.c.l.b16 %v6891
    %v7022 = vunpack.c.l.b16 %v6892
    %v7023 = vunpack.c.l.b16 %v6893
    %v7024 = vunpack.c.l.b16 %v6894
    %v7025 = vunpack.c.l.b16 %v6895
    %v7026 = vunpack.c.l.b16 %v6896
    %v7027 = vunpack.c.l.b16 %v6897
    %v7028 = vunpack.c.l.b16 %v6898
    %v7029 = vunpack.c.l.b16 %v6899
    %v7030 = vpack.c.b16 %v6967, %v6966
    %v7031 = vpack.c.b16 %v6969, %v6968
    %v7032 = vpack.c.b16 %v6971, %v6970
    %v7033 = vpack.c.b16 %v6973, %v6972
    %v7034 = vpack.c.b16 %v6975, %v6974
    %v7035 = vpack.c.b16 %v6977, %v6976
    %v7036 = vpack.c.b16 %v6979, %v6978
    %v7037 = vpack.c.b16 %v6981, %v6980
    %v7038 = vpack.c.b16 %v6983, %v6982
    %v7039 = vpack.c.b16 %v6985, %v6984
    %v7040 = vpack.c.b16 %v6987, %v6986
    %v7041 = vpack.c.b16 %v6989, %v6988
    %v7042 = vpack.c.b16 %v6991, %v6990
    %v7043 = vpack.c.b16 %v6993, %v6992
    %v7044 = vpack.c.b16 %v6995, %v6994
    %v7045 = vpack.c.b16 %v6997, %v6996
    %v7046 = vpack.c.b16 %v6999, %v6998
    %v7047 = vpack.c.b16 %v7001, %v7000
    %v7048 = vpack.c.b16 %v7003, %v7002
    %v7049 = vpack.c.b16 %v7005, %v7004
    %v7050 = vpack.c.b16 %v7007, %v7006
    %v7051 = vpack.c.b16 %v7009, %v7008
    %v7052 = vpack.c.b16 %v7011, %v7010
    %v7053 = vpack.c.b16 %v7013, %v7012
    %v7054 = vpack.c.b16 %v7015, %v7014
    %v7055 = vpack.c.b16 %v7017, %v7016
    %v7056 = vpack.c.b16 %v7019, %v7018
    %v7057 = vpack.c.b16 %v7021, %v7020
    %v7058 = vpack.c.b16 %v7023, %v7022
    %v7059 = vpack.c.b16 %v7025, %v7024
    %v7060 = vpack.c.b16 %v7027, %v7026
    %v7061 = vpack.c.b16 %v7029, %v7028
    %v7063 = vsel %vm295, %v7030, 0
    %v7066 = vsel %vm295, %v7031, 0
    %v7069 = vsel %vm295, %v7032, 0
    %v7072 = vsel %vm295, %v7033, 0
    %v7075 = vsel %vm295, %v7034, 0
    %v7078 = vsel %vm295, %v7035, 0
    %v7081 = vsel %vm295, %v7036, 0
    %v7084 = vsel %vm295, %v7037, 0
    %v7087 = vsel %vm295, %v7038, 0
    %v7090 = vsel %vm295, %v7039, 0
    %v7093 = vsel %vm295, %v7040, 0
    %v7096 = vsel %vm295, %v7041, 0
    %v7099 = vsel %vm295, %v7042, 0
    %v7102 = vsel %vm295, %v7043, 0
    %v7105 = vsel %vm295, %v7044, 0
    %v7108 = vsel %vm295, %v7045, 0
    %v7111 = vsel %vm295, %v7046, 0
    %v7114 = vsel %vm295, %v7047, 0
    %v7117 = vsel %vm295, %v7048, 0
    %v7120 = vsel %vm295, %v7049, 0
    %v7123 = vsel %vm295, %v7050, 0
    %v7126 = vsel %vm295, %v7051, 0
    %v7129 = vsel %vm295, %v7052, 0
    %v7132 = vsel %vm295, %v7053, 0
    %v7135 = vsel %vm295, %v7054, 0
    %v7138 = vsel %vm295, %v7055, 0
    %v7141 = vsel %vm295, %v7056, 0
    %v7144 = vsel %vm295, %v7057, 0
    %v7147 = vsel %vm295, %v7058, 0
    %v7150 = vsel %vm295, %v7059, 0
    %v7153 = vsel %vm295, %v7060, 0
    %v7156 = vsel %vm295, %v7061, 0
    %v7159 = vsel %vm392, %v6901, 0
    %7161 = vmatprep.subr.bf16.mxu0 0
    %7162 = vmatpush1.bf16.msra.mxu0 %v7159
    %7163 = vmatprep.subr.bf16.mxu0 0
    %7164 = vmatpush1.bf16.msra.mxu0 0
    %7165 = vmatprep.subr.bf16.mxu0 0
    %7166 = vmatpush1.bf16.msra.mxu0 0
    %7167 = vmatprep.subr.bf16.mxu0 0
    %7168 = vmatpush1.bf16.msra.mxu0 0
    %7169 = vmatprep.subr.bf16.mxu0 0
    %7170 = vmatpush1.bf16.msra.mxu0 0
    %7171 = vmatprep.subr.bf16.mxu0 0
    %7172 = vmatpush1.bf16.msra.mxu0 0
    %7173 = vmatprep.subr.bf16.mxu0 0
    %7174 = vmatpush1.bf16.msra.mxu0 0
    %7175 = vmatprep.subr.bf16.mxu0 0
    %7176 = vmatpush1.bf16.msra.mxu0 0
    %7177 = vmatprep.subr.bf16.mxu0 0
    %7178 = vmatpush1.bf16.msra.mxu0 0
    %7179 = vmatprep.subr.bf16.mxu0 0
    %7180 = vmatpush1.bf16.msra.mxu0 0
    %7181 = vmatprep.subr.bf16.mxu0 0
    %7182 = vmatpush1.bf16.msra.mxu0 0
    %7183 = vmatprep.subr.bf16.mxu0 0
    %7184 = vmatpush1.bf16.msra.mxu0 0
    %7185 = vmatprep.subr.bf16.mxu0 0
    %7186 = vmatpush1.bf16.msra.mxu0 0
    %7187 = vmatprep.subr.bf16.mxu0 0
    %7188 = vmatpush1.bf16.msra.mxu0 0
    %7189 = vmatprep.subr.bf16.mxu0 0
    %7190 = vmatpush1.bf16.msra.mxu0 0
    %7191 = vmatprep.subr.bf16.mxu0 0
    %7192 = vmatpush1.bf16.msra.mxu0 0
    %7193 = vmatprep.mubr.bf16.mxu0 0
    %7194 = vmatmul.mubr.bf16.gmra.mrb[0].mxu0 %v7063
    %v7195 = vpop.f32.mrb[0].mxu0
    %v7196 = vadd.f32 0.0, %v7195
    %v7197 = vpop.f32.mrb[0].mxu0
    %v7198 = vpop.f32.mrb[0].mxu0
    %v7199 = vadd.f32 0.0, %v7198
    %v7200 = vpop.f32.mrb[0].mxu0
    %7201 = vmatprep.mubr.bf16.mxu0 0
    %7202 = vmatmul.mubr.bf16.gmra.mrb[0].mxu0 %v7066
    %v7203 = vpop.f32.mrb[0].mxu0
    %v7204 = vadd.f32 0.0, %v7203
    %v7205 = vpop.f32.mrb[0].mxu0
    %v7206 = vpop.f32.mrb[0].mxu0
    %v7207 = vadd.f32 0.0, %v7206
    %v7208 = vpop.f32.mrb[0].mxu0
    %7209 = vmatprep.mubr.bf16.mxu0 0
    %7210 = vmatmul.mubr.bf16.gmra.mrb[0].mxu0 %v7069
    %v7211 = vpop.f32.mrb[0].mxu0
    %v7212 = vadd.f32 0.0, %v7211
    %v7213 = vpop.f32.mrb[0].mxu0
    %v7214 = vpop.f32.mrb[0].mxu0
    %v7215 = vadd.f32 0.0, %v7214
    %v7216 = vpop.f32.mrb[0].mxu0
    %7217 = vmatprep.mubr.bf16.mxu0 0
    %7218 = vmatmul.mubr.bf16.gmra.mrb[0].mxu0 %v7072
    %v7219 = vpop.f32.mrb[0].mxu0
    %v7220 = vadd.f32 0.0, %v7219
    %v7221 = vpop.f32.mrb[0].mxu0
    %v7222 = vpop.f32.mrb[0].mxu0
    %v7223 = vadd.f32 0.0, %v7222
    %v7224 = vpop.f32.mrb[0].mxu0
    %7225 = vmatprep.mubr.bf16.mxu0 0
    %7226 = vmatmul.mubr.bf16.gmra.mrb[0].mxu0 %v7075
    %v7227 = vpop.f32.mrb[0].mxu0
    %v7228 = vadd.f32 0.0, %v7227
    %v7229 = vpop.f32.mrb[0].mxu0
    %v7230 = vpop.f32.mrb[0].mxu0
    %v7231 = vadd.f32 0.0, %v7230
    %v7232 = vpop.f32.mrb[0].mxu0
    %7233 = vmatprep.mubr.bf16.mxu0 0
    %7234 = vmatmul.mubr.bf16.gmra.mrb[0].mxu0 %v7078
    %v7235 = vpop.f32.mrb[0].mxu0
    %v7236 = vadd.f32 0.0, %v7235
    %v7237 = vpop.f32.mrb[0].mxu0
    %v7238 = vpop.f32.mrb[0].mxu0
    %v7239 = vadd.f32 0.0, %v7238
    %v7240 = vpop.f32.mrb[0].mxu0
    %7241 = vmatprep.mubr.bf16.mxu0 0
    %7242 = vmatmul.mubr.bf16.gmra.mrb[0].mxu0 %v7081
    %v7243 = vpop.f32.mrb[0].mxu0
    %v7244 = vadd.f32 0.0, %v7243
    %v7245 = vpop.f32.mrb[0].mxu0
    %v7246 = vpop.f32.mrb[0].mxu0
    %v7247 = vadd.f32 0.0, %v7246
    %v7248 = vpop.f32.mrb[0].mxu0
    %7249 = vmatprep.mubr.bf16.mxu0 0
    %7250 = vmatmul.mubr.bf16.gmra.mrb[0].mxu0 %v7084
    %v7251 = vpop.f32.mrb[0].mxu0
    %v7252 = vadd.f32 0.0, %v7251
    %v7253 = vpop.f32.mrb[0].mxu0
    %v7254 = vpop.f32.mrb[0].mxu0
    %v7255 = vadd.f32 0.0, %v7254
    %v7256 = vpop.f32.mrb[0].mxu0
    %7257 = vmatprep.mubr.bf16.mxu0 0
    %7258 = vmatmul.mubr.bf16.gmra.mrb[0].mxu0 %v7087
    %v7259 = vpop.f32.mrb[0].mxu0
    %v7260 = vadd.f32 0.0, %v7259
    %v7261 = vpop.f32.mrb[0].mxu0
    %v7262 = vpop.f32.mrb[0].mxu0
    %v7263 = vadd.f32 0.0, %v7262
    %v7264 = vpop.f32.mrb[0].mxu0
    %7265 = vmatprep.mubr.bf16.mxu0 0
    %7266 = vmatmul.mubr.bf16.gmra.mrb[0].mxu0 %v7090
    %v7267 = vpop.f32.mrb[0].mxu0
    %v7268 = vadd.f32 0.0, %v7267
    %v7269 = vpop.f32.mrb[0].mxu0
    %v7270 = vpop.f32.mrb[0].mxu0
    %v7271 = vadd.f32 0.0, %v7270
    %v7272 = vpop.f32.mrb[0].mxu0
    %7273 = vmatprep.mubr.bf16.mxu0 0
    %7274 = vmatmul.mubr.bf16.gmra.mrb[0].mxu0 %v7093
    %v7275 = vpop.f32.mrb[0].mxu0
    %v7276 = vadd.f32 0.0, %v7275
    %v7277 = vpop.f32.mrb[0].mxu0
    %v7278 = vpop.f32.mrb[0].mxu0
    %v7279 = vadd.f32 0.0, %v7278
    %v7280 = vpop.f32.mrb[0].mxu0
    %7281 = vmatprep.mubr.bf16.mxu0 0
    %7282 = vmatmul.mubr.bf16.gmra.mrb[0].mxu0 %v7096
    %v7283 = vpop.f32.mrb[0].mxu0
    %v7284 = vadd.f32 0.0, %v7283
    %v7285 = vpop.f32.mrb[0].mxu0
    %v7286 = vpop.f32.mrb[0].mxu0
    %v7287 = vadd.f32 0.0, %v7286
    %v7288 = vpop.f32.mrb[0].mxu0
    %7289 = vmatprep.mubr.bf16.mxu0 0
    %7290 = vmatmul.mubr.bf16.gmra.mrb[0].mxu0 %v7099
    %v7291 = vpop.f32.mrb[0].mxu0
    %v7292 = vadd.f32 0.0, %v7291
    %v7293 = vpop.f32.mrb[0].mxu0
    %v7294 = vpop.f32.mrb[0].mxu0
    %v7295 = vadd.f32 0.0, %v7294
    %v7296 = vpop.f32.mrb[0].mxu0
    %7297 = vmatprep.mubr.bf16.mxu0 0
    %7298 = vmatmul.mubr.bf16.gmra.mrb[0].mxu0 %v7102
    %v7299 = vpop.f32.mrb[0].mxu0
    %v7300 = vadd.f32 0.0, %v7299
    %v7301 = vpop.f32.mrb[0].mxu0
    %v7302 = vpop.f32.mrb[0].mxu0
    %v7303 = vadd.f32 0.0, %v7302
    %v7304 = vpop.f32.mrb[0].mxu0
    %7305 = vmatprep.mubr.bf16.mxu0 0
    %7306 = vmatmul.mubr.bf16.gmra.mrb[0].mxu0 %v7105
    %v7307 = vpop.f32.mrb[0].mxu0
    %v7308 = vadd.f32 0.0, %v7307
    %v7309 = vpop.f32.mrb[0].mxu0
    %v7310 = vpop.f32.mrb[0].mxu0
    %v7311 = vadd.f32 0.0, %v7310
    %v7312 = vpop.f32.mrb[0].mxu0
    %7313 = vmatprep.mubr.bf16.mxu0 0
    %7314 = vmatmul.mubr.bf16.gmra.mrb[0].mxu0 %v7108
    %v7315 = vpop.f32.mrb[0].mxu0
    %v7316 = vadd.f32 0.0, %v7315
    %v7317 = vpop.f32.mrb[0].mxu0
    %v7318 = vpop.f32.mrb[0].mxu0
    %v7319 = vadd.f32 0.0, %v7318
    %v7320 = vpop.f32.mrb[0].mxu0
    %7321 = vmatprep.mubr.bf16.mxu0 0
    %7322 = vmatmul.mubr.bf16.gmra.mrb[0].mxu0 %v7111
    %v7323 = vpop.f32.mrb[0].mxu0
    %v7324 = vadd.f32 0.0, %v7323
    %v7325 = vpop.f32.mrb[0].mxu0
    %v7326 = vpop.f32.mrb[0].mxu0
    %v7327 = vadd.f32 0.0, %v7326
    %v7328 = vpop.f32.mrb[0].mxu0
    %7329 = vmatprep.mubr.bf16.mxu0 0
    %7330 = vmatmul.mubr.bf16.gmra.mrb[0].mxu0 %v7114
    %v7331 = vpop.f32.mrb[0].mxu0
    %v7332 = vadd.f32 0.0, %v7331
    %v7333 = vpop.f32.mrb[0].mxu0
    %v7334 = vpop.f32.mrb[0].mxu0
    %v7335 = vadd.f32 0.0, %v7334
    %v7336 = vpop.f32.mrb[0].mxu0
    %7337 = vmatprep.mubr.bf16.mxu0 0
    %7338 = vmatmul.mubr.bf16.gmra.mrb[0].mxu0 %v7117
    %v7339 = vpop.f32.mrb[0].mxu0
    %v7340 = vadd.f32 0.0, %v7339
    %v7341 = vpop.f32.mrb[0].mxu0
    %v7342 = vpop.f32.mrb[0].mxu0
    %v7343 = vadd.f32 0.0, %v7342
    %v7344 = vpop.f32.mrb[0].mxu0
    %7345 = vmatprep.mubr.bf16.mxu0 0
    %7346 = vmatmul.mubr.bf16.gmra.mrb[0].mxu0 %v7120
    %v7347 = vpop.f32.mrb[0].mxu0
    %v7348 = vadd.f32 0.0, %v7347
    %v7349 = vpop.f32.mrb[0].mxu0
    %v7350 = vpop.f32.mrb[0].mxu0
    %v7351 = vadd.f32 0.0, %v7350
    %v7352 = vpop.f32.mrb[0].mxu0
    %7353 = vmatprep.mubr.bf16.mxu0 0
    %7354 = vmatmul.mubr.bf16.gmra.mrb[0].mxu0 %v7123
    %v7355 = vpop.f32.mrb[0].mxu0
    %v7356 = vadd.f32 0.0, %v7355
    %v7357 = vpop.f32.mrb[0].mxu0
    %v7358 = vpop.f32.mrb[0].mxu0
    %v7359 = vadd.f32 0.0, %v7358
    %v7360 = vpop.f32.mrb[0].mxu0
    %7361 = vmatprep.mubr.bf16.mxu0 0
    %7362 = vmatmul.mubr.bf16.gmra.mrb[0].mxu0 %v7126
    %v7363 = vpop.f32.mrb[0].mxu0
    %v7364 = vadd.f32 0.0, %v7363
    %v7365 = vpop.f32.mrb[0].mxu0
    %v7366 = vpop.f32.mrb[0].mxu0
    %v7367 = vadd.f32 0.0, %v7366
    %v7368 = vpop.f32.mrb[0].mxu0
    %7369 = vmatprep.mubr.bf16.mxu0 0
    %7370 = vmatmul.mubr.bf16.gmra.mrb[0].mxu0 %v7129
    %v7371 = vpop.f32.mrb[0].mxu0
    %v7372 = vadd.f32 0.0, %v7371
    %v7373 = vpop.f32.mrb[0].mxu0
    %v7374 = vpop.f32.mrb[0].mxu0
    %v7375 = vadd.f32 0.0, %v7374
    %v7376 = vpop.f32.mrb[0].mxu0
    %7377 = vmatprep.mubr.bf16.mxu0 0
    %7378 = vmatmul.mubr.bf16.gmra.mrb[0].mxu0 %v7132
    %v7379 = vpop.f32.mrb[0].mxu0
    %v7380 = vadd.f32 0.0, %v7379
    %v7381 = vpop.f32.mrb[0].mxu0
    %v7382 = vpop.f32.mrb[0].mxu0
    %v7383 = vadd.f32 0.0, %v7382
    %v7384 = vpop.f32.mrb[0].mxu0
    %7385 = vmatprep.mubr.bf16.mxu0 0
    %7386 = vmatmul.mubr.bf16.gmra.mrb[0].mxu0 %v7135
    %v7387 = vpop.f32.mrb[0].mxu0
    %v7388 = vadd.f32 0.0, %v7387
    %v7389 = vpop.f32.mrb[0].mxu0
    %v7390 = vpop.f32.mrb[0].mxu0
    %v7391 = vadd.f32 0.0, %v7390
    %v7392 = vpop.f32.mrb[0].mxu0
    %7393 = vmatprep.mubr.bf16.mxu0 0
    %7394 = vmatmul.mubr.bf16.gmra.mrb[0].mxu0 %v7138
    %v7395 = vpop.f32.mrb[0].mxu0
    %v7396 = vadd.f32 0.0, %v7395
    %v7397 = vpop.f32.mrb[0].mxu0
    %v7398 = vpop.f32.mrb[0].mxu0
    %v7399 = vadd.f32 0.0, %v7398
    %v7400 = vpop.f32.mrb[0].mxu0
    %7401 = vmatprep.mubr.bf16.mxu0 0
    %7402 = vmatmul.mubr.bf16.gmra.mrb[0].mxu0 %v7141
    %v7403 = vpop.f32.mrb[0].mxu0
    %v7404 = vadd.f32 0.0, %v7403
    %v7405 = vpop.f32.mrb[0].mxu0
    %v7406 = vpop.f32.mrb[0].mxu0
    %v7407 = vadd.f32 0.0, %v7406
    %v7408 = vpop.f32.mrb[0].mxu0
    %7409 = vmatprep.mubr.bf16.mxu0 0
    %7410 = vmatmul.mubr.bf16.gmra.mrb[0].mxu0 %v7144
    %v7411 = vpop.f32.mrb[0].mxu0
    %v7412 = vadd.f32 0.0, %v7411
    %v7413 = vpop.f32.mrb[0].mxu0
    %v7414 = vpop.f32.mrb[0].mxu0
    %v7415 = vadd.f32 0.0, %v7414
    %v7416 = vpop.f32.mrb[0].mxu0
    %7417 = vmatprep.mubr.bf16.mxu0 0
    %7418 = vmatmul.mubr.bf16.gmra.mrb[0].mxu0 %v7147
    %v7419 = vpop.f32.mrb[0].mxu0
    %v7420 = vadd.f32 0.0, %v7419
    %v7421 = vpop.f32.mrb[0].mxu0
    %v7422 = vpop.f32.mrb[0].mxu0
    %v7423 = vadd.f32 0.0, %v7422
    %v7424 = vpop.f32.mrb[0].mxu0
    %7425 = vmatprep.mubr.bf16.mxu0 0
    %7426 = vmatmul.mubr.bf16.gmra.mrb[0].mxu0 %v7150
    %v7427 = vpop.f32.mrb[0].mxu0
    %v7428 = vadd.f32 0.0, %v7427
    %v7429 = vpop.f32.mrb[0].mxu0
    %v7430 = vpop.f32.mrb[0].mxu0
    %v7431 = vadd.f32 0.0, %v7430
    %v7432 = vpop.f32.mrb[0].mxu0
    %7433 = vmatprep.mubr.bf16.mxu0 0
    %7434 = vmatmul.mubr.bf16.gmra.mrb[0].mxu0 %v7153
    %v7435 = vpop.f32.mrb[0].mxu0
    %v7436 = vadd.f32 0.0, %v7435
    %v7437 = vpop.f32.mrb[0].mxu0
    %v7438 = vpop.f32.mrb[0].mxu0
    %v7439 = vadd.f32 0.0, %v7438
    %v7440 = vpop.f32.mrb[0].mxu0
    %7441 = vmatprep.mubr.bf16.mxu0 0
    %7442 = vmatmul.mubr.bf16.gmra.mrb[0].mxu0 %v7156
    %v7443 = vpop.f32.mrb[0].mxu0
    %v7444 = vadd.f32 0.0, %v7443
    %v7445 = vpop.f32.mrb[0].mxu0
    %v7446 = vpop.f32.mrb[0].mxu0
    %v7447 = vadd.f32 0.0, %v7446
    %v7448 = vpop.f32.mrb[0].mxu0
    %7449 = vdwg.mxu0
    %v7450 = vld [vmem:[#allocation2] sm:$0xff]
    %v7451 = vld [vmem:[#allocation2 + $0x8] sm:$0xff]
    %v7452 = vld [vmem:[#allocation2 + $0x10] sm:$0xff]
    %v7453 = vld [vmem:[#allocation2 + $0x18] sm:$0xff]
    %v7454 = vld [vmem:[#allocation2 + $0x20] sm:$0xff]
    %v7455 = vld [vmem:[#allocation2 + $0x28] sm:$0xff]
    %v7456 = vld [vmem:[#allocation2 + $0x30] sm:$0xff]
    %v7457 = vld [vmem:[#allocation2 + $0x38] sm:$0xff]
    %v7458 = vld [vmem:[#allocation2 + $0x40] sm:$0xff]
    %v7459 = vld [vmem:[#allocation2 + $0x48] sm:$0xff]
    %v7460 = vld [vmem:[#allocation2 + $0x50] sm:$0xff]
    %v7461 = vld [vmem:[#allocation2 + $0x58] sm:$0xff]
    %v7462 = vld [vmem:[#allocation2 + $0x60] sm:$0xff]
    %v7463 = vld [vmem:[#allocation2 + $0x68] sm:$0xff]
    %v7464 = vld [vmem:[#allocation2 + $0x70] sm:$0xff]
    %v7465 = vld [vmem:[#allocation2 + $0x78] sm:$0xff]
    %v7466 = vld [vmem:[#allocation2 + $0x80] sm:$0xff]
    %v7467 = vld [vmem:[#allocation2 + $0x88] sm:$0xff]
    %v7468 = vld [vmem:[#allocation2 + $0x90] sm:$0xff]
    %v7469 = vld [vmem:[#allocation2 + $0x98] sm:$0xff]
    %v7470 = vld [vmem:[#allocation2 + $0xa0] sm:$0xff]
    %v7471 = vld [vmem:[#allocation2 + $0xa8] sm:$0xff]
    %v7472 = vld [vmem:[#allocation2 + $0xb0] sm:$0xff]
    %v7473 = vld [vmem:[#allocation2 + $0xb8] sm:$0xff]
    %v7474 = vld [vmem:[#allocation2 + $0xc0] sm:$0xff]
    %v7475 = vld [vmem:[#allocation2 + $0xc8] sm:$0xff]
    %v7476 = vld [vmem:[#allocation2 + $0xd0] sm:$0xff]
    %v7477 = vld [vmem:[#allocation2 + $0xd8] sm:$0xff]
    %v7478 = vld [vmem:[#allocation2 + $0xe0] sm:$0xff]
    %v7479 = vld [vmem:[#allocation2 + $0xe8] sm:$0xff]
    %v7480 = vld [vmem:[#allocation2 + $0xf0] sm:$0xff]
    %v7481 = vld [vmem:[#allocation2 + $0xf8] sm:$0xff]
    %v7482 = vld [vmem:[#allocation2 + $0x100] sm:$0xff]
    %v7483 = vld [vmem:[#allocation2 + $0x108] sm:$0xff]
    %v7484 = vld [vmem:[#allocation2 + $0x110] sm:$0xff]
    %v7485 = vld [vmem:[#allocation2 + $0x118] sm:$0xff]
    %v7486 = vld [vmem:[#allocation2 + $0x120] sm:$0xff]
    %v7487 = vld [vmem:[#allocation2 + $0x128] sm:$0xff]
    %v7488 = vld [vmem:[#allocation2 + $0x130] sm:$0xff]
    %v7489 = vld [vmem:[#allocation2 + $0x138] sm:$0xff]
    %v7490 = vld [vmem:[#allocation2 + $0x140] sm:$0xff]
    %v7491 = vld [vmem:[#allocation2 + $0x148] sm:$0xff]
    %v7492 = vld [vmem:[#allocation2 + $0x150] sm:$0xff]
    %v7493 = vld [vmem:[#allocation2 + $0x158] sm:$0xff]
    %v7494 = vld [vmem:[#allocation2 + $0x160] sm:$0xff]
    %v7495 = vld [vmem:[#allocation2 + $0x168] sm:$0xff]
    %v7496 = vld [vmem:[#allocation2 + $0x170] sm:$0xff]
    %v7497 = vld [vmem:[#allocation2 + $0x178] sm:$0xff]
    %v7498 = vld [vmem:[#allocation2 + $0x180] sm:$0xff]
    %v7499 = vld [vmem:[#allocation2 + $0x188] sm:$0xff]
    %v7500 = vld [vmem:[#allocation2 + $0x190] sm:$0xff]
    %v7501 = vld [vmem:[#allocation2 + $0x198] sm:$0xff]
    %v7502 = vld [vmem:[#allocation2 + $0x1a0] sm:$0xff]
    %v7503 = vld [vmem:[#allocation2 + $0x1a8] sm:$0xff]
    %v7504 = vld [vmem:[#allocation2 + $0x1b0] sm:$0xff]
    %v7505 = vld [vmem:[#allocation2 + $0x1b8] sm:$0xff]
    %v7506 = vld [vmem:[#allocation2 + $0x1c0] sm:$0xff]
    %v7507 = vld [vmem:[#allocation2 + $0x1c8] sm:$0xff]
    %v7508 = vld [vmem:[#allocation2 + $0x1d0] sm:$0xff]
    %v7509 = vld [vmem:[#allocation2 + $0x1d8] sm:$0xff]
    %v7510 = vld [vmem:[#allocation2 + $0x1e0] sm:$0xff]
    %v7511 = vld [vmem:[#allocation2 + $0x1e8] sm:$0xff]
    %v7512 = vld [vmem:[#allocation2 + $0x1f0] sm:$0xff]
    %v7513 = vld [vmem:[#allocation2 + $0x1f8] sm:$0xff]
    %v7514 = vadd.f32 %v7450, %v7196
    %v7515 = vadd.f32 %v7451, %v7199
    %v7516 = vadd.f32 %v7452, %v7204
    %v7517 = vadd.f32 %v7453, %v7207
    %v7518 = vadd.f32 %v7454, %v7212
    %v7519 = vadd.f32 %v7455, %v7215
    %v7520 = vadd.f32 %v7456, %v7220
    %v7521 = vadd.f32 %v7457, %v7223
    %v7522 = vadd.f32 %v7458, %v7228
    %v7523 = vadd.f32 %v7459, %v7231
    %v7524 = vadd.f32 %v7460, %v7236
    %v7525 = vadd.f32 %v7461, %v7239
    %v7526 = vadd.f32 %v7462, %v7244
    %v7527 = vadd.f32 %v7463, %v7247
    %v7528 = vadd.f32 %v7464, %v7252
    %v7529 = vadd.f32 %v7465, %v7255
    %v7530 = vadd.f32 %v7466, %v7260
    %v7531 = vadd.f32 %v7467, %v7263
    %v7532 = vadd.f32 %v7468, %v7268
    %v7533 = vadd.f32 %v7469, %v7271
    %v7534 = vadd.f32 %v7470, %v7276
    %v7535 = vadd.f32 %v7471, %v7279
    %v7536 = vadd.f32 %v7472, %v7284
    %v7537 = vadd.f32 %v7473, %v7287
    %v7538 = vadd.f32 %v7474, %v7292
    %v7539 = vadd.f32 %v7475, %v7295
    %v7540 = vadd.f32 %v7476, %v7300
    %v7541 = vadd.f32 %v7477, %v7303
    %v7542 = vadd.f32 %v7478, %v7308
    %v7543 = vadd.f32 %v7479, %v7311
    %v7544 = vadd.f32 %v7480, %v7316
    %v7545 = vadd.f32 %v7481, %v7319
    %v7546 = vadd.f32 %v7482, %v7324
    %v7547 = vadd.f32 %v7483, %v7327
    %v7548 = vadd.f32 %v7484, %v7332
    %v7549 = vadd.f32 %v7485, %v7335
    %v7550 = vadd.f32 %v7486, %v7340
    %v7551 = vadd.f32 %v7487, %v7343
    %v7552 = vadd.f32 %v7488, %v7348
    %v7553 = vadd.f32 %v7489, %v7351
    %v7554 = vadd.f32 %v7490, %v7356
    %v7555 = vadd.f32 %v7491, %v7359
    %v7556 = vadd.f32 %v7492, %v7364
    %v7557 = vadd.f32 %v7493, %v7367
    %v7558 = vadd.f32 %v7494, %v7372
    %v7559 = vadd.f32 %v7495, %v7375
    %v7560 = vadd.f32 %v7496, %v7380
    %v7561 = vadd.f32 %v7497, %v7383
    %v7562 = vadd.f32 %v7498, %v7388
    %v7563 = vadd.f32 %v7499, %v7391
    %v7564 = vadd.f32 %v7500, %v7396
    %v7565 = vadd.f32 %v7501, %v7399
    %v7566 = vadd.f32 %v7502, %v7404
    %v7567 = vadd.f32 %v7503, %v7407
    %v7568 = vadd.f32 %v7504, %v7412
    %v7569 = vadd.f32 %v7505, %v7415
    %v7570 = vadd.f32 %v7506, %v7420
    %v7571 = vadd.f32 %v7507, %v7423
    %v7572 = vadd.f32 %v7508, %v7428
    %v7573 = vadd.f32 %v7509, %v7431
    %v7574 = vadd.f32 %v7510, %v7436
    %v7575 = vadd.f32 %v7511, %v7439
    %v7576 = vadd.f32 %v7512, %v7444
    %v7577 = vadd.f32 %v7513, %v7447
    %7578 = vst.msk [vmem:[#allocation2] sm:$0xff] %vm685, %v7514
    %7579 = vst.msk [vmem:[#allocation2 + $0x8] sm:$0xff] %vm685, %v7515
    %7580 = vst.msk [vmem:[#allocation2 + $0x10] sm:$0xff] %vm685, %v7516
    %7581 = vst.msk [vmem:[#allocation2 + $0x18] sm:$0xff] %vm685, %v7517
    %7582 = vst.msk [vmem:[#allocation2 + $0x20] sm:$0xff] %vm685, %v7518
    %7583 = vst.msk [vmem:[#allocation2 + $0x28] sm:$0xff] %vm685, %v7519
    %7584 = vst.msk [vmem:[#allocation2 + $0x30] sm:$0xff] %vm685, %v7520
    %7585 = vst.msk [vmem:[#allocation2 + $0x38] sm:$0xff] %vm685, %v7521
    %7586 = vst.msk [vmem:[#allocation2 + $0x40] sm:$0xff] %vm685, %v7522
    %7587 = vst.msk [vmem:[#allocation2 + $0x48] sm:$0xff] %vm685, %v7523
    %7588 = vst.msk [vmem:[#allocation2 + $0x50] sm:$0xff] %vm685, %v7524
    %7589 = vst.msk [vmem:[#allocation2 + $0x58] sm:$0xff] %vm685, %v7525
    %7590 = vst.msk [vmem:[#allocation2 + $0x60] sm:$0xff] %vm685, %v7526
    %7591 = vst.msk [vmem:[#allocation2 + $0x68] sm:$0xff] %vm685, %v7527
    %7592 = vst.msk [vmem:[#allocation2 + $0x70] sm:$0xff] %vm685, %v7528
    %7593 = vst.msk [vmem:[#allocation2 + $0x78] sm:$0xff] %vm685, %v7529
    %7594 = vst.msk [vmem:[#allocation2 + $0x80] sm:$0xff] %vm685, %v7530
    %7595 = vst.msk [vmem:[#allocation2 + $0x88] sm:$0xff] %vm685, %v7531
    %7596 = vst.msk [vmem:[#allocation2 + $0x90] sm:$0xff] %vm685, %v7532
    %7597 = vst.msk [vmem:[#allocation2 + $0x98] sm:$0xff] %vm685, %v7533
    %7598 = vst.msk [vmem:[#allocation2 + $0xa0] sm:$0xff] %vm685, %v7534
    %7599 = vst.msk [vmem:[#allocation2 + $0xa8] sm:$0xff] %vm685, %v7535
    %7600 = vst.msk [vmem:[#allocation2 + $0xb0] sm:$0xff] %vm685, %v7536
    %7601 = vst.msk [vmem:[#allocation2 + $0xb8] sm:$0xff] %vm685, %v7537
    %7602 = vst.msk [vmem:[#allocation2 + $0xc0] sm:$0xff] %vm685, %v7538
    %7603 = vst.msk [vmem:[#allocation2 + $0xc8] sm:$0xff] %vm685, %v7539
    %7604 = vst.msk [vmem:[#allocation2 + $0xd0] sm:$0xff] %vm685, %v7540
    %7605 = vst.msk [vmem:[#allocation2 + $0xd8] sm:$0xff] %vm685, %v7541
    %7606 = vst.msk [vmem:[#allocation2 + $0xe0] sm:$0xff] %vm685, %v7542
    %7607 = vst.msk [vmem:[#allocation2 + $0xe8] sm:$0xff] %vm685, %v7543
    %7608 = vst.msk [vmem:[#allocation2 + $0xf0] sm:$0xff] %vm685, %v7544
    %7609 = vst.msk [vmem:[#allocation2 + $0xf8] sm:$0xff] %vm685, %v7545
    %7610 = vst.msk [vmem:[#allocation2 + $0x100] sm:$0xff] %vm685, %v7546
    %7611 = vst.msk [vmem:[#allocation2 + $0x108] sm:$0xff] %vm685, %v7547
    %7612 = vst.msk [vmem:[#allocation2 + $0x110] sm:$0xff] %vm685, %v7548
    %7613 = vst.msk [vmem:[#allocation2 + $0x118] sm:$0xff] %vm685, %v7549
    %7614 = vst.msk [vmem:[#allocation2 + $0x120] sm:$0xff] %vm685, %v7550
    %7615 = vst.msk [vmem:[#allocation2 + $0x128] sm:$0xff] %vm685, %v7551
    %7616 = vst.msk [vmem:[#allocation2 + $0x130] sm:$0xff] %vm685, %v7552
    %7617 = vst.msk [vmem:[#allocation2 + $0x138] sm:$0xff] %vm685, %v7553
    %7618 = vst.msk [vmem:[#allocation2 + $0x140] sm:$0xff] %vm685, %v7554
    %7619 = vst.msk [vmem:[#allocation2 + $0x148] sm:$0xff] %vm685, %v7555
    %7620 = vst.msk [vmem:[#allocation2 + $0x150] sm:$0xff] %vm685, %v7556
    %7621 = vst.msk [vmem:[#allocation2 + $0x158] sm:$0xff] %vm685, %v7557
    %7622 = vst.msk [vmem:[#allocation2 + $0x160] sm:$0xff] %vm685, %v7558
    %7623 = vst.msk [vmem:[#allocation2 + $0x168] sm:$0xff] %vm685, %v7559
    %7624 = vst.msk [vmem:[#allocation2 + $0x170] sm:$0xff] %vm685, %v7560
    %7625 = vst.msk [vmem:[#allocation2 + $0x178] sm:$0xff] %vm685, %v7561
    %7626 = vst.msk [vmem:[#allocation2 + $0x180] sm:$0xff] %vm685, %v7562
    %7627 = vst.msk [vmem:[#allocation2 + $0x188] sm:$0xff] %vm685, %v7563
    %7628 = vst.msk [vmem:[#allocation2 + $0x190] sm:$0xff] %vm685, %v7564
    %7629 = vst.msk [vmem:[#allocation2 + $0x198] sm:$0xff] %vm685, %v7565
    %7630 = vst.msk [vmem:[#allocation2 + $0x1a0] sm:$0xff] %vm685, %v7566
    %7631 = vst.msk [vmem:[#allocation2 + $0x1a8] sm:$0xff] %vm685, %v7567
    %7632 = vst.msk [vmem:[#allocation2 + $0x1b0] sm:$0xff] %vm685, %v7568
    %7633 = vst.msk [vmem:[#allocation2 + $0x1b8] sm:$0xff] %vm685, %v7569
    %7634 = vst.msk [vmem:[#allocation2 + $0x1c0] sm:$0xff] %vm685, %v7570
    %7635 = vst.msk [vmem:[#allocation2 + $0x1c8] sm:$0xff] %vm685, %v7571
    %7636 = vst.msk [vmem:[#allocation2 + $0x1d0] sm:$0xff] %vm685, %v7572
    %7637 = vst.msk [vmem:[#allocation2 + $0x1d8] sm:$0xff] %vm685, %v7573
    %7638 = vst.msk [vmem:[#allocation2 + $0x1e0] sm:$0xff] %vm685, %v7574
    %7639 = vst.msk [vmem:[#allocation2 + $0x1e8] sm:$0xff] %vm685, %v7575
    %7640 = vst.msk [vmem:[#allocation2 + $0x1f0] sm:$0xff] %vm685, %v7576
    %7641 = vst.msk [vmem:[#allocation2 + $0x1f8] sm:$0xff] %vm685, %v7577
    %v7642 = vld [vmem:[%s6835] sm:$0xf]
    %v7643 = vld [vmem:[%s6835 + $0x4] sm:$0xf]
    %v7644 = vld [vmem:[%s6835 + $0x8] sm:$0x1]
    %v7645 = vld [vmem:[%s6835 + $0xc] sm:$0xf]
    %v7646 = vld [vmem:[%s6835 + $0x10] sm:$0xf]
    %v7647 = vld [vmem:[%s6835 + $0x14] sm:$0x1]
    %v7648 = vld [vmem:[%s6835 + $0x18] sm:$0xf]
    %v7649 = vld [vmem:[%s6835 + $0x1c] sm:$0xf]
    %v7650 = vld [vmem:[%s6835 + $0x20] sm:$0x1]
    %v7651 = vld [vmem:[%s6835 + $0x24] sm:$0xf]
    %v7652 = vld [vmem:[%s6835 + $0x28] sm:$0xf]
    %v7653 = vld [vmem:[%s6835 + $0x2c] sm:$0x1]
    %v7654 = vld [vmem:[%s6835 + $0x30] sm:$0xf]
    %v7655 = vld [vmem:[%s6835 + $0x34] sm:$0xf]
    %v7656 = vld [vmem:[%s6835 + $0x38] sm:$0x1]
    %v7657 = vld [vmem:[%s6835 + $0x3c] sm:$0xf]
    %v7658 = vld [vmem:[%s6835 + $0x40] sm:$0xf]
    %v7659 = vld [vmem:[%s6835 + $0x44] sm:$0x1]
    %v7660 = vld [vmem:[%s6835 + $0x48] sm:$0xf]
    %v7661 = vld [vmem:[%s6835 + $0x4c] sm:$0xf]
    %v7662 = vld [vmem:[%s6835 + $0x50] sm:$0x1]
    %v7663 = vld [vmem:[%s6835 + $0x54] sm:$0xf]
    %v7664 = vld [vmem:[%s6835 + $0x58] sm:$0xf]
    %v7665 = vld [vmem:[%s6835 + $0x5c] sm:$0x1]
    %v7666 = vld [vmem:[%s6835 + $0x60] sm:$0xf]
    %v7667 = vld [vmem:[%s6835 + $0x64] sm:$0xf]
    %v7668 = vld [vmem:[%s6835 + $0x68] sm:$0x1]
    %v7669 = vld [vmem:[%s6835 + $0x6c] sm:$0xf]
    %v7670 = vld [vmem:[%s6835 + $0x70] sm:$0xf]
    %v7671 = vld [vmem:[%s6835 + $0x74] sm:$0x1]
    %v7672 = vld [vmem:[%s6835 + $0x78] sm:$0xf]
    %v7673 = vld [vmem:[%s6835 + $0x7c] sm:$0xf]
    %v7674 = vld [vmem:[%s6835 + $0x80] sm:$0x1]
    %v7675 = vld [vmem:[%s6835 + $0x84] sm:$0xf]
    %v7676 = vld [vmem:[%s6835 + $0x88] sm:$0xf]
    %v7677 = vld [vmem:[%s6835 + $0x8c] sm:$0x1]
    %v7678 = vld [vmem:[%s6835 + $0x90] sm:$0xf]
    %v7679 = vld [vmem:[%s6835 + $0x94] sm:$0xf]
    %v7680 = vld [vmem:[%s6835 + $0x98] sm:$0x1]
    %v7681 = vld [vmem:[%s6835 + $0x9c] sm:$0xf]
    %v7682 = vld [vmem:[%s6835 + $0xa0] sm:$0xf]
    %v7683 = vld [vmem:[%s6835 + $0xa4] sm:$0x1]
    %v7684 = vld [vmem:[%s6835 + $0xa8] sm:$0xf]
    %v7685 = vld [vmem:[%s6835 + $0xac] sm:$0xf]
    %v7686 = vld [vmem:[%s6835 + $0xb0] sm:$0x1]
    %v7687 = vld [vmem:[%s6835 + $0xb4] sm:$0xf]
    %v7688 = vld [vmem:[%s6835 + $0xb8] sm:$0xf]
    %v7689 = vld [vmem:[%s6835 + $0xbc] sm:$0x1]
    %v7690 = vld [vmem:[%s6835 + $0xd8] sm:$0xf]
    %v7691 = vld [vmem:[%s6835 + $0xdc] sm:$0xf]
    %v7692 = vld [vmem:[%s6835 + $0xe0] sm:$0x1]
    %v7693 = vld [vmem:[%s6835 + $0xe4] sm:$0xf]
    %v7694 = vld [vmem:[%s6835 + $0xe8] sm:$0xf]
    %v7695 = vld [vmem:[%s6835 + $0xec] sm:$0x1]
    %v7696 = vld [vmem:[%s6835 + $0xf0] sm:$0xf]
    %v7697 = vld [vmem:[%s6835 + $0xf4] sm:$0xf]
    %v7698 = vld [vmem:[%s6835 + $0xf8] sm:$0x1]
    %v7699 = vld [vmem:[%s6835 + $0xfc] sm:$0xf]
    %v7700 = vld [vmem:[%s6835 + $0x100] sm:$0xf]
    %v7701 = vld [vmem:[%s6835 + $0x104] sm:$0x1]
    %v7702 = vld [vmem:[%s6835 + $0x108] sm:$0xf]
    %v7703 = vld [vmem:[%s6835 + $0x10c] sm:$0xf]
    %v7704 = vld [vmem:[%s6835 + $0x110] sm:$0x1]
    %v7705 = vld [vmem:[%s6835 + $0x114] sm:$0xf]
    %v7706 = vld [vmem:[%s6835 + $0x118] sm:$0xf]
    %v7707 = vld [vmem:[%s6835 + $0x11c] sm:$0x1]
    %v7708 = vld [vmem:[%s6835 + $0x120] sm:$0xf]
    %v7709 = vld [vmem:[%s6835 + $0x124] sm:$0xf]
    %v7710 = vld [vmem:[%s6835 + $0x128] sm:$0x1]
    %v7711 = vld [vmem:[%s6835 + $0x12c] sm:$0xf]
    %v7712 = vld [vmem:[%s6835 + $0x130] sm:$0xf]
    %v7713 = vld [vmem:[%s6835 + $0x134] sm:$0x1]
    %v7714 = vld [vmem:[%s6835 + $0x138] sm:$0xf]
    %v7715 = vld [vmem:[%s6835 + $0x13c] sm:$0xf]
    %v7716 = vld [vmem:[%s6835 + $0x140] sm:$0x1]
    %v7717 = vld [vmem:[%s6835 + $0x144] sm:$0xf]
    %v7718 = vld [vmem:[%s6835 + $0x148] sm:$0xf]
    %v7719 = vld [vmem:[%s6835 + $0x14c] sm:$0x1]
    %v7720 = vld [vmem:[%s6835 + $0x150] sm:$0xf]
    %v7721 = vld [vmem:[%s6835 + $0x154] sm:$0xf]
    %v7722 = vld [vmem:[%s6835 + $0x158] sm:$0x1]
    %v7723 = vld [vmem:[%s6835 + $0x15c] sm:$0xf]
    %v7724 = vld [vmem:[%s6835 + $0x160] sm:$0xf]
    %v7725 = vld [vmem:[%s6835 + $0x164] sm:$0x1]
    %v7726 = vld [vmem:[%s6835 + $0x168] sm:$0xf]
    %v7727 = vld [vmem:[%s6835 + $0x16c] sm:$0xf]
    %v7728 = vld [vmem:[%s6835 + $0x170] sm:$0x1]
    %v7729 = vld [vmem:[%s6835 + $0x174] sm:$0xf]
    %v7730 = vld [vmem:[%s6835 + $0x178] sm:$0xf]
    %v7731 = vld [vmem:[%s6835 + $0x17c] sm:$0x1]
    %v7732 = vld [vmem:[%s6835 + $0x180] sm:$0xf]
    %v7733 = vld [vmem:[%s6835 + $0x184] sm:$0xf]
    %v7734 = vld [vmem:[%s6835 + $0x188] sm:$0x1]
    %v7735 = vld [vmem:[%s6835 + $0x18c] sm:$0xf]
    %v7736 = vld [vmem:[%s6835 + $0x190] sm:$0xf]
    %v7737 = vld [vmem:[%s6835 + $0x194] sm:$0x1]
    %v7739 = vshrl.u32 %v7642, 16
    %v7741 = vrot.slane %v7739, 4
    %v7742 = vshll.u32 %v7642, 16
    %v7744 = vrot.slane %v7742, 5
    %v7745 = vor.u32 %v7741, %v7744
    %v7746 = vrot.slane %v7745, 4
    %v7748 = vshll.u32 %v7643, 16
    %v7750 = vrot.slane %v7748, 5
    %v7751 = vsel %vm848, %v7746, %v7750
    %v7752 = vshrl.u32 %v7643, 16
    %v7754 = vrot.slane %v7752, 4
    %v7755 = vor.u32 %v7754, %v7750
    %v7756 = vrot.slane %v7755, 4
    %v7758 = vshll.u32 %v7644, 16
    %v7760 = vrot.slane %v7758, 5
    %v7761 = vsel %vm848, %v7756, %v7760
    %v7763 = vshrl.u32 %v7645, 16
    %v7765 = vrot.slane %v7763, 4
    %v7766 = vshll.u32 %v7645, 16
    %v7768 = vrot.slane %v7766, 5
    %v7769 = vor.u32 %v7765, %v7768
    %v7770 = vrot.slane %v7769, 4
    %v7772 = vshll.u32 %v7646, 16
    %v7774 = vrot.slane %v7772, 5
    %v7775 = vsel %vm848, %v7770, %v7774
    %v7776 = vshrl.u32 %v7646, 16
    %v7778 = vrot.slane %v7776, 4
    %v7779 = vor.u32 %v7778, %v7774
    %v7780 = vrot.slane %v7779, 4
    %v7782 = vshll.u32 %v7647, 16
    %v7784 = vrot.slane %v7782, 5
    %v7785 = vsel %vm848, %v7780, %v7784
    %v7787 = vshrl.u32 %v7648, 16
    %v7789 = vrot.slane %v7787, 4
    %v7790 = vshll.u32 %v7648, 16
    %v7792 = vrot.slane %v7790, 5
    %v7793 = vor.u32 %v7789, %v7792
    %v7794 = vrot.slane %v7793, 4
    %v7796 = vshll.u32 %v7649, 16
    %v7798 = vrot.slane %v7796, 5
    %v7799 = vsel %vm848, %v7794, %v7798
    %v7800 = vshrl.u32 %v7649, 16
    %v7802 = vrot.slane %v7800, 4
    %v7803 = vor.u32 %v7802, %v7798
    %v7804 = vrot.slane %v7803, 4
    %v7806 = vshll.u32 %v7650, 16
    %v7808 = vrot.slane %v7806, 5
    %v7809 = vsel %vm848, %v7804, %v7808
    %v7811 = vshrl.u32 %v7651, 16
    %v7813 = vrot.slane %v7811, 4
    %v7814 = vshll.u32 %v7651, 16
    %v7816 = vrot.slane %v7814, 5
    %v7817 = vor.u32 %v7813, %v7816
    %v7818 = vrot.slane %v7817, 4
    %v7820 = vshll.u32 %v7652, 16
    %v7822 = vrot.slane %v7820, 5
    %v7823 = vsel %vm848, %v7818, %v7822
    %v7824 = vshrl.u32 %v7652, 16
    %v7826 = vrot.slane %v7824, 4
    %v7827 = vor.u32 %v7826, %v7822
    %v7828 = vrot.slane %v7827, 4
    %v7830 = vshll.u32 %v7653, 16
    %v7832 = vrot.slane %v7830, 5
    %v7833 = vsel %vm848, %v7828, %v7832
    %v7835 = vshrl.u32 %v7654, 16
    %v7837 = vrot.slane %v7835, 4
    %v7838 = vshll.u32 %v7654, 16
    %v7840 = vrot.slane %v7838, 5
    %v7841 = vor.u32 %v7837, %v7840
    %v7842 = vrot.slane %v7841, 4
    %v7844 = vshll.u32 %v7655, 16
    %v7846 = vrot.slane %v7844, 5
    %v7847 = vsel %vm848, %v7842, %v7846
    %v7848 = vshrl.u32 %v7655, 16
    %v7850 = vrot.slane %v7848, 4
    %v7851 = vor.u32 %v7850, %v7846
    %v7852 = vrot.slane %v7851, 4
    %v7854 = vshll.u32 %v7656, 16
    %v7856 = vrot.slane %v7854, 5
    %v7857 = vsel %vm848, %v7852, %v7856
    %v7859 = vshrl.u32 %v7657, 16
    %v7861 = vrot.slane %v7859, 4
    %v7862 = vshll.u32 %v7657, 16
    %v7864 = vrot.slane %v7862, 5
    %v7865 = vor.u32 %v7861, %v7864
    %v7866 = vrot.slane %v7865, 4
    %v7868 = vshll.u32 %v7658, 16
    %v7870 = vrot.slane %v7868, 5
    %v7871 = vsel %vm848, %v7866, %v7870
    %v7872 = vshrl.u32 %v7658, 16
    %v7874 = vrot.slane %v7872, 4
    %v7875 = vor.u32 %v7874, %v7870
    %v7876 = vrot.slane %v7875, 4
    %v7878 = vshll.u32 %v7659, 16
    %v7880 = vrot.slane %v7878, 5
    %v7881 = vsel %vm848, %v7876, %v7880
    %v7883 = vshrl.u32 %v7660, 16
    %v7885 = vrot.slane %v7883, 4
    %v7886 = vshll.u32 %v7660, 16
    %v7888 = vrot.slane %v7886, 5
    %v7889 = vor.u32 %v7885, %v7888
    %v7890 = vrot.slane %v7889, 4
    %v7892 = vshll.u32 %v7661, 16
    %v7894 = vrot.slane %v7892, 5
    %v7895 = vsel %vm848, %v7890, %v7894
    %v7896 = vshrl.u32 %v7661, 16
    %v7898 = vrot.slane %v7896, 4
    %v7899 = vor.u32 %v7898, %v7894
    %v7900 = vrot.slane %v7899, 4
    %v7902 = vshll.u32 %v7662, 16
    %v7904 = vrot.slane %v7902, 5
    %v7905 = vsel %vm848, %v7900, %v7904
    %v7907 = vshrl.u32 %v7663, 16
    %v7909 = vrot.slane %v7907, 4
    %v7910 = vshll.u32 %v7663, 16
    %v7912 = vrot.slane %v7910, 5
    %v7913 = vor.u32 %v7909, %v7912
    %v7914 = vrot.slane %v7913, 4
    %v7916 = vshll.u32 %v7664, 16
    %v7918 = vrot.slane %v7916, 5
    %v7919 = vsel %vm848, %v7914, %v7918
    %v7920 = vshrl.u32 %v7664, 16
    %v7922 = vrot.slane %v7920, 4
    %v7923 = vor.u32 %v7922, %v7918
    %v7924 = vrot.slane %v7923, 4
    %v7926 = vshll.u32 %v7665, 16
    %v7928 = vrot.slane %v7926, 5
    %v7929 = vsel %vm848, %v7924, %v7928
    %v7931 = vshrl.u32 %v7666, 16
    %v7933 = vrot.slane %v7931, 4
    %v7934 = vshll.u32 %v7666, 16
    %v7936 = vrot.slane %v7934, 5
    %v7937 = vor.u32 %v7933, %v7936
    %v7938 = vrot.slane %v7937, 4
    %v7940 = vshll.u32 %v7667, 16
    %v7942 = vrot.slane %v7940, 5
    %v7943 = vsel %vm848, %v7938, %v7942
    %v7944 = vshrl.u32 %v7667, 16
    %v7946 = vrot.slane %v7944, 4
    %v7947 = vor.u32 %v7946, %v7942
    %v7948 = vrot.slane %v7947, 4
    %v7950 = vshll.u32 %v7668, 16
    %v7952 = vrot.slane %v7950, 5
    %v7953 = vsel %vm848, %v7948, %v7952
    %v7955 = vshrl.u32 %v7669, 16
    %v7957 = vrot.slane %v7955, 4
    %v7958 = vshll.u32 %v7669, 16
    %v7960 = vrot.slane %v7958, 5
    %v7961 = vor.u32 %v7957, %v7960
    %v7962 = vrot.slane %v7961, 4
    %v7964 = vshll.u32 %v7670, 16
    %v7966 = vrot.slane %v7964, 5
    %v7967 = vsel %vm848, %v7962, %v7966
    %v7968 = vshrl.u32 %v7670, 16
    %v7970 = vrot.slane %v7968, 4
    %v7971 = vor.u32 %v7970, %v7966
    %v7972 = vrot.slane %v7971, 4
    %v7974 = vshll.u32 %v7671, 16
    %v7976 = vrot.slane %v7974, 5
    %v7977 = vsel %vm848, %v7972, %v7976
    %v7979 = vshrl.u32 %v7672, 16
    %v7981 = vrot.slane %v7979, 4
    %v7982 = vshll.u32 %v7672, 16
    %v7984 = vrot.slane %v7982, 5
    %v7985 = vor.u32 %v7981, %v7984
    %v7986 = vrot.slane %v7985, 4
    %v7988 = vshll.u32 %v7673, 16
    %v7990 = vrot.slane %v7988, 5
    %v7991 = vsel %vm848, %v7986, %v7990
    %v7992 = vshrl.u32 %v7673, 16
    %v7994 = vrot.slane %v7992, 4
    %v7995 = vor.u32 %v7994, %v7990
    %v7996 = vrot.slane %v7995, 4
    %v7998 = vshll.u32 %v7674, 16
    %v8000 = vrot.slane %v7998, 5
    %v8001 = vsel %vm848, %v7996, %v8000
    %v8003 = vshrl.u32 %v7675, 16
    %v8005 = vrot.slane %v8003, 4
    %v8006 = vshll.u32 %v7675, 16
    %v8008 = vrot.slane %v8006, 5
    %v8009 = vor.u32 %v8005, %v8008
    %v8010 = vrot.slane %v8009, 4
    %v8012 = vshll.u32 %v7676, 16
    %v8014 = vrot.slane %v8012, 5
    %v8015 = vsel %vm848, %v8010, %v8014
    %v8016 = vshrl.u32 %v7676, 16
    %v8018 = vrot.slane %v8016, 4
    %v8019 = vor.u32 %v8018, %v8014
    %v8020 = vrot.slane %v8019, 4
    %v8022 = vshll.u32 %v7677, 16
    %v8024 = vrot.slane %v8022, 5
    %v8025 = vsel %vm848, %v8020, %v8024
    %v8027 = vshrl.u32 %v7678, 16
    %v8029 = vrot.slane %v8027, 4
    %v8030 = vshll.u32 %v7678, 16
    %v8032 = vrot.slane %v8030, 5
    %v8033 = vor.u32 %v8029, %v8032
    %v8034 = vrot.slane %v8033, 4
    %v8036 = vshll.u32 %v7679, 16
    %v8038 = vrot.slane %v8036, 5
    %v8039 = vsel %vm848, %v8034, %v8038
    %v8040 = vshrl.u32 %v7679, 16
    %v8042 = vrot.slane %v8040, 4
    %v8043 = vor.u32 %v8042, %v8038
    %v8044 = vrot.slane %v8043, 4
    %v8046 = vshll.u32 %v7680, 16
    %v8048 = vrot.slane %v8046, 5
    %v8049 = vsel %vm848, %v8044, %v8048
    %v8051 = vshrl.u32 %v7681, 16
    %v8053 = vrot.slane %v8051, 4
    %v8054 = vshll.u32 %v7681, 16
    %v8056 = vrot.slane %v8054, 5
    %v8057 = vor.u32 %v8053, %v8056
    %v8058 = vrot.slane %v8057, 4
    %v8060 = vshll.u32 %v7682, 16
    %v8062 = vrot.slane %v8060, 5
    %v8063 = vsel %vm848, %v8058, %v8062
    %v8064 = vshrl.u32 %v7682, 16
    %v8066 = vrot.slane %v8064, 4
    %v8067 = vor.u32 %v8066, %v8062
    %v8068 = vrot.slane %v8067, 4
    %v8070 = vshll.u32 %v7683, 16
    %v8072 = vrot.slane %v8070, 5
    %v8073 = vsel %vm848, %v8068, %v8072
    %v8075 = vshrl.u32 %v7684, 16
    %v8077 = vrot.slane %v8075, 4
    %v8078 = vshll.u32 %v7684, 16
    %v8080 = vrot.slane %v8078, 5
    %v8081 = vor.u32 %v8077, %v8080
    %v8082 = vrot.slane %v8081, 4
    %v8084 = vshll.u32 %v7685, 16
    %v8086 = vrot.slane %v8084, 5
    %v8087 = vsel %vm848, %v8082, %v8086
    %v8088 = vshrl.u32 %v7685, 16
    %v8090 = vrot.slane %v8088, 4
    %v8091 = vor.u32 %v8090, %v8086
    %v8092 = vrot.slane %v8091, 4
    %v8094 = vshll.u32 %v7686, 16
    %v8096 = vrot.slane %v8094, 5
    %v8097 = vsel %vm848, %v8092, %v8096
    %v8099 = vshrl.u32 %v7687, 16
    %v8101 = vrot.slane %v8099, 4
    %v8102 = vshll.u32 %v7687, 16
    %v8104 = vrot.slane %v8102, 5
    %v8105 = vor.u32 %v8101, %v8104
    %v8106 = vrot.slane %v8105, 4
    %v8108 = vshll.u32 %v7688, 16
    %v8110 = vrot.slane %v8108, 5
    %v8111 = vsel %vm848, %v8106, %v8110
    %v8112 = vshrl.u32 %v7688, 16
    %v8114 = vrot.slane %v8112, 4
    %v8115 = vor.u32 %v8114, %v8110
    %v8116 = vrot.slane %v8115, 4
    %v8118 = vshll.u32 %v7689, 16
    %v8120 = vrot.slane %v8118, 5
    %v8121 = vsel %vm848, %v8116, %v8120
    %v8123 = vshrl.u32 %v7690, 16
    %v8125 = vrot.slane %v8123, 4
    %v8126 = vshll.u32 %v7690, 16
    %v8128 = vrot.slane %v8126, 5
    %v8129 = vor.u32 %v8125, %v8128
    %v8130 = vrot.slane %v8129, 4
    %v8132 = vshll.u32 %v7691, 16
    %v8134 = vrot.slane %v8132, 5
    %v8135 = vsel %vm848, %v8130, %v8134
    %v8136 = vshrl.u32 %v7691, 16
    %v8138 = vrot.slane %v8136, 4
    %v8139 = vor.u32 %v8138, %v8134
    %v8140 = vrot.slane %v8139, 4
    %v8142 = vshll.u32 %v7692, 16
    %v8144 = vrot.slane %v8142, 5
    %v8145 = vsel %vm848, %v8140, %v8144
    %v8147 = vshrl.u32 %v7693, 16
    %v8149 = vrot.slane %v8147, 4
    %v8150 = vshll.u32 %v7693, 16
    %v8152 = vrot.slane %v8150, 5
    %v8153 = vor.u32 %v8149, %v8152
    %v8154 = vrot.slane %v8153, 4
    %v8156 = vshll.u32 %v7694, 16
    %v8158 = vrot.slane %v8156, 5
    %v8159 = vsel %vm848, %v8154, %v8158
    %v8160 = vshrl.u32 %v7694, 16
    %v8162 = vrot.slane %v8160, 4
    %v8163 = vor.u32 %v8162, %v8158
    %v8164 = vrot.slane %v8163, 4
    %v8166 = vshll.u32 %v7695, 16
    %v8168 = vrot.slane %v8166, 5
    %v8169 = vsel %vm848, %v8164, %v8168
    %v8171 = vshrl.u32 %v7696, 16
    %v8173 = vrot.slane %v8171, 4
    %v8174 = vshll.u32 %v7696, 16
    %v8176 = vrot.slane %v8174, 5
    %v8177 = vor.u32 %v8173, %v8176
    %v8178 = vrot.slane %v8177, 4
    %v8180 = vshll.u32 %v7697, 16
    %v8182 = vrot.slane %v8180, 5
    %v8183 = vsel %vm848, %v8178, %v8182
    %v8184 = vshrl.u32 %v7697, 16
    %v8186 = vrot.slane %v8184, 4
    %v8187 = vor.u32 %v8186, %v8182
    %v8188 = vrot.slane %v8187, 4
    %v8190 = vshll.u32 %v7698, 16
    %v8192 = vrot.slane %v8190, 5
    %v8193 = vsel %vm848, %v8188, %v8192
    %v8195 = vshrl.u32 %v7699, 16
    %v8197 = vrot.slane %v8195, 4
    %v8198 = vshll.u32 %v7699, 16
    %v8200 = vrot.slane %v8198, 5
    %v8201 = vor.u32 %v8197, %v8200
    %v8202 = vrot.slane %v8201, 4
    %v8204 = vshll.u32 %v7700, 16
    %v8206 = vrot.slane %v8204, 5
    %v8207 = vsel %vm848, %v8202, %v8206
    %v8208 = vshrl.u32 %v7700, 16
    %v8210 = vrot.slane %v8208, 4
    %v8211 = vor.u32 %v8210, %v8206
    %v8212 = vrot.slane %v8211, 4
    %v8214 = vshll.u32 %v7701, 16
    %v8216 = vrot.slane %v8214, 5
    %v8217 = vsel %vm848, %v8212, %v8216
    %v8219 = vshrl.u32 %v7702, 16
    %v8221 = vrot.slane %v8219, 4
    %v8222 = vshll.u32 %v7702, 16
    %v8224 = vrot.slane %v8222, 5
    %v8225 = vor.u32 %v8221, %v8224
    %v8226 = vrot.slane %v8225, 4
    %v8228 = vshll.u32 %v7703, 16
    %v8230 = vrot.slane %v8228, 5
    %v8231 = vsel %vm848, %v8226, %v8230
    %v8232 = vshrl.u32 %v7703, 16
    %v8234 = vrot.slane %v8232, 4
    %v8235 = vor.u32 %v8234, %v8230
    %v8236 = vrot.slane %v8235, 4
    %v8238 = vshll.u32 %v7704, 16
    %v8240 = vrot.slane %v8238, 5
    %v8241 = vsel %vm848, %v8236, %v8240
    %v8243 = vshrl.u32 %v7705, 16
    %v8245 = vrot.slane %v8243, 4
    %v8246 = vshll.u32 %v7705, 16
    %v8248 = vrot.slane %v8246, 5
    %v8249 = vor.u32 %v8245, %v8248
    %v8250 = vrot.slane %v8249, 4
    %v8252 = vshll.u32 %v7706, 16
    %v8254 = vrot.slane %v8252, 5
    %v8255 = vsel %vm848, %v8250, %v8254
    %v8256 = vshrl.u32 %v7706, 16
    %v8258 = vrot.slane %v8256, 4
    %v8259 = vor.u32 %v8258, %v8254
    %v8260 = vrot.slane %v8259, 4
    %v8262 = vshll.u32 %v7707, 16
    %v8264 = vrot.slane %v8262, 5
    %v8265 = vsel %vm848, %v8260, %v8264
    %v8267 = vshrl.u32 %v7708, 16
    %v8269 = vrot.slane %v8267, 4
    %v8270 = vshll.u32 %v7708, 16
    %v8272 = vrot.slane %v8270, 5
    %v8273 = vor.u32 %v8269, %v8272
    %v8274 = vrot.slane %v8273, 4
    %v8276 = vshll.u32 %v7709, 16
    %v8278 = vrot.slane %v8276, 5
    %v8279 = vsel %vm848, %v8274, %v8278
    %v8280 = vshrl.u32 %v7709, 16
    %v8282 = vrot.slane %v8280, 4
    %v8283 = vor.u32 %v8282, %v8278
    %v8284 = vrot.slane %v8283, 4
    %v8286 = vshll.u32 %v7710, 16
    %v8288 = vrot.slane %v8286, 5
    %v8289 = vsel %vm848, %v8284, %v8288
    %v8291 = vshrl.u32 %v7711, 16
    %v8293 = vrot.slane %v8291, 4
    %v8294 = vshll.u32 %v7711, 16
    %v8296 = vrot.slane %v8294, 5
    %v8297 = vor.u32 %v8293, %v8296
    %v8298 = vrot.slane %v8297, 4
    %v8300 = vshll.u32 %v7712, 16
    %v8302 = vrot.slane %v8300, 5
    %v8303 = vsel %vm848, %v8298, %v8302
    %v8304 = vshrl.u32 %v7712, 16
    %v8306 = vrot.slane %v8304, 4
    %v8307 = vor.u32 %v8306, %v8302
    %v8308 = vrot.slane %v8307, 4
    %v8310 = vshll.u32 %v7713, 16
    %v8312 = vrot.slane %v8310, 5
    %v8313 = vsel %vm848, %v8308, %v8312
    %v8315 = vshrl.u32 %v7714, 16
    %v8317 = vrot.slane %v8315, 4
    %v8318 = vshll.u32 %v7714, 16
    %v8320 = vrot.slane %v8318, 5
    %v8321 = vor.u32 %v8317, %v8320
    %v8322 = vrot.slane %v8321, 4
    %v8324 = vshll.u32 %v7715, 16
    %v8326 = vrot.slane %v8324, 5
    %v8327 = vsel %vm848, %v8322, %v8326
    %v8328 = vshrl.u32 %v7715, 16
    %v8330 = vrot.slane %v8328, 4
    %v8331 = vor.u32 %v8330, %v8326
    %v8332 = vrot.slane %v8331, 4
    %v8334 = vshll.u32 %v7716, 16
    %v8336 = vrot.slane %v8334, 5
    %v8337 = vsel %vm848, %v8332, %v8336
    %v8339 = vshrl.u32 %v7717, 16
    %v8341 = vrot.slane %v8339, 4
    %v8342 = vshll.u32 %v7717, 16
    %v8344 = vrot.slane %v8342, 5
    %v8345 = vor.u32 %v8341, %v8344
    %v8346 = vrot.slane %v8345, 4
    %v8348 = vshll.u32 %v7718, 16
    %v8350 = vrot.slane %v8348, 5
    %v8351 = vsel %vm848, %v8346, %v8350
    %v8352 = vshrl.u32 %v7718, 16
    %v8354 = vrot.slane %v8352, 4
    %v8355 = vor.u32 %v8354, %v8350
    %v8356 = vrot.slane %v8355, 4
    %v8358 = vshll.u32 %v7719, 16
    %v8360 = vrot.slane %v8358, 5
    %v8361 = vsel %vm848, %v8356, %v8360
    %v8363 = vshrl.u32 %v7720, 16
    %v8365 = vrot.slane %v8363, 4
    %v8366 = vshll.u32 %v7720, 16
    %v8368 = vrot.slane %v8366, 5
    %v8369 = vor.u32 %v8365, %v8368
    %v8370 = vrot.slane %v8369, 4
    %v8372 = vshll.u32 %v7721, 16
    %v8374 = vrot.slane %v8372, 5
    %v8375 = vsel %vm848, %v8370, %v8374
    %v8376 = vshrl.u32 %v7721, 16
    %v8378 = vrot.slane %v8376, 4
    %v8379 = vor.u32 %v8378, %v8374
    %v8380 = vrot.slane %v8379, 4
    %v8382 = vshll.u32 %v7722, 16
    %v8384 = vrot.slane %v8382, 5
    %v8385 = vsel %vm848, %v8380, %v8384
    %v8387 = vshrl.u32 %v7723, 16
    %v8389 = vrot.slane %v8387, 4
    %v8390 = vshll.u32 %v7723, 16
    %v8392 = vrot.slane %v8390, 5
    %v8393 = vor.u32 %v8389, %v8392
    %v8394 = vrot.slane %v8393, 4
    %v8396 = vshll.u32 %v7724, 16
    %v8398 = vrot.slane %v8396, 5
    %v8399 = vsel %vm848, %v8394, %v8398
    %v8400 = vshrl.u32 %v7724, 16
    %v8402 = vrot.slane %v8400, 4
    %v8403 = vor.u32 %v8402, %v8398
    %v8404 = vrot.slane %v8403, 4
    %v8406 = vshll.u32 %v7725, 16
    %v8408 = vrot.slane %v8406, 5
    %v8409 = vsel %vm848, %v8404, %v8408
    %v8411 = vshrl.u32 %v7726, 16
    %v8413 = vrot.slane %v8411, 4
    %v8414 = vshll.u32 %v7726, 16
    %v8416 = vrot.slane %v8414, 5
    %v8417 = vor.u32 %v8413, %v8416
    %v8418 = vrot.slane %v8417, 4
    %v8420 = vshll.u32 %v7727, 16
    %v8422 = vrot.slane %v8420, 5
    %v8423 = vsel %vm848, %v8418, %v8422
    %v8424 = vshrl.u32 %v7727, 16
    %v8426 = vrot.slane %v8424, 4
    %v8427 = vor.u32 %v8426, %v8422
    %v8428 = vrot.slane %v8427, 4
    %v8430 = vshll.u32 %v7728, 16
    %v8432 = vrot.slane %v8430, 5
    %v8433 = vsel %vm848, %v8428, %v8432
    %v8435 = vshrl.u32 %v7729, 16
    %v8437 = vrot.slane %v8435, 4
    %v8438 = vshll.u32 %v7729, 16
    %v8440 = vrot.slane %v8438, 5
    %v8441 = vor.u32 %v8437, %v8440
    %v8442 = vrot.slane %v8441, 4
    %v8444 = vshll.u32 %v7730, 16
    %v8446 = vrot.slane %v8444, 5
    %v8447 = vsel %vm848, %v8442, %v8446
    %v8448 = vshrl.u32 %v7730, 16
    %v8450 = vrot.slane %v8448, 4
    %v8451 = vor.u32 %v8450, %v8446
    %v8452 = vrot.slane %v8451, 4
    %v8454 = vshll.u32 %v7731, 16
    %v8456 = vrot.slane %v8454, 5
    %v8457 = vsel %vm848, %v8452, %v8456
    %v8459 = vshrl.u32 %v7732, 16
    %v8461 = vrot.slane %v8459, 4
    %v8462 = vshll.u32 %v7732, 16
    %v8464 = vrot.slane %v8462, 5
    %v8465 = vor.u32 %v8461, %v8464
    %v8466 = vrot.slane %v8465, 4
    %v8468 = vshll.u32 %v7733, 16
    %v8470 = vrot.slane %v8468, 5
    %v8471 = vsel %vm848, %v8466, %v8470
    %v8472 = vshrl.u32 %v7733, 16
    %v8474 = vrot.slane %v8472, 4
    %v8475 = vor.u32 %v8474, %v8470
    %v8476 = vrot.slane %v8475, 4
    %v8478 = vshll.u32 %v7734, 16
    %v8480 = vrot.slane %v8478, 5
    %v8481 = vsel %vm848, %v8476, %v8480
    %v8483 = vshrl.u32 %v7735, 16
    %v8485 = vrot.slane %v8483, 4
    %v8486 = vshll.u32 %v7735, 16
    %v8488 = vrot.slane %v8486, 5
    %v8489 = vor.u32 %v8485, %v8488
    %v8490 = vrot.slane %v8489, 4
    %v8492 = vshll.u32 %v7736, 16
    %v8494 = vrot.slane %v8492, 5
    %v8495 = vsel %vm848, %v8490, %v8494
    %v8496 = vshrl.u32 %v7736, 16
    %v8498 = vrot.slane %v8496, 4
    %v8499 = vor.u32 %v8498, %v8494
    %v8500 = vrot.slane %v8499, 4
    %v8502 = vshll.u32 %v7737, 16
    %v8504 = vrot.slane %v8502, 5
    %v8505 = vsel %vm848, %v8500, %v8504
    %s8506 = scalar_lea.vmem [#allocation6], 14
    %v8507 = vld [vmem:[%s8506] sm:$0x3]
    %v8508 = vunpack.c.l.b16 %v7751
    %v8509 = vunpack.c.l.b16 %v7761
    %v8510 = vunpack.c.l.b16 %v7775
    %v8511 = vunpack.c.l.b16 %v7785
    %v8512 = vunpack.c.l.b16 %v7799
    %v8513 = vunpack.c.l.b16 %v7809
    %v8514 = vunpack.c.l.b16 %v7823
    %v8515 = vunpack.c.l.b16 %v7833
    %v8516 = vunpack.c.l.b16 %v7847
    %v8517 = vunpack.c.l.b16 %v7857
    %v8518 = vunpack.c.l.b16 %v7871
    %v8519 = vunpack.c.l.b16 %v7881
    %v8520 = vunpack.c.l.b16 %v7895
    %v8521 = vunpack.c.l.b16 %v7905
    %v8522 = vunpack.c.l.b16 %v7919
    %v8523 = vunpack.c.l.b16 %v7929
    %v8524 = vunpack.c.l.b16 %v7943
    %v8525 = vunpack.c.l.b16 %v7953
    %v8526 = vunpack.c.l.b16 %v7967
    %v8527 = vunpack.c.l.b16 %v7977
    %v8528 = vunpack.c.l.b16 %v7991
    %v8529 = vunpack.c.l.b16 %v8001
    %v8530 = vunpack.c.l.b16 %v8015
    %v8531 = vunpack.c.l.b16 %v8025
    %v8532 = vunpack.c.l.b16 %v8039
    %v8533 = vunpack.c.l.b16 %v8049
    %v8534 = vunpack.c.l.b16 %v8063
    %v8535 = vunpack.c.l.b16 %v8073
    %v8536 = vunpack.c.l.b16 %v8087
    %v8537 = vunpack.c.l.b16 %v8097
    %v8538 = vunpack.c.l.b16 %v8111
    %v8539 = vunpack.c.l.b16 %v8121
    %v8540 = vunpack.c.l.b16 %v8135
    %v8541 = vunpack.c.l.b16 %v8145
    %v8542 = vunpack.c.l.b16 %v8159
    %v8543 = vunpack.c.l.b16 %v8169
    %v8544 = vunpack.c.l.b16 %v8183
    %v8545 = vunpack.c.l.b16 %v8193
    %v8546 = vunpack.c.l.b16 %v8207
    %v8547 = vunpack.c.l.b16 %v8217
    %v8548 = vunpack.c.l.b16 %v8231
    %v8549 = vunpack.c.l.b16 %v8241
    %v8550 = vunpack.c.l.b16 %v8255
    %v8551 = vunpack.c.l.b16 %v8265
    %v8552 = vunpack.c.l.b16 %v8279
    %v8553 = vunpack.c.l.b16 %v8289
    %v8554 = vunpack.c.l.b16 %v8303
    %v8555 = vunpack.c.l.b16 %v8313
    %v8556 = vunpack.c.l.b16 %v8327
    %v8557 = vunpack.c.l.b16 %v8337
    %v8558 = vunpack.c.l.b16 %v8351
    %v8559 = vunpack.c.l.b16 %v8361
    %v8560 = vunpack.c.l.b16 %v8375
    %v8561 = vunpack.c.l.b16 %v8385
    %v8562 = vunpack.c.l.b16 %v8399
    %v8563 = vunpack.c.l.b16 %v8409
    %v8564 = vunpack.c.l.b16 %v8423
    %v8565 = vunpack.c.l.b16 %v8433
    %v8566 = vunpack.c.l.b16 %v8447
    %v8567 = vunpack.c.l.b16 %v8457
    %v8568 = vunpack.c.l.b16 %v8471
    %v8569 = vunpack.c.l.b16 %v8481
    %v8570 = vunpack.c.l.b16 %v8495
    %v8571 = vunpack.c.l.b16 %v8505
    %v8572 = vpack.c.b16 %v8509, %v8508
    %v8573 = vpack.c.b16 %v8511, %v8510
    %v8574 = vpack.c.b16 %v8513, %v8512
    %v8575 = vpack.c.b16 %v8515, %v8514
    %v8576 = vpack.c.b16 %v8517, %v8516
    %v8577 = vpack.c.b16 %v8519, %v8518
    %v8578 = vpack.c.b16 %v8521, %v8520
    %v8579 = vpack.c.b16 %v8523, %v8522
    %v8580 = vpack.c.b16 %v8525, %v8524
    %v8581 = vpack.c.b16 %v8527, %v8526
    %v8582 = vpack.c.b16 %v8529, %v8528
    %v8583 = vpack.c.b16 %v8531, %v8530
    %v8584 = vpack.c.b16 %v8533, %v8532
    %v8585 = vpack.c.b16 %v8535, %v8534
    %v8586 = vpack.c.b16 %v8537, %v8536
    %v8587 = vpack.c.b16 %v8539, %v8538
    %v8588 = vpack.c.b16 %v8541, %v8540
    %v8589 = vpack.c.b16 %v8543, %v8542
    %v8590 = vpack.c.b16 %v8545, %v8544
    %v8591 = vpack.c.b16 %v8547, %v8546
    %v8592 = vpack.c.b16 %v8549, %v8548
    %v8593 = vpack.c.b16 %v8551, %v8550
    %v8594 = vpack.c.b16 %v8553, %v8552
    %v8595 = vpack.c.b16 %v8555, %v8554
    %v8596 = vpack.c.b16 %v8557, %v8556
    %v8597 = vpack.c.b16 %v8559, %v8558
    %v8598 = vpack.c.b16 %v8561, %v8560
    %v8599 = vpack.c.b16 %v8563, %v8562
    %v8600 = vpack.c.b16 %v8565, %v8564
    %v8601 = vpack.c.b16 %v8567, %v8566
    %v8602 = vpack.c.b16 %v8569, %v8568
    %v8603 = vpack.c.b16 %v8571, %v8570
    %v8605 = vsel %vm295, %v8572, 0
    %v8608 = vsel %vm295, %v8573, 0
    %v8611 = vsel %vm295, %v8574, 0
    %v8614 = vsel %vm295, %v8575, 0
    %v8617 = vsel %vm295, %v8576, 0
    %v8620 = vsel %vm295, %v8577, 0
    %v8623 = vsel %vm295, %v8578, 0
    %v8626 = vsel %vm295, %v8579, 0
    %v8629 = vsel %vm295, %v8580, 0
    %v8632 = vsel %vm295, %v8581, 0
    %v8635 = vsel %vm295, %v8582, 0
    %v8638 = vsel %vm295, %v8583, 0
    %v8641 = vsel %vm295, %v8584, 0
    %v8644 = vsel %vm295, %v8585, 0
    %v8647 = vsel %vm295, %v8586, 0
    %v8650 = vsel %vm295, %v8587, 0
    %v8653 = vsel %vm295, %v8588, 0
    %v8656 = vsel %vm295, %v8589, 0
    %v8659 = vsel %vm295, %v8590, 0
    %v8662 = vsel %vm295, %v8591, 0
    %v8665 = vsel %vm295, %v8592, 0
    %v8668 = vsel %vm295, %v8593, 0
    %v8671 = vsel %vm295, %v8594, 0
    %v8674 = vsel %vm295, %v8595, 0
    %v8677 = vsel %vm295, %v8596, 0
    %v8680 = vsel %vm295, %v8597, 0
    %v8683 = vsel %vm295, %v8598, 0
    %v8686 = vsel %vm295, %v8599, 0
    %v8689 = vsel %vm295, %v8600, 0
    %v8692 = vsel %vm295, %v8601, 0
    %v8695 = vsel %vm295, %v8602, 0
    %v8698 = vsel %vm295, %v8603, 0
    %v8701 = vsel %vm392, %v8507, 0
    %8703 = vmatprep.subr.bf16.mxu0 0
    %8704 = vmatpush1.bf16.msra.mxu0 %v8701
    %8705 = vmatprep.subr.bf16.mxu0 0
    %8706 = vmatpush1.bf16.msra.mxu0 0
    %8707 = vmatprep.subr.bf16.mxu0 0
    %8708 = vmatpush1.bf16.msra.mxu0 0
    %8709 = vmatprep.subr.bf16.mxu0 0
    %8710 = vmatpush1.bf16.msra.mxu0 0
    %8711 = vmatprep.subr.bf16.mxu0 0
    %8712 = vmatpush1.bf16.msra.mxu0 0
    %8713 = vmatprep.subr.bf16.mxu0 0
    %8714 = vmatpush1.bf16.msra.mxu0 0
    %8715 = vmatprep.subr.bf16.mxu0 0
    %8716 = vmatpush1.bf16.msra.mxu0 0
    %8717 = vmatprep.subr.bf16.mxu0 0
    %8718 = vmatpush1.bf16.msra.mxu0 0
    %8719 = vmatprep.subr.bf16.mxu0 0
    %8720 = vmatpush1.bf16.msra.mxu0 0
    %8721 = vmatprep.subr.bf16.mxu0 0
    %8722 = vmatpush1.bf16.msra.mxu0 0
    %8723 = vmatprep.subr.bf16.mxu0 0
    %8724 = vmatpush1.bf16.msra.mxu0 0
    %8725 = vmatprep.subr.bf16.mxu0 0
    %8726 = vmatpush1.bf16.msra.mxu0 0
    %8727 = vmatprep.subr.bf16.mxu0 0
    %8728 = vmatpush1.bf16.msra.mxu0 0
    %8729 = vmatprep.subr.bf16.mxu0 0
    %8730 = vmatpush1.bf16.msra.mxu0 0
    %8731 = vmatprep.subr.bf16.mxu0 0
    %8732 = vmatpush1.bf16.msra.mxu0 0
    %8733 = vmatprep.subr.bf16.mxu0 0
    %8734 = vmatpush1.bf16.msra.mxu0 0
    %8735 = vmatprep.mubr.bf16.mxu0 0
    %8736 = vmatmul.mubr.bf16.gmra.mrb[0].mxu0 %v8605
    %v8737 = vpop.f32.mrb[0].mxu0
    %v8738 = vadd.f32 0.0, %v8737
    %v8739 = vpop.f32.mrb[0].mxu0
    %v8740 = vpop.f32.mrb[0].mxu0
    %v8741 = vadd.f32 0.0, %v8740
    %v8742 = vpop.f32.mrb[0].mxu0
    %8743 = vmatprep.mubr.bf16.mxu0 0
    %8744 = vmatmul.mubr.bf16.gmra.mrb[0].mxu0 %v8608
    %v8745 = vpop.f32.mrb[0].mxu0
    %v8746 = vadd.f32 0.0, %v8745
    %v8747 = vpop.f32.mrb[0].mxu0
    %v8748 = vpop.f32.mrb[0].mxu0
    %v8749 = vadd.f32 0.0, %v8748
    %v8750 = vpop.f32.mrb[0].mxu0
    %8751 = vmatprep.mubr.bf16.mxu0 0
    %8752 = vmatmul.mubr.bf16.gmra.mrb[0].mxu0 %v8611
    %v8753 = vpop.f32.mrb[0].mxu0
    %v8754 = vadd.f32 0.0, %v8753
    %v8755 = vpop.f32.mrb[0].mxu0
    %v8756 = vpop.f32.mrb[0].mxu0
    %v8757 = vadd.f32 0.0, %v8756
    %v8758 = vpop.f32.mrb[0].mxu0
    %8759 = vmatprep.mubr.bf16.mxu0 0
    %8760 = vmatmul.mubr.bf16.gmra.mrb[0].mxu0 %v8614
    %v8761 = vpop.f32.mrb[0].mxu0
    %v8762 = vadd.f32 0.0, %v8761
    %v8763 = vpop.f32.mrb[0].mxu0
    %v8764 = vpop.f32.mrb[0].mxu0
    %v8765 = vadd.f32 0.0, %v8764
    %v8766 = vpop.f32.mrb[0].mxu0
    %8767 = vmatprep.mubr.bf16.mxu0 0
    %8768 = vmatmul.mubr.bf16.gmra.mrb[0].mxu0 %v8617
    %v8769 = vpop.f32.mrb[0].mxu0
    %v8770 = vadd.f32 0.0, %v8769
    %v8771 = vpop.f32.mrb[0].mxu0
    %v8772 = vpop.f32.mrb[0].mxu0
    %v8773 = vadd.f32 0.0, %v8772
    %v8774 = vpop.f32.mrb[0].mxu0
    %8775 = vmatprep.mubr.bf16.mxu0 0
    %8776 = vmatmul.mubr.bf16.gmra.mrb[0].mxu0 %v8620
    %v8777 = vpop.f32.mrb[0].mxu0
    %v8778 = vadd.f32 0.0, %v8777
    %v8779 = vpop.f32.mrb[0].mxu0
    %v8780 = vpop.f32.mrb[0].mxu0
    %v8781 = vadd.f32 0.0, %v8780
    %v8782 = vpop.f32.mrb[0].mxu0
    %8783 = vmatprep.mubr.bf16.mxu0 0
    %8784 = vmatmul.mubr.bf16.gmra.mrb[0].mxu0 %v8623
    %v8785 = vpop.f32.mrb[0].mxu0
    %v8786 = vadd.f32 0.0, %v8785
    %v8787 = vpop.f32.mrb[0].mxu0
    %v8788 = vpop.f32.mrb[0].mxu0
    %v8789 = vadd.f32 0.0, %v8788
    %v8790 = vpop.f32.mrb[0].mxu0
    %8791 = vmatprep.mubr.bf16.mxu0 0
    %8792 = vmatmul.mubr.bf16.gmra.mrb[0].mxu0 %v8626
    %v8793 = vpop.f32.mrb[0].mxu0
    %v8794 = vadd.f32 0.0, %v8793
    %v8795 = vpop.f32.mrb[0].mxu0
    %v8796 = vpop.f32.mrb[0].mxu0
    %v8797 = vadd.f32 0.0, %v8796
    %v8798 = vpop.f32.mrb[0].mxu0
    %8799 = vmatprep.mubr.bf16.mxu0 0
    %8800 = vmatmul.mubr.bf16.gmra.mrb[0].mxu0 %v8629
    %v8801 = vpop.f32.mrb[0].mxu0
    %v8802 = vadd.f32 0.0, %v8801
    %v8803 = vpop.f32.mrb[0].mxu0
    %v8804 = vpop.f32.mrb[0].mxu0
    %v8805 = vadd.f32 0.0, %v8804
    %v8806 = vpop.f32.mrb[0].mxu0
    %8807 = vmatprep.mubr.bf16.mxu0 0
    %8808 = vmatmul.mubr.bf16.gmra.mrb[0].mxu0 %v8632
    %v8809 = vpop.f32.mrb[0].mxu0
    %v8810 = vadd.f32 0.0, %v8809
    %v8811 = vpop.f32.mrb[0].mxu0
    %v8812 = vpop.f32.mrb[0].mxu0
    %v8813 = vadd.f32 0.0, %v8812
    %v8814 = vpop.f32.mrb[0].mxu0
    %8815 = vmatprep.mubr.bf16.mxu0 0
    %8816 = vmatmul.mubr.bf16.gmra.mrb[0].mxu0 %v8635
    %v8817 = vpop.f32.mrb[0].mxu0
    %v8818 = vadd.f32 0.0, %v8817
    %v8819 = vpop.f32.mrb[0].mxu0
    %v8820 = vpop.f32.mrb[0].mxu0
    %v8821 = vadd.f32 0.0, %v8820
    %v8822 = vpop.f32.mrb[0].mxu0
    %8823 = vmatprep.mubr.bf16.mxu0 0
    %8824 = vmatmul.mubr.bf16.gmra.mrb[0].mxu0 %v8638
    %v8825 = vpop.f32.mrb[0].mxu0
    %v8826 = vadd.f32 0.0, %v8825
    %v8827 = vpop.f32.mrb[0].mxu0
    %v8828 = vpop.f32.mrb[0].mxu0
    %v8829 = vadd.f32 0.0, %v8828
    %v8830 = vpop.f32.mrb[0].mxu0
    %8831 = vmatprep.mubr.bf16.mxu0 0
    %8832 = vmatmul.mubr.bf16.gmra.mrb[0].mxu0 %v8641
    %v8833 = vpop.f32.mrb[0].mxu0
    %v8834 = vadd.f32 0.0, %v8833
    %v8835 = vpop.f32.mrb[0].mxu0
    %v8836 = vpop.f32.mrb[0].mxu0
    %v8837 = vadd.f32 0.0, %v8836
    %v8838 = vpop.f32.mrb[0].mxu0
    %8839 = vmatprep.mubr.bf16.mxu0 0
    %8840 = vmatmul.mubr.bf16.gmra.mrb[0].mxu0 %v8644
    %v8841 = vpop.f32.mrb[0].mxu0
    %v8842 = vadd.f32 0.0, %v8841
    %v8843 = vpop.f32.mrb[0].mxu0
    %v8844 = vpop.f32.mrb[0].mxu0
    %v8845 = vadd.f32 0.0, %v8844
    %v8846 = vpop.f32.mrb[0].mxu0
    %8847 = vmatprep.mubr.bf16.mxu0 0
    %8848 = vmatmul.mubr.bf16.gmra.mrb[0].mxu0 %v8647
    %v8849 = vpop.f32.mrb[0].mxu0
    %v8850 = vadd.f32 0.0, %v8849
    %v8851 = vpop.f32.mrb[0].mxu0
    %v8852 = vpop.f32.mrb[0].mxu0
    %v8853 = vadd.f32 0.0, %v8852
    %v8854 = vpop.f32.mrb[0].mxu0
    %8855 = vmatprep.mubr.bf16.mxu0 0
    %8856 = vmatmul.mubr.bf16.gmra.mrb[0].mxu0 %v8650
    %v8857 = vpop.f32.mrb[0].mxu0
    %v8858 = vadd.f32 0.0, %v8857
    %v8859 = vpop.f32.mrb[0].mxu0
    %v8860 = vpop.f32.mrb[0].mxu0
    %v8861 = vadd.f32 0.0, %v8860
    %v8862 = vpop.f32.mrb[0].mxu0
    %8863 = vmatprep.mubr.bf16.mxu0 0
    %8864 = vmatmul.mubr.bf16.gmra.mrb[0].mxu0 %v8653
    %v8865 = vpop.f32.mrb[0].mxu0
    %v8866 = vadd.f32 0.0, %v8865
    %v8867 = vpop.f32.mrb[0].mxu0
    %v8868 = vpop.f32.mrb[0].mxu0
    %v8869 = vadd.f32 0.0, %v8868
    %v8870 = vpop.f32.mrb[0].mxu0
    %8871 = vmatprep.mubr.bf16.mxu0 0
    %8872 = vmatmul.mubr.bf16.gmra.mrb[0].mxu0 %v8656
    %v8873 = vpop.f32.mrb[0].mxu0
    %v8874 = vadd.f32 0.0, %v8873
    %v8875 = vpop.f32.mrb[0].mxu0
    %v8876 = vpop.f32.mrb[0].mxu0
    %v8877 = vadd.f32 0.0, %v8876
    %v8878 = vpop.f32.mrb[0].mxu0
    %8879 = vmatprep.mubr.bf16.mxu0 0
    %8880 = vmatmul.mubr.bf16.gmra.mrb[0].mxu0 %v8659
    %v8881 = vpop.f32.mrb[0].mxu0
    %v8882 = vadd.f32 0.0, %v8881
    %v8883 = vpop.f32.mrb[0].mxu0
    %v8884 = vpop.f32.mrb[0].mxu0
    %v8885 = vadd.f32 0.0, %v8884
    %v8886 = vpop.f32.mrb[0].mxu0
    %8887 = vmatprep.mubr.bf16.mxu0 0
    %8888 = vmatmul.mubr.bf16.gmra.mrb[0].mxu0 %v8662
    %v8889 = vpop.f32.mrb[0].mxu0
    %v8890 = vadd.f32 0.0, %v8889
    %v8891 = vpop.f32.mrb[0].mxu0
    %v8892 = vpop.f32.mrb[0].mxu0
    %v8893 = vadd.f32 0.0, %v8892
    %v8894 = vpop.f32.mrb[0].mxu0
    %8895 = vmatprep.mubr.bf16.mxu0 0
    %8896 = vmatmul.mubr.bf16.gmra.mrb[0].mxu0 %v8665
    %v8897 = vpop.f32.mrb[0].mxu0
    %v8898 = vadd.f32 0.0, %v8897
    %v8899 = vpop.f32.mrb[0].mxu0
    %v8900 = vpop.f32.mrb[0].mxu0
    %v8901 = vadd.f32 0.0, %v8900
    %v8902 = vpop.f32.mrb[0].mxu0
    %8903 = vmatprep.mubr.bf16.mxu0 0
    %8904 = vmatmul.mubr.bf16.gmra.mrb[0].mxu0 %v8668
    %v8905 = vpop.f32.mrb[0].mxu0
    %v8906 = vadd.f32 0.0, %v8905
    %v8907 = vpop.f32.mrb[0].mxu0
    %v8908 = vpop.f32.mrb[0].mxu0
    %v8909 = vadd.f32 0.0, %v8908
    %v8910 = vpop.f32.mrb[0].mxu0
    %8911 = vmatprep.mubr.bf16.mxu0 0
    %8912 = vmatmul.mubr.bf16.gmra.mrb[0].mxu0 %v8671
    %v8913 = vpop.f32.mrb[0].mxu0
    %v8914 = vadd.f32 0.0, %v8913
    %v8915 = vpop.f32.mrb[0].mxu0
    %v8916 = vpop.f32.mrb[0].mxu0
    %v8917 = vadd.f32 0.0, %v8916
    %v8918 = vpop.f32.mrb[0].mxu0
    %8919 = vmatprep.mubr.bf16.mxu0 0
    %8920 = vmatmul.mubr.bf16.gmra.mrb[0].mxu0 %v8674
    %v8921 = vpop.f32.mrb[0].mxu0
    %v8922 = vadd.f32 0.0, %v8921
    %v8923 = vpop.f32.mrb[0].mxu0
    %v8924 = vpop.f32.mrb[0].mxu0
    %v8925 = vadd.f32 0.0, %v8924
    %v8926 = vpop.f32.mrb[0].mxu0
    %8927 = vmatprep.mubr.bf16.mxu0 0
    %8928 = vmatmul.mubr.bf16.gmra.mrb[0].mxu0 %v8677
    %v8929 = vpop.f32.mrb[0].mxu0
    %v8930 = vadd.f32 0.0, %v8929
    %v8931 = vpop.f32.mrb[0].mxu0
    %v8932 = vpop.f32.mrb[0].mxu0
    %v8933 = vadd.f32 0.0, %v8932
    %v8934 = vpop.f32.mrb[0].mxu0
    %8935 = vmatprep.mubr.bf16.mxu0 0
    %8936 = vmatmul.mubr.bf16.gmra.mrb[0].mxu0 %v8680
    %v8937 = vpop.f32.mrb[0].mxu0
    %v8938 = vadd.f32 0.0, %v8937
    %v8939 = vpop.f32.mrb[0].mxu0
    %v8940 = vpop.f32.mrb[0].mxu0
    %v8941 = vadd.f32 0.0, %v8940
    %v8942 = vpop.f32.mrb[0].mxu0
    %8943 = vmatprep.mubr.bf16.mxu0 0
    %8944 = vmatmul.mubr.bf16.gmra.mrb[0].mxu0 %v8683
    %v8945 = vpop.f32.mrb[0].mxu0
    %v8946 = vadd.f32 0.0, %v8945
    %v8947 = vpop.f32.mrb[0].mxu0
    %v8948 = vpop.f32.mrb[0].mxu0
    %v8949 = vadd.f32 0.0, %v8948
    %v8950 = vpop.f32.mrb[0].mxu0
    %8951 = vmatprep.mubr.bf16.mxu0 0
    %8952 = vmatmul.mubr.bf16.gmra.mrb[0].mxu0 %v8686
    %v8953 = vpop.f32.mrb[0].mxu0
    %v8954 = vadd.f32 0.0, %v8953
    %v8955 = vpop.f32.mrb[0].mxu0
    %v8956 = vpop.f32.mrb[0].mxu0
    %v8957 = vadd.f32 0.0, %v8956
    %v8958 = vpop.f32.mrb[0].mxu0
    %8959 = vmatprep.mubr.bf16.mxu0 0
    %8960 = vmatmul.mubr.bf16.gmra.mrb[0].mxu0 %v8689
    %v8961 = vpop.f32.mrb[0].mxu0
    %v8962 = vadd.f32 0.0, %v8961
    %v8963 = vpop.f32.mrb[0].mxu0
    %v8964 = vpop.f32.mrb[0].mxu0
    %v8965 = vadd.f32 0.0, %v8964
    %v8966 = vpop.f32.mrb[0].mxu0
    %8967 = vmatprep.mubr.bf16.mxu0 0
    %8968 = vmatmul.mubr.bf16.gmra.mrb[0].mxu0 %v8692
    %v8969 = vpop.f32.mrb[0].mxu0
    %v8970 = vadd.f32 0.0, %v8969
    %v8971 = vpop.f32.mrb[0].mxu0
    %v8972 = vpop.f32.mrb[0].mxu0
    %v8973 = vadd.f32 0.0, %v8972
    %v8974 = vpop.f32.mrb[0].mxu0
    %8975 = vmatprep.mubr.bf16.mxu0 0
    %8976 = vmatmul.mubr.bf16.gmra.mrb[0].mxu0 %v8695
    %v8977 = vpop.f32.mrb[0].mxu0
    %v8978 = vadd.f32 0.0, %v8977
    %v8979 = vpop.f32.mrb[0].mxu0
    %v8980 = vpop.f32.mrb[0].mxu0
    %v8981 = vadd.f32 0.0, %v8980
    %v8982 = vpop.f32.mrb[0].mxu0
    %8983 = vmatprep.mubr.bf16.mxu0 0
    %8984 = vmatmul.mubr.bf16.gmra.mrb[0].mxu0 %v8698
    %v8985 = vpop.f32.mrb[0].mxu0
    %v8986 = vadd.f32 0.0, %v8985
    %v8987 = vpop.f32.mrb[0].mxu0
    %v8988 = vpop.f32.mrb[0].mxu0
    %v8989 = vadd.f32 0.0, %v8988
    %v8990 = vpop.f32.mrb[0].mxu0
    %8991 = vdwg.mxu0
    %v8992 = vld [vmem:[#allocation2] sm:$0xff]
    %v8993 = vld [vmem:[#allocation2 + $0x8] sm:$0xff]
    %v8994 = vld [vmem:[#allocation2 + $0x10] sm:$0xff]
    %v8995 = vld [vmem:[#allocation2 + $0x18] sm:$0xff]
    %v8996 = vld [vmem:[#allocation2 + $0x20] sm:$0xff]
    %v8997 = vld [vmem:[#allocation2 + $0x28] sm:$0xff]
    %v8998 = vld [vmem:[#allocation2 + $0x30] sm:$0xff]
    %v8999 = vld [vmem:[#allocation2 + $0x38] sm:$0xff]
    %v9000 = vld [vmem:[#allocation2 + $0x40] sm:$0xff]
    %v9001 = vld [vmem:[#allocation2 + $0x48] sm:$0xff]
    %v9002 = vld [vmem:[#allocation2 + $0x50] sm:$0xff]
    %v9003 = vld [vmem:[#allocation2 + $0x58] sm:$0xff]
    %v9004 = vld [vmem:[#allocation2 + $0x60] sm:$0xff]
    %v9005 = vld [vmem:[#allocation2 + $0x68] sm:$0xff]
    %v9006 = vld [vmem:[#allocation2 + $0x70] sm:$0xff]
    %v9007 = vld [vmem:[#allocation2 + $0x78] sm:$0xff]
    %v9008 = vld [vmem:[#allocation2 + $0x80] sm:$0xff]
    %v9009 = vld [vmem:[#allocation2 + $0x88] sm:$0xff]
    %v9010 = vld [vmem:[#allocation2 + $0x90] sm:$0xff]
    %v9011 = vld [vmem:[#allocation2 + $0x98] sm:$0xff]
    %v9012 = vld [vmem:[#allocation2 + $0xa0] sm:$0xff]
    %v9013 = vld [vmem:[#allocation2 + $0xa8] sm:$0xff]
    %v9014 = vld [vmem:[#allocation2 + $0xb0] sm:$0xff]
    %v9015 = vld [vmem:[#allocation2 + $0xb8] sm:$0xff]
    %v9016 = vld [vmem:[#allocation2 + $0xc0] sm:$0xff]
    %v9017 = vld [vmem:[#allocation2 + $0xc8] sm:$0xff]
    %v9018 = vld [vmem:[#allocation2 + $0xd0] sm:$0xff]
    %v9019 = vld [vmem:[#allocation2 + $0xd8] sm:$0xff]
    %v9020 = vld [vmem:[#allocation2 + $0xe0] sm:$0xff]
    %v9021 = vld [vmem:[#allocation2 + $0xe8] sm:$0xff]
    %v9022 = vld [vmem:[#allocation2 + $0xf0] sm:$0xff]
    %v9023 = vld [vmem:[#allocation2 + $0xf8] sm:$0xff]
    %v9024 = vld [vmem:[#allocation2 + $0x100] sm:$0xff]
    %v9025 = vld [vmem:[#allocation2 + $0x108] sm:$0xff]
    %v9026 = vld [vmem:[#allocation2 + $0x110] sm:$0xff]
    %v9027 = vld [vmem:[#allocation2 + $0x118] sm:$0xff]
    %v9028 = vld [vmem:[#allocation2 + $0x120] sm:$0xff]
    %v9029 = vld [vmem:[#allocation2 + $0x128] sm:$0xff]
    %v9030 = vld [vmem:[#allocation2 + $0x130] sm:$0xff]
    %v9031 = vld [vmem:[#allocation2 + $0x138] sm:$0xff]
    %v9032 = vld [vmem:[#allocation2 + $0x140] sm:$0xff]
    %v9033 = vld [vmem:[#allocation2 + $0x148] sm:$0xff]
    %v9034 = vld [vmem:[#allocation2 + $0x150] sm:$0xff]
    %v9035 = vld [vmem:[#allocation2 + $0x158] sm:$0xff]
    %v9036 = vld [vmem:[#allocation2 + $0x160] sm:$0xff]
    %v9037 = vld [vmem:[#allocation2 + $0x168] sm:$0xff]
    %v9038 = vld [vmem:[#allocation2 + $0x170] sm:$0xff]
    %v9039 = vld [vmem:[#allocation2 + $0x178] sm:$0xff]
    %v9040 = vld [vmem:[#allocation2 + $0x180] sm:$0xff]
    %v9041 = vld [vmem:[#allocation2 + $0x188] sm:$0xff]
    %v9042 = vld [vmem:[#allocation2 + $0x190] sm:$0xff]
    %v9043 = vld [vmem:[#allocation2 + $0x198] sm:$0xff]
    %v9044 = vld [vmem:[#allocation2 + $0x1a0] sm:$0xff]
    %v9045 = vld [vmem:[#allocation2 + $0x1a8] sm:$0xff]
    %v9046 = vld [vmem:[#allocation2 + $0x1b0] sm:$0xff]
    %v9047 = vld [vmem:[#allocation2 + $0x1b8] sm:$0xff]
    %v9048 = vld [vmem:[#allocation2 + $0x1c0] sm:$0xff]
    %v9049 = vld [vmem:[#allocation2 + $0x1c8] sm:$0xff]
    %v9050 = vld [vmem:[#allocation2 + $0x1d0] sm:$0xff]
    %v9051 = vld [vmem:[#allocation2 + $0x1d8] sm:$0xff]
    %v9052 = vld [vmem:[#allocation2 + $0x1e0] sm:$0xff]
    %v9053 = vld [vmem:[#allocation2 + $0x1e8] sm:$0xff]
    %v9054 = vld [vmem:[#allocation2 + $0x1f0] sm:$0xff]
    %v9055 = vld [vmem:[#allocation2 + $0x1f8] sm:$0xff]
    %v9056 = vadd.f32 %v8992, %v8738
    %v9057 = vadd.f32 %v8993, %v8741
    %v9058 = vadd.f32 %v8994, %v8746
    %v9059 = vadd.f32 %v8995, %v8749
    %v9060 = vadd.f32 %v8996, %v8754
    %v9061 = vadd.f32 %v8997, %v8757
    %v9062 = vadd.f32 %v8998, %v8762
    %v9063 = vadd.f32 %v8999, %v8765
    %v9064 = vadd.f32 %v9000, %v8770
    %v9065 = vadd.f32 %v9001, %v8773
    %v9066 = vadd.f32 %v9002, %v8778
    %v9067 = vadd.f32 %v9003, %v8781
    %v9068 = vadd.f32 %v9004, %v8786
    %v9069 = vadd.f32 %v9005, %v8789
    %v9070 = vadd.f32 %v9006, %v8794
    %v9071 = vadd.f32 %v9007, %v8797
    %v9072 = vadd.f32 %v9008, %v8802
    %v9073 = vadd.f32 %v9009, %v8805
    %v9074 = vadd.f32 %v9010, %v8810
    %v9075 = vadd.f32 %v9011, %v8813
    %v9076 = vadd.f32 %v9012, %v8818
    %v9077 = vadd.f32 %v9013, %v8821
    %v9078 = vadd.f32 %v9014, %v8826
    %v9079 = vadd.f32 %v9015, %v8829
    %v9080 = vadd.f32 %v9016, %v8834
    %v9081 = vadd.f32 %v9017, %v8837
    %v9082 = vadd.f32 %v9018, %v8842
    %v9083 = vadd.f32 %v9019, %v8845
    %v9084 = vadd.f32 %v9020, %v8850
    %v9085 = vadd.f32 %v9021, %v8853
    %v9086 = vadd.f32 %v9022, %v8858
    %v9087 = vadd.f32 %v9023, %v8861
    %v9088 = vadd.f32 %v9024, %v8866
    %v9089 = vadd.f32 %v9025, %v8869
    %v9090 = vadd.f32 %v9026, %v8874
    %v9091 = vadd.f32 %v9027, %v8877
    %v9092 = vadd.f32 %v9028, %v8882
    %v9093 = vadd.f32 %v9029, %v8885
    %v9094 = vadd.f32 %v9030, %v8890
    %v9095 = vadd.f32 %v9031, %v8893
    %v9096 = vadd.f32 %v9032, %v8898
    %v9097 = vadd.f32 %v9033, %v8901
    %v9098 = vadd.f32 %v9034, %v8906
    %v9099 = vadd.f32 %v9035, %v8909
    %v9100 = vadd.f32 %v9036, %v8914
    %v9101 = vadd.f32 %v9037, %v8917
    %v9102 = vadd.f32 %v9038, %v8922
    %v9103 = vadd.f32 %v9039, %v8925
    %v9104 = vadd.f32 %v9040, %v8930
    %v9105 = vadd.f32 %v9041, %v8933
    %v9106 = vadd.f32 %v9042, %v8938
    %v9107 = vadd.f32 %v9043, %v8941
    %v9108 = vadd.f32 %v9044, %v8946
    %v9109 = vadd.f32 %v9045, %v8949
    %v9110 = vadd.f32 %v9046, %v8954
    %v9111 = vadd.f32 %v9047, %v8957
    %v9112 = vadd.f32 %v9048, %v8962
    %v9113 = vadd.f32 %v9049, %v8965
    %v9114 = vadd.f32 %v9050, %v8970
    %v9115 = vadd.f32 %v9051, %v8973
    %v9116 = vadd.f32 %v9052, %v8978
    %v9117 = vadd.f32 %v9053, %v8981
    %v9118 = vadd.f32 %v9054, %v8986
    %v9119 = vadd.f32 %v9055, %v8989
    %9120 = vst.msk [vmem:[#allocation2] sm:$0xff] %vm685, %v9056
    %9121 = vst.msk [vmem:[#allocation2 + $0x8] sm:$0xff] %vm685, %v9057
    %9122 = vst.msk [vmem:[#allocation2 + $0x10] sm:$0xff] %vm685, %v9058
    %9123 = vst.msk [vmem:[#allocation2 + $0x18] sm:$0xff] %vm685, %v9059
    %9124 = vst.msk [vmem:[#allocation2 + $0x20] sm:$0xff] %vm685, %v9060
    %9125 = vst.msk [vmem:[#allocation2 + $0x28] sm:$0xff] %vm685, %v9061
    %9126 = vst.msk [vmem:[#allocation2 + $0x30] sm:$0xff] %vm685, %v9062
    %9127 = vst.msk [vmem:[#allocation2 + $0x38] sm:$0xff] %vm685, %v9063
    %9128 = vst.msk [vmem:[#allocation2 + $0x40] sm:$0xff] %vm685, %v9064
    %9129 = vst.msk [vmem:[#allocation2 + $0x48] sm:$0xff] %vm685, %v9065
    %9130 = vst.msk [vmem:[#allocation2 + $0x50] sm:$0xff] %vm685, %v9066
    %9131 = vst.msk [vmem:[#allocation2 + $0x58] sm:$0xff] %vm685, %v9067
    %9132 = vst.msk [vmem:[#allocation2 + $0x60] sm:$0xff] %vm685, %v9068
    %9133 = vst.msk [vmem:[#allocation2 + $0x68] sm:$0xff] %vm685, %v9069
    %9134 = vst.msk [vmem:[#allocation2 + $0x70] sm:$0xff] %vm685, %v9070
    %9135 = vst.msk [vmem:[#allocation2 + $0x78] sm:$0xff] %vm685, %v9071
    %9136 = vst.msk [vmem:[#allocation2 + $0x80] sm:$0xff] %vm685, %v9072
    %9137 = vst.msk [vmem:[#allocation2 + $0x88] sm:$0xff] %vm685, %v9073
    %9138 = vst.msk [vmem:[#allocation2 + $0x90] sm:$0xff] %vm685, %v9074
    %9139 = vst.msk [vmem:[#allocation2 + $0x98] sm:$0xff] %vm685, %v9075
    %9140 = vst.msk [vmem:[#allocation2 + $0xa0] sm:$0xff] %vm685, %v9076
    %9141 = vst.msk [vmem:[#allocation2 + $0xa8] sm:$0xff] %vm685, %v9077
    %9142 = vst.msk [vmem:[#allocation2 + $0xb0] sm:$0xff] %vm685, %v9078
    %9143 = vst.msk [vmem:[#allocation2 + $0xb8] sm:$0xff] %vm685, %v9079
    %9144 = vst.msk [vmem:[#allocation2 + $0xc0] sm:$0xff] %vm685, %v9080
    %9145 = vst.msk [vmem:[#allocation2 + $0xc8] sm:$0xff] %vm685, %v9081
    %9146 = vst.msk [vmem:[#allocation2 + $0xd0] sm:$0xff] %vm685, %v9082
    %9147 = vst.msk [vmem:[#allocation2 + $0xd8] sm:$0xff] %vm685, %v9083
    %9148 = vst.msk [vmem:[#allocation2 + $0xe0] sm:$0xff] %vm685, %v9084
    %9149 = vst.msk [vmem:[#allocation2 + $0xe8] sm:$0xff] %vm685, %v9085
    %9150 = vst.msk [vmem:[#allocation2 + $0xf0] sm:$0xff] %vm685, %v9086
    %9151 = vst.msk [vmem:[#allocation2 + $0xf8] sm:$0xff] %vm685, %v9087
    %9152 = vst.msk [vmem:[#allocation2 + $0x100] sm:$0xff] %vm685, %v9088
    %9153 = vst.msk [vmem:[#allocation2 + $0x108] sm:$0xff] %vm685, %v9089
    %9154 = vst.msk [vmem:[#allocation2 + $0x110] sm:$0xff] %vm685, %v9090
    %9155 = vst.msk [vmem:[#allocation2 + $0x118] sm:$0xff] %vm685, %v9091
    %9156 = vst.msk [vmem:[#allocation2 + $0x120] sm:$0xff] %vm685, %v9092
    %9157 = vst.msk [vmem:[#allocation2 + $0x128] sm:$0xff] %vm685, %v9093
    %9158 = vst.msk [vmem:[#allocation2 + $0x130] sm:$0xff] %vm685, %v9094
    %9159 = vst.msk [vmem:[#allocation2 + $0x138] sm:$0xff] %vm685, %v9095
    %9160 = vst.msk [vmem:[#allocation2 + $0x140] sm:$0xff] %vm685, %v9096
    %9161 = vst.msk [vmem:[#allocation2 + $0x148] sm:$0xff] %vm685, %v9097
    %9162 = vst.msk [vmem:[#allocation2 + $0x150] sm:$0xff] %vm685, %v9098
    %9163 = vst.msk [vmem:[#allocation2 + $0x158] sm:$0xff] %vm685, %v9099
    %9164 = vst.msk [vmem:[#allocation2 + $0x160] sm:$0xff] %vm685, %v9100
    %9165 = vst.msk [vmem:[#allocation2 + $0x168] sm:$0xff] %vm685, %v9101
    %9166 = vst.msk [vmem:[#allocation2 + $0x170] sm:$0xff] %vm685, %v9102
    %9167 = vst.msk [vmem:[#allocation2 + $0x178] sm:$0xff] %vm685, %v9103
    %9168 = vst.msk [vmem:[#allocation2 + $0x180] sm:$0xff] %vm685, %v9104
    %9169 = vst.msk [vmem:[#allocation2 + $0x188] sm:$0xff] %vm685, %v9105
    %9170 = vst.msk [vmem:[#allocation2 + $0x190] sm:$0xff] %vm685, %v9106
    %9171 = vst.msk [vmem:[#allocation2 + $0x198] sm:$0xff] %vm685, %v9107
    %9172 = vst.msk [vmem:[#allocation2 + $0x1a0] sm:$0xff] %vm685, %v9108
    %9173 = vst.msk [vmem:[#allocation2 + $0x1a8] sm:$0xff] %vm685, %v9109
    %9174 = vst.msk [vmem:[#allocation2 + $0x1b0] sm:$0xff] %vm685, %v9110
    %9175 = vst.msk [vmem:[#allocation2 + $0x1b8] sm:$0xff] %vm685, %v9111
    %9176 = vst.msk [vmem:[#allocation2 + $0x1c0] sm:$0xff] %vm685, %v9112
    %9177 = vst.msk [vmem:[#allocation2 + $0x1c8] sm:$0xff] %vm685, %v9113
    %9178 = vst.msk [vmem:[#allocation2 + $0x1d0] sm:$0xff] %vm685, %v9114
    %9179 = vst.msk [vmem:[#allocation2 + $0x1d8] sm:$0xff] %vm685, %v9115
    %9180 = vst.msk [vmem:[#allocation2 + $0x1e0] sm:$0xff] %vm685, %v9116
    %9181 = vst.msk [vmem:[#allocation2 + $0x1e8] sm:$0xff] %vm685, %v9117
    %9182 = vst.msk [vmem:[#allocation2 + $0x1f0] sm:$0xff] %vm685, %v9118
    %9183 = vst.msk [vmem:[#allocation2 + $0x1f8] sm:$0xff] %vm685, %v9119
    %v9184 = vld [vmem:[%s6835] sm:$0xe]
    %v9185 = vld [vmem:[%s6835 + $0x4] sm:$0xf]
    %v9186 = vld [vmem:[%s6835 + $0x8] sm:$0x1]
    %v9187 = vld [vmem:[%s6835 + $0xc] sm:$0xe]
    %v9188 = vld [vmem:[%s6835 + $0x10] sm:$0xf]
    %v9189 = vld [vmem:[%s6835 + $0x14] sm:$0x1]
    %v9190 = vld [vmem:[%s6835 + $0x18] sm:$0xe]
    %v9191 = vld [vmem:[%s6835 + $0x1c] sm:$0xf]
    %v9192 = vld [vmem:[%s6835 + $0x20] sm:$0x1]
    %v9193 = vld [vmem:[%s6835 + $0x24] sm:$0xe]
    %v9194 = vld [vmem:[%s6835 + $0x28] sm:$0xf]
    %v9195 = vld [vmem:[%s6835 + $0x2c] sm:$0x1]
    %v9196 = vld [vmem:[%s6835 + $0x30] sm:$0xe]
    %v9197 = vld [vmem:[%s6835 + $0x34] sm:$0xf]
    %v9198 = vld [vmem:[%s6835 + $0x38] sm:$0x1]
    %v9199 = vld [vmem:[%s6835 + $0x3c] sm:$0xe]
    %v9200 = vld [vmem:[%s6835 + $0x40] sm:$0xf]
    %v9201 = vld [vmem:[%s6835 + $0x44] sm:$0x1]
    %v9202 = vld [vmem:[%s6835 + $0x48] sm:$0xe]
    %v9203 = vld [vmem:[%s6835 + $0x4c] sm:$0xf]
    %v9204 = vld [vmem:[%s6835 + $0x50] sm:$0x1]
    %v9205 = vld [vmem:[%s6835 + $0x54] sm:$0xe]
    %v9206 = vld [vmem:[%s6835 + $0x58] sm:$0xf]
    %v9207 = vld [vmem:[%s6835 + $0x5c] sm:$0x1]
    %v9208 = vld [vmem:[%s6835 + $0x60] sm:$0xe]
    %v9209 = vld [vmem:[%s6835 + $0x64] sm:$0xf]
    %v9210 = vld [vmem:[%s6835 + $0x68] sm:$0x1]
    %v9211 = vld [vmem:[%s6835 + $0x6c] sm:$0xe]
    %v9212 = vld [vmem:[%s6835 + $0x70] sm:$0xf]
    %v9213 = vld [vmem:[%s6835 + $0x74] sm:$0x1]
    %v9214 = vld [vmem:[%s6835 + $0x78] sm:$0xe]
    %v9215 = vld [vmem:[%s6835 + $0x7c] sm:$0xf]
    %v9216 = vld [vmem:[%s6835 + $0x80] sm:$0x1]
    %v9217 = vld [vmem:[%s6835 + $0x84] sm:$0xe]
    %v9218 = vld [vmem:[%s6835 + $0x88] sm:$0xf]
    %v9219 = vld [vmem:[%s6835 + $0x8c] sm:$0x1]
    %v9220 = vld [vmem:[%s6835 + $0x90] sm:$0xe]
    %v9221 = vld [vmem:[%s6835 + $0x94] sm:$0xf]
    %v9222 = vld [vmem:[%s6835 + $0x98] sm:$0x1]
    %v9223 = vld [vmem:[%s6835 + $0x9c] sm:$0xe]
    %v9224 = vld [vmem:[%s6835 + $0xa0] sm:$0xf]
    %v9225 = vld [vmem:[%s6835 + $0xa4] sm:$0x1]
    %v9226 = vld [vmem:[%s6835 + $0xa8] sm:$0xe]
    %v9227 = vld [vmem:[%s6835 + $0xac] sm:$0xf]
    %v9228 = vld [vmem:[%s6835 + $0xb0] sm:$0x1]
    %v9229 = vld [vmem:[%s6835 + $0xb4] sm:$0xe]
    %v9230 = vld [vmem:[%s6835 + $0xb8] sm:$0xf]
    %v9231 = vld [vmem:[%s6835 + $0xbc] sm:$0x1]
    %v9232 = vld [vmem:[%s6835 + $0xd8] sm:$0xe]
    %v9233 = vld [vmem:[%s6835 + $0xdc] sm:$0xf]
    %v9234 = vld [vmem:[%s6835 + $0xe0] sm:$0x1]
    %v9235 = vld [vmem:[%s6835 + $0xe4] sm:$0xe]
    %v9236 = vld [vmem:[%s6835 + $0xe8] sm:$0xf]
    %v9237 = vld [vmem:[%s6835 + $0xec] sm:$0x1]
    %v9238 = vld [vmem:[%s6835 + $0xf0] sm:$0xe]
    %v9239 = vld [vmem:[%s6835 + $0xf4] sm:$0xf]
    %v9240 = vld [vmem:[%s6835 + $0xf8] sm:$0x1]
    %v9241 = vld [vmem:[%s6835 + $0xfc] sm:$0xe]
    %v9242 = vld [vmem:[%s6835 + $0x100] sm:$0xf]
    %v9243 = vld [vmem:[%s6835 + $0x104] sm:$0x1]
    %v9244 = vld [vmem:[%s6835 + $0x108] sm:$0xe]
    %v9245 = vld [vmem:[%s6835 + $0x10c] sm:$0xf]
    %v9246 = vld [vmem:[%s6835 + $0x110] sm:$0x1]
    %v9247 = vld [vmem:[%s6835 + $0x114] sm:$0xe]
    %v9248 = vld [vmem:[%s6835 + $0x118] sm:$0xf]
    %v9249 = vld [vmem:[%s6835 + $0x11c] sm:$0x1]
    %v9250 = vld [vmem:[%s6835 + $0x120] sm:$0xe]
    %v9251 = vld [vmem:[%s6835 + $0x124] sm:$0xf]
    %v9252 = vld [vmem:[%s6835 + $0x128] sm:$0x1]
    %v9253 = vld [vmem:[%s6835 + $0x12c] sm:$0xe]
    %v9254 = vld [vmem:[%s6835 + $0x130] sm:$0xf]
    %v9255 = vld [vmem:[%s6835 + $0x134] sm:$0x1]
    %v9256 = vld [vmem:[%s6835 + $0x138] sm:$0xe]
    %v9257 = vld [vmem:[%s6835 + $0x13c] sm:$0xf]
    %v9258 = vld [vmem:[%s6835 + $0x140] sm:$0x1]
    %v9259 = vld [vmem:[%s6835 + $0x144] sm:$0xe]
    %v9260 = vld [vmem:[%s6835 + $0x148] sm:$0xf]
    %v9261 = vld [vmem:[%s6835 + $0x14c] sm:$0x1]
    %v9262 = vld [vmem:[%s6835 + $0x150] sm:$0xe]
    %v9263 = vld [vmem:[%s6835 + $0x154] sm:$0xf]
    %v9264 = vld [vmem:[%s6835 + $0x158] sm:$0x1]
    %v9265 = vld [vmem:[%s6835 + $0x15c] sm:$0xe]
    %v9266 = vld [vmem:[%s6835 + $0x160] sm:$0xf]
    %v9267 = vld [vmem:[%s6835 + $0x164] sm:$0x1]
    %v9268 = vld [vmem:[%s6835 + $0x168] sm:$0xe]
    %v9269 = vld [vmem:[%s6835 + $0x16c] sm:$0xf]
    %v9270 = vld [vmem:[%s6835 + $0x170] sm:$0x1]
    %v9271 = vld [vmem:[%s6835 + $0x174] sm:$0xe]
    %v9272 = vld [vmem:[%s6835 + $0x178] sm:$0xf]
    %v9273 = vld [vmem:[%s6835 + $0x17c] sm:$0x1]
    %v9274 = vld [vmem:[%s6835 + $0x180] sm:$0xe]
    %v9275 = vld [vmem:[%s6835 + $0x184] sm:$0xf]
    %v9276 = vld [vmem:[%s6835 + $0x188] sm:$0x1]
    %v9277 = vld [vmem:[%s6835 + $0x18c] sm:$0xe]
    %v9278 = vld [vmem:[%s6835 + $0x190] sm:$0xf]
    %v9279 = vld [vmem:[%s6835 + $0x194] sm:$0x1]
    %v9376 = vrot.slane %v9184, 5
    %v9377 = vrot.slane %v9376, 4
    %v9378 = vrot.slane %v9185, 5
    %v9379 = vsel %vm2489, %v9377, %v9378
    %v9380 = vrot.slane %v9378, 4
    %v9381 = vrot.slane %v9186, 5
    %v9382 = vsel %vm2489, %v9380, %v9381
    %v9383 = vrot.slane %v9187, 5
    %v9384 = vrot.slane %v9383, 4
    %v9385 = vrot.slane %v9188, 5
    %v9386 = vsel %vm2489, %v9384, %v9385
    %v9387 = vrot.slane %v9385, 4
    %v9388 = vrot.slane %v9189, 5
    %v9389 = vsel %vm2489, %v9387, %v9388
    %v9390 = vrot.slane %v9190, 5
    %v9391 = vrot.slane %v9390, 4
    %v9392 = vrot.slane %v9191, 5
    %v9393 = vsel %vm2489, %v9391, %v9392
    %v9394 = vrot.slane %v9392, 4
    %v9395 = vrot.slane %v9192, 5
    %v9396 = vsel %vm2489, %v9394, %v9395
    %v9397 = vrot.slane %v9193, 5
    %v9398 = vrot.slane %v9397, 4
    %v9399 = vrot.slane %v9194, 5
    %v9400 = vsel %vm2489, %v9398, %v9399
    %v9401 = vrot.slane %v9399, 4
    %v9402 = vrot.slane %v9195, 5
    %v9403 = vsel %vm2489, %v9401, %v9402
    %v9404 = vrot.slane %v9196, 5
    %v9405 = vrot.slane %v9404, 4
    %v9406 = vrot.slane %v9197, 5
    %v9407 = vsel %vm2489, %v9405, %v9406
    %v9408 = vrot.slane %v9406, 4
    %v9409 = vrot.slane %v9198, 5
    %v9410 = vsel %vm2489, %v9408, %v9409
    %v9411 = vrot.slane %v9199, 5
    %v9412 = vrot.slane %v9411, 4
    %v9413 = vrot.slane %v9200, 5
    %v9414 = vsel %vm2489, %v9412, %v9413
    %v9415 = vrot.slane %v9413, 4
    %v9416 = vrot.slane %v9201, 5
    %v9417 = vsel %vm2489, %v9415, %v9416
    %v9418 = vrot.slane %v9202, 5
    %v9419 = vrot.slane %v9418, 4
    %v9420 = vrot.slane %v9203, 5
    %v9421 = vsel %vm2489, %v9419, %v9420
    %v9422 = vrot.slane %v9420, 4
    %v9423 = vrot.slane %v9204, 5
    %v9424 = vsel %vm2489, %v9422, %v9423
    %v9425 = vrot.slane %v9205, 5
    %v9426 = vrot.slane %v9425, 4
    %v9427 = vrot.slane %v9206, 5
    %v9428 = vsel %vm2489, %v9426, %v9427
    %v9429 = vrot.slane %v9427, 4
    %v9430 = vrot.slane %v9207, 5
    %v9431 = vsel %vm2489, %v9429, %v9430
    %v9432 = vrot.slane %v9208, 5
    %v9433 = vrot.slane %v9432, 4
    %v9434 = vrot.slane %v9209, 5
    %v9435 = vsel %vm2489, %v9433, %v9434
    %v9436 = vrot.slane %v9434, 4
    %v9437 = vrot.slane %v9210, 5
    %v9438 = vsel %vm2489, %v9436, %v9437
    %v9439 = vrot.slane %v9211, 5
    %v9440 = vrot.slane %v9439, 4
    %v9441 = vrot.slane %v9212, 5
    %v9442 = vsel %vm2489, %v9440, %v9441
    %v9443 = vrot.slane %v9441, 4
    %v9444 = vrot.slane %v9213, 5
    %v9445 = vsel %vm2489, %v9443, %v9444
    %v9446 = vrot.slane %v9214, 5
    %v9447 = vrot.slane %v9446, 4
    %v9448 = vrot.slane %v9215, 5
    %v9449 = vsel %vm2489, %v9447, %v9448
    %v9450 = vrot.slane %v9448, 4
    %v9451 = vrot.slane %v9216, 5
    %v9452 = vsel %vm2489, %v9450, %v9451
    %v9453 = vrot.slane %v9217, 5
    %v9454 = vrot.slane %v9453, 4
    %v9455 = vrot.slane %v9218, 5
    %v9456 = vsel %vm2489, %v9454, %v9455
    %v9457 = vrot.slane %v9455, 4
    %v9458 = vrot.slane %v9219, 5
    %v9459 = vsel %vm2489, %v9457, %v9458
    %v9460 = vrot.slane %v9220, 5
    %v9461 = vrot.slane %v9460, 4
    %v9462 = vrot.slane %v9221, 5
    %v9463 = vsel %vm2489, %v9461, %v9462
    %v9464 = vrot.slane %v9462, 4
    %v9465 = vrot.slane %v9222, 5
    %v9466 = vsel %vm2489, %v9464, %v9465
    %v9467 = vrot.slane %v9223, 5
    %v9468 = vrot.slane %v9467, 4
    %v9469 = vrot.slane %v9224, 5
    %v9470 = vsel %vm2489, %v9468, %v9469
    %v9471 = vrot.slane %v9469, 4
    %v9472 = vrot.slane %v9225, 5
    %v9473 = vsel %vm2489, %v9471, %v9472
    %v9474 = vrot.slane %v9226, 5
    %v9475 = vrot.slane %v9474, 4
    %v9476 = vrot.slane %v9227, 5
    %v9477 = vsel %vm2489, %v9475, %v9476
    %v9478 = vrot.slane %v9476, 4
    %v9479 = vrot.slane %v9228, 5
    %v9480 = vsel %vm2489, %v9478, %v9479
    %v9481 = vrot.slane %v9229, 5
    %v9482 = vrot.slane %v9481, 4
    %v9483 = vrot.slane %v9230, 5
    %v9484 = vsel %vm2489, %v9482, %v9483
    %v9485 = vrot.slane %v9483, 4
    %v9486 = vrot.slane %v9231, 5
    %v9487 = vsel %vm2489, %v9485, %v9486
    %v9488 = vrot.slane %v9232, 5
    %v9489 = vrot.slane %v9488, 4
    %v9490 = vrot.slane %v9233, 5
    %v9491 = vsel %vm2489, %v9489, %v9490
    %v9492 = vrot.slane %v9490, 4
    %v9493 = vrot.slane %v9234, 5
    %v9494 = vsel %vm2489, %v9492, %v9493
    %v9495 = vrot.slane %v9235, 5
    %v9496 = vrot.slane %v9495, 4
    %v9497 = vrot.slane %v9236, 5
    %v9498 = vsel %vm2489, %v9496, %v9497
    %v9499 = vrot.slane %v9497, 4
    %v9500 = vrot.slane %v9237, 5
    %v9501 = vsel %vm2489, %v9499, %v9500
    %v9502 = vrot.slane %v9238, 5
    %v9503 = vrot.slane %v9502, 4
    %v9504 = vrot.slane %v9239, 5
    %v9505 = vsel %vm2489, %v9503, %v9504
    %v9506 = vrot.slane %v9504, 4
    %v9507 = vrot.slane %v9240, 5
    %v9508 = vsel %vm2489, %v9506, %v9507
    %v9509 = vrot.slane %v9241, 5
    %v9510 = vrot.slane %v9509, 4
    %v9511 = vrot.slane %v9242, 5
    %v9512 = vsel %vm2489, %v9510, %v9511
    %v9513 = vrot.slane %v9511, 4
    %v9514 = vrot.slane %v9243, 5
    %v9515 = vsel %vm2489, %v9513, %v9514
    %v9516 = vrot.slane %v9244, 5
    %v9517 = vrot.slane %v9516, 4
    %v9518 = vrot.slane %v9245, 5
    %v9519 = vsel %vm2489, %v9517, %v9518
    %v9520 = vrot.slane %v9518, 4
    %v9521 = vrot.slane %v9246, 5
    %v9522 = vsel %vm2489, %v9520, %v9521
    %v9523 = vrot.slane %v9247, 5
    %v9524 = vrot.slane %v9523, 4
    %v9525 = vrot.slane %v9248, 5
    %v9526 = vsel %vm2489, %v9524, %v9525
    %v9527 = vrot.slane %v9525, 4
    %v9528 = vrot.slane %v9249, 5
    %v9529 = vsel %vm2489, %v9527, %v9528
    %v9530 = vrot.slane %v9250, 5
    %v9531 = vrot.slane %v9530, 4
    %v9532 = vrot.slane %v9251, 5
    %v9533 = vsel %vm2489, %v9531, %v9532
    %v9534 = vrot.slane %v9532, 4
    %v9535 = vrot.slane %v9252, 5
    %v9536 = vsel %vm2489, %v9534, %v9535
    %v9537 = vrot.slane %v9253, 5
    %v9538 = vrot.slane %v9537, 4
    %v9539 = vrot.slane %v9254, 5
    %v9540 = vsel %vm2489, %v9538, %v9539
    %v9541 = vrot.slane %v9539, 4
    %v9542 = vrot.slane %v9255, 5
    %v9543 = vsel %vm2489, %v9541, %v9542
    %v9544 = vrot.slane %v9256, 5
    %v9545 = vrot.slane %v9544, 4
    %v9546 = vrot.slane %v9257, 5
    %v9547 = vsel %vm2489, %v9545, %v9546
    %v9548 = vrot.slane %v9546, 4
    %v9549 = vrot.slane %v9258, 5
    %v9550 = vsel %vm2489, %v9548, %v9549
    %v9551 = vrot.slane %v9259, 5
    %v9552 = vrot.slane %v9551, 4
    %v9553 = vrot.slane %v9260, 5
    %v9554 = vsel %vm2489, %v9552, %v9553
    %v9555 = vrot.slane %v9553, 4
    %v9556 = vrot.slane %v9261, 5
    %v9557 = vsel %vm2489, %v9555, %v9556
    %v9558 = vrot.slane %v9262, 5
    %v9559 = vrot.slane %v9558, 4
    %v9560 = vrot.slane %v9263, 5
    %v9561 = vsel %vm2489, %v9559, %v9560
    %v9562 = vrot.slane %v9560, 4
    %v9563 = vrot.slane %v9264, 5
    %v9564 = vsel %vm2489, %v9562, %v9563
    %v9565 = vrot.slane %v9265, 5
    %v9566 = vrot.slane %v9565, 4
    %v9567 = vrot.slane %v9266, 5
    %v9568 = vsel %vm2489, %v9566, %v9567
    %v9569 = vrot.slane %v9567, 4
    %v9570 = vrot.slane %v9267, 5
    %v9571 = vsel %vm2489, %v9569, %v9570
    %v9572 = vrot.slane %v9268, 5
    %v9573 = vrot.slane %v9572, 4
    %v9574 = vrot.slane %v9269, 5
    %v9575 = vsel %vm2489, %v9573, %v9574
    %v9576 = vrot.slane %v9574, 4
    %v9577 = vrot.slane %v9270, 5
    %v9578 = vsel %vm2489, %v9576, %v9577
    %v9579 = vrot.slane %v9271, 5
    %v9580 = vrot.slane %v9579, 4
    %v9581 = vrot.slane %v9272, 5
    %v9582 = vsel %vm2489, %v9580, %v9581
    %v9583 = vrot.slane %v9581, 4
    %v9584 = vrot.slane %v9273, 5
    %v9585 = vsel %vm2489, %v9583, %v9584
    %v9586 = vrot.slane %v9274, 5
    %v9587 = vrot.slane %v9586, 4
    %v9588 = vrot.slane %v9275, 5
    %v9589 = vsel %vm2489, %v9587, %v9588
    %v9590 = vrot.slane %v9588, 4
    %v9591 = vrot.slane %v9276, 5
    %v9592 = vsel %vm2489, %v9590, %v9591
    %v9593 = vrot.slane %v9277, 5
    %v9594 = vrot.slane %v9593, 4
    %v9595 = vrot.slane %v9278, 5
    %v9596 = vsel %vm2489, %v9594, %v9595
    %v9597 = vrot.slane %v9595, 4
    %v9598 = vrot.slane %v9279, 5
    %v9599 = vsel %vm2489, %v9597, %v9598
    %s9600 = scalar_lea.vmem [#allocation6], 16
    %v9601 = vld [vmem:[%s9600] sm:$0x3]
    %v9602 = vunpack.c.l.b16 %v9379
    %v9603 = vunpack.c.l.b16 %v9382
    %v9604 = vunpack.c.l.b16 %v9386
    %v9605 = vunpack.c.l.b16 %v9389
    %v9606 = vunpack.c.l.b16 %v9393
    %v9607 = vunpack.c.l.b16 %v9396
    %v9608 = vunpack.c.l.b16 %v9400
    %v9609 = vunpack.c.l.b16 %v9403
    %v9610 = vunpack.c.l.b16 %v9407
    %v9611 = vunpack.c.l.b16 %v9410
    %v9612 = vunpack.c.l.b16 %v9414
    %v9613 = vunpack.c.l.b16 %v9417
    %v9614 = vunpack.c.l.b16 %v9421
    %v9615 = vunpack.c.l.b16 %v9424
    %v9616 = vunpack.c.l.b16 %v9428
    %v9617 = vunpack.c.l.b16 %v9431
    %v9618 = vunpack.c.l.b16 %v9435
    %v9619 = vunpack.c.l.b16 %v9438
    %v9620 = vunpack.c.l.b16 %v9442
    %v9621 = vunpack.c.l.b16 %v9445
    %v9622 = vunpack.c.l.b16 %v9449
    %v9623 = vunpack.c.l.b16 %v9452
    %v9624 = vunpack.c.l.b16 %v9456
    %v9625 = vunpack.c.l.b16 %v9459
    %v9626 = vunpack.c.l.b16 %v9463
    %v9627 = vunpack.c.l.b16 %v9466
    %v9628 = vunpack.c.l.b16 %v9470
    %v9629 = vunpack.c.l.b16 %v9473
    %v9630 = vunpack.c.l.b16 %v9477
    %v9631 = vunpack.c.l.b16 %v9480
    %v9632 = vunpack.c.l.b16 %v9484
    %v9633 = vunpack.c.l.b16 %v9487
    %v9634 = vunpack.c.l.b16 %v9491
    %v9635 = vunpack.c.l.b16 %v9494
    %v9636 = vunpack.c.l.b16 %v9498
    %v9637 = vunpack.c.l.b16 %v9501
    %v9638 = vunpack.c.l.b16 %v9505
    %v9639 = vunpack.c.l.b16 %v9508
    %v9640 = vunpack.c.l.b16 %v9512
    %v9641 = vunpack.c.l.b16 %v9515
    %v9642 = vunpack.c.l.b16 %v9519
    %v9643 = vunpack.c.l.b16 %v9522
    %v9644 = vunpack.c.l.b16 %v9526
    %v9645 = vunpack.c.l.b16 %v9529
    %v9646 = vunpack.c.l.b16 %v9533
    %v9647 = vunpack.c.l.b16 %v9536
    %v9648 = vunpack.c.l.b16 %v9540
    %v9649 = vunpack.c.l.b16 %v9543
    %v9650 = vunpack.c.l.b16 %v9547
    %v9651 = vunpack.c.l.b16 %v9550
    %v9652 = vunpack.c.l.b16 %v9554
    %v9653 = vunpack.c.l.b16 %v9557
    %v9654 = vunpack.c.l.b16 %v9561
    %v9655 = vunpack.c.l.b16 %v9564
    %v9656 = vunpack.c.l.b16 %v9568
    %v9657 = vunpack.c.l.b16 %v9571
    %v9658 = vunpack.c.l.b16 %v9575
    %v9659 = vunpack.c.l.b16 %v9578
    %v9660 = vunpack.c.l.b16 %v9582
    %v9661 = vunpack.c.l.b16 %v9585
    %v9662 = vunpack.c.l.b16 %v9589
    %v9663 = vunpack.c.l.b16 %v9592
    %v9664 = vunpack.c.l.b16 %v9596
    %v9665 = vunpack.c.l.b16 %v9599
    %v9666 = vpack.c.b16 %v9603, %v9602
    %v9667 = vpack.c.b16 %v9605, %v9604
    %v9668 = vpack.c.b16 %v9607, %v9606
    %v9669 = vpack.c.b16 %v9609, %v9608
    %v9670 = vpack.c.b16 %v9611, %v9610
    %v9671 = vpack.c.b16 %v9613, %v9612
    %v9672 = vpack.c.b16 %v9615, %v9614
    %v9673 = vpack.c.b16 %v9617, %v9616
    %v9674 = vpack.c.b16 %v9619, %v9618
    %v9675 = vpack.c.b16 %v9621, %v9620
    %v9676 = vpack.c.b16 %v9623, %v9622
    %v9677 = vpack.c.b16 %v9625, %v9624
    %v9678 = vpack.c.b16 %v9627, %v9626
    %v9679 = vpack.c.b16 %v9629, %v9628
    %v9680 = vpack.c.b16 %v9631, %v9630
    %v9681 = vpack.c.b16 %v9633, %v9632
    %v9682 = vpack.c.b16 %v9635, %v9634
    %v9683 = vpack.c.b16 %v9637, %v9636
    %v9684 = vpack.c.b16 %v9639, %v9638
    %v9685 = vpack.c.b16 %v9641, %v9640
    %v9686 = vpack.c.b16 %v9643, %v9642
    %v9687 = vpack.c.b16 %v9645, %v9644
    %v9688 = vpack.c.b16 %v9647, %v9646
    %v9689 = vpack.c.b16 %v9649, %v9648
    %v9690 = vpack.c.b16 %v9651, %v9650
    %v9691 = vpack.c.b16 %v9653, %v9652
    %v9692 = vpack.c.b16 %v9655, %v9654
    %v9693 = vpack.c.b16 %v9657, %v9656
    %v9694 = vpack.c.b16 %v9659, %v9658
    %v9695 = vpack.c.b16 %v9661, %v9660
    %v9696 = vpack.c.b16 %v9663, %v9662
    %v9697 = vpack.c.b16 %v9665, %v9664
    %v9699 = vsel %vm295, %v9666, 0
    %v9702 = vsel %vm295, %v9667, 0
    %v9705 = vsel %vm295, %v9668, 0
    %v9708 = vsel %vm295, %v9669, 0
    %v9711 = vsel %vm295, %v9670, 0
    %v9714 = vsel %vm295, %v9671, 0
    %v9717 = vsel %vm295, %v9672, 0
    %v9720 = vsel %vm295, %v9673, 0
    %v9723 = vsel %vm295, %v9674, 0
    %v9726 = vsel %vm295, %v9675, 0
    %v9729 = vsel %vm295, %v9676, 0
    %v9732 = vsel %vm295, %v9677, 0
    %v9735 = vsel %vm295, %v9678, 0
    %v9738 = vsel %vm295, %v9679, 0
    %v9741 = vsel %vm295, %v9680, 0
    %v9744 = vsel %vm295, %v9681, 0
    %v9747 = vsel %vm295, %v9682, 0
    %v9750 = vsel %vm295, %v9683, 0
    %v9753 = vsel %vm295, %v9684, 0
    %v9756 = vsel %vm295, %v9685, 0
    %v9759 = vsel %vm295, %v9686, 0
    %v9762 = vsel %vm295, %v9687, 0
    %v9765 = vsel %vm295, %v9688, 0
    %v9768 = vsel %vm295, %v9689, 0
    %v9771 = vsel %vm295, %v9690, 0
    %v9774 = vsel %vm295, %v9691, 0
    %v9777 = vsel %vm295, %v9692, 0
    %v9780 = vsel %vm295, %v9693, 0
    %v9783 = vsel %vm295, %v9694, 0
    %v9786 = vsel %vm295, %v9695, 0
    %v9789 = vsel %vm295, %v9696, 0
    %v9792 = vsel %vm295, %v9697, 0
    %v9795 = vsel %vm392, %v9601, 0
    %9797 = vmatprep.subr.bf16.mxu0 0
    %9798 = vmatpush1.bf16.msra.mxu0 %v9795
    %9799 = vmatprep.subr.bf16.mxu0 0
    %9800 = vmatpush1.bf16.msra.mxu0 0
    %9801 = vmatprep.subr.bf16.mxu0 0
    %9802 = vmatpush1.bf16.msra.mxu0 0
    %9803 = vmatprep.subr.bf16.mxu0 0
    %9804 = vmatpush1.bf16.msra.mxu0 0
    %9805 = vmatprep.subr.bf16.mxu0 0
    %9806 = vmatpush1.bf16.msra.mxu0 0
    %9807 = vmatprep.subr.bf16.mxu0 0
    %9808 = vmatpush1.bf16.msra.mxu0 0
    %9809 = vmatprep.subr.bf16.mxu0 0
    %9810 = vmatpush1.bf16.msra.mxu0 0
    %9811 = vmatprep.subr.bf16.mxu0 0
    %9812 = vmatpush1.bf16.msra.mxu0 0
    %9813 = vmatprep.subr.bf16.mxu0 0
    %9814 = vmatpush1.bf16.msra.mxu0 0
    %9815 = vmatprep.subr.bf16.mxu0 0
    %9816 = vmatpush1.bf16.msra.mxu0 0
    %9817 = vmatprep.subr.bf16.mxu0 0
    %9818 = vmatpush1.bf16.msra.mxu0 0
    %9819 = vmatprep.subr.bf16.mxu0 0
    %9820 = vmatpush1.bf16.msra.mxu0 0
    %9821 = vmatprep.subr.bf16.mxu0 0
    %9822 = vmatpush1.bf16.msra.mxu0 0
    %9823 = vmatprep.subr.bf16.mxu0 0
    %9824 = vmatpush1.bf16.msra.mxu0 0
    %9825 = vmatprep.subr.bf16.mxu0 0
    %9826 = vmatpush1.bf16.msra.mxu0 0
    %9827 = vmatprep.subr.bf16.mxu0 0
    %9828 = vmatpush1.bf16.msra.mxu0 0
    %9829 = vmatprep.mubr.bf16.mxu0 0
    %9830 = vmatmul.mubr.bf16.gmra.mrb[0].mxu0 %v9699
    %v9831 = vpop.f32.mrb[0].mxu0
    %v9832 = vadd.f32 0.0, %v9831
    %v9833 = vpop.f32.mrb[0].mxu0
    %v9834 = vpop.f32.mrb[0].mxu0
    %v9835 = vadd.f32 0.0, %v9834
    %v9836 = vpop.f32.mrb[0].mxu0
    %9837 = vmatprep.mubr.bf16.mxu0 0
    %9838 = vmatmul.mubr.bf16.gmra.mrb[0].mxu0 %v9702
    %v9839 = vpop.f32.mrb[0].mxu0
    %v9840 = vadd.f32 0.0, %v9839
    %v9841 = vpop.f32.mrb[0].mxu0
    %v9842 = vpop.f32.mrb[0].mxu0
    %v9843 = vadd.f32 0.0, %v9842
    %v9844 = vpop.f32.mrb[0].mxu0
    %9845 = vmatprep.mubr.bf16.mxu0 0
    %9846 = vmatmul.mubr.bf16.gmra.mrb[0].mxu0 %v9705
    %v9847 = vpop.f32.mrb[0].mxu0
    %v9848 = vadd.f32 0.0, %v9847
    %v9849 = vpop.f32.mrb[0].mxu0
    %v9850 = vpop.f32.mrb[0].mxu0
    %v9851 = vadd.f32 0.0, %v9850
    %v9852 = vpop.f32.mrb[0].mxu0
    %9853 = vmatprep.mubr.bf16.mxu0 0
    %9854 = vmatmul.mubr.bf16.gmra.mrb[0].mxu0 %v9708
    %v9855 = vpop.f32.mrb[0].mxu0
    %v9856 = vadd.f32 0.0, %v9855
    %v9857 = vpop.f32.mrb[0].mxu0
    %v9858 = vpop.f32.mrb[0].mxu0
    %v9859 = vadd.f32 0.0, %v9858
    %v9860 = vpop.f32.mrb[0].mxu0
    %9861 = vmatprep.mubr.bf16.mxu0 0
    %9862 = vmatmul.mubr.bf16.gmra.mrb[0].mxu0 %v9711
    %v9863 = vpop.f32.mrb[0].mxu0
    %v9864 = vadd.f32 0.0, %v9863
    %v9865 = vpop.f32.mrb[0].mxu0
    %v9866 = vpop.f32.mrb[0].mxu0
    %v9867 = vadd.f32 0.0, %v9866
    %v9868 = vpop.f32.mrb[0].mxu0
    %9869 = vmatprep.mubr.bf16.mxu0 0
    %9870 = vmatmul.mubr.bf16.gmra.mrb[0].mxu0 %v9714
    %v9871 = vpop.f32.mrb[0].mxu0
    %v9872 = vadd.f32 0.0, %v9871
    %v9873 = vpop.f32.mrb[0].mxu0
    %v9874 = vpop.f32.mrb[0].mxu0
    %v9875 = vadd.f32 0.0, %v9874
    %v9876 = vpop.f32.mrb[0].mxu0
    %9877 = vmatprep.mubr.bf16.mxu0 0
    %9878 = vmatmul.mubr.bf16.gmra.mrb[0].mxu0 %v9717
    %v9879 = vpop.f32.mrb[0].mxu0
    %v9880 = vadd.f32 0.0, %v9879
    %v9881 = vpop.f32.mrb[0].mxu0
    %v9882 = vpop.f32.mrb[0].mxu0
    %v9883 = vadd.f32 0.0, %v9882
    %v9884 = vpop.f32.mrb[0].mxu0
    %9885 = vmatprep.mubr.bf16.mxu0 0
    %9886 = vmatmul.mubr.bf16.gmra.mrb[0].mxu0 %v9720
    %v9887 = vpop.f32.mrb[0].mxu0
    %v9888 = vadd.f32 0.0, %v9887
    %v9889 = vpop.f32.mrb[0].mxu0
    %v9890 = vpop.f32.mrb[0].mxu0
    %v9891 = vadd.f32 0.0, %v9890
    %v9892 = vpop.f32.mrb[0].mxu0
    %9893 = vmatprep.mubr.bf16.mxu0 0
    %9894 = vmatmul.mubr.bf16.gmra.mrb[0].mxu0 %v9723
    %v9895 = vpop.f32.mrb[0].mxu0
    %v9896 = vadd.f32 0.0, %v9895
    %v9897 = vpop.f32.mrb[0].mxu0
    %v9898 = vpop.f32.mrb[0].mxu0
    %v9899 = vadd.f32 0.0, %v9898
    %v9900 = vpop.f32.mrb[0].mxu0
    %9901 = vmatprep.mubr.bf16.mxu0 0
    %9902 = vmatmul.mubr.bf16.gmra.mrb[0].mxu0 %v9726
    %v9903 = vpop.f32.mrb[0].mxu0
    %v9904 = vadd.f32 0.0, %v9903
    %v9905 = vpop.f32.mrb[0].mxu0
    %v9906 = vpop.f32.mrb[0].mxu0
    %v9907 = vadd.f32 0.0, %v9906
    %v9908 = vpop.f32.mrb[0].mxu0
    %9909 = vmatprep.mubr.bf16.mxu0 0
    %9910 = vmatmul.mubr.bf16.gmra.mrb[0].mxu0 %v9729
    %v9911 = vpop.f32.mrb[0].mxu0
    %v9912 = vadd.f32 0.0, %v9911
    %v9913 = vpop.f32.mrb[0].mxu0
    %v9914 = vpop.f32.mrb[0].mxu0
    %v9915 = vadd.f32 0.0, %v9914
    %v9916 = vpop.f32.mrb[0].mxu0
    %9917 = vmatprep.mubr.bf16.mxu0 0
    %9918 = vmatmul.mubr.bf16.gmra.mrb[0].mxu0 %v9732
    %v9919 = vpop.f32.mrb[0].mxu0
    %v9920 = vadd.f32 0.0, %v9919
    %v9921 = vpop.f32.mrb[0].mxu0
    %v9922 = vpop.f32.mrb[0].mxu0
    %v9923 = vadd.f32 0.0, %v9922
    %v9924 = vpop.f32.mrb[0].mxu0
    %9925 = vmatprep.mubr.bf16.mxu0 0
    %9926 = vmatmul.mubr.bf16.gmra.mrb[0].mxu0 %v9735
    %v9927 = vpop.f32.mrb[0].mxu0
    %v9928 = vadd.f32 0.0, %v9927
    %v9929 = vpop.f32.mrb[0].mxu0
    %v9930 = vpop.f32.mrb[0].mxu0
    %v9931 = vadd.f32 0.0, %v9930
    %v9932 = vpop.f32.mrb[0].mxu0
    %9933 = vmatprep.mubr.bf16.mxu0 0
    %9934 = vmatmul.mubr.bf16.gmra.mrb[0].mxu0 %v9738
    %v9935 = vpop.f32.mrb[0].mxu0
    %v9936 = vadd.f32 0.0, %v9935
    %v9937 = vpop.f32.mrb[0].mxu0
    %v9938 = vpop.f32.mrb[0].mxu0
    %v9939 = vadd.f32 0.0, %v9938
    %v9940 = vpop.f32.mrb[0].mxu0
    %9941 = vmatprep.mubr.bf16.mxu0 0
    %9942 = vmatmul.mubr.bf16.gmra.mrb[0].mxu0 %v9741
    %v9943 = vpop.f32.mrb[0].mxu0
    %v9944 = vadd.f32 0.0, %v9943
    %v9945 = vpop.f32.mrb[0].mxu0
    %v9946 = vpop.f32.mrb[0].mxu0
    %v9947 = vadd.f32 0.0, %v9946
    %v9948 = vpop.f32.mrb[0].mxu0
    %9949 = vmatprep.mubr.bf16.mxu0 0
    %9950 = vmatmul.mubr.bf16.gmra.mrb[0].mxu0 %v9744
    %v9951 = vpop.f32.mrb[0].mxu0
    %v9952 = vadd.f32 0.0, %v9951
    %v9953 = vpop.f32.mrb[0].mxu0
    %v9954 = vpop.f32.mrb[0].mxu0
    %v9955 = vadd.f32 0.0, %v9954
    %v9956 = vpop.f32.mrb[0].mxu0
    %9957 = vmatprep.mubr.bf16.mxu0 0
    %9958 = vmatmul.mubr.bf16.gmra.mrb[0].mxu0 %v9747
    %v9959 = vpop.f32.mrb[0].mxu0
    %v9960 = vadd.f32 0.0, %v9959
    %v9961 = vpop.f32.mrb[0].mxu0
    %v9962 = vpop.f32.mrb[0].mxu0
    %v9963 = vadd.f32 0.0, %v9962
    %v9964 = vpop.f32.mrb[0].mxu0
    %9965 = vmatprep.mubr.bf16.mxu0 0
    %9966 = vmatmul.mubr.bf16.gmra.mrb[0].mxu0 %v9750
    %v9967 = vpop.f32.mrb[0].mxu0
    %v9968 = vadd.f32 0.0, %v9967
    %v9969 = vpop.f32.mrb[0].mxu0
    %v9970 = vpop.f32.mrb[0].mxu0
    %v9971 = vadd.f32 0.0, %v9970
    %v9972 = vpop.f32.mrb[0].mxu0
    %9973 = vmatprep.mubr.bf16.mxu0 0
    %9974 = vmatmul.mubr.bf16.gmra.mrb[0].mxu0 %v9753
    %v9975 = vpop.f32.mrb[0].mxu0
    %v9976 = vadd.f32 0.0, %v9975
    %v9977 = vpop.f32.mrb[0].mxu0
    %v9978 = vpop.f32.mrb[0].mxu0
    %v9979 = vadd.f32 0.0, %v9978
    %v9980 = vpop.f32.mrb[0].mxu0
    %9981 = vmatprep.mubr.bf16.mxu0 0
    %9982 = vmatmul.mubr.bf16.gmra.mrb[0].mxu0 %v9756
    %v9983 = vpop.f32.mrb[0].mxu0
    %v9984 = vadd.f32 0.0, %v9983
    %v9985 = vpop.f32.mrb[0].mxu0
    %v9986 = vpop.f32.mrb[0].mxu0
    %v9987 = vadd.f32 0.0, %v9986
    %v9988 = vpop.f32.mrb[0].mxu0
    %9989 = vmatprep.mubr.bf16.mxu0 0
    %9990 = vmatmul.mubr.bf16.gmra.mrb[0].mxu0 %v9759
    %v9991 = vpop.f32.mrb[0].mxu0
    %v9992 = vadd.f32 0.0, %v9991
    %v9993 = vpop.f32.mrb[0].mxu0
    %v9994 = vpop.f32.mrb[0].mxu0
    %v9995 = vadd.f32 0.0, %v9994
    %v9996 = vpop.f32.mrb[0].mxu0
    %9997 = vmatprep.mubr.bf16.mxu0 0
    %9998 = vmatmul.mubr.bf16.gmra.mrb[0].mxu0 %v9762
    %v9999 = vpop.f32.mrb[0].mxu0
    %v10000 = vadd.f32 0.0, %v9999
    %v10001 = vpop.f32.mrb[0].mxu0
    %v10002 = vpop.f32.mrb[0].mxu0
    %v10003 = vadd.f32 0.0, %v10002
    %v10004 = vpop.f32.mrb[0].mxu0
    %10005 = vmatprep.mubr.bf16.mxu0 0
    %10006 = vmatmul.mubr.bf16.gmra.mrb[0].mxu0 %v9765
    %v10007 = vpop.f32.mrb[0].mxu0
    %v10008 = vadd.f32 0.0, %v10007
    %v10009 = vpop.f32.mrb[0].mxu0
    %v10010 = vpop.f32.mrb[0].mxu0
    %v10011 = vadd.f32 0.0, %v10010
    %v10012 = vpop.f32.mrb[0].mxu0
    %10013 = vmatprep.mubr.bf16.mxu0 0
    %10014 = vmatmul.mubr.bf16.gmra.mrb[0].mxu0 %v9768
    %v10015 = vpop.f32.mrb[0].mxu0
    %v10016 = vadd.f32 0.0, %v10015
    %v10017 = vpop.f32.mrb[0].mxu0
    %v10018 = vpop.f32.mrb[0].mxu0
    %v10019 = vadd.f32 0.0, %v10018
    %v10020 = vpop.f32.mrb[0].mxu0
    %10021 = vmatprep.mubr.bf16.mxu0 0
    %10022 = vmatmul.mubr.bf16.gmra.mrb[0].mxu0 %v9771
    %v10023 = vpop.f32.mrb[0].mxu0
    %v10024 = vadd.f32 0.0, %v10023
    %v10025 = vpop.f32.mrb[0].mxu0
    %v10026 = vpop.f32.mrb[0].mxu0
    %v10027 = vadd.f32 0.0, %v10026
    %v10028 = vpop.f32.mrb[0].mxu0
    %10029 = vmatprep.mubr.bf16.mxu0 0
    %10030 = vmatmul.mubr.bf16.gmra.mrb[0].mxu0 %v9774
    %v10031 = vpop.f32.mrb[0].mxu0
    %v10032 = vadd.f32 0.0, %v10031
    %v10033 = vpop.f32.mrb[0].mxu0
    %v10034 = vpop.f32.mrb[0].mxu0
    %v10035 = vadd.f32 0.0, %v10034
    %v10036 = vpop.f32.mrb[0].mxu0
    %10037 = vmatprep.mubr.bf16.mxu0 0
    %10038 = vmatmul.mubr.bf16.gmra.mrb[0].mxu0 %v9777
    %v10039 = vpop.f32.mrb[0].mxu0
    %v10040 = vadd.f32 0.0, %v10039
    %v10041 = vpop.f32.mrb[0].mxu0
    %v10042 = vpop.f32.mrb[0].mxu0
    %v10043 = vadd.f32 0.0, %v10042
    %v10044 = vpop.f32.mrb[0].mxu0
    %10045 = vmatprep.mubr.bf16.mxu0 0
    %10046 = vmatmul.mubr.bf16.gmra.mrb[0].mxu0 %v9780
    %v10047 = vpop.f32.mrb[0].mxu0
    %v10048 = vadd.f32 0.0, %v10047
    %v10049 = vpop.f32.mrb[0].mxu0
    %v10050 = vpop.f32.mrb[0].mxu0
    %v10051 = vadd.f32 0.0, %v10050
    %v10052 = vpop.f32.mrb[0].mxu0
    %10053 = vmatprep.mubr.bf16.mxu0 0
    %10054 = vmatmul.mubr.bf16.gmra.mrb[0].mxu0 %v9783
    %v10055 = vpop.f32.mrb[0].mxu0
    %v10056 = vadd.f32 0.0, %v10055
    %v10057 = vpop.f32.mrb[0].mxu0
    %v10058 = vpop.f32.mrb[0].mxu0
    %v10059 = vadd.f32 0.0, %v10058
    %v10060 = vpop.f32.mrb[0].mxu0
    %10061 = vmatprep.mubr.bf16.mxu0 0
    %10062 = vmatmul.mubr.bf16.gmra.mrb[0].mxu0 %v9786
    %v10063 = vpop.f32.mrb[0].mxu0
    %v10064 = vadd.f32 0.0, %v10063
    %v10065 = vpop.f32.mrb[0].mxu0
    %v10066 = vpop.f32.mrb[0].mxu0
    %v10067 = vadd.f32 0.0, %v10066
    %v10068 = vpop.f32.mrb[0].mxu0
    %10069 = vmatprep.mubr.bf16.mxu0 0
    %10070 = vmatmul.mubr.bf16.gmra.mrb[0].mxu0 %v9789
    %v10071 = vpop.f32.mrb[0].mxu0
    %v10072 = vadd.f32 0.0, %v10071
    %v10073 = vpop.f32.mrb[0].mxu0
    %v10074 = vpop.f32.mrb[0].mxu0
    %v10075 = vadd.f32 0.0, %v10074
    %v10076 = vpop.f32.mrb[0].mxu0
    %10077 = vmatprep.mubr.bf16.mxu0 0
    %10078 = vmatmul.mubr.bf16.gmra.mrb[0].mxu0 %v9792
    %v10079 = vpop.f32.mrb[0].mxu0
    %v10080 = vadd.f32 0.0, %v10079
    %v10081 = vpop.f32.mrb[0].mxu0
    %v10082 = vpop.f32.mrb[0].mxu0
    %v10083 = vadd.f32 0.0, %v10082
    %v10084 = vpop.f32.mrb[0].mxu0
    %10085 = vdwg.mxu0
    %v10086 = vld [vmem:[#allocation2] sm:$0xff]
    %v10087 = vld [vmem:[#allocation2 + $0x8] sm:$0xff]
    %v10088 = vld [vmem:[#allocation2 + $0x10] sm:$0xff]
    %v10089 = vld [vmem:[#allocation2 + $0x18] sm:$0xff]
    %v10090 = vld [vmem:[#allocation2 + $0x20] sm:$0xff]
    %v10091 = vld [vmem:[#allocation2 + $0x28] sm:$0xff]
    %v10092 = vld [vmem:[#allocation2 + $0x30] sm:$0xff]
    %v10093 = vld [vmem:[#allocation2 + $0x38] sm:$0xff]
    %v10094 = vld [vmem:[#allocation2 + $0x40] sm:$0xff]
    %v10095 = vld [vmem:[#allocation2 + $0x48] sm:$0xff]
    %v10096 = vld [vmem:[#allocation2 + $0x50] sm:$0xff]
    %v10097 = vld [vmem:[#allocation2 + $0x58] sm:$0xff]
    %v10098 = vld [vmem:[#allocation2 + $0x60] sm:$0xff]
    %v10099 = vld [vmem:[#allocation2 + $0x68] sm:$0xff]
    %v10100 = vld [vmem:[#allocation2 + $0x70] sm:$0xff]
    %v10101 = vld [vmem:[#allocation2 + $0x78] sm:$0xff]
    %v10102 = vld [vmem:[#allocation2 + $0x80] sm:$0xff]
    %v10103 = vld [vmem:[#allocation2 + $0x88] sm:$0xff]
    %v10104 = vld [vmem:[#allocation2 + $0x90] sm:$0xff]
    %v10105 = vld [vmem:[#allocation2 + $0x98] sm:$0xff]
    %v10106 = vld [vmem:[#allocation2 + $0xa0] sm:$0xff]
    %v10107 = vld [vmem:[#allocation2 + $0xa8] sm:$0xff]
    %v10108 = vld [vmem:[#allocation2 + $0xb0] sm:$0xff]
    %v10109 = vld [vmem:[#allocation2 + $0xb8] sm:$0xff]
    %v10110 = vld [vmem:[#allocation2 + $0xc0] sm:$0xff]
    %v10111 = vld [vmem:[#allocation2 + $0xc8] sm:$0xff]
    %v10112 = vld [vmem:[#allocation2 + $0xd0] sm:$0xff]
    %v10113 = vld [vmem:[#allocation2 + $0xd8] sm:$0xff]
    %v10114 = vld [vmem:[#allocation2 + $0xe0] sm:$0xff]
    %v10115 = vld [vmem:[#allocation2 + $0xe8] sm:$0xff]
    %v10116 = vld [vmem:[#allocation2 + $0xf0] sm:$0xff]
    %v10117 = vld [vmem:[#allocation2 + $0xf8] sm:$0xff]
    %v10118 = vld [vmem:[#allocation2 + $0x100] sm:$0xff]
    %v10119 = vld [vmem:[#allocation2 + $0x108] sm:$0xff]
    %v10120 = vld [vmem:[#allocation2 + $0x110] sm:$0xff]
    %v10121 = vld [vmem:[#allocation2 + $0x118] sm:$0xff]
    %v10122 = vld [vmem:[#allocation2 + $0x120] sm:$0xff]
    %v10123 = vld [vmem:[#allocation2 + $0x128] sm:$0xff]
    %v10124 = vld [vmem:[#allocation2 + $0x130] sm:$0xff]
    %v10125 = vld [vmem:[#allocation2 + $0x138] sm:$0xff]
    %v10126 = vld [vmem:[#allocation2 + $0x140] sm:$0xff]
    %v10127 = vld [vmem:[#allocation2 + $0x148] sm:$0xff]
    %v10128 = vld [vmem:[#allocation2 + $0x150] sm:$0xff]
    %v10129 = vld [vmem:[#allocation2 + $0x158] sm:$0xff]
    %v10130 = vld [vmem:[#allocation2 + $0x160] sm:$0xff]
    %v10131 = vld [vmem:[#allocation2 + $0x168] sm:$0xff]
    %v10132 = vld [vmem:[#allocation2 + $0x170] sm:$0xff]
    %v10133 = vld [vmem:[#allocation2 + $0x178] sm:$0xff]
    %v10134 = vld [vmem:[#allocation2 + $0x180] sm:$0xff]
    %v10135 = vld [vmem:[#allocation2 + $0x188] sm:$0xff]
    %v10136 = vld [vmem:[#allocation2 + $0x190] sm:$0xff]
    %v10137 = vld [vmem:[#allocation2 + $0x198] sm:$0xff]
    %v10138 = vld [vmem:[#allocation2 + $0x1a0] sm:$0xff]
    %v10139 = vld [vmem:[#allocation2 + $0x1a8] sm:$0xff]
    %v10140 = vld [vmem:[#allocation2 + $0x1b0] sm:$0xff]
    %v10141 = vld [vmem:[#allocation2 + $0x1b8] sm:$0xff]
    %v10142 = vld [vmem:[#allocation2 + $0x1c0] sm:$0xff]
    %v10143 = vld [vmem:[#allocation2 + $0x1c8] sm:$0xff]
    %v10144 = vld [vmem:[#allocation2 + $0x1d0] sm:$0xff]
    %v10145 = vld [vmem:[#allocation2 + $0x1d8] sm:$0xff]
    %v10146 = vld [vmem:[#allocation2 + $0x1e0] sm:$0xff]
    %v10147 = vld [vmem:[#allocation2 + $0x1e8] sm:$0xff]
    %v10148 = vld [vmem:[#allocation2 + $0x1f0] sm:$0xff]
    %v10149 = vld [vmem:[#allocation2 + $0x1f8] sm:$0xff]
    %v10150 = vadd.f32 %v10086, %v9832
    %v10151 = vadd.f32 %v10087, %v9835
    %v10152 = vadd.f32 %v10088, %v9840
    %v10153 = vadd.f32 %v10089, %v9843
    %v10154 = vadd.f32 %v10090, %v9848
    %v10155 = vadd.f32 %v10091, %v9851
    %v10156 = vadd.f32 %v10092, %v9856
    %v10157 = vadd.f32 %v10093, %v9859
    %v10158 = vadd.f32 %v10094, %v9864
    %v10159 = vadd.f32 %v10095, %v9867
    %v10160 = vadd.f32 %v10096, %v9872
    %v10161 = vadd.f32 %v10097, %v9875
    %v10162 = vadd.f32 %v10098, %v9880
    %v10163 = vadd.f32 %v10099, %v9883
    %v10164 = vadd.f32 %v10100, %v9888
    %v10165 = vadd.f32 %v10101, %v9891
    %v10166 = vadd.f32 %v10102, %v9896
    %v10167 = vadd.f32 %v10103, %v9899
    %v10168 = vadd.f32 %v10104, %v9904
    %v10169 = vadd.f32 %v10105, %v9907
    %v10170 = vadd.f32 %v10106, %v9912
    %v10171 = vadd.f32 %v10107, %v9915
    %v10172 = vadd.f32 %v10108, %v9920
    %v10173 = vadd.f32 %v10109, %v9923
    %v10174 = vadd.f32 %v10110, %v9928
    %v10175 = vadd.f32 %v10111, %v9931
    %v10176 = vadd.f32 %v10112, %v9936
    %v10177 = vadd.f32 %v10113, %v9939
    %v10178 = vadd.f32 %v10114, %v9944
    %v10179 = vadd.f32 %v10115, %v9947
    %v10180 = vadd.f32 %v10116, %v9952
    %v10181 = vadd.f32 %v10117, %v9955
    %v10182 = vadd.f32 %v10118, %v9960
    %v10183 = vadd.f32 %v10119, %v9963
    %v10184 = vadd.f32 %v10120, %v9968
    %v10185 = vadd.f32 %v10121, %v9971
    %v10186 = vadd.f32 %v10122, %v9976
    %v10187 = vadd.f32 %v10123, %v9979
    %v10188 = vadd.f32 %v10124, %v9984
    %v10189 = vadd.f32 %v10125, %v9987
    %v10190 = vadd.f32 %v10126, %v9992
    %v10191 = vadd.f32 %v10127, %v9995
    %v10192 = vadd.f32 %v10128, %v10000
    %v10193 = vadd.f32 %v10129, %v10003
    %v10194 = vadd.f32 %v10130, %v10008
    %v10195 = vadd.f32 %v10131, %v10011
    %v10196 = vadd.f32 %v10132, %v10016
    %v10197 = vadd.f32 %v10133, %v10019
    %v10198 = vadd.f32 %v10134, %v10024
    %v10199 = vadd.f32 %v10135, %v10027
    %v10200 = vadd.f32 %v10136, %v10032
    %v10201 = vadd.f32 %v10137, %v10035
    %v10202 = vadd.f32 %v10138, %v10040
    %v10203 = vadd.f32 %v10139, %v10043
    %v10204 = vadd.f32 %v10140, %v10048
    %v10205 = vadd.f32 %v10141, %v10051
    %v10206 = vadd.f32 %v10142, %v10056
    %v10207 = vadd.f32 %v10143, %v10059
    %v10208 = vadd.f32 %v10144, %v10064
    %v10209 = vadd.f32 %v10145, %v10067
    %v10210 = vadd.f32 %v10146, %v10072
    %v10211 = vadd.f32 %v10147, %v10075
    %v10212 = vadd.f32 %v10148, %v10080
    %v10213 = vadd.f32 %v10149, %v10083
    %10214 = vst.msk [vmem:[#allocation2] sm:$0xff] %vm685, %v10150
    %10215 = vst.msk [vmem:[#allocation2 + $0x8] sm:$0xff] %vm685, %v10151
    %10216 = vst.msk [vmem:[#allocation2 + $0x10] sm:$0xff] %vm685, %v10152
    %10217 = vst.msk [vmem:[#allocation2 + $0x18] sm:$0xff] %vm685, %v10153
    %10218 = vst.msk [vmem:[#allocation2 + $0x20] sm:$0xff] %vm685, %v10154
    %10219 = vst.msk [vmem:[#allocation2 + $0x28] sm:$0xff] %vm685, %v10155
    %10220 = vst.msk [vmem:[#allocation2 + $0x30] sm:$0xff] %vm685, %v10156
    %10221 = vst.msk [vmem:[#allocation2 + $0x38] sm:$0xff] %vm685, %v10157
    %10222 = vst.msk [vmem:[#allocation2 + $0x40] sm:$0xff] %vm685, %v10158
    %10223 = vst.msk [vmem:[#allocation2 + $0x48] sm:$0xff] %vm685, %v10159
    %10224 = vst.msk [vmem:[#allocation2 + $0x50] sm:$0xff] %vm685, %v10160
    %10225 = vst.msk [vmem:[#allocation2 + $0x58] sm:$0xff] %vm685, %v10161
    %10226 = vst.msk [vmem:[#allocation2 + $0x60] sm:$0xff] %vm685, %v10162
    %10227 = vst.msk [vmem:[#allocation2 + $0x68] sm:$0xff] %vm685, %v10163
    %10228 = vst.msk [vmem:[#allocation2 + $0x70] sm:$0xff] %vm685, %v10164
    %10229 = vst.msk [vmem:[#allocation2 + $0x78] sm:$0xff] %vm685, %v10165
    %10230 = vst.msk [vmem:[#allocation2 + $0x80] sm:$0xff] %vm685, %v10166
    %10231 = vst.msk [vmem:[#allocation2 + $0x88] sm:$0xff] %vm685, %v10167
    %10232 = vst.msk [vmem:[#allocation2 + $0x90] sm:$0xff] %vm685, %v10168
    %10233 = vst.msk [vmem:[#allocation2 + $0x98] sm:$0xff] %vm685, %v10169
    %10234 = vst.msk [vmem:[#allocation2 + $0xa0] sm:$0xff] %vm685, %v10170
    %10235 = vst.msk [vmem:[#allocation2 + $0xa8] sm:$0xff] %vm685, %v10171
    %10236 = vst.msk [vmem:[#allocation2 + $0xb0] sm:$0xff] %vm685, %v10172
    %10237 = vst.msk [vmem:[#allocation2 + $0xb8] sm:$0xff] %vm685, %v10173
    %10238 = vst.msk [vmem:[#allocation2 + $0xc0] sm:$0xff] %vm685, %v10174
    %10239 = vst.msk [vmem:[#allocation2 + $0xc8] sm:$0xff] %vm685, %v10175
    %10240 = vst.msk [vmem:[#allocation2 + $0xd0] sm:$0xff] %vm685, %v10176
    %10241 = vst.msk [vmem:[#allocation2 + $0xd8] sm:$0xff] %vm685, %v10177
    %10242 = vst.msk [vmem:[#allocation2 + $0xe0] sm:$0xff] %vm685, %v10178
    %10243 = vst.msk [vmem:[#allocation2 + $0xe8] sm:$0xff] %vm685, %v10179
    %10244 = vst.msk [vmem:[#allocation2 + $0xf0] sm:$0xff] %vm685, %v10180
    %10245 = vst.msk [vmem:[#allocation2 + $0xf8] sm:$0xff] %vm685, %v10181
    %10246 = vst.msk [vmem:[#allocation2 + $0x100] sm:$0xff] %vm685, %v10182
    %10247 = vst.msk [vmem:[#allocation2 + $0x108] sm:$0xff] %vm685, %v10183
    %10248 = vst.msk [vmem:[#allocation2 + $0x110] sm:$0xff] %vm685, %v10184
    %10249 = vst.msk [vmem:[#allocation2 + $0x118] sm:$0xff] %vm685, %v10185
    %10250 = vst.msk [vmem:[#allocation2 + $0x120] sm:$0xff] %vm685, %v10186
    %10251 = vst.msk [vmem:[#allocation2 + $0x128] sm:$0xff] %vm685, %v10187
    %10252 = vst.msk [vmem:[#allocation2 + $0x130] sm:$0xff] %vm685, %v10188
    %10253 = vst.msk [vmem:[#allocation2 + $0x138] sm:$0xff] %vm685, %v10189
    %10254 = vst.msk [vmem:[#allocation2 + $0x140] sm:$0xff] %vm685, %v10190
    %10255 = vst.msk [vmem:[#allocation2 + $0x148] sm:$0xff] %vm685, %v10191
    %10256 = vst.msk [vmem:[#allocation2 + $0x150] sm:$0xff] %vm685, %v10192
    %10257 = vst.msk [vmem:[#allocation2 + $0x158] sm:$0xff] %vm685, %v10193
    %10258 = vst.msk [vmem:[#allocation2 + $0x160] sm:$0xff] %vm685, %v10194
    %10259 = vst.msk [vmem:[#allocation2 + $0x168] sm:$0xff] %vm685, %v10195
    %10260 = vst.msk [vmem:[#allocation2 + $0x170] sm:$0xff] %vm685, %v10196
    %10261 = vst.msk [vmem:[#allocation2 + $0x178] sm:$0xff] %vm685, %v10197
    %10262 = vst.msk [vmem:[#allocation2 + $0x180] sm:$0xff] %vm685, %v10198
    %10263 = vst.msk [vmem:[#allocation2 + $0x188] sm:$0xff] %vm685, %v10199
    %10264 = vst.msk [vmem:[#allocation2 + $0x190] sm:$0xff] %vm685, %v10200
    %10265 = vst.msk [vmem:[#allocation2 + $0x198] sm:$0xff] %vm685, %v10201
    %10266 = vst.msk [vmem:[#allocation2 + $0x1a0] sm:$0xff] %vm685, %v10202
    %10267 = vst.msk [vmem:[#allocation2 + $0x1a8] sm:$0xff] %vm685, %v10203
    %10268 = vst.msk [vmem:[#allocation2 + $0x1b0] sm:$0xff] %vm685, %v10204
    %10269 = vst.msk [vmem:[#allocation2 + $0x1b8] sm:$0xff] %vm685, %v10205
    %10270 = vst.msk [vmem:[#allocation2 + $0x1c0] sm:$0xff] %vm685, %v10206
    %10271 = vst.msk [vmem:[#allocation2 + $0x1c8] sm:$0xff] %vm685, %v10207
    %10272 = vst.msk [vmem:[#allocation2 + $0x1d0] sm:$0xff] %vm685, %v10208
    %10273 = vst.msk [vmem:[#allocation2 + $0x1d8] sm:$0xff] %vm685, %v10209
    %10274 = vst.msk [vmem:[#allocation2 + $0x1e0] sm:$0xff] %vm685, %v10210
    %10275 = vst.msk [vmem:[#allocation2 + $0x1e8] sm:$0xff] %vm685, %v10211
    %10276 = vst.msk [vmem:[#allocation2 + $0x1f0] sm:$0xff] %vm685, %v10212
    %10277 = vst.msk [vmem:[#allocation2 + $0x1f8] sm:$0xff] %vm685, %v10213
    %v10278 = vld [vmem:[#allocation2] sm:$0xff]
    %v10279 = vld [vmem:[#allocation2 + $0x8] sm:$0xff]
    %v10280 = vld [vmem:[#allocation2 + $0x10] sm:$0xff]
    %v10281 = vld [vmem:[#allocation2 + $0x18] sm:$0xff]
    %v10282 = vld [vmem:[#allocation2 + $0x20] sm:$0xff]
    %v10283 = vld [vmem:[#allocation2 + $0x28] sm:$0xff]
    %v10284 = vld [vmem:[#allocation2 + $0x30] sm:$0xff]
    %v10285 = vld [vmem:[#allocation2 + $0x38] sm:$0xff]
    %v10286 = vld [vmem:[#allocation2 + $0x40] sm:$0xff]
    %v10287 = vld [vmem:[#allocation2 + $0x48] sm:$0xff]
    %v10288 = vld [vmem:[#allocation2 + $0x50] sm:$0xff]
    %v10289 = vld [vmem:[#allocation2 + $0x58] sm:$0xff]
    %v10290 = vld [vmem:[#allocation2 + $0x60] sm:$0xff]
    %v10291 = vld [vmem:[#allocation2 + $0x68] sm:$0xff]
    %v10292 = vld [vmem:[#allocation2 + $0x70] sm:$0xff]
    %v10293 = vld [vmem:[#allocation2 + $0x78] sm:$0xff]
    %v10294 = vld [vmem:[#allocation2 + $0x80] sm:$0xff]
    %v10295 = vld [vmem:[#allocation2 + $0x88] sm:$0xff]
    %v10296 = vld [vmem:[#allocation2 + $0x90] sm:$0xff]
    %v10297 = vld [vmem:[#allocation2 + $0x98] sm:$0xff]
    %v10298 = vld [vmem:[#allocation2 + $0xa0] sm:$0xff]
    %v10299 = vld [vmem:[#allocation2 + $0xa8] sm:$0xff]
    %v10300 = vld [vmem:[#allocation2 + $0xb0] sm:$0xff]
    %v10301 = vld [vmem:[#allocation2 + $0xb8] sm:$0xff]
    %v10302 = vld [vmem:[#allocation2 + $0xc0] sm:$0xff]
    %v10303 = vld [vmem:[#allocation2 + $0xc8] sm:$0xff]
    %v10304 = vld [vmem:[#allocation2 + $0xd0] sm:$0xff]
    %v10305 = vld [vmem:[#allocation2 + $0xd8] sm:$0xff]
    %v10306 = vld [vmem:[#allocation2 + $0xe0] sm:$0xff]
    %v10307 = vld [vmem:[#allocation2 + $0xe8] sm:$0xff]
    %v10308 = vld [vmem:[#allocation2 + $0xf0] sm:$0xff]
    %v10309 = vld [vmem:[#allocation2 + $0xf8] sm:$0xff]
    %v10310 = vld [vmem:[#allocation2 + $0x100] sm:$0xff]
    %v10311 = vld [vmem:[#allocation2 + $0x108] sm:$0xff]
    %v10312 = vld [vmem:[#allocation2 + $0x110] sm:$0xff]
    %v10313 = vld [vmem:[#allocation2 + $0x118] sm:$0xff]
    %v10314 = vld [vmem:[#allocation2 + $0x120] sm:$0xff]
    %v10315 = vld [vmem:[#allocation2 + $0x128] sm:$0xff]
    %v10316 = vld [vmem:[#allocation2 + $0x130] sm:$0xff]
    %v10317 = vld [vmem:[#allocation2 + $0x138] sm:$0xff]
    %v10318 = vld [vmem:[#allocation2 + $0x140] sm:$0xff]
    %v10319 = vld [vmem:[#allocation2 + $0x148] sm:$0xff]
    %v10320 = vld [vmem:[#allocation2 + $0x150] sm:$0xff]
    %v10321 = vld [vmem:[#allocation2 + $0x158] sm:$0xff]
    %v10322 = vld [vmem:[#allocation2 + $0x160] sm:$0xff]
    %v10323 = vld [vmem:[#allocation2 + $0x168] sm:$0xff]
    %v10324 = vld [vmem:[#allocation2 + $0x170] sm:$0xff]
    %v10325 = vld [vmem:[#allocation2 + $0x178] sm:$0xff]
    %v10326 = vld [vmem:[#allocation2 + $0x180] sm:$0xff]
    %v10327 = vld [vmem:[#allocation2 + $0x188] sm:$0xff]
    %v10328 = vld [vmem:[#allocation2 + $0x190] sm:$0xff]
    %v10329 = vld [vmem:[#allocation2 + $0x198] sm:$0xff]
    %v10330 = vld [vmem:[#allocation2 + $0x1a0] sm:$0xff]
    %v10331 = vld [vmem:[#allocation2 + $0x1a8] sm:$0xff]
    %v10332 = vld [vmem:[#allocation2 + $0x1b0] sm:$0xff]
    %v10333 = vld [vmem:[#allocation2 + $0x1b8] sm:$0xff]
    %v10334 = vld [vmem:[#allocation2 + $0x1c0] sm:$0xff]
    %v10335 = vld [vmem:[#allocation2 + $0x1c8] sm:$0xff]
    %v10336 = vld [vmem:[#allocation2 + $0x1d0] sm:$0xff]
    %v10337 = vld [vmem:[#allocation2 + $0x1d8] sm:$0xff]
    %v10338 = vld [vmem:[#allocation2 + $0x1e0] sm:$0xff]
    %v10339 = vld [vmem:[#allocation2 + $0x1e8] sm:$0xff]
    %v10340 = vld [vmem:[#allocation2 + $0x1f0] sm:$0xff]
    %v10341 = vld [vmem:[#allocation2 + $0x1f8] sm:$0xff]
    %v10342 = vsel %vm685, %v10278, 0.0
    %v10343 = vsel %vm685, %v10279, 0.0
    %v10344 = vadd.f32 %v10342, %v10343
    %v10345 = vsel %vm685, %v10280, 0.0
    %v10346 = vadd.f32 %v10344, %v10345
    %v10347 = vsel %vm685, %v10281, 0.0
    %v10348 = vadd.f32 %v10346, %v10347
    %v10349 = vsel %vm685, %v10282, 0.0
    %v10350 = vadd.f32 %v10348, %v10349
    %v10351 = vsel %vm685, %v10283, 0.0
    %v10352 = vadd.f32 %v10350, %v10351
    %v10353 = vsel %vm685, %v10284, 0.0
    %v10354 = vadd.f32 %v10352, %v10353
    %v10355 = vsel %vm685, %v10285, 0.0
    %v10356 = vadd.f32 %v10354, %v10355
    %v10357 = vsel %vm685, %v10286, 0.0
    %v10358 = vadd.f32 %v10356, %v10357
    %v10359 = vsel %vm685, %v10287, 0.0
    %v10360 = vadd.f32 %v10358, %v10359
    %v10361 = vsel %vm685, %v10288, 0.0
    %v10362 = vadd.f32 %v10360, %v10361
    %v10363 = vsel %vm685, %v10289, 0.0
    %v10364 = vadd.f32 %v10362, %v10363
    %v10365 = vsel %vm685, %v10290, 0.0
    %v10366 = vadd.f32 %v10364, %v10365
    %v10367 = vsel %vm685, %v10291, 0.0
    %v10368 = vadd.f32 %v10366, %v10367
    %v10369 = vsel %vm685, %v10292, 0.0
    %v10370 = vadd.f32 %v10368, %v10369
    %v10371 = vsel %vm685, %v10293, 0.0
    %v10372 = vadd.f32 %v10370, %v10371
    %v10373 = vsel %vm685, %v10294, 0.0
    %v10374 = vadd.f32 %v10372, %v10373
    %v10375 = vsel %vm685, %v10295, 0.0
    %v10376 = vadd.f32 %v10374, %v10375
    %v10377 = vsel %vm685, %v10296, 0.0
    %v10378 = vadd.f32 %v10376, %v10377
    %v10379 = vsel %vm685, %v10297, 0.0
    %v10380 = vadd.f32 %v10378, %v10379
    %v10381 = vsel %vm685, %v10298, 0.0
    %v10382 = vadd.f32 %v10380, %v10381
    %v10383 = vsel %vm685, %v10299, 0.0
    %v10384 = vadd.f32 %v10382, %v10383
    %v10385 = vsel %vm685, %v10300, 0.0
    %v10386 = vadd.f32 %v10384, %v10385
    %v10387 = vsel %vm685, %v10301, 0.0
    %v10388 = vadd.f32 %v10386, %v10387
    %v10389 = vsel %vm685, %v10302, 0.0
    %v10390 = vadd.f32 %v10388, %v10389
    %v10391 = vsel %vm685, %v10303, 0.0
    %v10392 = vadd.f32 %v10390, %v10391
    %v10393 = vsel %vm685, %v10304, 0.0
    %v10394 = vadd.f32 %v10392, %v10393
    %v10395 = vsel %vm685, %v10305, 0.0
    %v10396 = vadd.f32 %v10394, %v10395
    %v10397 = vsel %vm685, %v10306, 0.0
    %v10398 = vadd.f32 %v10396, %v10397
    %v10399 = vsel %vm685, %v10307, 0.0
    %v10400 = vadd.f32 %v10398, %v10399
    %v10401 = vsel %vm685, %v10308, 0.0
    %v10402 = vadd.f32 %v10400, %v10401
    %v10403 = vsel %vm685, %v10309, 0.0
    %v10404 = vadd.f32 %v10402, %v10403
    %v10405 = vsel %vm685, %v10310, 0.0
    %v10406 = vadd.f32 %v10404, %v10405
    %v10407 = vsel %vm685, %v10311, 0.0
    %v10408 = vadd.f32 %v10406, %v10407
    %v10409 = vsel %vm685, %v10312, 0.0
    %v10410 = vadd.f32 %v10408, %v10409
    %v10411 = vsel %vm685, %v10313, 0.0
    %v10412 = vadd.f32 %v10410, %v10411
    %v10413 = vsel %vm685, %v10314, 0.0
    %v10414 = vadd.f32 %v10412, %v10413
    %v10415 = vsel %vm685, %v10315, 0.0
    %v10416 = vadd.f32 %v10414, %v10415
    %v10417 = vsel %vm685, %v10316, 0.0
    %v10418 = vadd.f32 %v10416, %v10417
    %v10419 = vsel %vm685, %v10317, 0.0
    %v10420 = vadd.f32 %v10418, %v10419
    %v10421 = vsel %vm685, %v10318, 0.0
    %v10422 = vadd.f32 %v10420, %v10421
    %v10423 = vsel %vm685, %v10319, 0.0
    %v10424 = vadd.f32 %v10422, %v10423
    %v10425 = vsel %vm685, %v10320, 0.0
    %v10426 = vadd.f32 %v10424, %v10425
    %v10427 = vsel %vm685, %v10321, 0.0
    %v10428 = vadd.f32 %v10426, %v10427
    %v10429 = vsel %vm685, %v10322, 0.0
    %v10430 = vadd.f32 %v10428, %v10429
    %v10431 = vsel %vm685, %v10323, 0.0
    %v10432 = vadd.f32 %v10430, %v10431
    %v10433 = vsel %vm685, %v10324, 0.0
    %v10434 = vadd.f32 %v10432, %v10433
    %v10435 = vsel %vm685, %v10325, 0.0
    %v10436 = vadd.f32 %v10434, %v10435
    %v10437 = vsel %vm685, %v10326, 0.0
    %v10438 = vadd.f32 %v10436, %v10437
    %v10439 = vsel %vm685, %v10327, 0.0
    %v10440 = vadd.f32 %v10438, %v10439
    %v10441 = vsel %vm685, %v10328, 0.0
    %v10442 = vadd.f32 %v10440, %v10441
    %v10443 = vsel %vm685, %v10329, 0.0
    %v10444 = vadd.f32 %v10442, %v10443
    %v10445 = vsel %vm685, %v10330, 0.0
    %v10446 = vadd.f32 %v10444, %v10445
    %v10447 = vsel %vm685, %v10331, 0.0
    %v10448 = vadd.f32 %v10446, %v10447
    %v10449 = vsel %vm685, %v10332, 0.0
    %v10450 = vadd.f32 %v10448, %v10449
    %v10451 = vsel %vm685, %v10333, 0.0
    %v10452 = vadd.f32 %v10450, %v10451
    %v10453 = vsel %vm685, %v10334, 0.0
    %v10454 = vadd.f32 %v10452, %v10453
    %v10455 = vsel %vm685, %v10335, 0.0
    %v10456 = vadd.f32 %v10454, %v10455
    %v10457 = vsel %vm685, %v10336, 0.0
    %v10458 = vadd.f32 %v10456, %v10457
    %v10459 = vsel %vm685, %v10337, 0.0
    %v10460 = vadd.f32 %v10458, %v10459
    %v10461 = vsel %vm685, %v10338, 0.0
    %v10462 = vadd.f32 %v10460, %v10461
    %v10463 = vsel %vm685, %v10339, 0.0
    %v10464 = vadd.f32 %v10462, %v10463
    %v10465 = vsel %vm685, %v10340, 0.0
    %v10466 = vadd.f32 %v10464, %v10465
    %v10467 = vsel %vm685, %v10341, 0.0
    %v10468 = vadd.f32 %v10466, %v10467
    %v10469 = vrot.slane %v10468, 4
    %v10470 = vadd.f32 %v10468, %v10469
    %v10471 = vrot.slane %v10470, 2
    %v10472 = vadd.f32 %v10470, %v10471
    %v10473 = vrot.slane %v10472, 1
    %v10474 = vadd.f32 %v10472, %v10473
    %v10475 = vmul.f32 %v10474, 0.001953125
    %v10476 = vmul.f32 %v10278, %v10278
    %v10477 = vmul.f32 %v10279, %v10279
    %v10478 = vmul.f32 %v10280, %v10280
    %v10479 = vmul.f32 %v10281, %v10281
    %v10480 = vmul.f32 %v10282, %v10282
    %v10481 = vmul.f32 %v10283, %v10283
    %v10482 = vmul.f32 %v10284, %v10284
    %v10483 = vmul.f32 %v10285, %v10285
    %v10484 = vmul.f32 %v10286, %v10286
    %v10485 = vmul.f32 %v10287, %v10287
    %v10486 = vmul.f32 %v10288, %v10288
    %v10487 = vmul.f32 %v10289, %v10289
    %v10488 = vmul.f32 %v10290, %v10290
    %v10489 = vmul.f32 %v10291, %v10291
    %v10490 = vmul.f32 %v10292, %v10292
    %v10491 = vmul.f32 %v10293, %v10293
    %v10492 = vmul.f32 %v10294, %v10294
    %v10493 = vmul.f32 %v10295, %v10295
    %v10494 = vmul.f32 %v10296, %v10296
    %v10495 = vmul.f32 %v10297, %v10297
    %v10496 = vmul.f32 %v10298, %v10298
    %v10497 = vmul.f32 %v10299, %v10299
    %v10498 = vmul.f32 %v10300, %v10300
    %v10499 = vmul.f32 %v10301, %v10301
    %v10500 = vmul.f32 %v10302, %v10302
    %v10501 = vmul.f32 %v10303, %v10303
    %v10502 = vmul.f32 %v10304, %v10304
    %v10503 = vmul.f32 %v10305, %v10305
    %v10504 = vmul.f32 %v10306, %v10306
    %v10505 = vmul.f32 %v10307, %v10307
    %v10506 = vmul.f32 %v10308, %v10308
    %v10507 = vmul.f32 %v10309, %v10309
    %v10508 = vmul.f32 %v10310, %v10310
    %v10509 = vmul.f32 %v10311, %v10311
    %v10510 = vmul.f32 %v10312, %v10312
    %v10511 = vmul.f32 %v10313, %v10313
    %v10512 = vmul.f32 %v10314, %v10314
    %v10513 = vmul.f32 %v10315, %v10315
    %v10514 = vmul.f32 %v10316, %v10316
    %v10515 = vmul.f32 %v10317, %v10317
    %v10516 = vmul.f32 %v10318, %v10318
    %v10517 = vmul.f32 %v10319, %v10319
    %v10518 = vmul.f32 %v10320, %v10320
    %v10519 = vmul.f32 %v10321, %v10321
    %v10520 = vmul.f32 %v10322, %v10322
    %v10521 = vmul.f32 %v10323, %v10323
    %v10522 = vmul.f32 %v10324, %v10324
    %v10523 = vmul.f32 %v10325, %v10325
    %v10524 = vmul.f32 %v10326, %v10326
    %v10525 = vmul.f32 %v10327, %v10327
    %v10526 = vmul.f32 %v10328, %v10328
    %v10527 = vmul.f32 %v10329, %v10329
    %v10528 = vmul.f32 %v10330, %v10330
    %v10529 = vmul.f32 %v10331, %v10331
    %v10530 = vmul.f32 %v10332, %v10332
    %v10531 = vmul.f32 %v10333, %v10333
    %v10532 = vmul.f32 %v10334, %v10334
    %v10533 = vmul.f32 %v10335, %v10335
    %v10534 = vmul.f32 %v10336, %v10336
    %v10535 = vmul.f32 %v10337, %v10337
    %v10536 = vmul.f32 %v10338, %v10338
    %v10537 = vmul.f32 %v10339, %v10339
    %v10538 = vmul.f32 %v10340, %v10340
    %v10539 = vmul.f32 %v10341, %v10341
    %v10540 = vsel %vm685, %v10476, 0.0
    %v10541 = vsel %vm685, %v10477, 0.0
    %v10542 = vadd.f32 %v10540, %v10541
    %v10543 = vsel %vm685, %v10478, 0.0
    %v10544 = vadd.f32 %v10542, %v10543
    %v10545 = vsel %vm685, %v10479, 0.0
    %v10546 = vadd.f32 %v10544, %v10545
    %v10547 = vsel %vm685, %v10480, 0.0
    %v10548 = vadd.f32 %v10546, %v10547
    %v10549 = vsel %vm685, %v10481, 0.0
    %v10550 = vadd.f32 %v10548, %v10549
    %v10551 = vsel %vm685, %v10482, 0.0
    %v10552 = vadd.f32 %v10550, %v10551
    %v10553 = vsel %vm685, %v10483, 0.0
    %v10554 = vadd.f32 %v10552, %v10553
    %v10555 = vsel %vm685, %v10484, 0.0
    %v10556 = vadd.f32 %v10554, %v10555
    %v10557 = vsel %vm685, %v10485, 0.0
    %v10558 = vadd.f32 %v10556, %v10557
    %v10559 = vsel %vm685, %v10486, 0.0
    %v10560 = vadd.f32 %v10558, %v10559
    %v10561 = vsel %vm685, %v10487, 0.0
    %v10562 = vadd.f32 %v10560, %v10561
    %v10563 = vsel %vm685, %v10488, 0.0
    %v10564 = vadd.f32 %v10562, %v10563
    %v10565 = vsel %vm685, %v10489, 0.0
    %v10566 = vadd.f32 %v10564, %v10565
    %v10567 = vsel %vm685, %v10490, 0.0
    %v10568 = vadd.f32 %v10566, %v10567
    %v10569 = vsel %vm685, %v10491, 0.0
    %v10570 = vadd.f32 %v10568, %v10569
    %v10571 = vsel %vm685, %v10492, 0.0
    %v10572 = vadd.f32 %v10570, %v10571
    %v10573 = vsel %vm685, %v10493, 0.0
    %v10574 = vadd.f32 %v10572, %v10573
    %v10575 = vsel %vm685, %v10494, 0.0
    %v10576 = vadd.f32 %v10574, %v10575
    %v10577 = vsel %vm685, %v10495, 0.0
    %v10578 = vadd.f32 %v10576, %v10577
    %v10579 = vsel %vm685, %v10496, 0.0
    %v10580 = vadd.f32 %v10578, %v10579
    %v10581 = vsel %vm685, %v10497, 0.0
    %v10582 = vadd.f32 %v10580, %v10581
    %v10583 = vsel %vm685, %v10498, 0.0
    %v10584 = vadd.f32 %v10582, %v10583
    %v10585 = vsel %vm685, %v10499, 0.0
    %v10586 = vadd.f32 %v10584, %v10585
    %v10587 = vsel %vm685, %v10500, 0.0
    %v10588 = vadd.f32 %v10586, %v10587
    %v10589 = vsel %vm685, %v10501, 0.0
    %v10590 = vadd.f32 %v10588, %v10589
    %v10591 = vsel %vm685, %v10502, 0.0
    %v10592 = vadd.f32 %v10590, %v10591
    %v10593 = vsel %vm685, %v10503, 0.0
    %v10594 = vadd.f32 %v10592, %v10593
    %v10595 = vsel %vm685, %v10504, 0.0
    %v10596 = vadd.f32 %v10594, %v10595
    %v10597 = vsel %vm685, %v10505, 0.0
    %v10598 = vadd.f32 %v10596, %v10597
    %v10599 = vsel %vm685, %v10506, 0.0
    %v10600 = vadd.f32 %v10598, %v10599
    %v10601 = vsel %vm685, %v10507, 0.0
    %v10602 = vadd.f32 %v10600, %v10601
    %v10603 = vsel %vm685, %v10508, 0.0
    %v10604 = vadd.f32 %v10602, %v10603
    %v10605 = vsel %vm685, %v10509, 0.0
    %v10606 = vadd.f32 %v10604, %v10605
    %v10607 = vsel %vm685, %v10510, 0.0
    %v10608 = vadd.f32 %v10606, %v10607
    %v10609 = vsel %vm685, %v10511, 0.0
    %v10610 = vadd.f32 %v10608, %v10609
    %v10611 = vsel %vm685, %v10512, 0.0
    %v10612 = vadd.f32 %v10610, %v10611
    %v10613 = vsel %vm685, %v10513, 0.0
    %v10614 = vadd.f32 %v10612, %v10613
    %v10615 = vsel %vm685, %v10514, 0.0
    %v10616 = vadd.f32 %v10614, %v10615
    %v10617 = vsel %vm685, %v10515, 0.0
    %v10618 = vadd.f32 %v10616, %v10617
    %v10619 = vsel %vm685, %v10516, 0.0
    %v10620 = vadd.f32 %v10618, %v10619
    %v10621 = vsel %vm685, %v10517, 0.0
    %v10622 = vadd.f32 %v10620, %v10621
    %v10623 = vsel %vm685, %v10518, 0.0
    %v10624 = vadd.f32 %v10622, %v10623
    %v10625 = vsel %vm685, %v10519, 0.0
    %v10626 = vadd.f32 %v10624, %v10625
    %v10627 = vsel %vm685, %v10520, 0.0
    %v10628 = vadd.f32 %v10626, %v10627
    %v10629 = vsel %vm685, %v10521, 0.0
    %v10630 = vadd.f32 %v10628, %v10629
    %v10631 = vsel %vm685, %v10522, 0.0
    %v10632 = vadd.f32 %v10630, %v10631
    %v10633 = vsel %vm685, %v10523, 0.0
    %v10634 = vadd.f32 %v10632, %v10633
    %v10635 = vsel %vm685, %v10524, 0.0
    %v10636 = vadd.f32 %v10634, %v10635
    %v10637 = vsel %vm685, %v10525, 0.0
    %v10638 = vadd.f32 %v10636, %v10637
    %v10639 = vsel %vm685, %v10526, 0.0
    %v10640 = vadd.f32 %v10638, %v10639
    %v10641 = vsel %vm685, %v10527, 0.0
    %v10642 = vadd.f32 %v10640, %v10641
    %v10643 = vsel %vm685, %v10528, 0.0
    %v10644 = vadd.f32 %v10642, %v10643
    %v10645 = vsel %vm685, %v10529, 0.0
    %v10646 = vadd.f32 %v10644, %v10645
    %v10647 = vsel %vm685, %v10530, 0.0
    %v10648 = vadd.f32 %v10646, %v10647
    %v10649 = vsel %vm685, %v10531, 0.0
    %v10650 = vadd.f32 %v10648, %v10649
    %v10651 = vsel %vm685, %v10532, 0.0
    %v10652 = vadd.f32 %v10650, %v10651
    %v10653 = vsel %vm685, %v10533, 0.0
    %v10654 = vadd.f32 %v10652, %v10653
    %v10655 = vsel %vm685, %v10534, 0.0
    %v10656 = vadd.f32 %v10654, %v10655
    %v10657 = vsel %vm685, %v10535, 0.0
    %v10658 = vadd.f32 %v10656, %v10657
    %v10659 = vsel %vm685, %v10536, 0.0
    %v10660 = vadd.f32 %v10658, %v10659
    %v10661 = vsel %vm685, %v10537, 0.0
    %v10662 = vadd.f32 %v10660, %v10661
    %v10663 = vsel %vm685, %v10538, 0.0
    %v10664 = vadd.f32 %v10662, %v10663
    %v10665 = vsel %vm685, %v10539, 0.0
    %v10666 = vadd.f32 %v10664, %v10665
    %v10667 = vrot.slane %v10666, 4
    %v10668 = vadd.f32 %v10666, %v10667
    %v10669 = vrot.slane %v10668, 2
    %v10670 = vadd.f32 %v10668, %v10669
    %v10671 = vrot.slane %v10670, 1
    %v10672 = vadd.f32 %v10670, %v10671
    %v10673 = vmul.f32 %v10672, 0.001953125
    %v10674 = vmul.f32 %v10475, %v10475
    %v10675 = vsub.f32 %v10673, %v10674
    %v10676 = vld [vmem:[#allocation8] sm:$0x1]
    %v10677 = vadd.f32 %v10675, 1e-05
    %v10678 = vrsqrt.pop %v10677
    %v10679 = vmul.f32 %v10676, %v10678
    %v10680 = vsub.f32 %v10278, %v10475
    %v10681 = vsub.f32 %v10279, %v10475
    %v10682 = vsub.f32 %v10280, %v10475
    %v10683 = vsub.f32 %v10281, %v10475
    %v10684 = vsub.f32 %v10282, %v10475
    %v10685 = vsub.f32 %v10283, %v10475
    %v10686 = vsub.f32 %v10284, %v10475
    %v10687 = vsub.f32 %v10285, %v10475
    %v10688 = vsub.f32 %v10286, %v10475
    %v10689 = vsub.f32 %v10287, %v10475
    %v10690 = vsub.f32 %v10288, %v10475
    %v10691 = vsub.f32 %v10289, %v10475
    %v10692 = vsub.f32 %v10290, %v10475
    %v10693 = vsub.f32 %v10291, %v10475
    %v10694 = vsub.f32 %v10292, %v10475
    %v10695 = vsub.f32 %v10293, %v10475
    %v10696 = vsub.f32 %v10294, %v10475
    %v10697 = vsub.f32 %v10295, %v10475
    %v10698 = vsub.f32 %v10296, %v10475
    %v10699 = vsub.f32 %v10297, %v10475
    %v10700 = vsub.f32 %v10298, %v10475
    %v10701 = vsub.f32 %v10299, %v10475
    %v10702 = vsub.f32 %v10300, %v10475
    %v10703 = vsub.f32 %v10301, %v10475
    %v10704 = vsub.f32 %v10302, %v10475
    %v10705 = vsub.f32 %v10303, %v10475
    %v10706 = vsub.f32 %v10304, %v10475
    %v10707 = vsub.f32 %v10305, %v10475
    %v10708 = vsub.f32 %v10306, %v10475
    %v10709 = vsub.f32 %v10307, %v10475
    %v10710 = vsub.f32 %v10308, %v10475
    %v10711 = vsub.f32 %v10309, %v10475
    %v10712 = vsub.f32 %v10310, %v10475
    %v10713 = vsub.f32 %v10311, %v10475
    %v10714 = vsub.f32 %v10312, %v10475
    %v10715 = vsub.f32 %v10313, %v10475
    %v10716 = vsub.f32 %v10314, %v10475
    %v10717 = vsub.f32 %v10315, %v10475
    %v10718 = vsub.f32 %v10316, %v10475
    %v10719 = vsub.f32 %v10317, %v10475
    %v10720 = vsub.f32 %v10318, %v10475
    %v10721 = vsub.f32 %v10319, %v10475
    %v10722 = vsub.f32 %v10320, %v10475
    %v10723 = vsub.f32 %v10321, %v10475
    %v10724 = vsub.f32 %v10322, %v10475
    %v10725 = vsub.f32 %v10323, %v10475
    %v10726 = vsub.f32 %v10324, %v10475
    %v10727 = vsub.f32 %v10325, %v10475
    %v10728 = vsub.f32 %v10326, %v10475
    %v10729 = vsub.f32 %v10327, %v10475
    %v10730 = vsub.f32 %v10328, %v10475
    %v10731 = vsub.f32 %v10329, %v10475
    %v10732 = vsub.f32 %v10330, %v10475
    %v10733 = vsub.f32 %v10331, %v10475
    %v10734 = vsub.f32 %v10332, %v10475
    %v10735 = vsub.f32 %v10333, %v10475
    %v10736 = vsub.f32 %v10334, %v10475
    %v10737 = vsub.f32 %v10335, %v10475
    %v10738 = vsub.f32 %v10336, %v10475
    %v10739 = vsub.f32 %v10337, %v10475
    %v10740 = vsub.f32 %v10338, %v10475
    %v10741 = vsub.f32 %v10339, %v10475
    %v10742 = vsub.f32 %v10340, %v10475
    %v10743 = vsub.f32 %v10341, %v10475
    %v10745 = vlaneseq
    %v10746 = vshrl.u32 %v10745, 7
    %v10747 = vsub.s32 0, %v10746
    %v10748 = vrot.slane %v10679, %v10747
    %v10750 = vmul.f32 %v10680, %v10748
    %v10751 = vmul.f32 %v10681, %v10748
    %v10752 = vmul.f32 %v10682, %v10748
    %v10753 = vmul.f32 %v10683, %v10748
    %v10754 = vmul.f32 %v10684, %v10748
    %v10755 = vmul.f32 %v10685, %v10748
    %v10756 = vmul.f32 %v10686, %v10748
    %v10757 = vmul.f32 %v10687, %v10748
    %v10758 = vmul.f32 %v10688, %v10748
    %v10759 = vmul.f32 %v10689, %v10748
    %v10760 = vmul.f32 %v10690, %v10748
    %v10761 = vmul.f32 %v10691, %v10748
    %v10762 = vmul.f32 %v10692, %v10748
    %v10763 = vmul.f32 %v10693, %v10748
    %v10764 = vmul.f32 %v10694, %v10748
    %v10765 = vmul.f32 %v10695, %v10748
    %v10766 = vmul.f32 %v10696, %v10748
    %v10767 = vmul.f32 %v10697, %v10748
    %v10768 = vmul.f32 %v10698, %v10748
    %v10769 = vmul.f32 %v10699, %v10748
    %v10770 = vmul.f32 %v10700, %v10748
    %v10771 = vmul.f32 %v10701, %v10748
    %v10772 = vmul.f32 %v10702, %v10748
    %v10773 = vmul.f32 %v10703, %v10748
    %v10774 = vmul.f32 %v10704, %v10748
    %v10775 = vmul.f32 %v10705, %v10748
    %v10776 = vmul.f32 %v10706, %v10748
    %v10777 = vmul.f32 %v10707, %v10748
    %v10778 = vmul.f32 %v10708, %v10748
    %v10779 = vmul.f32 %v10709, %v10748
    %v10780 = vmul.f32 %v10710, %v10748
    %v10781 = vmul.f32 %v10711, %v10748
    %v10782 = vmul.f32 %v10712, %v10748
    %v10783 = vmul.f32 %v10713, %v10748
    %v10784 = vmul.f32 %v10714, %v10748
    %v10785 = vmul.f32 %v10715, %v10748
    %v10786 = vmul.f32 %v10716, %v10748
    %v10787 = vmul.f32 %v10717, %v10748
    %v10788 = vmul.f32 %v10718, %v10748
    %v10789 = vmul.f32 %v10719, %v10748
    %v10790 = vmul.f32 %v10720, %v10748
    %v10791 = vmul.f32 %v10721, %v10748
    %v10792 = vmul.f32 %v10722, %v10748
    %v10793 = vmul.f32 %v10723, %v10748
    %v10794 = vmul.f32 %v10724, %v10748
    %v10795 = vmul.f32 %v10725, %v10748
    %v10796 = vmul.f32 %v10726, %v10748
    %v10797 = vmul.f32 %v10727, %v10748
    %v10798 = vmul.f32 %v10728, %v10748
    %v10799 = vmul.f32 %v10729, %v10748
    %v10800 = vmul.f32 %v10730, %v10748
    %v10801 = vmul.f32 %v10731, %v10748
    %v10802 = vmul.f32 %v10732, %v10748
    %v10803 = vmul.f32 %v10733, %v10748
    %v10804 = vmul.f32 %v10734, %v10748
    %v10805 = vmul.f32 %v10735, %v10748
    %v10806 = vmul.f32 %v10736, %v10748
    %v10807 = vmul.f32 %v10737, %v10748
    %v10808 = vmul.f32 %v10738, %v10748
    %v10809 = vmul.f32 %v10739, %v10748
    %v10810 = vmul.f32 %v10740, %v10748
    %v10811 = vmul.f32 %v10741, %v10748
    %v10812 = vmul.f32 %v10742, %v10748
    %v10813 = vmul.f32 %v10743, %v10748
    %v10814 = vld [vmem:[#allocation9] sm:$0x1]
    %v10816 = vlaneseq
    %v10817 = vshrl.u32 %v10816, 7
    %v10818 = vsub.s32 0, %v10817
    %v10819 = vrot.slane %v10814, %v10818
    %v10821 = vadd.f32 %v10750, %v10819
    %v10822 = vadd.f32 %v10751, %v10819
    %v10823 = vadd.f32 %v10752, %v10819
    %v10824 = vadd.f32 %v10753, %v10819
    %v10825 = vadd.f32 %v10754, %v10819
    %v10826 = vadd.f32 %v10755, %v10819
    %v10827 = vadd.f32 %v10756, %v10819
    %v10828 = vadd.f32 %v10757, %v10819
    %v10829 = vadd.f32 %v10758, %v10819
    %v10830 = vadd.f32 %v10759, %v10819
    %v10831 = vadd.f32 %v10760, %v10819
    %v10832 = vadd.f32 %v10761, %v10819
    %v10833 = vadd.f32 %v10762, %v10819
    %v10834 = vadd.f32 %v10763, %v10819
    %v10835 = vadd.f32 %v10764, %v10819
    %v10836 = vadd.f32 %v10765, %v10819
    %v10837 = vadd.f32 %v10766, %v10819
    %v10838 = vadd.f32 %v10767, %v10819
    %v10839 = vadd.f32 %v10768, %v10819
    %v10840 = vadd.f32 %v10769, %v10819
    %v10841 = vadd.f32 %v10770, %v10819
    %v10842 = vadd.f32 %v10771, %v10819
    %v10843 = vadd.f32 %v10772, %v10819
    %v10844 = vadd.f32 %v10773, %v10819
    %v10845 = vadd.f32 %v10774, %v10819
    %v10846 = vadd.f32 %v10775, %v10819
    %v10847 = vadd.f32 %v10776, %v10819
    %v10848 = vadd.f32 %v10777, %v10819
    %v10849 = vadd.f32 %v10778, %v10819
    %v10850 = vadd.f32 %v10779, %v10819
    %v10851 = vadd.f32 %v10780, %v10819
    %v10852 = vadd.f32 %v10781, %v10819
    %v10853 = vadd.f32 %v10782, %v10819
    %v10854 = vadd.f32 %v10783, %v10819
    %v10855 = vadd.f32 %v10784, %v10819
    %v10856 = vadd.f32 %v10785, %v10819
    %v10857 = vadd.f32 %v10786, %v10819
    %v10858 = vadd.f32 %v10787, %v10819
    %v10859 = vadd.f32 %v10788, %v10819
    %v10860 = vadd.f32 %v10789, %v10819
    %v10861 = vadd.f32 %v10790, %v10819
    %v10862 = vadd.f32 %v10791, %v10819
    %v10863 = vadd.f32 %v10792, %v10819
    %v10864 = vadd.f32 %v10793, %v10819
    %v10865 = vadd.f32 %v10794, %v10819
    %v10866 = vadd.f32 %v10795, %v10819
    %v10867 = vadd.f32 %v10796, %v10819
    %v10868 = vadd.f32 %v10797, %v10819
    %v10869 = vadd.f32 %v10798, %v10819
    %v10870 = vadd.f32 %v10799, %v10819
    %v10871 = vadd.f32 %v10800, %v10819
    %v10872 = vadd.f32 %v10801, %v10819
    %v10873 = vadd.f32 %v10802, %v10819
    %v10874 = vadd.f32 %v10803, %v10819
    %v10875 = vadd.f32 %v10804, %v10819
    %v10876 = vadd.f32 %v10805, %v10819
    %v10877 = vadd.f32 %v10806, %v10819
    %v10878 = vadd.f32 %v10807, %v10819
    %v10879 = vadd.f32 %v10808, %v10819
    %v10880 = vadd.f32 %v10809, %v10819
    %v10881 = vadd.f32 %v10810, %v10819
    %v10882 = vadd.f32 %v10811, %v10819
    %v10883 = vadd.f32 %v10812, %v10819
    %v10884 = vadd.f32 %v10813, %v10819
    %v10885 = vmax.f32 %v10821, 0.0
    %v10886 = vmax.f32 %v10822, 0.0
    %v10887 = vmax.f32 %v10823, 0.0
    %v10888 = vmax.f32 %v10824, 0.0
    %v10889 = vmax.f32 %v10825, 0.0
    %v10890 = vmax.f32 %v10826, 0.0
    %v10891 = vmax.f32 %v10827, 0.0
    %v10892 = vmax.f32 %v10828, 0.0
    %v10893 = vmax.f32 %v10829, 0.0
    %v10894 = vmax.f32 %v10830, 0.0
    %v10895 = vmax.f32 %v10831, 0.0
    %v10896 = vmax.f32 %v10832, 0.0
    %v10897 = vmax.f32 %v10833, 0.0
    %v10898 = vmax.f32 %v10834, 0.0
    %v10899 = vmax.f32 %v10835, 0.0
    %v10900 = vmax.f32 %v10836, 0.0
    %v10901 = vmax.f32 %v10837, 0.0
    %v10902 = vmax.f32 %v10838, 0.0
    %v10903 = vmax.f32 %v10839, 0.0
    %v10904 = vmax.f32 %v10840, 0.0
    %v10905 = vmax.f32 %v10841, 0.0
    %v10906 = vmax.f32 %v10842, 0.0
    %v10907 = vmax.f32 %v10843, 0.0
    %v10908 = vmax.f32 %v10844, 0.0
    %v10909 = vmax.f32 %v10845, 0.0
    %v10910 = vmax.f32 %v10846, 0.0
    %v10911 = vmax.f32 %v10847, 0.0
    %v10912 = vmax.f32 %v10848, 0.0
    %v10913 = vmax.f32 %v10849, 0.0
    %v10914 = vmax.f32 %v10850, 0.0
    %v10915 = vmax.f32 %v10851, 0.0
    %v10916 = vmax.f32 %v10852, 0.0
    %v10917 = vmax.f32 %v10853, 0.0
    %v10918 = vmax.f32 %v10854, 0.0
    %v10919 = vmax.f32 %v10855, 0.0
    %v10920 = vmax.f32 %v10856, 0.0
    %v10921 = vmax.f32 %v10857, 0.0
    %v10922 = vmax.f32 %v10858, 0.0
    %v10923 = vmax.f32 %v10859, 0.0
    %v10924 = vmax.f32 %v10860, 0.0
    %v10925 = vmax.f32 %v10861, 0.0
    %v10926 = vmax.f32 %v10862, 0.0
    %v10927 = vmax.f32 %v10863, 0.0
    %v10928 = vmax.f32 %v10864, 0.0
    %v10929 = vmax.f32 %v10865, 0.0
    %v10930 = vmax.f32 %v10866, 0.0
    %v10931 = vmax.f32 %v10867, 0.0
    %v10932 = vmax.f32 %v10868, 0.0
    %v10933 = vmax.f32 %v10869, 0.0
    %v10934 = vmax.f32 %v10870, 0.0
    %v10935 = vmax.f32 %v10871, 0.0
    %v10936 = vmax.f32 %v10872, 0.0
    %v10937 = vmax.f32 %v10873, 0.0
    %v10938 = vmax.f32 %v10874, 0.0
    %v10939 = vmax.f32 %v10875, 0.0
    %v10940 = vmax.f32 %v10876, 0.0
    %v10941 = vmax.f32 %v10877, 0.0
    %v10942 = vmax.f32 %v10878, 0.0
    %v10943 = vmax.f32 %v10879, 0.0
    %v10944 = vmax.f32 %v10880, 0.0
    %v10945 = vmax.f32 %v10881, 0.0
    %v10946 = vmax.f32 %v10882, 0.0
    %v10947 = vmax.f32 %v10883, 0.0
    %v10948 = vmax.f32 %v10884, 0.0
    %v10949 = vpack.c.bf16 %v10886, %v10885
    %v10950 = vpack.c.bf16 %v10888, %v10887
    %v10951 = vpack.c.bf16 %v10890, %v10889
    %v10952 = vpack.c.bf16 %v10892, %v10891
    %v10953 = vpack.c.bf16 %v10894, %v10893
    %v10954 = vpack.c.bf16 %v10896, %v10895
    %v10955 = vpack.c.bf16 %v10898, %v10897
    %v10956 = vpack.c.bf16 %v10900, %v10899
    %v10957 = vpack.c.bf16 %v10902, %v10901
    %v10958 = vpack.c.bf16 %v10904, %v10903
    %v10959 = vpack.c.bf16 %v10906, %v10905
    %v10960 = vpack.c.bf16 %v10908, %v10907
    %v10961 = vpack.c.bf16 %v10910, %v10909
    %v10962 = vpack.c.bf16 %v10912, %v10911
    %v10963 = vpack.c.bf16 %v10914, %v10913
    %v10964 = vpack.c.bf16 %v10916, %v10915
    %v10965 = vpack.c.bf16 %v10918, %v10917
    %v10966 = vpack.c.bf16 %v10920, %v10919
    %v10967 = vpack.c.bf16 %v10922, %v10921
    %v10968 = vpack.c.bf16 %v10924, %v10923
    %v10969 = vpack.c.bf16 %v10926, %v10925
    %v10970 = vpack.c.bf16 %v10928, %v10927
    %v10971 = vpack.c.bf16 %v10930, %v10929
    %v10972 = vpack.c.bf16 %v10932, %v10931
    %v10973 = vpack.c.bf16 %v10934, %v10933
    %v10974 = vpack.c.bf16 %v10936, %v10935
    %v10975 = vpack.c.bf16 %v10938, %v10937
    %v10976 = vpack.c.bf16 %v10940, %v10939
    %v10977 = vpack.c.bf16 %v10942, %v10941
    %v10978 = vpack.c.bf16 %v10944, %v10943
    %v10979 = vpack.c.bf16 %v10946, %v10945
    %v10980 = vpack.c.bf16 %v10948, %v10947
    %v11013 = vunpack.c.l.b16 %v10949
    %v11014 = vunpack.c.h.b16 %v10949
    %v11015 = vunpack.c.l.b16 %v10950
    %v11016 = vunpack.c.h.b16 %v10950
    %v11017 = vunpack.c.l.b16 %v10951
    %v11018 = vunpack.c.h.b16 %v10951
    %v11019 = vunpack.c.l.b16 %v10952
    %v11020 = vunpack.c.h.b16 %v10952
    %v11021 = vunpack.c.l.b16 %v10953
    %v11022 = vunpack.c.h.b16 %v10953
    %v11023 = vunpack.c.l.b16 %v10954
    %v11024 = vunpack.c.h.b16 %v10954
    %v11025 = vunpack.c.l.b16 %v10955
    %v11026 = vunpack.c.h.b16 %v10955
    %v11027 = vunpack.c.l.b16 %v10956
    %v11028 = vunpack.c.h.b16 %v10956
    %v11029 = vunpack.c.l.b16 %v10957
    %v11030 = vunpack.c.h.b16 %v10957
    %v11031 = vunpack.c.l.b16 %v10958
    %v11032 = vunpack.c.h.b16 %v10958
    %v11033 = vunpack.c.l.b16 %v10959
    %v11034 = vunpack.c.h.b16 %v10959
    %v11035 = vunpack.c.l.b16 %v10960
    %v11036 = vunpack.c.h.b16 %v10960
    %v11037 = vunpack.c.l.b16 %v10961
    %v11038 = vunpack.c.h.b16 %v10961
    %v11039 = vunpack.c.l.b16 %v10962
    %v11040 = vunpack.c.h.b16 %v10962
    %v11041 = vunpack.c.l.b16 %v10963
    %v11042 = vunpack.c.h.b16 %v10963
    %v11043 = vunpack.c.l.b16 %v10964
    %v11044 = vunpack.c.h.b16 %v10964
    %v11045 = vunpack.c.l.b16 %v10965
    %v11046 = vunpack.c.h.b16 %v10965
    %v11047 = vunpack.c.l.b16 %v10966
    %v11048 = vunpack.c.h.b16 %v10966
    %v11049 = vunpack.c.l.b16 %v10967
    %v11050 = vunpack.c.h.b16 %v10967
    %v11051 = vunpack.c.l.b16 %v10968
    %v11052 = vunpack.c.h.b16 %v10968
    %v11053 = vunpack.c.l.b16 %v10969
    %v11054 = vunpack.c.h.b16 %v10969
    %v11055 = vunpack.c.l.b16 %v10970
    %v11056 = vunpack.c.h.b16 %v10970
    %v11057 = vunpack.c.l.b16 %v10971
    %v11058 = vunpack.c.h.b16 %v10971
    %v11059 = vunpack.c.l.b16 %v10972
    %v11060 = vunpack.c.h.b16 %v10972
    %v11061 = vunpack.c.l.b16 %v10973
    %v11062 = vunpack.c.h.b16 %v10973
    %v11063 = vunpack.c.l.b16 %v10974
    %v11064 = vunpack.c.h.b16 %v10974
    %v11065 = vunpack.c.l.b16 %v10975
    %v11066 = vunpack.c.h.b16 %v10975
    %v11067 = vunpack.c.l.b16 %v10976
    %v11068 = vunpack.c.h.b16 %v10976
    %v11069 = vunpack.c.l.b16 %v10977
    %v11070 = vunpack.c.h.b16 %v10977
    %v11071 = vunpack.c.l.b16 %v10978
    %v11072 = vunpack.c.h.b16 %v10978
    %v11073 = vunpack.c.l.b16 %v10979
    %v11074 = vunpack.c.h.b16 %v10979
    %v11075 = vunpack.c.l.b16 %v10980
    %v11076 = vunpack.c.h.b16 %v10980
    %v11077 = vpack.c.b16 %v11013, %v11013
    %v11078 = vpack.c.b16 %v11014, %v11014
    %v11079 = vpack.c.b16 %v11015, %v11015
    %v11080 = vpack.c.b16 %v11016, %v11016
    %v11081 = vpack.c.b16 %v11017, %v11017
    %v11082 = vpack.c.b16 %v11018, %v11018
    %v11083 = vpack.c.b16 %v11019, %v11019
    %v11084 = vpack.c.b16 %v11020, %v11020
    %v11085 = vpack.c.b16 %v11021, %v11021
    %v11086 = vpack.c.b16 %v11022, %v11022
    %v11087 = vpack.c.b16 %v11023, %v11023
    %v11088 = vpack.c.b16 %v11024, %v11024
    %v11089 = vpack.c.b16 %v11025, %v11025
    %v11090 = vpack.c.b16 %v11026, %v11026
    %v11091 = vpack.c.b16 %v11027, %v11027
    %v11092 = vpack.c.b16 %v11028, %v11028
    %v11093 = vpack.c.b16 %v11029, %v11029
    %v11094 = vpack.c.b16 %v11030, %v11030
    %v11095 = vpack.c.b16 %v11031, %v11031
    %v11096 = vpack.c.b16 %v11032, %v11032
    %v11097 = vpack.c.b16 %v11033, %v11033
    %v11098 = vpack.c.b16 %v11034, %v11034
    %v11099 = vpack.c.b16 %v11035, %v11035
    %v11100 = vpack.c.b16 %v11036, %v11036
    %v11101 = vpack.c.b16 %v11037, %v11037
    %v11102 = vpack.c.b16 %v11038, %v11038
    %v11103 = vpack.c.b16 %v11039, %v11039
    %v11104 = vpack.c.b16 %v11040, %v11040
    %v11105 = vpack.c.b16 %v11041, %v11041
    %v11106 = vpack.c.b16 %v11042, %v11042
    %v11107 = vpack.c.b16 %v11043, %v11043
    %v11108 = vpack.c.b16 %v11044, %v11044
    %v11109 = vpack.c.b16 %v11045, %v11045
    %v11110 = vpack.c.b16 %v11046, %v11046
    %v11111 = vpack.c.b16 %v11047, %v11047
    %v11112 = vpack.c.b16 %v11048, %v11048
    %v11113 = vpack.c.b16 %v11049, %v11049
    %v11114 = vpack.c.b16 %v11050, %v11050
    %v11115 = vpack.c.b16 %v11051, %v11051
    %v11116 = vpack.c.b16 %v11052, %v11052
    %v11117 = vpack.c.b16 %v11053, %v11053
    %v11118 = vpack.c.b16 %v11054, %v11054
    %v11119 = vpack.c.b16 %v11055, %v11055
    %v11120 = vpack.c.b16 %v11056, %v11056
    %v11121 = vpack.c.b16 %v11057, %v11057
    %v11122 = vpack.c.b16 %v11058, %v11058
    %v11123 = vpack.c.b16 %v11059, %v11059
    %v11124 = vpack.c.b16 %v11060, %v11060
    %v11125 = vpack.c.b16 %v11061, %v11061
    %v11126 = vpack.c.b16 %v11062, %v11062
    %v11127 = vpack.c.b16 %v11063, %v11063
    %v11128 = vpack.c.b16 %v11064, %v11064
    %v11129 = vpack.c.b16 %v11065, %v11065
    %v11130 = vpack.c.b16 %v11066, %v11066
    %v11131 = vpack.c.b16 %v11067, %v11067
    %v11132 = vpack.c.b16 %v11068, %v11068
    %v11133 = vpack.c.b16 %v11069, %v11069
    %v11134 = vpack.c.b16 %v11070, %v11070
    %v11135 = vpack.c.b16 %v11071, %v11071
    %v11136 = vpack.c.b16 %v11072, %v11072
    %v11137 = vpack.c.b16 %v11073, %v11073
    %v11138 = vpack.c.b16 %v11074, %v11074
    %v11139 = vpack.c.b16 %v11075, %v11075
    %v11140 = vpack.c.b16 %v11076, %v11076
    %vm11205 = vcmask 60416
    %11206 = vst.msk [vmem:[#allocation11] sm:$0xf] %vm11205, %v11077
    %11207 = vst.msk [vmem:[#allocation11 + $0x4] sm:$0xf] %vm11205, %v11078
    %11208 = vst.msk [vmem:[#allocation11 + $0x8] sm:$0xf] %vm11205, %v11079
    %11209 = vst.msk [vmem:[#allocation11 + $0xc] sm:$0xf] %vm11205, %v11080
    %11210 = vst.msk [vmem:[#allocation11 + $0x10] sm:$0xf] %vm11205, %v11081
    %11211 = vst.msk [vmem:[#allocation11 + $0x14] sm:$0xf] %vm11205, %v11082
    %11212 = vst.msk [vmem:[#allocation11 + $0x18] sm:$0xf] %vm11205, %v11083
    %11213 = vst.msk [vmem:[#allocation11 + $0x1c] sm:$0xf] %vm11205, %v11084
    %11214 = vst.msk [vmem:[#allocation11 + $0x20] sm:$0xf] %vm11205, %v11085
    %11215 = vst.msk [vmem:[#allocation11 + $0x24] sm:$0xf] %vm11205, %v11086
    %11216 = vst.msk [vmem:[#allocation11 + $0x28] sm:$0xf] %vm11205, %v11087
    %11217 = vst.msk [vmem:[#allocation11 + $0x2c] sm:$0xf] %vm11205, %v11088
    %11218 = vst.msk [vmem:[#allocation11 + $0x30] sm:$0xf] %vm11205, %v11089
    %11219 = vst.msk [vmem:[#allocation11 + $0x34] sm:$0xf] %vm11205, %v11090
    %11220 = vst.msk [vmem:[#allocation11 + $0x38] sm:$0xf] %vm11205, %v11091
    %11221 = vst.msk [vmem:[#allocation11 + $0x3c] sm:$0xf] %vm11205, %v11092
    %11222 = vst.msk [vmem:[#allocation11 + $0x40] sm:$0xf] %vm11205, %v11093
    %11223 = vst.msk [vmem:[#allocation11 + $0x44] sm:$0xf] %vm11205, %v11094
    %11224 = vst.msk [vmem:[#allocation11 + $0x48] sm:$0xf] %vm11205, %v11095
    %11225 = vst.msk [vmem:[#allocation11 + $0x4c] sm:$0xf] %vm11205, %v11096
    %11226 = vst.msk [vmem:[#allocation11 + $0x50] sm:$0xf] %vm11205, %v11097
    %11227 = vst.msk [vmem:[#allocation11 + $0x54] sm:$0xf] %vm11205, %v11098
    %11228 = vst.msk [vmem:[#allocation11 + $0x58] sm:$0xf] %vm11205, %v11099
    %11229 = vst.msk [vmem:[#allocation11 + $0x5c] sm:$0xf] %vm11205, %v11100
    %11230 = vst.msk [vmem:[#allocation11 + $0x60] sm:$0xf] %vm11205, %v11101
    %11231 = vst.msk [vmem:[#allocation11 + $0x64] sm:$0xf] %vm11205, %v11102
    %11232 = vst.msk [vmem:[#allocation11 + $0x68] sm:$0xf] %vm11205, %v11103
    %11233 = vst.msk [vmem:[#allocation11 + $0x6c] sm:$0xf] %vm11205, %v11104
    %11234 = vst.msk [vmem:[#allocation11 + $0x70] sm:$0xf] %vm11205, %v11105
    %11235 = vst.msk [vmem:[#allocation11 + $0x74] sm:$0xf] %vm11205, %v11106
    %11236 = vst.msk [vmem:[#allocation11 + $0x78] sm:$0xf] %vm11205, %v11107
    %11237 = vst.msk [vmem:[#allocation11 + $0x7c] sm:$0xf] %vm11205, %v11108
    %11238 = vst.msk [vmem:[#allocation11 + $0x80] sm:$0xf] %vm11205, %v11109
    %11239 = vst.msk [vmem:[#allocation11 + $0x84] sm:$0xf] %vm11205, %v11110
    %11240 = vst.msk [vmem:[#allocation11 + $0x88] sm:$0xf] %vm11205, %v11111
    %11241 = vst.msk [vmem:[#allocation11 + $0x8c] sm:$0xf] %vm11205, %v11112
    %11242 = vst.msk [vmem:[#allocation11 + $0x90] sm:$0xf] %vm11205, %v11113
    %11243 = vst.msk [vmem:[#allocation11 + $0x94] sm:$0xf] %vm11205, %v11114
    %11244 = vst.msk [vmem:[#allocation11 + $0x98] sm:$0xf] %vm11205, %v11115
    %11245 = vst.msk [vmem:[#allocation11 + $0x9c] sm:$0xf] %vm11205, %v11116
    %11246 = vst.msk [vmem:[#allocation11 + $0xa0] sm:$0xf] %vm11205, %v11117
    %11247 = vst.msk [vmem:[#allocation11 + $0xa4] sm:$0xf] %vm11205, %v11118
    %11248 = vst.msk [vmem:[#allocation11 + $0xa8] sm:$0xf] %vm11205, %v11119
    %11249 = vst.msk [vmem:[#allocation11 + $0xac] sm:$0xf] %vm11205, %v11120
    %11250 = vst.msk [vmem:[#allocation11 + $0xb0] sm:$0xf] %vm11205, %v11121
    %11251 = vst.msk [vmem:[#allocation11 + $0xb4] sm:$0xf] %vm11205, %v11122
    %11252 = vst.msk [vmem:[#allocation11 + $0xb8] sm:$0xf] %vm11205, %v11123
    %11253 = vst.msk [vmem:[#allocation11 + $0xbc] sm:$0xf] %vm11205, %v11124
    %11254 = vst.msk [vmem:[#allocation11 + $0xc0] sm:$0xf] %vm11205, %v11125
    %11255 = vst.msk [vmem:[#allocation11 + $0xc4] sm:$0xf] %vm11205, %v11126
    %11256 = vst.msk [vmem:[#allocation11 + $0xc8] sm:$0xf] %vm11205, %v11127
    %11257 = vst.msk [vmem:[#allocation11 + $0xcc] sm:$0xf] %vm11205, %v11128
    %11258 = vst.msk [vmem:[#allocation11 + $0xd0] sm:$0xf] %vm11205, %v11129
    %11259 = vst.msk [vmem:[#allocation11 + $0xd4] sm:$0xf] %vm11205, %v11130
    %11260 = vst.msk [vmem:[#allocation11 + $0xd8] sm:$0xf] %vm11205, %v11131
    %11261 = vst.msk [vmem:[#allocation11 + $0xdc] sm:$0xf] %vm11205, %v11132
    %11262 = vst.msk [vmem:[#allocation11 + $0xe0] sm:$0xf] %vm11205, %v11133
    %11263 = vst.msk [vmem:[#allocation11 + $0xe4] sm:$0xf] %vm11205, %v11134
    %11264 = vst.msk [vmem:[#allocation11 + $0xe8] sm:$0xf] %vm11205, %v11135
    %11265 = vst.msk [vmem:[#allocation11 + $0xec] sm:$0xf] %vm11205, %v11136
    %11266 = vst.msk [vmem:[#allocation11 + $0xf0] sm:$0xf] %vm11205, %v11137
    %11267 = vst.msk [vmem:[#allocation11 + $0xf4] sm:$0xf] %vm11205, %v11138
    %11268 = vst.msk [vmem:[#allocation11 + $0xf8] sm:$0xf] %vm11205, %v11139
    %11269 = vst.msk [vmem:[#allocation11 + $0xfc] sm:$0xf] %vm11205, %v11140
    // Predicated region
    $region34: #{tpu_custom_call.1} parent=1 // pred_check
      _
    $region35: #{tpu_custom_call.1} parent=1 // pred_check_branch
      %11271 = sbr.rel (0) target = $region37
    $region36: #{tpu_custom_call.1} parent=1 // pred_region
      %s11273 = ssub.s32 4096, 4096
      %11274 = vsyncadd [#allocation5], %s11273
      %s11275 = sshll.u32 [#allocation11], 4
      %s11276 = int_to_ptr.vmem [resolvable:$true] %s11275
      %11281 = dma.vmem_to_hbm [thread:$0]  %s11276, 4096, %s4, [#allocation5], 64, 64, 4
    $region37: #{tpu_custom_call.1} parent=1 // pred_fallthru
      _
    // Predicated region
    $region38: #{tpu_custom_call.1} parent=1 // pred_check
      _
    $region39: #{tpu_custom_call.1} parent=1 // pred_check_branch
      %11283 = sbr.rel (0) target = $region41
    $region40: #{tpu_custom_call.1} parent=1 // pred_region
      %11284 = dma.done [#allocation5], 4096
    $region41: #{tpu_custom_call.1} parent=1 // pred_fallthru
      _
    %11285 = vsyncpa [#allocation4], 1
    %11286 = vsyncpa [#allocation7], 1
    %11287 = vsyncpa [#allocation10], 1
    %11288 = vsyncpa [#allocation5], 1

</llo_original>
